<compile_context>
chip_gen: v7x
topology: tpu7x:2x2x1
jax: 0.10.0
libtpu: 0.0.40
codegen_flags: <defaults>
</compile_context>

<pallas_src>
import numpy as np
import jax
import jax.numpy as jnp
from jax import lax
from jax.experimental import pallas as pl
from jax.experimental.pallas import tpu as pltpu

C_IN, C_MID, C_HID = 512, 256, 32   # fixed by the module
BN_EPS = 1e-5


# --------------------------- Pallas kernel ---------------------------

def _make_kernel(W, L):
    W2 = W + 2

    def kernel(xp_ref, xg_ref, mint_ref, sel_ref,
               w1_ref, b1_ref, wc_ref, bc_ref,
               wl1_ref, bl1_ref, wl2_ref, bl2_ref, out_ref):
        # ---- SpatialAttention ----
        # 1x1 conv (+ folded BN) over every padded row; the interior mask zeroes
        # the halo rows so the result is a valid zero-padded feature map.
        y1 = jnp.dot(xp_ref[...], w1_ref[...],
                     preferred_element_type=jnp.float32)        # (NBLK, 256) f32
        y1 = (y1 + b1_ref[...]) * mint_ref[...]

        # merged 3x3 + 1x3 + 3x1 conv: 9 contiguous row-offset tap slices,
        # accumulated in traced values (MXU results feed the add directly).
        acc = None
        for t in range(9):
            ky, kx = t // 3, t % 3
            d = ky * W2 + kx
            tap = y1[d:d + L, :].astype(jnp.bfloat16)            # contiguous window
            part = jnp.dot(tap, wc_ref[t], preferred_element_type=jnp.float32)
            acc = part if acc is None else acc + part

        z = jnp.maximum(acc + bc_ref[...], 0.0)                  # (L, 512) f32
        s = jnp.sum(z, axis=-1, keepdims=True)                   # (L, 1) channel sum

        # ---- fused  (x * y.sum(1))  +  global average pool ----
        # x_gap is x re-laid-out at the conv-output row indexing with zeros at
        # invalid rows; sel applies the per-batch segmentation and the 1/(H*W).
        xg = xg_ref[...]
        p = xg[0:L, :] * s                                       # f32 via promotion
        gap = jnp.dot(sel_ref[...], p,
                      preferred_element_type=jnp.float32)        # (BT, 512)

        # ---- ChannelAttention MLP (+ folded BN1d) ----
        h = jnp.dot(gap.astype(jnp.bfloat16), wl1_ref[...],
                    preferred_element_type=jnp.float32) + bl1_ref[...]
        h = jnp.maximum(h, 0.0)
        a = jax.nn.sigmoid(
            jnp.dot(h.astype(jnp.bfloat16), wl2_ref[...],
                    preferred_element_type=jnp.float32) + bl2_ref[...])
        out_ref[0] = (gap * a).astype(out_ref.dtype)

    return kernel


def _pick_bt(B, rows_per_batch, target_rows=256, max_bt=8):
    """Largest divisor of B (<= max_bt) that is just enough to reach target M rows."""
    bt = 1
    for d in range(1, min(B, max_bt) + 1):
        if B % d == 0:
            bt = d
            if d * rows_per_batch >= target_rows:
                break
    return bt


@jax.jit
def cross_attention_head(x_nchw, folded_params):
    B, C, H, W = x_nchw.shape
    assert C == C_IN
    W2, HW = W + 2, H * W
    PHW = (H + 2) * W2
    PHWp = ((PHW + 7) // 8) * 8          # per-batch padded row count (8-aligned)
    BT = _pick_bt(B, PHWp)               # batch elements per grid step
    G = B // BT
    NBLK = BT * PHWp
    D_MAX = 2 * W2 + 2                   # largest tap offset
    L = NBLK - D_MAX                     # rows at which conv outputs are computed

    (w1, b1, wc, bc, wl1, bl1, wl2, bl2) = folded_params

    x_nhwc = jnp.transpose(x_nchw, (0, 2, 3, 1))                       # (B,H,W,C)

    # center-aligned zero-padded flat layout (for the convolutions)
    xp = jnp.pad(x_nhwc, ((0, 0), (1, 1), (1, 1), (0, 0))).reshape(B, PHW, C)
    xp = jnp.pad(xp, ((0, 0), (0, PHWp - PHW), (0, 0)))
    x_pad = xp.reshape(B * PHWp, C).astype(jnp.bfloat16)

    # top-left-aligned flat layout (for the fused spatial-sum / GAP matmul)
    xg = jnp.pad(x_nhwc, ((0, 0), (0, 0), (0, 2), (0, 0))).reshape(B, H * W2, C)
    xg = jnp.pad(xg, ((0, 0), (0, PHWp - H * W2), (0, 0)))
    x_gap = xg.reshape(B * PHWp, C).astype(jnp.bfloat16)

    # interior mask of the padded layout (periodic per batch) -- trace-time const
    p = np.arange(PHWp)
    ph, pw = p // W2, p % W2
    interior = ((ph >= 1) & (ph <= H) & (pw >= 1) & (pw <= W)).astype(np.float32)
    mint = jnp.asarray(np.tile(interior, BT).reshape(NBLK, 1))

    # per-batch-segment GAP selector (also applies the 1/(H*W) averaging)
    n = np.arange(L)
    sel = jnp.asarray(
        (n[None, :] // PHWp == np.arange(BT)[:, None]).astype(np.float32) / HW)

    sb = pl.Buffered(1)   # grid-invariant operands: no double buffering needed

    out = pl.pallas_call(
        _make_kernel(W, L),
        out_shape=jax.ShapeDtypeStruct((G, BT, C_IN), jnp.float32),
        grid_spec=pltpu.PrefetchScalarGridSpec(
            num_scalar_prefetch=0,
            grid=(G,),
            in_specs=[
                pl.BlockSpec((NBLK, C_IN), lambda g: (g, 0)),                  # x_pad
                pl.BlockSpec((NBLK, C_IN), lambda g: (g, 0)),                  # x_gap
                pl.BlockSpec((NBLK, 1), lambda g: (0, 0), pipeline_mode=sb),   # mint
                pl.BlockSpec((BT, L), lambda g: (0, 0), pipeline_mode=sb),     # sel
                pl.BlockSpec((C_IN, C_MID), lambda g: (0, 0), pipeline_mode=sb),      # w1
                pl.BlockSpec((1, C_MID), lambda g: (0, 0), pipeline_mode=sb),         # b1
                pl.BlockSpec((9, C_MID, C_IN), lambda g: (0, 0, 0), pipeline_mode=sb),  # wc
                pl.BlockSpec((1, C_IN), lambda g: (0, 0), pipeline_mode=sb),          # bc
                pl.BlockSpec((C_IN, C_HID), lambda g: (0, 0), pipeline_mode=sb),      # wl1
                pl.BlockSpec((1, C_HID), lambda g: (0, 0), pipeline_mode=sb),         # bl1
                pl.BlockSpec((C_HID, C_IN), lambda g: (0, 0), pipeline_mode=sb),      # wl2
                pl.BlockSpec((1, C_IN), lambda g: (0, 0), pipeline_mode=sb),          # bl2
            ],
            out_specs=pl.BlockSpec((1, BT, C_IN), lambda g: (g, 0, 0)),
        ),
        compiler_params=pltpu.CompilerParams(
            dimension_semantics=("parallel",),   # batches are independent (v7x 2-TC)
            vmem_limit_bytes=48 << 20,           # below v7x's 64 MiB per-core VMEM
        ),
    )(x_pad, x_gap, mint, sel, w1, b1, wc, bc, wl1, bl1, wl2, bl2)
    return out.reshape(B, C_IN)


# ---------------- parameter construction (deterministic, torch-style init) ----------------

def _bn_fold(gamma, beta, mean, var, eps=BN_EPS):
    scale = gamma / jnp.sqrt(var + eps)
    return scale, beta - mean * scale


def init_params(key):
    ks = jax.random.split(key, 6)

    def kaiming(k, shape):  # conv weight (out, in, kh, kw), mode='fan_out'
        fan_out = shape[0] * shape[2] * shape[3]
        return jax.random.normal(k, shape, jnp.float32) * float(np.sqrt(2.0 / fan_out))

    w_1x1 = kaiming(ks[0], (C_MID, C_IN, 1, 1)); b_1x1 = jnp.zeros((C_MID,), jnp.float32)
    w_3x3 = kaiming(ks[1], (C_IN, C_MID, 3, 3)); b_3x3 = jnp.zeros((C_IN,), jnp.float32)
    w_1x3 = kaiming(ks[2], (C_IN, C_MID, 1, 3)); b_1x3 = jnp.zeros((C_IN,), jnp.float32)
    w_3x1 = kaiming(ks[3], (C_IN, C_MID, 3, 1)); b_3x1 = jnp.zeros((C_IN,), jnp.float32)
    wlin1 = jax.random.normal(ks[4], (C_HID, C_IN), jnp.float32) * 1e-3
    blin1 = jnp.zeros((C_HID,), jnp.float32)
    wlin2 = jax.random.normal(ks[5], (C_IN, C_HID), jnp.float32) * 1e-3
    blin2 = jnp.zeros((C_IN,), jnp.float32)
    bn = lambda m: (jnp.ones((m,), jnp.float32), jnp.zeros((m,), jnp.float32),
                    jnp.zeros((m,), jnp.float32), jnp.ones((m,), jnp.float32))
    bn_1x1, bn_3x3, bn_1x3, bn_3x1, bn_lin = bn(C_MID), bn(C_IN), bn(C_IN), bn(C_IN), bn(C_HID)

    raw = dict(w_1x1=w_1x1, b_1x1=b_1x1, w_3x3=w_3x3, b_3x3=b_3x3,
               w_1x3=w_1x3, b_1x3=b_1x3, w_3x1=w_3x1, b_3x1=b_3x1,
               wlin1=wlin1, blin1=blin1, wlin2=wlin2, blin2=blin2,
               bn_1x1=bn_1x1, bn_3x3=bn_3x3, bn_1x3=bn_1x3, bn_3x1=bn_3x1, bn_lin=bn_lin)

    # ---- fold BN and pack for the kernel (large matmul operands in bf16) ----
    s1, t1 = _bn_fold(*bn_1x1)
    w1_k = (w_1x1[:, :, 0, 0] * s1[:, None]).T.astype(jnp.bfloat16)   # (512, 256)
    b1_k = (b_1x1 * s1 + t1).reshape(1, C_MID)

    def fold_conv(w, b, bnp):
        s, t = _bn_fold(*bnp)
        return w * s[:, None, None, None], b * s + t

    w33f, b33f = fold_conv(w_3x3, b_3x3, bn_3x3)
    w13f, b13f = fold_conv(w_1x3, b_1x3, bn_1x3)
    w31f, b31f = fold_conv(w_3x1, b_3x1, bn_3x1)

    wc = jnp.transpose(w33f, (2, 3, 1, 0))                            # (3,3,256,512)
    wc = wc.at[1].add(jnp.transpose(w13f, (2, 3, 1, 0))[0])           # 1x3 -> center row
    wc = wc.at[:, 1].add(jnp.transpose(w31f, (2, 3, 1, 0))[:, 0])     # 3x1 -> center col
    wc = wc.reshape(9, C_MID, C_IN).astype(jnp.bfloat16)
    bc = (b33f + b13f + b31f).reshape(1, C_IN)

    sl, tl = _bn_fold(*bn_lin)
    wl1_k = (wlin1 * sl[:, None]).T.astype(jnp.bfloat16)              # (512, 32)
    bl1_k = (blin1 * sl + tl).reshape(1, C_HID)
    wl2_k = wlin2.T.astype(jnp.bfloat16)                              # (32, 512)
    bl2_k = blin2.reshape(1, C_IN)

    folded = (w1_k, b1_k, wc, bc, wl1_k, bl1_k, wl2_k, bl2_k)
    return raw, folded


# ---------------- pure-JAX reference (eval-mode BN) ----------------

def reference(x, p):
    def conv(x, w, b, pad):
        out = lax.conv_general_dilated(x, w, (1, 1), pad,
                                       dimension_numbers=('NCHW', 'OIHW', 'NCHW'))
        return out + b[None, :, None, None]

    def bn2d(x, bnp):
        g, be, m, v = bnp
        s = g / jnp.sqrt(v + BN_EPS)
        return x * s[None, :, None, None] + (be - m * s)[None, :, None, None]

    y = bn2d(conv(x, p['w_1x1'], p['b_1x1'], ((0, 0), (0, 0))), p['bn_1x1'])
    y3 = bn2d(conv(y, p['w_3x3'], p['b_3x3'], ((1, 1), (1, 1))), p['bn_3x3'])
    y13 = bn2d(conv(y, p['w_1x3'], p['b_1x3'], ((0, 0), (1, 1))), p['bn_1x3'])
    y31 = bn2d(conv(y, p['w_3x1'], p['b_3x1'], ((1, 1), (0, 0))), p['bn_3x1'])
    yy = jnp.maximum(y3 + y13 + y31, 0.0)
    yy = jnp.sum(yy, axis=1, keepdims=True)
    sa = x * yy
    gap = jnp.mean(sa, axis=(2, 3))                                   # (B, 512)
    g, be, m, v = p['bn_lin']
    s = g / jnp.sqrt(v + BN_EPS)
    h = gap @ p['wlin1'].T + p['blin1']
    h = jnp.maximum(h * s + (be - m * s), 0.0)
    a = jax.nn.sigmoid(h @ p['wlin2'].T + p['blin2'])
    return gap * a


if __name__ == "__main__":
    key = jax.random.PRNGKey(0)
    kx, kp = jax.random.split(key)
    B, H, W = 2, 8, 8
    x = jax.random.normal(kx, (B, C_IN, H, W), jnp.float32)
    raw, folded = init_params(kp)

    out = jax.block_until_ready(cross_attention_head(x, folded))
    ref = jax.block_until_ready(reference(x, raw))

    assert out.shape == (B, C_IN)
    rel_err = float(jnp.max(jnp.abs(out - ref)) / (jnp.max(jnp.abs(ref)) + 1e-6))
    assert rel_err < 2e-2, f"mismatch vs reference: rel_err={rel_err}"
    print("KERNEL_OK")
</pallas_src>

<mosaic_0001>
module attributes {stable_mosaic.version = 11 : i64} {
  func.func @kernel(%arg0: i32, %arg1: memref<208x512xbf16, #tpu.memory_space<vmem>>, %arg2: memref<208x512xbf16, #tpu.memory_space<vmem>>, %arg3: memref<208x1xf32, #tpu.memory_space<vmem>>, %arg4: memref<2x186xf32, #tpu.memory_space<vmem>>, %arg5: memref<512x256xbf16, #tpu.memory_space<vmem>>, %arg6: memref<1x256xf32, #tpu.memory_space<vmem>>, %arg7: memref<9x256x512xbf16, #tpu.memory_space<vmem>>, %arg8: memref<1x512xf32, #tpu.memory_space<vmem>>, %arg9: memref<512x32xbf16, #tpu.memory_space<vmem>>, %arg10: memref<1x32xf32, #tpu.memory_space<vmem>>, %arg11: memref<32x512xbf16, #tpu.memory_space<vmem>>, %arg12: memref<1x512xf32, #tpu.memory_space<vmem>>, %arg13: memref<1x2x512xf32, #tpu.memory_space<vmem>>) attributes {dimension_semantics = [#tpu.dimension_semantics<parallel>], iteration_bounds = array<i64: 1>, scalar_prefetch = 0 : i64, scratch_operands = 0 : i64, tpu.core_type = #tpu.core_type<tc>, window_params = [{transform_indices = @transform_0, window_bounds = array<i64: 208, 512>}, {transform_indices = @transform_1, window_bounds = array<i64: 208, 512>}, {pipeline_mode = #tpu.pipeline_mode<synchronous>, transform_indices = @transform_2, window_bounds = array<i64: 208, 1>}, {pipeline_mode = #tpu.pipeline_mode<synchronous>, transform_indices = @transform_3, window_bounds = array<i64: 2, 186>}, {pipeline_mode = #tpu.pipeline_mode<synchronous>, transform_indices = @transform_4, window_bounds = array<i64: 512, 256>}, {pipeline_mode = #tpu.pipeline_mode<synchronous>, transform_indices = @transform_5, window_bounds = array<i64: 1, 256>}, {pipeline_mode = #tpu.pipeline_mode<synchronous>, transform_indices = @transform_6, window_bounds = array<i64: 9, 256, 512>}, {pipeline_mode = #tpu.pipeline_mode<synchronous>, transform_indices = @transform_7, window_bounds = array<i64: 1, 512>}, {pipeline_mode = #tpu.pipeline_mode<synchronous>, transform_indices = @transform_8, window_bounds = array<i64: 512, 32>}, {pipeline_mode = #tpu.pipeline_mode<synchronous>, transform_indices = @transform_9, window_bounds = array<i64: 1, 32>}, {pipeline_mode = #tpu.pipeline_mode<synchronous>, transform_indices = @transform_10, window_bounds = array<i64: 32, 512>}, {pipeline_mode = #tpu.pipeline_mode<synchronous>, transform_indices = @transform_11, window_bounds = array<i64: 1, 512>}, {transform_indices = @transform_12, window_bounds = array<i64: 1, 2, 512>}]} {
    %c0 = arith.constant 0 : index
    %c0_0 = arith.constant 0 : index
    %0 = vector.load %arg1[%c0, %c0_0] : memref<208x512xbf16, #tpu.memory_space<vmem>>, vector<208x512xbf16>
    %c0_1 = arith.constant 0 : index
    %c0_2 = arith.constant 0 : index
    %1 = vector.load %arg5[%c0_1, %c0_2] : memref<512x256xbf16, #tpu.memory_space<vmem>>, vector<512x256xbf16>
    %cst = arith.constant dense<0.000000e+00> : vector<208x256xf32>
    %2 = tpu.matmul %0, %1, %cst {dimension_numbers = #tpu.dot_dimension_numbers<[1], [0], [0], [1], [0, 0, 1, 1], [], []>} : vector<208x512xbf16>, vector<512x256xbf16>, vector<208x256xf32> -> vector<208x256xf32>
    %c0_3 = arith.constant 0 : index
    %c0_4 = arith.constant 0 : index
    %3 = vector.load %arg6[%c0_3, %c0_4] : memref<1x256xf32, #tpu.memory_space<vmem>>, vector<1x256xf32>
    %4 = vector.broadcast %3 : vector<1x256xf32> to vector<208x256xf32>
    %5 = arith.addf %2, %4 : vector<208x256xf32>
    %c0_5 = arith.constant 0 : index
    %c0_6 = arith.constant 0 : index
    %6 = vector.load %arg3[%c0_5, %c0_6] : memref<208x1xf32, #tpu.memory_space<vmem>>, vector<208x1xf32>
    %7 = vector.broadcast %6 : vector<208x1xf32> to vector<208x256xf32>
    %8 = arith.mulf %5, %7 : vector<208x256xf32>
    %9 = vector.extract_strided_slice %8 {offsets = [0, 0], sizes = [186, 256], strides = [1, 1]} : vector<208x256xf32> to vector<186x256xf32>
    %10 = arith.truncf %9 : vector<186x256xf32> to vector<186x256xbf16>
    %c0_7 = arith.constant 0 : index
    %c0_8 = arith.constant 0 : index
    %c0_9 = arith.constant 0 : index
    %11 = vector.load %arg7[%c0_7, %c0_8, %c0_9] : memref<9x256x512xbf16, #tpu.memory_space<vmem>>, vector<1x256x512xbf16>
    %12 = vector.shape_cast %11 : vector<1x256x512xbf16> to vector<256x512xbf16>
    %cst_10 = arith.constant dense<0.000000e+00> : vector<186x512xf32>
    %13 = tpu.matmul %10, %12, %cst_10 {dimension_numbers = #tpu.dot_dimension_numbers<[1], [0], [0], [1], [0, 0, 1, 1], [], []>} : vector<186x256xbf16>, vector<256x512xbf16>, vector<186x512xf32> -> vector<186x512xf32>
    %14 = vector.extract_strided_slice %8 {offsets = [1, 0], sizes = [186, 256], strides = [1, 1]} : vector<208x256xf32> to vector<186x256xf32>
    %15 = arith.truncf %14 : vector<186x256xf32> to vector<186x256xbf16>
    %c1 = arith.constant 1 : index
    %c0_11 = arith.constant 0 : index
    %c0_12 = arith.constant 0 : index
    %16 = vector.load %arg7[%c1, %c0_11, %c0_12] : memref<9x256x512xbf16, #tpu.memory_space<vmem>>, vector<1x256x512xbf16>
    %17 = vector.shape_cast %16 : vector<1x256x512xbf16> to vector<256x512xbf16>
    %cst_13 = arith.constant dense<0.000000e+00> : vector<186x512xf32>
    %18 = tpu.matmul %15, %17, %cst_13 {dimension_numbers = #tpu.dot_dimension_numbers<[1], [0], [0], [1], [0, 0, 1, 1], [], []>} : vector<186x256xbf16>, vector<256x512xbf16>, vector<186x512xf32> -> vector<186x512xf32>
    %19 = arith.addf %13, %18 : vector<186x512xf32>
    %20 = vector.extract_strided_slice %8 {offsets = [2, 0], sizes = [186, 256], strides = [1, 1]} : vector<208x256xf32> to vector<186x256xf32>
    %21 = arith.truncf %20 : vector<186x256xf32> to vector<186x256xbf16>
    %c2 = arith.constant 2 : index
    %c0_14 = arith.constant 0 : index
    %c0_15 = arith.constant 0 : index
    %22 = vector.load %arg7[%c2, %c0_14, %c0_15] : memref<9x256x512xbf16, #tpu.memory_space<vmem>>, vector<1x256x512xbf16>
    %23 = vector.shape_cast %22 : vector<1x256x512xbf16> to vector<256x512xbf16>
    %cst_16 = arith.constant dense<0.000000e+00> : vector<186x512xf32>
    %24 = tpu.matmul %21, %23, %cst_16 {dimension_numbers = #tpu.dot_dimension_numbers<[1], [0], [0], [1], [0, 0, 1, 1], [], []>} : vector<186x256xbf16>, vector<256x512xbf16>, vector<186x512xf32> -> vector<186x512xf32>
    %25 = arith.addf %19, %24 : vector<186x512xf32>
    %26 = vector.extract_strided_slice %8 {offsets = [10, 0], sizes = [186, 256], strides = [1, 1]} : vector<208x256xf32> to vector<186x256xf32>
    %27 = arith.truncf %26 : vector<186x256xf32> to vector<186x256xbf16>
    %c3 = arith.constant 3 : index
    %c0_17 = arith.constant 0 : index
    %c0_18 = arith.constant 0 : index
    %28 = vector.load %arg7[%c3, %c0_17, %c0_18] : memref<9x256x512xbf16, #tpu.memory_space<vmem>>, vector<1x256x512xbf16>
    %29 = vector.shape_cast %28 : vector<1x256x512xbf16> to vector<256x512xbf16>
    %cst_19 = arith.constant dense<0.000000e+00> : vector<186x512xf32>
    %30 = tpu.matmul %27, %29, %cst_19 {dimension_numbers = #tpu.dot_dimension_numbers<[1], [0], [0], [1], [0, 0, 1, 1], [], []>} : vector<186x256xbf16>, vector<256x512xbf16>, vector<186x512xf32> -> vector<186x512xf32>
    %31 = arith.addf %25, %30 : vector<186x512xf32>
    %32 = vector.extract_strided_slice %8 {offsets = [11, 0], sizes = [186, 256], strides = [1, 1]} : vector<208x256xf32> to vector<186x256xf32>
    %33 = arith.truncf %32 : vector<186x256xf32> to vector<186x256xbf16>
    %c4 = arith.constant 4 : index
    %c0_20 = arith.constant 0 : index
    %c0_21 = arith.constant 0 : index
    %34 = vector.load %arg7[%c4, %c0_20, %c0_21] : memref<9x256x512xbf16, #tpu.memory_space<vmem>>, vector<1x256x512xbf16>
    %35 = vector.shape_cast %34 : vector<1x256x512xbf16> to vector<256x512xbf16>
    %cst_22 = arith.constant dense<0.000000e+00> : vector<186x512xf32>
    %36 = tpu.matmul %33, %35, %cst_22 {dimension_numbers = #tpu.dot_dimension_numbers<[1], [0], [0], [1], [0, 0, 1, 1], [], []>} : vector<186x256xbf16>, vector<256x512xbf16>, vector<186x512xf32> -> vector<186x512xf32>
    %37 = arith.addf %31, %36 : vector<186x512xf32>
    %38 = vector.extract_strided_slice %8 {offsets = [12, 0], sizes = [186, 256], strides = [1, 1]} : vector<208x256xf32> to vector<186x256xf32>
    %39 = arith.truncf %38 : vector<186x256xf32> to vector<186x256xbf16>
    %c5 = arith.constant 5 : index
    %c0_23 = arith.constant 0 : index
    %c0_24 = arith.constant 0 : index
    %40 = vector.load %arg7[%c5, %c0_23, %c0_24] : memref<9x256x512xbf16, #tpu.memory_space<vmem>>, vector<1x256x512xbf16>
    %41 = vector.shape_cast %40 : vector<1x256x512xbf16> to vector<256x512xbf16>
    %cst_25 = arith.constant dense<0.000000e+00> : vector<186x512xf32>
    %42 = tpu.matmul %39, %41, %cst_25 {dimension_numbers = #tpu.dot_dimension_numbers<[1], [0], [0], [1], [0, 0, 1, 1], [], []>} : vector<186x256xbf16>, vector<256x512xbf16>, vector<186x512xf32> -> vector<186x512xf32>
    %43 = arith.addf %37, %42 : vector<186x512xf32>
    %44 = vector.extract_strided_slice %8 {offsets = [20, 0], sizes = [186, 256], strides = [1, 1]} : vector<208x256xf32> to vector<186x256xf32>
    %45 = arith.truncf %44 : vector<186x256xf32> to vector<186x256xbf16>
    %c6 = arith.constant 6 : index
    %c0_26 = arith.constant 0 : index
    %c0_27 = arith.constant 0 : index
    %46 = vector.load %arg7[%c6, %c0_26, %c0_27] : memref<9x256x512xbf16, #tpu.memory_space<vmem>>, vector<1x256x512xbf16>
    %47 = vector.shape_cast %46 : vector<1x256x512xbf16> to vector<256x512xbf16>
    %cst_28 = arith.constant dense<0.000000e+00> : vector<186x512xf32>
    %48 = tpu.matmul %45, %47, %cst_28 {dimension_numbers = #tpu.dot_dimension_numbers<[1], [0], [0], [1], [0, 0, 1, 1], [], []>} : vector<186x256xbf16>, vector<256x512xbf16>, vector<186x512xf32> -> vector<186x512xf32>
    %49 = arith.addf %43, %48 : vector<186x512xf32>
    %50 = vector.extract_strided_slice %8 {offsets = [21, 0], sizes = [186, 256], strides = [1, 1]} : vector<208x256xf32> to vector<186x256xf32>
    %51 = arith.truncf %50 : vector<186x256xf32> to vector<186x256xbf16>
    %c7 = arith.constant 7 : index
    %c0_29 = arith.constant 0 : index
    %c0_30 = arith.constant 0 : index
    %52 = vector.load %arg7[%c7, %c0_29, %c0_30] : memref<9x256x512xbf16, #tpu.memory_space<vmem>>, vector<1x256x512xbf16>
    %53 = vector.shape_cast %52 : vector<1x256x512xbf16> to vector<256x512xbf16>
    %cst_31 = arith.constant dense<0.000000e+00> : vector<186x512xf32>
    %54 = tpu.matmul %51, %53, %cst_31 {dimension_numbers = #tpu.dot_dimension_numbers<[1], [0], [0], [1], [0, 0, 1, 1], [], []>} : vector<186x256xbf16>, vector<256x512xbf16>, vector<186x512xf32> -> vector<186x512xf32>
    %55 = arith.addf %49, %54 : vector<186x512xf32>
    %56 = vector.extract_strided_slice %8 {offsets = [22, 0], sizes = [186, 256], strides = [1, 1]} : vector<208x256xf32> to vector<186x256xf32>
    %57 = arith.truncf %56 : vector<186x256xf32> to vector<186x256xbf16>
    %c8 = arith.constant 8 : index
    %c0_32 = arith.constant 0 : index
    %c0_33 = arith.constant 0 : index
    %58 = vector.load %arg7[%c8, %c0_32, %c0_33] : memref<9x256x512xbf16, #tpu.memory_space<vmem>>, vector<1x256x512xbf16>
    %59 = vector.shape_cast %58 : vector<1x256x512xbf16> to vector<256x512xbf16>
    %cst_34 = arith.constant dense<0.000000e+00> : vector<186x512xf32>
    %60 = tpu.matmul %57, %59, %cst_34 {dimension_numbers = #tpu.dot_dimension_numbers<[1], [0], [0], [1], [0, 0, 1, 1], [], []>} : vector<186x256xbf16>, vector<256x512xbf16>, vector<186x512xf32> -> vector<186x512xf32>
    %61 = arith.addf %55, %60 : vector<186x512xf32>
    %c0_35 = arith.constant 0 : index
    %c0_36 = arith.constant 0 : index
    %62 = vector.load %arg8[%c0_35, %c0_36] : memref<1x512xf32, #tpu.memory_space<vmem>>, vector<1x512xf32>
    %63 = vector.broadcast %62 : vector<1x512xf32> to vector<186x512xf32>
    %64 = arith.addf %61, %63 : vector<186x512xf32>
    %cst_37 = arith.constant 0.000000e+00 : f32
    %65 = vector.broadcast %cst_37 : f32 to vector<186x512xf32>
    %66 = arith.maximumf %64, %65 : vector<186x512xf32>
    %cst_38 = arith.constant dense<0.000000e+00> : vector<186xf32>
    %67 = vector.multi_reduction <add>, %66, %cst_38 [1] : vector<186x512xf32> to vector<186xf32>
    %68 = vector.shape_cast %67 : vector<186xf32> to vector<186x1xf32>
    %c0_39 = arith.constant 0 : index
    %c0_40 = arith.constant 0 : index
    %69 = vector.load %arg2[%c0_39, %c0_40] : memref<208x512xbf16, #tpu.memory_space<vmem>>, vector<208x512xbf16>
    %70 = vector.extract_strided_slice %69 {offsets = [0, 0], sizes = [186, 512], strides = [1, 1]} : vector<208x512xbf16> to vector<186x512xbf16>
    %71 = arith.extf %70 : vector<186x512xbf16> to vector<186x512xf32>
    %72 = vector.broadcast %68 : vector<186x1xf32> to vector<186x512xf32>
    %73 = arith.mulf %71, %72 : vector<186x512xf32>
    %c0_41 = arith.constant 0 : index
    %c0_42 = arith.constant 0 : index
    %74 = vector.load %arg4[%c0_41, %c0_42] : memref<2x186xf32, #tpu.memory_space<vmem>>, vector<2x186xf32>
    %cst_43 = arith.constant dense<0.000000e+00> : vector<2x512xf32>
    %75 = tpu.matmul %74, %73, %cst_43 {dimension_numbers = #tpu.dot_dimension_numbers<[1], [0], [0], [1], [0, 0, 1, 1], [], []>} : vector<2x186xf32>, vector<186x512xf32>, vector<2x512xf32> -> vector<2x512xf32>
    %76 = arith.truncf %75 : vector<2x512xf32> to vector<2x512xbf16>
    %c0_44 = arith.constant 0 : index
    %c0_45 = arith.constant 0 : index
    %77 = vector.load %arg9[%c0_44, %c0_45] : memref<512x32xbf16, #tpu.memory_space<vmem>>, vector<512x32xbf16>
    %cst_46 = arith.constant dense<0.000000e+00> : vector<2x32xf32>
    %78 = tpu.matmul %76, %77, %cst_46 {dimension_numbers = #tpu.dot_dimension_numbers<[1], [0], [0], [1], [0, 0, 1, 1], [], []>} : vector<2x512xbf16>, vector<512x32xbf16>, vector<2x32xf32> -> vector<2x32xf32>
    %c0_47 = arith.constant 0 : index
    %c0_48 = arith.constant 0 : index
    %79 = vector.load %arg10[%c0_47, %c0_48] : memref<1x32xf32, #tpu.memory_space<vmem>>, vector<1x32xf32>
    %80 = vector.broadcast %79 : vector<1x32xf32> to vector<2x32xf32>
    %81 = arith.addf %78, %80 : vector<2x32xf32>
    %cst_49 = arith.constant 0.000000e+00 : f32
    %82 = vector.broadcast %cst_49 : f32 to vector<2x32xf32>
    %83 = arith.maximumf %81, %82 : vector<2x32xf32>
    %84 = arith.truncf %83 : vector<2x32xf32> to vector<2x32xbf16>
    %c0_50 = arith.constant 0 : index
    %c0_51 = arith.constant 0 : index
    %85 = vector.load %arg11[%c0_50, %c0_51] : memref<32x512xbf16, #tpu.memory_space<vmem>>, vector<32x512xbf16>
    %cst_52 = arith.constant dense<0.000000e+00> : vector<2x512xf32>
    %86 = tpu.matmul %84, %85, %cst_52 {dimension_numbers = #tpu.dot_dimension_numbers<[1], [0], [0], [1], [0, 0, 1, 1], [], []>} : vector<2x32xbf16>, vector<32x512xbf16>, vector<2x512xf32> -> vector<2x512xf32>
    %c0_53 = arith.constant 0 : index
    %c0_54 = arith.constant 0 : index
    %87 = vector.load %arg12[%c0_53, %c0_54] : memref<1x512xf32, #tpu.memory_space<vmem>>, vector<1x512xf32>
    %88 = vector.broadcast %87 : vector<1x512xf32> to vector<2x512xf32>
    %89 = arith.addf %86, %88 : vector<2x512xf32>
    %90 = arith.negf %89 : vector<2x512xf32>
    %91 = math.exp %90 : vector<2x512xf32>
    %cst_55 = arith.constant 1.000000e+00 : f32
    %92 = vector.broadcast %cst_55 : f32 to vector<2x512xf32>
    %93 = arith.addf %92, %91 : vector<2x512xf32>
    %94 = arith.divf %92, %93 : vector<2x512xf32>
    %95 = arith.mulf %75, %94 : vector<2x512xf32>
    %c0_56 = arith.constant 0 : index
    %c0_57 = arith.constant 0 : index
    %c0_58 = arith.constant 0 : index
    %96 = vector.load %arg13[%c0_56, %c0_57, %c0_58] : memref<1x2x512xf32, #tpu.memory_space<vmem>>, vector<1x2x512xf32>
    %97 = vector.shape_cast %96 : vector<1x2x512xf32> to vector<2x512xf32>
    %98 = vector.shape_cast %95 : vector<2x512xf32> to vector<1x2x512xf32>
    tpu.vector_store %arg13[%c0_56, %c0_57, %c0_58], %98 {strides = array<i32>} : memref<1x2x512xf32, #tpu.memory_space<vmem>>, vector<1x2x512xf32>,
    return
  }
  func.func @transform_0(%arg0: i32) -> (i32, i32) {
    %c0_i32 = arith.constant 0 : i32
    %c0_i32_0 = arith.constant 0 : i32
    return %arg0, %c0_i32 : i32, i32
  }
  func.func @transform_1(%arg0: i32) -> (i32, i32) {
    %c0_i32 = arith.constant 0 : i32
    %c0_i32_0 = arith.constant 0 : i32
    return %arg0, %c0_i32 : i32, i32
  }
  func.func @transform_2(%arg0: i32) -> (i32, i32) {
    %c0_i32 = arith.constant 0 : i32
    %c0_i32_0 = arith.constant 0 : i32
    %c0_i32_1 = arith.constant 0 : i32
    return %c0_i32, %c0_i32_0 : i32, i32
  }
  func.func @transform_3(%arg0: i32) -> (i32, i32) {
    %c0_i32 = arith.constant 0 : i32
    %c0_i32_0 = arith.constant 0 : i32
    %c0_i32_1 = arith.constant 0 : i32
    return %c0_i32, %c0_i32_0 : i32, i32
  }
  func.func @transform_4(%arg0: i32) -> (i32, i32) {
    %c0_i32 = arith.constant 0 : i32
    %c0_i32_0 = arith.constant 0 : i32
    %c0_i32_1 = arith.constant 0 : i32
    return %c0_i32, %c0_i32_0 : i32, i32
  }
  func.func @transform_5(%arg0: i32) -> (i32, i32) {
    %c0_i32 = arith.constant 0 : i32
    %c0_i32_0 = arith.constant 0 : i32
    %c0_i32_1 = arith.constant 0 : i32
    return %c0_i32, %c0_i32_0 : i32, i32
  }
  func.func @transform_6(%arg0: i32) -> (i32, i32, i32) {
    %c0_i32 = arith.constant 0 : i32
    %c0_i32_0 = arith.constant 0 : i32
    %c0_i32_1 = arith.constant 0 : i32
    %c0_i32_2 = arith.constant 0 : i32
    return %c0_i32, %c0_i32_0, %c0_i32_1 : i32, i32, i32
  }
  func.func @transform_7(%arg0: i32) -> (i32, i32) {
    %c0_i32 = arith.constant 0 : i32
    %c0_i32_0 = arith.constant 0 : i32
    %c0_i32_1 = arith.constant 0 : i32
    return %c0_i32, %c0_i32_0 : i32, i32
  }
  func.func @transform_8(%arg0: i32) -> (i32, i32) {
    %c0_i32 = arith.constant 0 : i32
    %c0_i32_0 = arith.constant 0 : i32
    %c0_i32_1 = arith.constant 0 : i32
    return %c0_i32, %c0_i32_0 : i32, i32
  }
  func.func @transform_9(%arg0: i32) -> (i32, i32) {
    %c0_i32 = arith.constant 0 : i32
    %c0_i32_0 = arith.constant 0 : i32
    %c0_i32_1 = arith.constant 0 : i32
    return %c0_i32, %c0_i32_0 : i32, i32
  }
  func.func @transform_10(%arg0: i32) -> (i32, i32) {
    %c0_i32 = arith.constant 0 : i32
    %c0_i32_0 = arith.constant 0 : i32
    %c0_i32_1 = arith.constant 0 : i32
    return %c0_i32, %c0_i32_0 : i32, i32
  }
  func.func @transform_11(%arg0: i32) -> (i32, i32) {
    %c0_i32 = arith.constant 0 : i32
    %c0_i32_0 = arith.constant 0 : i32
    %c0_i32_1 = arith.constant 0 : i32
    return %c0_i32, %c0_i32_0 : i32, i32
  }
  func.func @transform_12(%arg0: i32) -> (i32, i32, i32) {
    %c0_i32 = arith.constant 0 : i32
    %c0_i32_0 = arith.constant 0 : i32
    %c0_i32_1 = arith.constant 0 : i32
    return %arg0, %c0_i32, %c0_i32_0 : i32, i32, i32
  }
}

</mosaic_0001>

<llo_original>
// kernel: cross_attention_head.1
$region0: #{cross_attention_head.1}
  #allocation0 [shape = 'u32[]', space=smem, size = 0x4, offset = 0x4, fixed_abs, tag = 'smem constant byte address 0x4 - core index']
  #allocation1 [shape = 'u32[144,128]{1,0:T(1,128)}', space=vmem, size = 0x12000, scoped, tag = 'internal scratch']
  %s0 = inlined_call_operand.vmem [shape: bf16[208,512], index: 0, kind: input, shape index: {}]
  %s1 = inlined_call_operand.vmem [shape: bf16[208,512], index: 1, kind: input, shape index: {}]
  %s2 = inlined_call_operand.vmem [shape: f32[208,1], index: 2, kind: input, shape index: {}]
  %s3 = inlined_call_operand.vmem [shape: f32[2,186], index: 3, kind: input, shape index: {}]
  %s4 = inlined_call_operand.vmem [shape: bf16[512,256], index: 4, kind: input, shape index: {}]
  %s5 = inlined_call_operand.vmem [shape: f32[1,256], index: 5, kind: input, shape index: {}]
  %s6 = inlined_call_operand.vmem [shape: bf16[9,256,512], index: 6, kind: input, shape index: {}]
  %s7 = inlined_call_operand.vmem [shape: f32[1,512], index: 7, kind: input, shape index: {}]
  %s8 = inlined_call_operand.vmem [shape: bf16[512,32], index: 8, kind: input, shape index: {}]
  %s9 = inlined_call_operand.vmem [shape: f32[1,32], index: 9, kind: input, shape index: {}]
  %s10 = inlined_call_operand.vmem [shape: bf16[32,512], index: 10, kind: input, shape index: {}]
  %s11 = inlined_call_operand.vmem [shape: f32[1,512], index: 11, kind: input, shape index: {}]
  %s12 = inlined_call_operand.hbm [shape: f32[1,2,512], index: 12, kind: output, shape index: {}]
  %s13 = sld [smem:[#allocation0]]
  $region58: #{cross_attention_head.1} parent=0
    _
  %s15 = ssub.s32 1, %s13
  %s16 = scalar_select 0, %s15, %s13
  $region1: #{cross_attention_head.1} parent=0
    #allocation2 [shape = 'u8[4096]{0}', space=vmem, size = 0x1000, scoped, tag = 'output window, operand 0, single buffered']
    #allocation3 [shape = 's32[1]{0}', space=sflag, size = 0x4, scoped, tag = 'scoped memory for cross_attention_head.1']
    %17 = vsyncpa [#allocation3], 0
    // Predicated region
    $region2: #{cross_attention_head.1} parent=1 // pred_check
      _
    $region3: #{cross_attention_head.1} parent=1 // pred_check_branch
      %19 = sbr.rel (0) target = $region5
    $region4: #{cross_attention_head.1} parent=1 // pred_region
      _
    $region5: #{cross_attention_head.1} parent=1 // pred_fallthru
      _
    // Predicated region
    $region6: #{cross_attention_head.1} parent=1 // pred_check
      _
    $region7: #{cross_attention_head.1} parent=1 // pred_check_branch
      %21 = sbr.rel (0) target = $region9
    $region8: #{cross_attention_head.1} parent=1 // pred_region
      _
    $region9: #{cross_attention_head.1} parent=1 // pred_fallthru
      _
    // Predicated region
    $region10: #{cross_attention_head.1} parent=1 // pred_check
      _
    $region11: #{cross_attention_head.1} parent=1 // pred_check_branch
      %23 = sbr.rel (0) target = $region13
    $region12: #{cross_attention_head.1} parent=1 // pred_region
      _
    $region13: #{cross_attention_head.1} parent=1 // pred_fallthru
      _
    // Predicated region
    $region14: #{cross_attention_head.1} parent=1 // pred_check
      _
    $region15: #{cross_attention_head.1} parent=1 // pred_check_branch
      %25 = sbr.rel (0) target = $region17
    $region16: #{cross_attention_head.1} parent=1 // pred_region
      _
    $region17: #{cross_attention_head.1} parent=1 // pred_fallthru
      _
    // Predicated region
    $region18: #{cross_attention_head.1} parent=1 // pred_check
      _
    $region19: #{cross_attention_head.1} parent=1 // pred_check_branch
      %27 = sbr.rel (0) target = $region21
    $region20: #{cross_attention_head.1} parent=1 // pred_region
      _
    $region21: #{cross_attention_head.1} parent=1 // pred_fallthru
      _
    // Predicated region
    $region22: #{cross_attention_head.1} parent=1 // pred_check
      _
    $region23: #{cross_attention_head.1} parent=1 // pred_check_branch
      %29 = sbr.rel (0) target = $region25
    $region24: #{cross_attention_head.1} parent=1 // pred_region
      _
    $region25: #{cross_attention_head.1} parent=1 // pred_fallthru
      _
    // Predicated region
    $region26: #{cross_attention_head.1} parent=1 // pred_check
      _
    $region27: #{cross_attention_head.1} parent=1 // pred_check_branch
      %31 = sbr.rel (0) target = $region29
    $region28: #{cross_attention_head.1} parent=1 // pred_region
      _
    $region29: #{cross_attention_head.1} parent=1 // pred_fallthru
      _
    // Predicated region
    $region30: #{cross_attention_head.1} parent=1 // pred_check
      _
    $region31: #{cross_attention_head.1} parent=1 // pred_check_branch
      %33 = sbr.rel (0) target = $region33
    $region32: #{cross_attention_head.1} parent=1 // pred_region
      _
    $region33: #{cross_attention_head.1} parent=1 // pred_fallthru
      _
    // Predicated region
    $region34: #{cross_attention_head.1} parent=1 // pred_check
      _
    $region35: #{cross_attention_head.1} parent=1 // pred_check_branch
      %35 = sbr.rel (0) target = $region37
    $region36: #{cross_attention_head.1} parent=1 // pred_region
      _
    $region37: #{cross_attention_head.1} parent=1 // pred_fallthru
      _
    // Predicated region
    $region38: #{cross_attention_head.1} parent=1 // pred_check
      _
    $region39: #{cross_attention_head.1} parent=1 // pred_check_branch
      %37 = sbr.rel (0) target = $region41
    $region40: #{cross_attention_head.1} parent=1 // pred_region
      _
    $region41: #{cross_attention_head.1} parent=1 // pred_fallthru
      _
    // Predicated region
    $region42: #{cross_attention_head.1} parent=1 // pred_check
      _
    $region43: #{cross_attention_head.1} parent=1 // pred_check_branch
      %39 = sbr.rel (0) target = $region45
    $region44: #{cross_attention_head.1} parent=1 // pred_region
      _
    $region45: #{cross_attention_head.1} parent=1 // pred_fallthru
      _
    // Predicated region
    $region46: #{cross_attention_head.1} parent=1 // pred_check
      _
    $region47: #{cross_attention_head.1} parent=1 // pred_check_branch
      %41 = sbr.rel (0) target = $region49
    $region48: #{cross_attention_head.1} parent=1 // pred_region
      _
    $region49: #{cross_attention_head.1} parent=1 // pred_fallthru
      _
    %v43 = vld [vmem:[%s0] sm:$0xff]
    %v44 = vld [vmem:[%s0 + $0x8] sm:$0xff]
    %v45 = vld [vmem:[%s0 + $0x10] sm:$0xff]
    %v46 = vld [vmem:[%s0 + $0x18] sm:$0xff]
    %v47 = vld [vmem:[%s0 + $0x20] sm:$0xff]
    %v48 = vld [vmem:[%s0 + $0x28] sm:$0xff]
    %v49 = vld [vmem:[%s0 + $0x30] sm:$0xff]
    %v50 = vld [vmem:[%s0 + $0x38] sm:$0xff]
    %v51 = vld [vmem:[%s0 + $0x40] sm:$0xff]
    %v52 = vld [vmem:[%s0 + $0x48] sm:$0xff]
    %v53 = vld [vmem:[%s0 + $0x50] sm:$0xff]
    %v54 = vld [vmem:[%s0 + $0x58] sm:$0xff]
    %v55 = vld [vmem:[%s0 + $0x60] sm:$0xff]
    %v56 = vld [vmem:[%s0 + $0x68] sm:$0xff]
    %v57 = vld [vmem:[%s0 + $0x70] sm:$0xff]
    %v58 = vld [vmem:[%s0 + $0x78] sm:$0xff]
    %v59 = vld [vmem:[%s0 + $0x80] sm:$0xff]
    %v60 = vld [vmem:[%s0 + $0x88] sm:$0xff]
    %v61 = vld [vmem:[%s0 + $0x90] sm:$0xff]
    %v62 = vld [vmem:[%s0 + $0x98] sm:$0xff]
    %v63 = vld [vmem:[%s0 + $0xa0] sm:$0xff]
    %v64 = vld [vmem:[%s0 + $0xa8] sm:$0xff]
    %v65 = vld [vmem:[%s0 + $0xb0] sm:$0xff]
    %v66 = vld [vmem:[%s0 + $0xb8] sm:$0xff]
    %v67 = vld [vmem:[%s0 + $0xc0] sm:$0xff]
    %v68 = vld [vmem:[%s0 + $0xc8] sm:$0xff]
    %v69 = vld [vmem:[%s0 + $0xd0] sm:$0xff]
    %v70 = vld [vmem:[%s0 + $0xd8] sm:$0xff]
    %v71 = vld [vmem:[%s0 + $0xe0] sm:$0xff]
    %v72 = vld [vmem:[%s0 + $0xe8] sm:$0xff]
    %v73 = vld [vmem:[%s0 + $0xf0] sm:$0xff]
    %v74 = vld [vmem:[%s0 + $0xf8] sm:$0xff]
    %v75 = vld [vmem:[%s0 + $0x100] sm:$0xff]
    %v76 = vld [vmem:[%s0 + $0x108] sm:$0xff]
    %v77 = vld [vmem:[%s0 + $0x110] sm:$0xff]
    %v78 = vld [vmem:[%s0 + $0x118] sm:$0xff]
    %v79 = vld [vmem:[%s0 + $0x120] sm:$0xff]
    %v80 = vld [vmem:[%s0 + $0x128] sm:$0xff]
    %v81 = vld [vmem:[%s0 + $0x130] sm:$0xff]
    %v82 = vld [vmem:[%s0 + $0x138] sm:$0xff]
    %v83 = vld [vmem:[%s0 + $0x140] sm:$0xff]
    %v84 = vld [vmem:[%s0 + $0x148] sm:$0xff]
    %v85 = vld [vmem:[%s0 + $0x150] sm:$0xff]
    %v86 = vld [vmem:[%s0 + $0x158] sm:$0xff]
    %v87 = vld [vmem:[%s0 + $0x160] sm:$0xff]
    %v88 = vld [vmem:[%s0 + $0x168] sm:$0xff]
    %v89 = vld [vmem:[%s0 + $0x170] sm:$0xff]
    %v90 = vld [vmem:[%s0 + $0x178] sm:$0xff]
    %v91 = vld [vmem:[%s0 + $0x180] sm:$0xff]
    %v92 = vld [vmem:[%s0 + $0x188] sm:$0xff]
    %v93 = vld [vmem:[%s0 + $0x190] sm:$0xff]
    %v94 = vld [vmem:[%s0 + $0x198] sm:$0xff]
    %v95 = vld [vmem:[%s4] sm:$0xff]
    %v96 = vld [vmem:[%s4 + $0x8] sm:$0xff]
    %v97 = vld [vmem:[%s4 + $0x10] sm:$0xff]
    %v98 = vld [vmem:[%s4 + $0x18] sm:$0xff]
    %v99 = vld [vmem:[%s4 + $0x20] sm:$0xff]
    %v100 = vld [vmem:[%s4 + $0x28] sm:$0xff]
    %v101 = vld [vmem:[%s4 + $0x30] sm:$0xff]
    %v102 = vld [vmem:[%s4 + $0x38] sm:$0xff]
    %v103 = vld [vmem:[%s4 + $0x40] sm:$0xff]
    %v104 = vld [vmem:[%s4 + $0x48] sm:$0xff]
    %v105 = vld [vmem:[%s4 + $0x50] sm:$0xff]
    %v106 = vld [vmem:[%s4 + $0x58] sm:$0xff]
    %v107 = vld [vmem:[%s4 + $0x60] sm:$0xff]
    %v108 = vld [vmem:[%s4 + $0x68] sm:$0xff]
    %v109 = vld [vmem:[%s4 + $0x70] sm:$0xff]
    %v110 = vld [vmem:[%s4 + $0x78] sm:$0xff]
    %v111 = vld [vmem:[%s4 + $0x80] sm:$0xff]
    %v112 = vld [vmem:[%s4 + $0x88] sm:$0xff]
    %v113 = vld [vmem:[%s4 + $0x90] sm:$0xff]
    %v114 = vld [vmem:[%s4 + $0x98] sm:$0xff]
    %v115 = vld [vmem:[%s4 + $0xa0] sm:$0xff]
    %v116 = vld [vmem:[%s4 + $0xa8] sm:$0xff]
    %v117 = vld [vmem:[%s4 + $0xb0] sm:$0xff]
    %v118 = vld [vmem:[%s4 + $0xb8] sm:$0xff]
    %v119 = vld [vmem:[%s4 + $0xc0] sm:$0xff]
    %v120 = vld [vmem:[%s4 + $0xc8] sm:$0xff]
    %v121 = vld [vmem:[%s4 + $0xd0] sm:$0xff]
    %v122 = vld [vmem:[%s4 + $0xd8] sm:$0xff]
    %v123 = vld [vmem:[%s4 + $0xe0] sm:$0xff]
    %v124 = vld [vmem:[%s4 + $0xe8] sm:$0xff]
    %v125 = vld [vmem:[%s4 + $0xf0] sm:$0xff]
    %v126 = vld [vmem:[%s4 + $0xf8] sm:$0xff]
    %v127 = vld [vmem:[%s4 + $0x100] sm:$0xff]
    %v128 = vld [vmem:[%s4 + $0x108] sm:$0xff]
    %v129 = vld [vmem:[%s4 + $0x110] sm:$0xff]
    %v130 = vld [vmem:[%s4 + $0x118] sm:$0xff]
    %v131 = vld [vmem:[%s4 + $0x120] sm:$0xff]
    %v132 = vld [vmem:[%s4 + $0x128] sm:$0xff]
    %v133 = vld [vmem:[%s4 + $0x130] sm:$0xff]
    %v134 = vld [vmem:[%s4 + $0x138] sm:$0xff]
    %v135 = vld [vmem:[%s4 + $0x140] sm:$0xff]
    %v136 = vld [vmem:[%s4 + $0x148] sm:$0xff]
    %v137 = vld [vmem:[%s4 + $0x150] sm:$0xff]
    %v138 = vld [vmem:[%s4 + $0x158] sm:$0xff]
    %v139 = vld [vmem:[%s4 + $0x160] sm:$0xff]
    %v140 = vld [vmem:[%s4 + $0x168] sm:$0xff]
    %v141 = vld [vmem:[%s4 + $0x170] sm:$0xff]
    %v142 = vld [vmem:[%s4 + $0x178] sm:$0xff]
    %v143 = vld [vmem:[%s4 + $0x180] sm:$0xff]
    %v144 = vld [vmem:[%s4 + $0x188] sm:$0xff]
    %v145 = vld [vmem:[%s4 + $0x190] sm:$0xff]
    %v146 = vld [vmem:[%s4 + $0x198] sm:$0xff]
    %v147 = vld [vmem:[%s4 + $0x1a0] sm:$0xff]
    %v148 = vld [vmem:[%s4 + $0x1a8] sm:$0xff]
    %v149 = vld [vmem:[%s4 + $0x1b0] sm:$0xff]
    %v150 = vld [vmem:[%s4 + $0x1b8] sm:$0xff]
    %v151 = vld [vmem:[%s4 + $0x1c0] sm:$0xff]
    %v152 = vld [vmem:[%s4 + $0x1c8] sm:$0xff]
    %v153 = vld [vmem:[%s4 + $0x1d0] sm:$0xff]
    %v154 = vld [vmem:[%s4 + $0x1d8] sm:$0xff]
    %v155 = vld [vmem:[%s4 + $0x1e0] sm:$0xff]
    %v156 = vld [vmem:[%s4 + $0x1e8] sm:$0xff]
    %v157 = vld [vmem:[%s4 + $0x1f0] sm:$0xff]
    %v158 = vld [vmem:[%s4 + $0x1f8] sm:$0xff]
    %v159 = vld [vmem:[%s5] sm:$0x3]
    %v161 = vlaneseq
    %v162 = vshrl.u32 %v161, 7
    %v163 = vsub.s32 0, %v162
    %v164 = vrot.slane %v159, %v163
    %v165 = vlaneseq
    %v166 = vshrl.u32 %v165, 7
    %v167 = vsub.s32 1, %v166
    %v168 = vrot.slane %v159, %v167
    %v223 = vunpack.c.l.b16 %v43
    %v224 = vunpack.c.h.b16 %v43
    %v225 = vunpack.c.l.b16 %v44
    %v226 = vunpack.c.h.b16 %v44
    %v227 = vunpack.c.l.b16 %v45
    %v228 = vunpack.c.h.b16 %v45
    %v229 = vunpack.c.l.b16 %v46
    %v230 = vunpack.c.h.b16 %v46
    %v231 = vunpack.c.l.b16 %v47
    %v232 = vunpack.c.h.b16 %v47
    %v233 = vunpack.c.l.b16 %v48
    %v234 = vunpack.c.h.b16 %v48
    %v235 = vunpack.c.l.b16 %v49
    %v236 = vunpack.c.h.b16 %v49
    %v237 = vunpack.c.l.b16 %v50
    %v238 = vunpack.c.h.b16 %v50
    %v239 = vunpack.c.l.b16 %v51
    %v240 = vunpack.c.h.b16 %v51
    %v241 = vunpack.c.l.b16 %v52
    %v242 = vunpack.c.h.b16 %v52
    %v243 = vunpack.c.l.b16 %v53
    %v244 = vunpack.c.h.b16 %v53
    %v245 = vunpack.c.l.b16 %v54
    %v246 = vunpack.c.h.b16 %v54
    %v247 = vunpack.c.l.b16 %v55
    %v248 = vunpack.c.h.b16 %v55
    %v249 = vunpack.c.l.b16 %v56
    %v250 = vunpack.c.h.b16 %v56
    %v251 = vunpack.c.l.b16 %v57
    %v252 = vunpack.c.h.b16 %v57
    %v253 = vunpack.c.l.b16 %v58
    %v254 = vunpack.c.h.b16 %v58
    %v255 = vunpack.c.l.b16 %v59
    %v256 = vunpack.c.h.b16 %v59
    %v257 = vunpack.c.l.b16 %v60
    %v258 = vunpack.c.h.b16 %v60
    %v259 = vunpack.c.l.b16 %v61
    %v260 = vunpack.c.h.b16 %v61
    %v261 = vunpack.c.l.b16 %v62
    %v262 = vunpack.c.h.b16 %v62
    %v263 = vunpack.c.l.b16 %v63
    %v264 = vunpack.c.h.b16 %v63
    %v265 = vunpack.c.l.b16 %v64
    %v266 = vunpack.c.h.b16 %v64
    %v267 = vunpack.c.l.b16 %v65
    %v268 = vunpack.c.h.b16 %v65
    %v269 = vunpack.c.l.b16 %v66
    %v270 = vunpack.c.h.b16 %v66
    %v271 = vunpack.c.l.b16 %v67
    %v272 = vunpack.c.h.b16 %v67
    %v273 = vunpack.c.l.b16 %v68
    %v274 = vunpack.c.h.b16 %v68
    %v275 = vunpack.c.l.b16 %v69
    %v276 = vunpack.c.h.b16 %v69
    %v277 = vunpack.c.l.b16 %v70
    %v278 = vunpack.c.h.b16 %v70
    %v279 = vunpack.c.l.b16 %v71
    %v280 = vunpack.c.h.b16 %v71
    %v281 = vunpack.c.l.b16 %v72
    %v282 = vunpack.c.h.b16 %v72
    %v283 = vunpack.c.l.b16 %v73
    %v284 = vunpack.c.h.b16 %v73
    %v285 = vunpack.c.l.b16 %v74
    %v286 = vunpack.c.h.b16 %v74
    %v287 = vunpack.c.l.b16 %v75
    %v288 = vunpack.c.h.b16 %v75
    %v289 = vunpack.c.l.b16 %v76
    %v290 = vunpack.c.h.b16 %v76
    %v291 = vunpack.c.l.b16 %v77
    %v292 = vunpack.c.h.b16 %v77
    %v293 = vunpack.c.l.b16 %v78
    %v294 = vunpack.c.h.b16 %v78
    %v295 = vunpack.c.l.b16 %v79
    %v296 = vunpack.c.h.b16 %v79
    %v297 = vunpack.c.l.b16 %v80
    %v298 = vunpack.c.h.b16 %v80
    %v299 = vunpack.c.l.b16 %v81
    %v300 = vunpack.c.h.b16 %v81
    %v301 = vunpack.c.l.b16 %v82
    %v302 = vunpack.c.h.b16 %v82
    %v303 = vunpack.c.l.b16 %v83
    %v304 = vunpack.c.h.b16 %v83
    %v305 = vunpack.c.l.b16 %v84
    %v306 = vunpack.c.h.b16 %v84
    %v307 = vunpack.c.l.b16 %v85
    %v308 = vunpack.c.h.b16 %v85
    %v309 = vunpack.c.l.b16 %v86
    %v310 = vunpack.c.h.b16 %v86
    %v311 = vunpack.c.l.b16 %v87
    %v312 = vunpack.c.h.b16 %v87
    %v313 = vunpack.c.l.b16 %v88
    %v314 = vunpack.c.h.b16 %v88
    %v315 = vunpack.c.l.b16 %v89
    %v316 = vunpack.c.h.b16 %v89
    %v317 = vunpack.c.l.b16 %v90
    %v318 = vunpack.c.h.b16 %v90
    %v319 = vunpack.c.l.b16 %v91
    %v320 = vunpack.c.h.b16 %v91
    %v321 = vunpack.c.l.b16 %v92
    %v322 = vunpack.c.h.b16 %v92
    %v323 = vunpack.c.l.b16 %v93
    %v324 = vunpack.c.h.b16 %v93
    %v325 = vunpack.c.l.b16 %v94
    %v326 = vunpack.c.h.b16 %v94
    %v327 = vpack.c.b16 %v227, %v223
    %v328 = vpack.c.b16 %v228, %v224
    %v329 = vpack.c.b16 %v229, %v225
    %v330 = vpack.c.b16 %v230, %v226
    %v331 = vpack.c.b16 %v235, %v231
    %v332 = vpack.c.b16 %v236, %v232
    %v333 = vpack.c.b16 %v237, %v233
    %v334 = vpack.c.b16 %v238, %v234
    %v335 = vpack.c.b16 %v243, %v239
    %v336 = vpack.c.b16 %v244, %v240
    %v337 = vpack.c.b16 %v245, %v241
    %v338 = vpack.c.b16 %v246, %v242
    %v339 = vpack.c.b16 %v251, %v247
    %v340 = vpack.c.b16 %v252, %v248
    %v341 = vpack.c.b16 %v253, %v249
    %v342 = vpack.c.b16 %v254, %v250
    %v343 = vpack.c.b16 %v259, %v255
    %v344 = vpack.c.b16 %v260, %v256
    %v345 = vpack.c.b16 %v261, %v257
    %v346 = vpack.c.b16 %v262, %v258
    %v347 = vpack.c.b16 %v267, %v263
    %v348 = vpack.c.b16 %v268, %v264
    %v349 = vpack.c.b16 %v269, %v265
    %v350 = vpack.c.b16 %v270, %v266
    %v351 = vpack.c.b16 %v275, %v271
    %v352 = vpack.c.b16 %v276, %v272
    %v353 = vpack.c.b16 %v277, %v273
    %v354 = vpack.c.b16 %v278, %v274
    %v355 = vpack.c.b16 %v283, %v279
    %v356 = vpack.c.b16 %v284, %v280
    %v357 = vpack.c.b16 %v285, %v281
    %v358 = vpack.c.b16 %v286, %v282
    %v359 = vpack.c.b16 %v291, %v287
    %v360 = vpack.c.b16 %v292, %v288
    %v361 = vpack.c.b16 %v293, %v289
    %v362 = vpack.c.b16 %v294, %v290
    %v363 = vpack.c.b16 %v299, %v295
    %v364 = vpack.c.b16 %v300, %v296
    %v365 = vpack.c.b16 %v301, %v297
    %v366 = vpack.c.b16 %v302, %v298
    %v367 = vpack.c.b16 %v307, %v303
    %v368 = vpack.c.b16 %v308, %v304
    %v369 = vpack.c.b16 %v309, %v305
    %v370 = vpack.c.b16 %v310, %v306
    %v371 = vpack.c.b16 %v315, %v311
    %v372 = vpack.c.b16 %v316, %v312
    %v373 = vpack.c.b16 %v317, %v313
    %v374 = vpack.c.b16 %v318, %v314
    %v375 = vpack.c.b16 %v323, %v319
    %v376 = vpack.c.b16 %v324, %v320
    %v377 = vpack.c.b16 %v325, %v321
    %v378 = vpack.c.b16 %v326, %v322
    %v495 = vunpack.c.l.b16 %v95
    %v496 = vunpack.c.h.b16 %v95
    %v497 = vunpack.c.l.b16 %v96
    %v498 = vunpack.c.h.b16 %v96
    %v499 = vunpack.c.l.b16 %v97
    %v500 = vunpack.c.h.b16 %v97
    %v501 = vunpack.c.l.b16 %v98
    %v502 = vunpack.c.h.b16 %v98
    %v503 = vunpack.c.l.b16 %v99
    %v504 = vunpack.c.h.b16 %v99
    %v505 = vunpack.c.l.b16 %v100
    %v506 = vunpack.c.h.b16 %v100
    %v507 = vunpack.c.l.b16 %v101
    %v508 = vunpack.c.h.b16 %v101
    %v509 = vunpack.c.l.b16 %v102
    %v510 = vunpack.c.h.b16 %v102
    %v511 = vunpack.c.l.b16 %v103
    %v512 = vunpack.c.h.b16 %v103
    %v513 = vunpack.c.l.b16 %v104
    %v514 = vunpack.c.h.b16 %v104
    %v515 = vunpack.c.l.b16 %v105
    %v516 = vunpack.c.h.b16 %v105
    %v517 = vunpack.c.l.b16 %v106
    %v518 = vunpack.c.h.b16 %v106
    %v519 = vunpack.c.l.b16 %v107
    %v520 = vunpack.c.h.b16 %v107
    %v521 = vunpack.c.l.b16 %v108
    %v522 = vunpack.c.h.b16 %v108
    %v523 = vunpack.c.l.b16 %v109
    %v524 = vunpack.c.h.b16 %v109
    %v525 = vunpack.c.l.b16 %v110
    %v526 = vunpack.c.h.b16 %v110
    %v527 = vunpack.c.l.b16 %v111
    %v528 = vunpack.c.h.b16 %v111
    %v529 = vunpack.c.l.b16 %v112
    %v530 = vunpack.c.h.b16 %v112
    %v531 = vunpack.c.l.b16 %v113
    %v532 = vunpack.c.h.b16 %v113
    %v533 = vunpack.c.l.b16 %v114
    %v534 = vunpack.c.h.b16 %v114
    %v535 = vunpack.c.l.b16 %v115
    %v536 = vunpack.c.h.b16 %v115
    %v537 = vunpack.c.l.b16 %v116
    %v538 = vunpack.c.h.b16 %v116
    %v539 = vunpack.c.l.b16 %v117
    %v540 = vunpack.c.h.b16 %v117
    %v541 = vunpack.c.l.b16 %v118
    %v542 = vunpack.c.h.b16 %v118
    %v543 = vunpack.c.l.b16 %v119
    %v544 = vunpack.c.h.b16 %v119
    %v545 = vunpack.c.l.b16 %v120
    %v546 = vunpack.c.h.b16 %v120
    %v547 = vunpack.c.l.b16 %v121
    %v548 = vunpack.c.h.b16 %v121
    %v549 = vunpack.c.l.b16 %v122
    %v550 = vunpack.c.h.b16 %v122
    %v551 = vunpack.c.l.b16 %v123
    %v552 = vunpack.c.h.b16 %v123
    %v553 = vunpack.c.l.b16 %v124
    %v554 = vunpack.c.h.b16 %v124
    %v555 = vunpack.c.l.b16 %v125
    %v556 = vunpack.c.h.b16 %v125
    %v557 = vunpack.c.l.b16 %v126
    %v558 = vunpack.c.h.b16 %v126
    %v559 = vunpack.c.l.b16 %v127
    %v560 = vunpack.c.h.b16 %v127
    %v561 = vunpack.c.l.b16 %v128
    %v562 = vunpack.c.h.b16 %v128
    %v563 = vunpack.c.l.b16 %v129
    %v564 = vunpack.c.h.b16 %v129
    %v565 = vunpack.c.l.b16 %v130
    %v566 = vunpack.c.h.b16 %v130
    %v567 = vunpack.c.l.b16 %v131
    %v568 = vunpack.c.h.b16 %v131
    %v569 = vunpack.c.l.b16 %v132
    %v570 = vunpack.c.h.b16 %v132
    %v571 = vunpack.c.l.b16 %v133
    %v572 = vunpack.c.h.b16 %v133
    %v573 = vunpack.c.l.b16 %v134
    %v574 = vunpack.c.h.b16 %v134
    %v575 = vunpack.c.l.b16 %v135
    %v576 = vunpack.c.h.b16 %v135
    %v577 = vunpack.c.l.b16 %v136
    %v578 = vunpack.c.h.b16 %v136
    %v579 = vunpack.c.l.b16 %v137
    %v580 = vunpack.c.h.b16 %v137
    %v581 = vunpack.c.l.b16 %v138
    %v582 = vunpack.c.h.b16 %v138
    %v583 = vunpack.c.l.b16 %v139
    %v584 = vunpack.c.h.b16 %v139
    %v585 = vunpack.c.l.b16 %v140
    %v586 = vunpack.c.h.b16 %v140
    %v587 = vunpack.c.l.b16 %v141
    %v588 = vunpack.c.h.b16 %v141
    %v589 = vunpack.c.l.b16 %v142
    %v590 = vunpack.c.h.b16 %v142
    %v591 = vunpack.c.l.b16 %v143
    %v592 = vunpack.c.h.b16 %v143
    %v593 = vunpack.c.l.b16 %v144
    %v594 = vunpack.c.h.b16 %v144
    %v595 = vunpack.c.l.b16 %v145
    %v596 = vunpack.c.h.b16 %v145
    %v597 = vunpack.c.l.b16 %v146
    %v598 = vunpack.c.h.b16 %v146
    %v599 = vunpack.c.l.b16 %v147
    %v600 = vunpack.c.h.b16 %v147
    %v601 = vunpack.c.l.b16 %v148
    %v602 = vunpack.c.h.b16 %v148
    %v603 = vunpack.c.l.b16 %v149
    %v604 = vunpack.c.h.b16 %v149
    %v605 = vunpack.c.l.b16 %v150
    %v606 = vunpack.c.h.b16 %v150
    %v607 = vunpack.c.l.b16 %v151
    %v608 = vunpack.c.h.b16 %v151
    %v609 = vunpack.c.l.b16 %v152
    %v610 = vunpack.c.h.b16 %v152
    %v611 = vunpack.c.l.b16 %v153
    %v612 = vunpack.c.h.b16 %v153
    %v613 = vunpack.c.l.b16 %v154
    %v614 = vunpack.c.h.b16 %v154
    %v615 = vunpack.c.l.b16 %v155
    %v616 = vunpack.c.h.b16 %v155
    %v617 = vunpack.c.l.b16 %v156
    %v618 = vunpack.c.h.b16 %v156
    %v619 = vunpack.c.l.b16 %v157
    %v620 = vunpack.c.h.b16 %v157
    %v621 = vunpack.c.l.b16 %v158
    %v622 = vunpack.c.h.b16 %v158
    %v623 = vpack.c.b16 %v497, %v495
    %v624 = vpack.c.b16 %v498, %v496
    %v625 = vpack.c.b16 %v501, %v499
    %v626 = vpack.c.b16 %v502, %v500
    %v627 = vpack.c.b16 %v505, %v503
    %v628 = vpack.c.b16 %v506, %v504
    %v629 = vpack.c.b16 %v509, %v507
    %v630 = vpack.c.b16 %v510, %v508
    %v631 = vpack.c.b16 %v513, %v511
    %v632 = vpack.c.b16 %v514, %v512
    %v633 = vpack.c.b16 %v517, %v515
    %v634 = vpack.c.b16 %v518, %v516
    %v635 = vpack.c.b16 %v521, %v519
    %v636 = vpack.c.b16 %v522, %v520
    %v637 = vpack.c.b16 %v525, %v523
    %v638 = vpack.c.b16 %v526, %v524
    %v639 = vpack.c.b16 %v529, %v527
    %v640 = vpack.c.b16 %v530, %v528
    %v641 = vpack.c.b16 %v533, %v531
    %v642 = vpack.c.b16 %v534, %v532
    %v643 = vpack.c.b16 %v537, %v535
    %v644 = vpack.c.b16 %v538, %v536
    %v645 = vpack.c.b16 %v541, %v539
    %v646 = vpack.c.b16 %v542, %v540
    %v647 = vpack.c.b16 %v545, %v543
    %v648 = vpack.c.b16 %v546, %v544
    %v649 = vpack.c.b16 %v549, %v547
    %v650 = vpack.c.b16 %v550, %v548
    %v651 = vpack.c.b16 %v553, %v551
    %v652 = vpack.c.b16 %v554, %v552
    %v653 = vpack.c.b16 %v557, %v555
    %v654 = vpack.c.b16 %v558, %v556
    %v655 = vpack.c.b16 %v561, %v559
    %v656 = vpack.c.b16 %v562, %v560
    %v657 = vpack.c.b16 %v565, %v563
    %v658 = vpack.c.b16 %v566, %v564
    %v659 = vpack.c.b16 %v569, %v567
    %v660 = vpack.c.b16 %v570, %v568
    %v661 = vpack.c.b16 %v573, %v571
    %v662 = vpack.c.b16 %v574, %v572
    %v663 = vpack.c.b16 %v577, %v575
    %v664 = vpack.c.b16 %v578, %v576
    %v665 = vpack.c.b16 %v581, %v579
    %v666 = vpack.c.b16 %v582, %v580
    %v667 = vpack.c.b16 %v585, %v583
    %v668 = vpack.c.b16 %v586, %v584
    %v669 = vpack.c.b16 %v589, %v587
    %v670 = vpack.c.b16 %v590, %v588
    %v671 = vpack.c.b16 %v593, %v591
    %v672 = vpack.c.b16 %v594, %v592
    %v673 = vpack.c.b16 %v597, %v595
    %v674 = vpack.c.b16 %v598, %v596
    %v675 = vpack.c.b16 %v601, %v599
    %v676 = vpack.c.b16 %v602, %v600
    %v677 = vpack.c.b16 %v605, %v603
    %v678 = vpack.c.b16 %v606, %v604
    %v679 = vpack.c.b16 %v609, %v607
    %v680 = vpack.c.b16 %v610, %v608
    %v681 = vpack.c.b16 %v613, %v611
    %v682 = vpack.c.b16 %v614, %v612
    %v683 = vpack.c.b16 %v617, %v615
    %v684 = vpack.c.b16 %v618, %v616
    %v685 = vpack.c.b16 %v621, %v619
    %v686 = vpack.c.b16 %v622, %v620
    %751 = vmatprep.subr.bf16.mxu0 %v624
    %752 = vmatpush1.bf16.msra.mxu0 %v623
    %753 = vmatprep.subr.bf16.mxu0 %v626
    %754 = vmatpush1.bf16.msra.mxu0 %v625
    %755 = vmatprep.subr.bf16.mxu0 %v628
    %756 = vmatpush1.bf16.msra.mxu0 %v627
    %757 = vmatprep.subr.bf16.mxu0 %v630
    %758 = vmatpush1.bf16.msra.mxu0 %v629
    %759 = vmatprep.subr.bf16.mxu0 %v632
    %760 = vmatpush1.bf16.msra.mxu0 %v631
    %761 = vmatprep.subr.bf16.mxu0 %v634
    %762 = vmatpush1.bf16.msra.mxu0 %v633
    %763 = vmatprep.subr.bf16.mxu0 %v636
    %764 = vmatpush1.bf16.msra.mxu0 %v635
    %765 = vmatprep.subr.bf16.mxu0 %v638
    %766 = vmatpush1.bf16.msra.mxu0 %v637
    %767 = vmatprep.subr.bf16.mxu0 %v640
    %768 = vmatpush1.bf16.msra.mxu0 %v639
    %769 = vmatprep.subr.bf16.mxu0 %v642
    %770 = vmatpush1.bf16.msra.mxu0 %v641
    %771 = vmatprep.subr.bf16.mxu0 %v644
    %772 = vmatpush1.bf16.msra.mxu0 %v643
    %773 = vmatprep.subr.bf16.mxu0 %v646
    %774 = vmatpush1.bf16.msra.mxu0 %v645
    %775 = vmatprep.subr.bf16.mxu0 %v648
    %776 = vmatpush1.bf16.msra.mxu0 %v647
    %777 = vmatprep.subr.bf16.mxu0 %v650
    %778 = vmatpush1.bf16.msra.mxu0 %v649
    %779 = vmatprep.subr.bf16.mxu0 %v652
    %780 = vmatpush1.bf16.msra.mxu0 %v651
    %781 = vmatprep.subr.bf16.mxu0 %v654
    %782 = vmatpush1.bf16.msra.mxu0 %v653
    %783 = vmatprep.mubr.bf16.mxu0 %v328
    %784 = vmatmul.mubr.bf16.gmra.mrb[0].mxu0 %v327
    %v785 = vpop.f32.mrb[0].mxu0
    %v786 = vadd.f32 %v164, %v785
    %v787 = vpop.f32.mrb[0].mxu0
    %v788 = vadd.f32 %v168, %v787
    %v789 = vpop.f32.mrb[0].mxu0
    %v790 = vadd.f32 %v164, %v789
    %v791 = vpop.f32.mrb[0].mxu0
    %v792 = vadd.f32 %v168, %v791
    %793 = vmatprep.mubr.bf16.mxu0 %v332
    %794 = vmatmul.mubr.bf16.gmra.mrb[0].mxu0 %v331
    %v795 = vpop.f32.mrb[0].mxu0
    %v796 = vadd.f32 %v164, %v795
    %v797 = vpop.f32.mrb[0].mxu0
    %v798 = vadd.f32 %v168, %v797
    %v799 = vpop.f32.mrb[0].mxu0
    %v800 = vadd.f32 %v164, %v799
    %v801 = vpop.f32.mrb[0].mxu0
    %v802 = vadd.f32 %v168, %v801
    %803 = vmatprep.mubr.bf16.mxu0 %v336
    %804 = vmatmul.mubr.bf16.gmra.mrb[0].mxu0 %v335
    %v805 = vpop.f32.mrb[0].mxu0
    %v806 = vadd.f32 %v164, %v805
    %v807 = vpop.f32.mrb[0].mxu0
    %v808 = vadd.f32 %v168, %v807
    %v809 = vpop.f32.mrb[0].mxu0
    %v810 = vadd.f32 %v164, %v809
    %v811 = vpop.f32.mrb[0].mxu0
    %v812 = vadd.f32 %v168, %v811
    %813 = vmatprep.mubr.bf16.mxu0 %v340
    %814 = vmatmul.mubr.bf16.gmra.mrb[0].mxu0 %v339
    %v815 = vpop.f32.mrb[0].mxu0
    %v816 = vadd.f32 %v164, %v815
    %v817 = vpop.f32.mrb[0].mxu0
    %v818 = vadd.f32 %v168, %v817
    %v819 = vpop.f32.mrb[0].mxu0
    %v820 = vadd.f32 %v164, %v819
    %v821 = vpop.f32.mrb[0].mxu0
    %v822 = vadd.f32 %v168, %v821
    %823 = vmatprep.mubr.bf16.mxu0 %v344
    %824 = vmatmul.mubr.bf16.gmra.mrb[0].mxu0 %v343
    %v825 = vpop.f32.mrb[0].mxu0
    %v826 = vadd.f32 %v164, %v825
    %v827 = vpop.f32.mrb[0].mxu0
    %v828 = vadd.f32 %v168, %v827
    %v829 = vpop.f32.mrb[0].mxu0
    %v830 = vadd.f32 %v164, %v829
    %v831 = vpop.f32.mrb[0].mxu0
    %v832 = vadd.f32 %v168, %v831
    %833 = vmatprep.mubr.bf16.mxu0 %v348
    %834 = vmatmul.mubr.bf16.gmra.mrb[0].mxu0 %v347
    %v835 = vpop.f32.mrb[0].mxu0
    %v836 = vadd.f32 %v164, %v835
    %v837 = vpop.f32.mrb[0].mxu0
    %v838 = vadd.f32 %v168, %v837
    %v839 = vpop.f32.mrb[0].mxu0
    %v840 = vadd.f32 %v164, %v839
    %v841 = vpop.f32.mrb[0].mxu0
    %v842 = vadd.f32 %v168, %v841
    %843 = vmatprep.mubr.bf16.mxu0 %v352
    %844 = vmatmul.mubr.bf16.gmra.mrb[0].mxu0 %v351
    %v845 = vpop.f32.mrb[0].mxu0
    %v846 = vadd.f32 %v164, %v845
    %v847 = vpop.f32.mrb[0].mxu0
    %v848 = vadd.f32 %v168, %v847
    %v849 = vpop.f32.mrb[0].mxu0
    %v850 = vadd.f32 %v164, %v849
    %v851 = vpop.f32.mrb[0].mxu0
    %v852 = vadd.f32 %v168, %v851
    %853 = vmatprep.mubr.bf16.mxu0 %v356
    %854 = vmatmul.mubr.bf16.gmra.mrb[0].mxu0 %v355
    %v855 = vpop.f32.mrb[0].mxu0
    %v856 = vadd.f32 %v164, %v855
    %v857 = vpop.f32.mrb[0].mxu0
    %v858 = vadd.f32 %v168, %v857
    %v859 = vpop.f32.mrb[0].mxu0
    %v860 = vadd.f32 %v164, %v859
    %v861 = vpop.f32.mrb[0].mxu0
    %v862 = vadd.f32 %v168, %v861
    %863 = vmatprep.mubr.bf16.mxu0 %v360
    %864 = vmatmul.mubr.bf16.gmra.mrb[0].mxu0 %v359
    %v865 = vpop.f32.mrb[0].mxu0
    %v866 = vadd.f32 %v164, %v865
    %v867 = vpop.f32.mrb[0].mxu0
    %v868 = vadd.f32 %v168, %v867
    %v869 = vpop.f32.mrb[0].mxu0
    %v870 = vadd.f32 %v164, %v869
    %v871 = vpop.f32.mrb[0].mxu0
    %v872 = vadd.f32 %v168, %v871
    %873 = vmatprep.mubr.bf16.mxu0 %v364
    %874 = vmatmul.mubr.bf16.gmra.mrb[0].mxu0 %v363
    %v875 = vpop.f32.mrb[0].mxu0
    %v876 = vadd.f32 %v164, %v875
    %v877 = vpop.f32.mrb[0].mxu0
    %v878 = vadd.f32 %v168, %v877
    %v879 = vpop.f32.mrb[0].mxu0
    %v880 = vadd.f32 %v164, %v879
    %v881 = vpop.f32.mrb[0].mxu0
    %v882 = vadd.f32 %v168, %v881
    %883 = vmatprep.mubr.bf16.mxu0 %v368
    %884 = vmatmul.mubr.bf16.gmra.mrb[0].mxu0 %v367
    %v885 = vpop.f32.mrb[0].mxu0
    %v886 = vadd.f32 %v164, %v885
    %v887 = vpop.f32.mrb[0].mxu0
    %v888 = vadd.f32 %v168, %v887
    %v889 = vpop.f32.mrb[0].mxu0
    %v890 = vadd.f32 %v164, %v889
    %v891 = vpop.f32.mrb[0].mxu0
    %v892 = vadd.f32 %v168, %v891
    %893 = vmatprep.mubr.bf16.mxu0 %v372
    %894 = vmatmul.mubr.bf16.gmra.mrb[0].mxu0 %v371
    %v895 = vpop.f32.mrb[0].mxu0
    %v896 = vadd.f32 %v164, %v895
    %v897 = vpop.f32.mrb[0].mxu0
    %v898 = vadd.f32 %v168, %v897
    %v899 = vpop.f32.mrb[0].mxu0
    %v900 = vadd.f32 %v164, %v899
    %v901 = vpop.f32.mrb[0].mxu0
    %v902 = vadd.f32 %v168, %v901
    %903 = vmatprep.mubr.bf16.mxu0 %v376
    %904 = vmatmul.mubr.bf16.gmra.mrb[0].mxu0 %v375
    %v905 = vpop.f32.mrb[0].mxu0
    %v906 = vadd.f32 %v164, %v905
    %v907 = vpop.f32.mrb[0].mxu0
    %v908 = vadd.f32 %v168, %v907
    %v909 = vpop.f32.mrb[0].mxu0
    %v910 = vadd.f32 %v164, %v909
    %v911 = vpop.f32.mrb[0].mxu0
    %v912 = vadd.f32 %v168, %v911
    %913 = vdwg.mxu0
    %914 = vmatprep.subr.bf16.mxu0 %v656
    %915 = vmatpush1.bf16.msra.mxu0 %v655
    %916 = vmatprep.subr.bf16.mxu0 %v658
    %917 = vmatpush1.bf16.msra.mxu0 %v657
    %918 = vmatprep.subr.bf16.mxu0 %v660
    %919 = vmatpush1.bf16.msra.mxu0 %v659
    %920 = vmatprep.subr.bf16.mxu0 %v662
    %921 = vmatpush1.bf16.msra.mxu0 %v661
    %922 = vmatprep.subr.bf16.mxu0 %v664
    %923 = vmatpush1.bf16.msra.mxu0 %v663
    %924 = vmatprep.subr.bf16.mxu0 %v666
    %925 = vmatpush1.bf16.msra.mxu0 %v665
    %926 = vmatprep.subr.bf16.mxu0 %v668
    %927 = vmatpush1.bf16.msra.mxu0 %v667
    %928 = vmatprep.subr.bf16.mxu0 %v670
    %929 = vmatpush1.bf16.msra.mxu0 %v669
    %930 = vmatprep.subr.bf16.mxu0 %v672
    %931 = vmatpush1.bf16.msra.mxu0 %v671
    %932 = vmatprep.subr.bf16.mxu0 %v674
    %933 = vmatpush1.bf16.msra.mxu0 %v673
    %934 = vmatprep.subr.bf16.mxu0 %v676
    %935 = vmatpush1.bf16.msra.mxu0 %v675
    %936 = vmatprep.subr.bf16.mxu0 %v678
    %937 = vmatpush1.bf16.msra.mxu0 %v677
    %938 = vmatprep.subr.bf16.mxu0 %v680
    %939 = vmatpush1.bf16.msra.mxu0 %v679
    %940 = vmatprep.subr.bf16.mxu0 %v682
    %941 = vmatpush1.bf16.msra.mxu0 %v681
    %942 = vmatprep.subr.bf16.mxu0 %v684
    %943 = vmatpush1.bf16.msra.mxu0 %v683
    %944 = vmatprep.subr.bf16.mxu0 %v686
    %945 = vmatpush1.bf16.msra.mxu0 %v685
    %946 = vmatprep.mubr.bf16.mxu0 %v330
    %947 = vmatmul.mubr.bf16.gmra.mrb[0].mxu0 %v329
    %v948 = vpop.f32.mrb[0].mxu0
    %v949 = vadd.f32 %v786, %v948
    %v950 = vpop.f32.mrb[0].mxu0
    %v951 = vadd.f32 %v788, %v950
    %v952 = vpop.f32.mrb[0].mxu0
    %v953 = vadd.f32 %v790, %v952
    %v954 = vpop.f32.mrb[0].mxu0
    %v955 = vadd.f32 %v792, %v954
    %956 = vmatprep.mubr.bf16.mxu0 %v334
    %957 = vmatmul.mubr.bf16.gmra.mrb[0].mxu0 %v333
    %v958 = vpop.f32.mrb[0].mxu0
    %v959 = vadd.f32 %v796, %v958
    %v960 = vpop.f32.mrb[0].mxu0
    %v961 = vadd.f32 %v798, %v960
    %v962 = vpop.f32.mrb[0].mxu0
    %v963 = vadd.f32 %v800, %v962
    %v964 = vpop.f32.mrb[0].mxu0
    %v965 = vadd.f32 %v802, %v964
    %966 = vmatprep.mubr.bf16.mxu0 %v338
    %967 = vmatmul.mubr.bf16.gmra.mrb[0].mxu0 %v337
    %v968 = vpop.f32.mrb[0].mxu0
    %v969 = vadd.f32 %v806, %v968
    %v970 = vpop.f32.mrb[0].mxu0
    %v971 = vadd.f32 %v808, %v970
    %v972 = vpop.f32.mrb[0].mxu0
    %v973 = vadd.f32 %v810, %v972
    %v974 = vpop.f32.mrb[0].mxu0
    %v975 = vadd.f32 %v812, %v974
    %976 = vmatprep.mubr.bf16.mxu0 %v342
    %977 = vmatmul.mubr.bf16.gmra.mrb[0].mxu0 %v341
    %v978 = vpop.f32.mrb[0].mxu0
    %v979 = vadd.f32 %v816, %v978
    %v980 = vpop.f32.mrb[0].mxu0
    %v981 = vadd.f32 %v818, %v980
    %v982 = vpop.f32.mrb[0].mxu0
    %v983 = vadd.f32 %v820, %v982
    %v984 = vpop.f32.mrb[0].mxu0
    %v985 = vadd.f32 %v822, %v984
    %986 = vmatprep.mubr.bf16.mxu0 %v346
    %987 = vmatmul.mubr.bf16.gmra.mrb[0].mxu0 %v345
    %v988 = vpop.f32.mrb[0].mxu0
    %v989 = vadd.f32 %v826, %v988
    %v990 = vpop.f32.mrb[0].mxu0
    %v991 = vadd.f32 %v828, %v990
    %v992 = vpop.f32.mrb[0].mxu0
    %v993 = vadd.f32 %v830, %v992
    %v994 = vpop.f32.mrb[0].mxu0
    %v995 = vadd.f32 %v832, %v994
    %996 = vmatprep.mubr.bf16.mxu0 %v350
    %997 = vmatmul.mubr.bf16.gmra.mrb[0].mxu0 %v349
    %v998 = vpop.f32.mrb[0].mxu0
    %v999 = vadd.f32 %v836, %v998
    %v1000 = vpop.f32.mrb[0].mxu0
    %v1001 = vadd.f32 %v838, %v1000
    %v1002 = vpop.f32.mrb[0].mxu0
    %v1003 = vadd.f32 %v840, %v1002
    %v1004 = vpop.f32.mrb[0].mxu0
    %v1005 = vadd.f32 %v842, %v1004
    %1006 = vmatprep.mubr.bf16.mxu0 %v354
    %1007 = vmatmul.mubr.bf16.gmra.mrb[0].mxu0 %v353
    %v1008 = vpop.f32.mrb[0].mxu0
    %v1009 = vadd.f32 %v846, %v1008
    %v1010 = vpop.f32.mrb[0].mxu0
    %v1011 = vadd.f32 %v848, %v1010
    %v1012 = vpop.f32.mrb[0].mxu0
    %v1013 = vadd.f32 %v850, %v1012
    %v1014 = vpop.f32.mrb[0].mxu0
    %v1015 = vadd.f32 %v852, %v1014
    %1016 = vmatprep.mubr.bf16.mxu0 %v358
    %1017 = vmatmul.mubr.bf16.gmra.mrb[0].mxu0 %v357
    %v1018 = vpop.f32.mrb[0].mxu0
    %v1019 = vadd.f32 %v856, %v1018
    %v1020 = vpop.f32.mrb[0].mxu0
    %v1021 = vadd.f32 %v858, %v1020
    %v1022 = vpop.f32.mrb[0].mxu0
    %v1023 = vadd.f32 %v860, %v1022
    %v1024 = vpop.f32.mrb[0].mxu0
    %v1025 = vadd.f32 %v862, %v1024
    %1026 = vmatprep.mubr.bf16.mxu0 %v362
    %1027 = vmatmul.mubr.bf16.gmra.mrb[0].mxu0 %v361
    %v1028 = vpop.f32.mrb[0].mxu0
    %v1029 = vadd.f32 %v866, %v1028
    %v1030 = vpop.f32.mrb[0].mxu0
    %v1031 = vadd.f32 %v868, %v1030
    %v1032 = vpop.f32.mrb[0].mxu0
    %v1033 = vadd.f32 %v870, %v1032
    %v1034 = vpop.f32.mrb[0].mxu0
    %v1035 = vadd.f32 %v872, %v1034
    %1036 = vmatprep.mubr.bf16.mxu0 %v366
    %1037 = vmatmul.mubr.bf16.gmra.mrb[0].mxu0 %v365
    %v1038 = vpop.f32.mrb[0].mxu0
    %v1039 = vadd.f32 %v876, %v1038
    %v1040 = vpop.f32.mrb[0].mxu0
    %v1041 = vadd.f32 %v878, %v1040
    %v1042 = vpop.f32.mrb[0].mxu0
    %v1043 = vadd.f32 %v880, %v1042
    %v1044 = vpop.f32.mrb[0].mxu0
    %v1045 = vadd.f32 %v882, %v1044
    %1046 = vmatprep.mubr.bf16.mxu0 %v370
    %1047 = vmatmul.mubr.bf16.gmra.mrb[0].mxu0 %v369
    %v1048 = vpop.f32.mrb[0].mxu0
    %v1049 = vadd.f32 %v886, %v1048
    %v1050 = vpop.f32.mrb[0].mxu0
    %v1051 = vadd.f32 %v888, %v1050
    %v1052 = vpop.f32.mrb[0].mxu0
    %v1053 = vadd.f32 %v890, %v1052
    %v1054 = vpop.f32.mrb[0].mxu0
    %v1055 = vadd.f32 %v892, %v1054
    %1056 = vmatprep.mubr.bf16.mxu0 %v374
    %1057 = vmatmul.mubr.bf16.gmra.mrb[0].mxu0 %v373
    %v1058 = vpop.f32.mrb[0].mxu0
    %v1059 = vadd.f32 %v896, %v1058
    %v1060 = vpop.f32.mrb[0].mxu0
    %v1061 = vadd.f32 %v898, %v1060
    %v1062 = vpop.f32.mrb[0].mxu0
    %v1063 = vadd.f32 %v900, %v1062
    %v1064 = vpop.f32.mrb[0].mxu0
    %v1065 = vadd.f32 %v902, %v1064
    %1066 = vmatprep.mubr.bf16.mxu0 %v378
    %1067 = vmatmul.mubr.bf16.gmra.mrb[0].mxu0 %v377
    %v1068 = vpop.f32.mrb[0].mxu0
    %v1069 = vadd.f32 %v906, %v1068
    %v1070 = vpop.f32.mrb[0].mxu0
    %v1071 = vadd.f32 %v908, %v1070
    %v1072 = vpop.f32.mrb[0].mxu0
    %v1073 = vadd.f32 %v910, %v1072
    %v1074 = vpop.f32.mrb[0].mxu0
    %v1075 = vadd.f32 %v912, %v1074
    %1076 = vdwg.mxu0
    %v1077 = vld [vmem:[%s2] sm:$0xff]
    %v1078 = vld [vmem:[%s2 + $0x8] sm:$0xff]
    %v1079 = vld [vmem:[%s2 + $0x10] sm:$0xff]
    %v1080 = vld [vmem:[%s2 + $0x18] sm:$0xff]
    %v1081 = vld [vmem:[%s2 + $0x20] sm:$0xff]
    %v1082 = vld [vmem:[%s2 + $0x28] sm:$0xff]
    %v1083 = vld [vmem:[%s2 + $0x30] sm:$0xff]
    %v1084 = vld [vmem:[%s2 + $0x38] sm:$0xff]
    %v1085 = vld [vmem:[%s2 + $0x40] sm:$0xff]
    %v1086 = vld [vmem:[%s2 + $0x48] sm:$0xff]
    %v1087 = vld [vmem:[%s2 + $0x50] sm:$0xff]
    %v1088 = vld [vmem:[%s2 + $0x58] sm:$0xff]
    %v1089 = vld [vmem:[%s2 + $0x60] sm:$0xff]
    %v1090 = vld [vmem:[%s2 + $0x68] sm:$0xff]
    %v1091 = vld [vmem:[%s2 + $0x70] sm:$0xff]
    %v1092 = vld [vmem:[%s2 + $0x78] sm:$0xff]
    %v1093 = vld [vmem:[%s2 + $0x80] sm:$0xff]
    %v1094 = vld [vmem:[%s2 + $0x88] sm:$0xff]
    %v1095 = vld [vmem:[%s2 + $0x90] sm:$0xff]
    %v1096 = vld [vmem:[%s2 + $0x98] sm:$0xff]
    %v1097 = vld [vmem:[%s2 + $0xa0] sm:$0xff]
    %v1098 = vld [vmem:[%s2 + $0xa8] sm:$0xff]
    %v1099 = vld [vmem:[%s2 + $0xb0] sm:$0xff]
    %v1100 = vld [vmem:[%s2 + $0xb8] sm:$0xff]
    %v1101 = vld [vmem:[%s2 + $0xc0] sm:$0xff]
    %v1102 = vld [vmem:[%s2 + $0xc8] sm:$0xff]
    %1104 = vset.pattern.permute.xlu0 0
    %1105 = vperm.xlu0 %1104, %v1077
    %v1106 = vpop.permute.xlu0 %1105
    %1109 = vset.pattern.permute.xlu0 0
    %1110 = vperm.xlu0 %1109, %v1078
    %v1111 = vpop.permute.xlu0 %1110
    %1114 = vset.pattern.permute.xlu0 0
    %1115 = vperm.xlu0 %1114, %v1079
    %v1116 = vpop.permute.xlu0 %1115
    %1119 = vset.pattern.permute.xlu0 0
    %1120 = vperm.xlu0 %1119, %v1080
    %v1121 = vpop.permute.xlu0 %1120
    %1124 = vset.pattern.permute.xlu0 0
    %1125 = vperm.xlu0 %1124, %v1081
    %v1126 = vpop.permute.xlu0 %1125
    %1129 = vset.pattern.permute.xlu0 0
    %1130 = vperm.xlu0 %1129, %v1082
    %v1131 = vpop.permute.xlu0 %1130
    %1134 = vset.pattern.permute.xlu0 0
    %1135 = vperm.xlu0 %1134, %v1083
    %v1136 = vpop.permute.xlu0 %1135
    %1139 = vset.pattern.permute.xlu0 0
    %1140 = vperm.xlu0 %1139, %v1084
    %v1141 = vpop.permute.xlu0 %1140
    %1144 = vset.pattern.permute.xlu0 0
    %1145 = vperm.xlu0 %1144, %v1085
    %v1146 = vpop.permute.xlu0 %1145
    %1149 = vset.pattern.permute.xlu0 0
    %1150 = vperm.xlu0 %1149, %v1086
    %v1151 = vpop.permute.xlu0 %1150
    %1154 = vset.pattern.permute.xlu0 0
    %1155 = vperm.xlu0 %1154, %v1087
    %v1156 = vpop.permute.xlu0 %1155
    %1159 = vset.pattern.permute.xlu0 0
    %1160 = vperm.xlu0 %1159, %v1088
    %v1161 = vpop.permute.xlu0 %1160
    %1164 = vset.pattern.permute.xlu0 0
    %1165 = vperm.xlu0 %1164, %v1089
    %v1166 = vpop.permute.xlu0 %1165
    %1169 = vset.pattern.permute.xlu0 0
    %1170 = vperm.xlu0 %1169, %v1090
    %v1171 = vpop.permute.xlu0 %1170
    %1174 = vset.pattern.permute.xlu0 0
    %1175 = vperm.xlu0 %1174, %v1091
    %v1176 = vpop.permute.xlu0 %1175
    %1179 = vset.pattern.permute.xlu0 0
    %1180 = vperm.xlu0 %1179, %v1092
    %v1181 = vpop.permute.xlu0 %1180
    %1184 = vset.pattern.permute.xlu0 0
    %1185 = vperm.xlu0 %1184, %v1093
    %v1186 = vpop.permute.xlu0 %1185
    %1189 = vset.pattern.permute.xlu0 0
    %1190 = vperm.xlu0 %1189, %v1094
    %v1191 = vpop.permute.xlu0 %1190
    %1194 = vset.pattern.permute.xlu0 0
    %1195 = vperm.xlu0 %1194, %v1095
    %v1196 = vpop.permute.xlu0 %1195
    %1199 = vset.pattern.permute.xlu0 0
    %1200 = vperm.xlu0 %1199, %v1096
    %v1201 = vpop.permute.xlu0 %1200
    %1204 = vset.pattern.permute.xlu0 0
    %1205 = vperm.xlu0 %1204, %v1097
    %v1206 = vpop.permute.xlu0 %1205
    %1209 = vset.pattern.permute.xlu0 0
    %1210 = vperm.xlu0 %1209, %v1098
    %v1211 = vpop.permute.xlu0 %1210
    %1214 = vset.pattern.permute.xlu0 0
    %1215 = vperm.xlu0 %1214, %v1099
    %v1216 = vpop.permute.xlu0 %1215
    %1219 = vset.pattern.permute.xlu0 0
    %1220 = vperm.xlu0 %1219, %v1100
    %v1221 = vpop.permute.xlu0 %1220
    %1224 = vset.pattern.permute.xlu0 0
    %1225 = vperm.xlu0 %1224, %v1101
    %v1226 = vpop.permute.xlu0 %1225
    %1229 = vset.pattern.permute.xlu0 0
    %1230 = vperm.xlu0 %1229, %v1102
    %v1231 = vpop.permute.xlu0 %1230
    %v1233 = vmul.f32 %v949, %v1106
    %v1234 = vmul.f32 %v951, %v1106
    %v1235 = vmul.f32 %v953, %v1111
    %v1236 = vmul.f32 %v955, %v1111
    %v1237 = vmul.f32 %v959, %v1116
    %v1238 = vmul.f32 %v961, %v1116
    %v1239 = vmul.f32 %v963, %v1121
    %v1240 = vmul.f32 %v965, %v1121
    %v1241 = vmul.f32 %v969, %v1126
    %v1242 = vmul.f32 %v971, %v1126
    %v1243 = vmul.f32 %v973, %v1131
    %v1244 = vmul.f32 %v975, %v1131
    %v1245 = vmul.f32 %v979, %v1136
    %v1246 = vmul.f32 %v981, %v1136
    %v1247 = vmul.f32 %v983, %v1141
    %v1248 = vmul.f32 %v985, %v1141
    %v1249 = vmul.f32 %v989, %v1146
    %v1250 = vmul.f32 %v991, %v1146
    %v1251 = vmul.f32 %v993, %v1151
    %v1252 = vmul.f32 %v995, %v1151
    %v1253 = vmul.f32 %v999, %v1156
    %v1254 = vmul.f32 %v1001, %v1156
    %v1255 = vmul.f32 %v1003, %v1161
    %v1256 = vmul.f32 %v1005, %v1161
    %v1257 = vmul.f32 %v1009, %v1166
    %v1258 = vmul.f32 %v1011, %v1166
    %v1259 = vmul.f32 %v1013, %v1171
    %v1260 = vmul.f32 %v1015, %v1171
    %v1261 = vmul.f32 %v1019, %v1176
    %v1262 = vmul.f32 %v1021, %v1176
    %v1263 = vmul.f32 %v1023, %v1181
    %v1264 = vmul.f32 %v1025, %v1181
    %v1265 = vmul.f32 %v1029, %v1186
    %v1266 = vmul.f32 %v1031, %v1186
    %v1267 = vmul.f32 %v1033, %v1191
    %v1268 = vmul.f32 %v1035, %v1191
    %v1269 = vmul.f32 %v1039, %v1196
    %v1270 = vmul.f32 %v1041, %v1196
    %v1271 = vmul.f32 %v1043, %v1201
    %v1272 = vmul.f32 %v1045, %v1201
    %v1273 = vmul.f32 %v1049, %v1206
    %v1274 = vmul.f32 %v1051, %v1206
    %v1275 = vmul.f32 %v1053, %v1211
    %v1276 = vmul.f32 %v1055, %v1211
    %v1277 = vmul.f32 %v1059, %v1216
    %v1278 = vmul.f32 %v1061, %v1216
    %v1279 = vmul.f32 %v1063, %v1221
    %v1280 = vmul.f32 %v1065, %v1221
    %v1281 = vmul.f32 %v1069, %v1226
    %v1282 = vmul.f32 %v1071, %v1226
    %v1283 = vmul.f32 %v1073, %v1231
    %v1284 = vmul.f32 %v1075, %v1231
    %v1285 = vpack.c.bf16 %v1235, %v1233
    %v1286 = vpack.c.bf16 %v1236, %v1234
    %v1287 = vpack.c.bf16 %v1239, %v1237
    %v1288 = vpack.c.bf16 %v1240, %v1238
    %v1289 = vpack.c.bf16 %v1243, %v1241
    %v1290 = vpack.c.bf16 %v1244, %v1242
    %v1291 = vpack.c.bf16 %v1247, %v1245
    %v1292 = vpack.c.bf16 %v1248, %v1246
    %v1293 = vpack.c.bf16 %v1251, %v1249
    %v1294 = vpack.c.bf16 %v1252, %v1250
    %v1295 = vpack.c.bf16 %v1255, %v1253
    %v1296 = vpack.c.bf16 %v1256, %v1254
    %v1297 = vpack.c.bf16 %v1259, %v1257
    %v1298 = vpack.c.bf16 %v1260, %v1258
    %v1299 = vpack.c.bf16 %v1263, %v1261
    %v1300 = vpack.c.bf16 %v1264, %v1262
    %v1301 = vpack.c.bf16 %v1267, %v1265
    %v1302 = vpack.c.bf16 %v1268, %v1266
    %v1303 = vpack.c.bf16 %v1271, %v1269
    %v1304 = vpack.c.bf16 %v1272, %v1270
    %v1305 = vpack.c.bf16 %v1275, %v1273
    %v1306 = vpack.c.bf16 %v1276, %v1274
    %v1307 = vpack.c.bf16 %v1279, %v1277
    %v1308 = vpack.c.bf16 %v1280, %v1278
    %v1309 = vld [vmem:[%s6] sm:$0xff]
    %v1310 = vld [vmem:[%s6 + $0x8] sm:$0xff]
    %v1311 = vld [vmem:[%s6 + $0x10] sm:$0xff]
    %v1312 = vld [vmem:[%s6 + $0x18] sm:$0xff]
    %v1313 = vld [vmem:[%s6 + $0x20] sm:$0xff]
    %v1314 = vld [vmem:[%s6 + $0x28] sm:$0xff]
    %v1315 = vld [vmem:[%s6 + $0x30] sm:$0xff]
    %v1316 = vld [vmem:[%s6 + $0x38] sm:$0xff]
    %v1317 = vld [vmem:[%s6 + $0x40] sm:$0xff]
    %v1318 = vld [vmem:[%s6 + $0x48] sm:$0xff]
    %v1319 = vld [vmem:[%s6 + $0x50] sm:$0xff]
    %v1320 = vld [vmem:[%s6 + $0x58] sm:$0xff]
    %v1321 = vld [vmem:[%s6 + $0x60] sm:$0xff]
    %v1322 = vld [vmem:[%s6 + $0x68] sm:$0xff]
    %v1323 = vld [vmem:[%s6 + $0x70] sm:$0xff]
    %v1324 = vld [vmem:[%s6 + $0x78] sm:$0xff]
    %v1325 = vld [vmem:[%s6 + $0x80] sm:$0xff]
    %v1326 = vld [vmem:[%s6 + $0x88] sm:$0xff]
    %v1327 = vld [vmem:[%s6 + $0x90] sm:$0xff]
    %v1328 = vld [vmem:[%s6 + $0x98] sm:$0xff]
    %v1329 = vld [vmem:[%s6 + $0xa0] sm:$0xff]
    %v1330 = vld [vmem:[%s6 + $0xa8] sm:$0xff]
    %v1331 = vld [vmem:[%s6 + $0xb0] sm:$0xff]
    %v1332 = vld [vmem:[%s6 + $0xb8] sm:$0xff]
    %v1333 = vld [vmem:[%s6 + $0xc0] sm:$0xff]
    %v1334 = vld [vmem:[%s6 + $0xc8] sm:$0xff]
    %v1335 = vld [vmem:[%s6 + $0xd0] sm:$0xff]
    %v1336 = vld [vmem:[%s6 + $0xd8] sm:$0xff]
    %v1337 = vld [vmem:[%s6 + $0xe0] sm:$0xff]
    %v1338 = vld [vmem:[%s6 + $0xe8] sm:$0xff]
    %v1339 = vld [vmem:[%s6 + $0xf0] sm:$0xff]
    %v1340 = vld [vmem:[%s6 + $0xf8] sm:$0xff]
    %v1341 = vld [vmem:[%s6 + $0x100] sm:$0xff]
    %v1342 = vld [vmem:[%s6 + $0x108] sm:$0xff]
    %v1343 = vld [vmem:[%s6 + $0x110] sm:$0xff]
    %v1344 = vld [vmem:[%s6 + $0x118] sm:$0xff]
    %v1345 = vld [vmem:[%s6 + $0x120] sm:$0xff]
    %v1346 = vld [vmem:[%s6 + $0x128] sm:$0xff]
    %v1347 = vld [vmem:[%s6 + $0x130] sm:$0xff]
    %v1348 = vld [vmem:[%s6 + $0x138] sm:$0xff]
    %v1349 = vld [vmem:[%s6 + $0x140] sm:$0xff]
    %v1350 = vld [vmem:[%s6 + $0x148] sm:$0xff]
    %v1351 = vld [vmem:[%s6 + $0x150] sm:$0xff]
    %v1352 = vld [vmem:[%s6 + $0x158] sm:$0xff]
    %v1353 = vld [vmem:[%s6 + $0x160] sm:$0xff]
    %v1354 = vld [vmem:[%s6 + $0x168] sm:$0xff]
    %v1355 = vld [vmem:[%s6 + $0x170] sm:$0xff]
    %v1356 = vld [vmem:[%s6 + $0x178] sm:$0xff]
    %v1357 = vld [vmem:[%s6 + $0x180] sm:$0xff]
    %v1358 = vld [vmem:[%s6 + $0x188] sm:$0xff]
    %v1359 = vld [vmem:[%s6 + $0x190] sm:$0xff]
    %v1360 = vld [vmem:[%s6 + $0x198] sm:$0xff]
    %v1361 = vld [vmem:[%s6 + $0x1a0] sm:$0xff]
    %v1362 = vld [vmem:[%s6 + $0x1a8] sm:$0xff]
    %v1363 = vld [vmem:[%s6 + $0x1b0] sm:$0xff]
    %v1364 = vld [vmem:[%s6 + $0x1b8] sm:$0xff]
    %v1365 = vld [vmem:[%s6 + $0x1c0] sm:$0xff]
    %v1366 = vld [vmem:[%s6 + $0x1c8] sm:$0xff]
    %v1367 = vld [vmem:[%s6 + $0x1d0] sm:$0xff]
    %v1368 = vld [vmem:[%s6 + $0x1d8] sm:$0xff]
    %v1369 = vld [vmem:[%s6 + $0x1e0] sm:$0xff]
    %v1370 = vld [vmem:[%s6 + $0x1e8] sm:$0xff]
    %v1371 = vld [vmem:[%s6 + $0x1f0] sm:$0xff]
    %v1372 = vld [vmem:[%s6 + $0x1f8] sm:$0xff]
    %s1373 = scalar_lea.vmem %s6, 512
    %v1374 = vld [vmem:[%s1373] sm:$0xff]
    %v1375 = vld [vmem:[%s1373 + $0x8] sm:$0xff]
    %v1376 = vld [vmem:[%s1373 + $0x10] sm:$0xff]
    %v1377 = vld [vmem:[%s1373 + $0x18] sm:$0xff]
    %v1378 = vld [vmem:[%s1373 + $0x20] sm:$0xff]
    %v1379 = vld [vmem:[%s1373 + $0x28] sm:$0xff]
    %v1380 = vld [vmem:[%s1373 + $0x30] sm:$0xff]
    %v1381 = vld [vmem:[%s1373 + $0x38] sm:$0xff]
    %v1382 = vld [vmem:[%s1373 + $0x40] sm:$0xff]
    %v1383 = vld [vmem:[%s1373 + $0x48] sm:$0xff]
    %v1384 = vld [vmem:[%s1373 + $0x50] sm:$0xff]
    %v1385 = vld [vmem:[%s1373 + $0x58] sm:$0xff]
    %v1386 = vld [vmem:[%s1373 + $0x60] sm:$0xff]
    %v1387 = vld [vmem:[%s1373 + $0x68] sm:$0xff]
    %v1388 = vld [vmem:[%s1373 + $0x70] sm:$0xff]
    %v1389 = vld [vmem:[%s1373 + $0x78] sm:$0xff]
    %v1390 = vld [vmem:[%s1373 + $0x80] sm:$0xff]
    %v1391 = vld [vmem:[%s1373 + $0x88] sm:$0xff]
    %v1392 = vld [vmem:[%s1373 + $0x90] sm:$0xff]
    %v1393 = vld [vmem:[%s1373 + $0x98] sm:$0xff]
    %v1394 = vld [vmem:[%s1373 + $0xa0] sm:$0xff]
    %v1395 = vld [vmem:[%s1373 + $0xa8] sm:$0xff]
    %v1396 = vld [vmem:[%s1373 + $0xb0] sm:$0xff]
    %v1397 = vld [vmem:[%s1373 + $0xb8] sm:$0xff]
    %v1398 = vld [vmem:[%s1373 + $0xc0] sm:$0xff]
    %v1399 = vld [vmem:[%s1373 + $0xc8] sm:$0xff]
    %v1400 = vld [vmem:[%s1373 + $0xd0] sm:$0xff]
    %v1401 = vld [vmem:[%s1373 + $0xd8] sm:$0xff]
    %v1402 = vld [vmem:[%s1373 + $0xe0] sm:$0xff]
    %v1403 = vld [vmem:[%s1373 + $0xe8] sm:$0xff]
    %v1404 = vld [vmem:[%s1373 + $0xf0] sm:$0xff]
    %v1405 = vld [vmem:[%s1373 + $0xf8] sm:$0xff]
    %v1406 = vld [vmem:[%s1373 + $0x100] sm:$0xff]
    %v1407 = vld [vmem:[%s1373 + $0x108] sm:$0xff]
    %v1408 = vld [vmem:[%s1373 + $0x110] sm:$0xff]
    %v1409 = vld [vmem:[%s1373 + $0x118] sm:$0xff]
    %v1410 = vld [vmem:[%s1373 + $0x120] sm:$0xff]
    %v1411 = vld [vmem:[%s1373 + $0x128] sm:$0xff]
    %v1412 = vld [vmem:[%s1373 + $0x130] sm:$0xff]
    %v1413 = vld [vmem:[%s1373 + $0x138] sm:$0xff]
    %v1414 = vld [vmem:[%s1373 + $0x140] sm:$0xff]
    %v1415 = vld [vmem:[%s1373 + $0x148] sm:$0xff]
    %v1416 = vld [vmem:[%s1373 + $0x150] sm:$0xff]
    %v1417 = vld [vmem:[%s1373 + $0x158] sm:$0xff]
    %v1418 = vld [vmem:[%s1373 + $0x160] sm:$0xff]
    %v1419 = vld [vmem:[%s1373 + $0x168] sm:$0xff]
    %v1420 = vld [vmem:[%s1373 + $0x170] sm:$0xff]
    %v1421 = vld [vmem:[%s1373 + $0x178] sm:$0xff]
    %v1422 = vld [vmem:[%s1373 + $0x180] sm:$0xff]
    %v1423 = vld [vmem:[%s1373 + $0x188] sm:$0xff]
    %v1424 = vld [vmem:[%s1373 + $0x190] sm:$0xff]
    %v1425 = vld [vmem:[%s1373 + $0x198] sm:$0xff]
    %v1426 = vld [vmem:[%s1373 + $0x1a0] sm:$0xff]
    %v1427 = vld [vmem:[%s1373 + $0x1a8] sm:$0xff]
    %v1428 = vld [vmem:[%s1373 + $0x1b0] sm:$0xff]
    %v1429 = vld [vmem:[%s1373 + $0x1b8] sm:$0xff]
    %v1430 = vld [vmem:[%s1373 + $0x1c0] sm:$0xff]
    %v1431 = vld [vmem:[%s1373 + $0x1c8] sm:$0xff]
    %v1432 = vld [vmem:[%s1373 + $0x1d0] sm:$0xff]
    %v1433 = vld [vmem:[%s1373 + $0x1d8] sm:$0xff]
    %v1434 = vld [vmem:[%s1373 + $0x1e0] sm:$0xff]
    %v1435 = vld [vmem:[%s1373 + $0x1e8] sm:$0xff]
    %v1436 = vld [vmem:[%s1373 + $0x1f0] sm:$0xff]
    %v1437 = vld [vmem:[%s1373 + $0x1f8] sm:$0xff]
    %vm1438 = vsmask.f32 7424
    %v1440 = vshrl.u32 %v1285, 16
    %v1442 = vshll.u32 %v1285, 16
    %v1444 = vrot.slane %v1442, 1
    %v1445 = vor.u32 %v1440, %v1444
    %v1447 = vshll.u32 %v1287, 16
    %v1449 = vrot.slane %v1447, 1
    %v1450 = vsel %vm1438, %v1445, %v1449
    %v1452 = vshrl.u32 %v1286, 16
    %v1454 = vshll.u32 %v1286, 16
    %v1456 = vrot.slane %v1454, 1
    %v1457 = vor.u32 %v1452, %v1456
    %v1459 = vshll.u32 %v1288, 16
    %v1461 = vrot.slane %v1459, 1
    %v1462 = vsel %vm1438, %v1457, %v1461
    %v1463 = vshrl.u32 %v1287, 16
    %v1465 = vor.u32 %v1463, %v1449
    %v1467 = vshll.u32 %v1289, 16
    %v1469 = vrot.slane %v1467, 1
    %v1470 = vsel %vm1438, %v1465, %v1469
    %v1471 = vshrl.u32 %v1288, 16
    %v1473 = vor.u32 %v1471, %v1461
    %v1475 = vshll.u32 %v1290, 16
    %v1477 = vrot.slane %v1475, 1
    %v1478 = vsel %vm1438, %v1473, %v1477
    %v1479 = vshrl.u32 %v1289, 16
    %v1481 = vor.u32 %v1479, %v1469
    %v1483 = vshll.u32 %v1291, 16
    %v1485 = vrot.slane %v1483, 1
    %v1486 = vsel %vm1438, %v1481, %v1485
    %v1487 = vshrl.u32 %v1290, 16
    %v1489 = vor.u32 %v1487, %v1477
    %v1491 = vshll.u32 %v1292, 16
    %v1493 = vrot.slane %v1491, 1
    %v1494 = vsel %vm1438, %v1489, %v1493
    %v1495 = vshrl.u32 %v1291, 16
    %v1497 = vor.u32 %v1495, %v1485
    %v1499 = vshll.u32 %v1293, 16
    %v1501 = vrot.slane %v1499, 1
    %v1502 = vsel %vm1438, %v1497, %v1501
    %v1503 = vshrl.u32 %v1292, 16
    %v1505 = vor.u32 %v1503, %v1493
    %v1507 = vshll.u32 %v1294, 16
    %v1509 = vrot.slane %v1507, 1
    %v1510 = vsel %vm1438, %v1505, %v1509
    %v1511 = vshrl.u32 %v1293, 16
    %v1513 = vor.u32 %v1511, %v1501
    %v1515 = vshll.u32 %v1295, 16
    %v1517 = vrot.slane %v1515, 1
    %v1518 = vsel %vm1438, %v1513, %v1517
    %v1519 = vshrl.u32 %v1294, 16
    %v1521 = vor.u32 %v1519, %v1509
    %v1523 = vshll.u32 %v1296, 16
    %v1525 = vrot.slane %v1523, 1
    %v1526 = vsel %vm1438, %v1521, %v1525
    %v1527 = vshrl.u32 %v1295, 16
    %v1529 = vor.u32 %v1527, %v1517
    %v1531 = vshll.u32 %v1297, 16
    %v1533 = vrot.slane %v1531, 1
    %v1534 = vsel %vm1438, %v1529, %v1533
    %v1535 = vshrl.u32 %v1296, 16
    %v1537 = vor.u32 %v1535, %v1525
    %v1539 = vshll.u32 %v1298, 16
    %v1541 = vrot.slane %v1539, 1
    %v1542 = vsel %vm1438, %v1537, %v1541
    %v1543 = vshrl.u32 %v1297, 16
    %v1545 = vor.u32 %v1543, %v1533
    %v1547 = vshll.u32 %v1299, 16
    %v1549 = vrot.slane %v1547, 1
    %v1550 = vsel %vm1438, %v1545, %v1549
    %v1551 = vshrl.u32 %v1298, 16
    %v1553 = vor.u32 %v1551, %v1541
    %v1555 = vshll.u32 %v1300, 16
    %v1557 = vrot.slane %v1555, 1
    %v1558 = vsel %vm1438, %v1553, %v1557
    %v1559 = vshrl.u32 %v1299, 16
    %v1561 = vor.u32 %v1559, %v1549
    %v1563 = vshll.u32 %v1301, 16
    %v1565 = vrot.slane %v1563, 1
    %v1566 = vsel %vm1438, %v1561, %v1565
    %v1567 = vshrl.u32 %v1300, 16
    %v1569 = vor.u32 %v1567, %v1557
    %v1571 = vshll.u32 %v1302, 16
    %v1573 = vrot.slane %v1571, 1
    %v1574 = vsel %vm1438, %v1569, %v1573
    %v1575 = vshrl.u32 %v1301, 16
    %v1577 = vor.u32 %v1575, %v1565
    %v1579 = vshll.u32 %v1303, 16
    %v1581 = vrot.slane %v1579, 1
    %v1582 = vsel %vm1438, %v1577, %v1581
    %v1583 = vshrl.u32 %v1302, 16
    %v1585 = vor.u32 %v1583, %v1573
    %v1587 = vshll.u32 %v1304, 16
    %v1589 = vrot.slane %v1587, 1
    %v1590 = vsel %vm1438, %v1585, %v1589
    %v1591 = vshrl.u32 %v1303, 16
    %v1593 = vor.u32 %v1591, %v1581
    %v1595 = vshll.u32 %v1305, 16
    %v1597 = vrot.slane %v1595, 1
    %v1598 = vsel %vm1438, %v1593, %v1597
    %v1599 = vshrl.u32 %v1304, 16
    %v1601 = vor.u32 %v1599, %v1589
    %v1603 = vshll.u32 %v1306, 16
    %v1605 = vrot.slane %v1603, 1
    %v1606 = vsel %vm1438, %v1601, %v1605
    %v1607 = vshrl.u32 %v1305, 16
    %v1609 = vor.u32 %v1607, %v1597
    %v1611 = vshll.u32 %v1307, 16
    %v1613 = vrot.slane %v1611, 1
    %v1614 = vsel %vm1438, %v1609, %v1613
    %v1615 = vshrl.u32 %v1306, 16
    %v1617 = vor.u32 %v1615, %v1605
    %v1619 = vshll.u32 %v1308, 16
    %v1621 = vrot.slane %v1619, 1
    %v1622 = vsel %vm1438, %v1617, %v1621
    %v1623 = vshrl.u32 %v1307, 16
    %v1625 = vor.u32 %v1623, %v1613
    %v1626 = vshrl.u32 %v1308, 16
    %v1628 = vor.u32 %v1626, %v1621
    %v1717 = vunpack.c.l.b16 %v1374
    %v1718 = vunpack.c.h.b16 %v1374
    %v1719 = vunpack.c.l.b16 %v1375
    %v1720 = vunpack.c.h.b16 %v1375
    %v1721 = vunpack.c.l.b16 %v1376
    %v1722 = vunpack.c.h.b16 %v1376
    %v1723 = vunpack.c.l.b16 %v1377
    %v1724 = vunpack.c.h.b16 %v1377
    %v1725 = vunpack.c.l.b16 %v1378
    %v1726 = vunpack.c.h.b16 %v1378
    %v1727 = vunpack.c.l.b16 %v1379
    %v1728 = vunpack.c.h.b16 %v1379
    %v1729 = vunpack.c.l.b16 %v1380
    %v1730 = vunpack.c.h.b16 %v1380
    %v1731 = vunpack.c.l.b16 %v1381
    %v1732 = vunpack.c.h.b16 %v1381
    %v1733 = vunpack.c.l.b16 %v1382
    %v1734 = vunpack.c.h.b16 %v1382
    %v1735 = vunpack.c.l.b16 %v1383
    %v1736 = vunpack.c.h.b16 %v1383
    %v1737 = vunpack.c.l.b16 %v1384
    %v1738 = vunpack.c.h.b16 %v1384
    %v1739 = vunpack.c.l.b16 %v1385
    %v1740 = vunpack.c.h.b16 %v1385
    %v1741 = vunpack.c.l.b16 %v1386
    %v1742 = vunpack.c.h.b16 %v1386
    %v1743 = vunpack.c.l.b16 %v1387
    %v1744 = vunpack.c.h.b16 %v1387
    %v1745 = vunpack.c.l.b16 %v1388
    %v1746 = vunpack.c.h.b16 %v1388
    %v1747 = vunpack.c.l.b16 %v1389
    %v1748 = vunpack.c.h.b16 %v1389
    %v1749 = vunpack.c.l.b16 %v1390
    %v1750 = vunpack.c.h.b16 %v1390
    %v1751 = vunpack.c.l.b16 %v1391
    %v1752 = vunpack.c.h.b16 %v1391
    %v1753 = vunpack.c.l.b16 %v1392
    %v1754 = vunpack.c.h.b16 %v1392
    %v1755 = vunpack.c.l.b16 %v1393
    %v1756 = vunpack.c.h.b16 %v1393
    %v1757 = vunpack.c.l.b16 %v1394
    %v1758 = vunpack.c.h.b16 %v1394
    %v1759 = vunpack.c.l.b16 %v1395
    %v1760 = vunpack.c.h.b16 %v1395
    %v1761 = vunpack.c.l.b16 %v1396
    %v1762 = vunpack.c.h.b16 %v1396
    %v1763 = vunpack.c.l.b16 %v1397
    %v1764 = vunpack.c.h.b16 %v1397
    %v1765 = vunpack.c.l.b16 %v1398
    %v1766 = vunpack.c.h.b16 %v1398
    %v1767 = vunpack.c.l.b16 %v1399
    %v1768 = vunpack.c.h.b16 %v1399
    %v1769 = vunpack.c.l.b16 %v1400
    %v1770 = vunpack.c.h.b16 %v1400
    %v1771 = vunpack.c.l.b16 %v1401
    %v1772 = vunpack.c.h.b16 %v1401
    %v1773 = vunpack.c.l.b16 %v1402
    %v1774 = vunpack.c.h.b16 %v1402
    %v1775 = vunpack.c.l.b16 %v1403
    %v1776 = vunpack.c.h.b16 %v1403
    %v1777 = vunpack.c.l.b16 %v1404
    %v1778 = vunpack.c.h.b16 %v1404
    %v1779 = vunpack.c.l.b16 %v1405
    %v1780 = vunpack.c.h.b16 %v1405
    %v1781 = vunpack.c.l.b16 %v1406
    %v1782 = vunpack.c.h.b16 %v1406
    %v1783 = vunpack.c.l.b16 %v1407
    %v1784 = vunpack.c.h.b16 %v1407
    %v1785 = vunpack.c.l.b16 %v1408
    %v1786 = vunpack.c.h.b16 %v1408
    %v1787 = vunpack.c.l.b16 %v1409
    %v1788 = vunpack.c.h.b16 %v1409
    %v1789 = vunpack.c.l.b16 %v1410
    %v1790 = vunpack.c.h.b16 %v1410
    %v1791 = vunpack.c.l.b16 %v1411
    %v1792 = vunpack.c.h.b16 %v1411
    %v1793 = vunpack.c.l.b16 %v1412
    %v1794 = vunpack.c.h.b16 %v1412
    %v1795 = vunpack.c.l.b16 %v1413
    %v1796 = vunpack.c.h.b16 %v1413
    %v1797 = vunpack.c.l.b16 %v1414
    %v1798 = vunpack.c.h.b16 %v1414
    %v1799 = vunpack.c.l.b16 %v1415
    %v1800 = vunpack.c.h.b16 %v1415
    %v1801 = vunpack.c.l.b16 %v1416
    %v1802 = vunpack.c.h.b16 %v1416
    %v1803 = vunpack.c.l.b16 %v1417
    %v1804 = vunpack.c.h.b16 %v1417
    %v1805 = vunpack.c.l.b16 %v1418
    %v1806 = vunpack.c.h.b16 %v1418
    %v1807 = vunpack.c.l.b16 %v1419
    %v1808 = vunpack.c.h.b16 %v1419
    %v1809 = vunpack.c.l.b16 %v1420
    %v1810 = vunpack.c.h.b16 %v1420
    %v1811 = vunpack.c.l.b16 %v1421
    %v1812 = vunpack.c.h.b16 %v1421
    %v1813 = vunpack.c.l.b16 %v1422
    %v1814 = vunpack.c.h.b16 %v1422
    %v1815 = vunpack.c.l.b16 %v1423
    %v1816 = vunpack.c.h.b16 %v1423
    %v1817 = vunpack.c.l.b16 %v1424
    %v1818 = vunpack.c.h.b16 %v1424
    %v1819 = vunpack.c.l.b16 %v1425
    %v1820 = vunpack.c.h.b16 %v1425
    %v1821 = vunpack.c.l.b16 %v1426
    %v1822 = vunpack.c.h.b16 %v1426
    %v1823 = vunpack.c.l.b16 %v1427
    %v1824 = vunpack.c.h.b16 %v1427
    %v1825 = vunpack.c.l.b16 %v1428
    %v1826 = vunpack.c.h.b16 %v1428
    %v1827 = vunpack.c.l.b16 %v1429
    %v1828 = vunpack.c.h.b16 %v1429
    %v1829 = vunpack.c.l.b16 %v1430
    %v1830 = vunpack.c.h.b16 %v1430
    %v1831 = vunpack.c.l.b16 %v1431
    %v1832 = vunpack.c.h.b16 %v1431
    %v1833 = vunpack.c.l.b16 %v1432
    %v1834 = vunpack.c.h.b16 %v1432
    %v1835 = vunpack.c.l.b16 %v1433
    %v1836 = vunpack.c.h.b16 %v1433
    %v1837 = vunpack.c.l.b16 %v1434
    %v1838 = vunpack.c.h.b16 %v1434
    %v1839 = vunpack.c.l.b16 %v1435
    %v1840 = vunpack.c.h.b16 %v1435
    %v1841 = vunpack.c.l.b16 %v1436
    %v1842 = vunpack.c.h.b16 %v1436
    %v1843 = vunpack.c.l.b16 %v1437
    %v1844 = vunpack.c.h.b16 %v1437
    %v1845 = vpack.c.b16 %v1721, %v1717
    %v1846 = vpack.c.b16 %v1722, %v1718
    %v1847 = vpack.c.b16 %v1723, %v1719
    %v1848 = vpack.c.b16 %v1724, %v1720
    %v1849 = vpack.c.b16 %v1729, %v1725
    %v1850 = vpack.c.b16 %v1730, %v1726
    %v1851 = vpack.c.b16 %v1731, %v1727
    %v1852 = vpack.c.b16 %v1732, %v1728
    %v1853 = vpack.c.b16 %v1737, %v1733
    %v1854 = vpack.c.b16 %v1738, %v1734
    %v1855 = vpack.c.b16 %v1739, %v1735
    %v1856 = vpack.c.b16 %v1740, %v1736
    %v1857 = vpack.c.b16 %v1745, %v1741
    %v1858 = vpack.c.b16 %v1746, %v1742
    %v1859 = vpack.c.b16 %v1747, %v1743
    %v1860 = vpack.c.b16 %v1748, %v1744
    %v1861 = vpack.c.b16 %v1753, %v1749
    %v1862 = vpack.c.b16 %v1754, %v1750
    %v1863 = vpack.c.b16 %v1755, %v1751
    %v1864 = vpack.c.b16 %v1756, %v1752
    %v1865 = vpack.c.b16 %v1761, %v1757
    %v1866 = vpack.c.b16 %v1762, %v1758
    %v1867 = vpack.c.b16 %v1763, %v1759
    %v1868 = vpack.c.b16 %v1764, %v1760
    %v1869 = vpack.c.b16 %v1769, %v1765
    %v1870 = vpack.c.b16 %v1770, %v1766
    %v1871 = vpack.c.b16 %v1771, %v1767
    %v1872 = vpack.c.b16 %v1772, %v1768
    %v1873 = vpack.c.b16 %v1777, %v1773
    %v1874 = vpack.c.b16 %v1778, %v1774
    %v1875 = vpack.c.b16 %v1779, %v1775
    %v1876 = vpack.c.b16 %v1780, %v1776
    %v1877 = vpack.c.b16 %v1785, %v1781
    %v1878 = vpack.c.b16 %v1786, %v1782
    %v1879 = vpack.c.b16 %v1787, %v1783
    %v1880 = vpack.c.b16 %v1788, %v1784
    %v1881 = vpack.c.b16 %v1793, %v1789
    %v1882 = vpack.c.b16 %v1794, %v1790
    %v1883 = vpack.c.b16 %v1795, %v1791
    %v1884 = vpack.c.b16 %v1796, %v1792
    %v1885 = vpack.c.b16 %v1801, %v1797
    %v1886 = vpack.c.b16 %v1802, %v1798
    %v1887 = vpack.c.b16 %v1803, %v1799
    %v1888 = vpack.c.b16 %v1804, %v1800
    %v1889 = vpack.c.b16 %v1809, %v1805
    %v1890 = vpack.c.b16 %v1810, %v1806
    %v1891 = vpack.c.b16 %v1811, %v1807
    %v1892 = vpack.c.b16 %v1812, %v1808
    %v1893 = vpack.c.b16 %v1817, %v1813
    %v1894 = vpack.c.b16 %v1818, %v1814
    %v1895 = vpack.c.b16 %v1819, %v1815
    %v1896 = vpack.c.b16 %v1820, %v1816
    %v1897 = vpack.c.b16 %v1825, %v1821
    %v1898 = vpack.c.b16 %v1826, %v1822
    %v1899 = vpack.c.b16 %v1827, %v1823
    %v1900 = vpack.c.b16 %v1828, %v1824
    %v1901 = vpack.c.b16 %v1833, %v1829
    %v1902 = vpack.c.b16 %v1834, %v1830
    %v1903 = vpack.c.b16 %v1835, %v1831
    %v1904 = vpack.c.b16 %v1836, %v1832
    %v1905 = vpack.c.b16 %v1841, %v1837
    %v1906 = vpack.c.b16 %v1842, %v1838
    %v1907 = vpack.c.b16 %v1843, %v1839
    %v1908 = vpack.c.b16 %v1844, %v1840
    %1973 = vmatprep.subr.bf16.mxu0 %v1846
    %1974 = vmatpush1.bf16.msra.mxu0 %v1845
    %1975 = vmatprep.subr.bf16.mxu0 %v1850
    %1976 = vmatpush1.bf16.msra.mxu0 %v1849
    %1977 = vmatprep.subr.bf16.mxu0 %v1854
    %1978 = vmatpush1.bf16.msra.mxu0 %v1853
    %1979 = vmatprep.subr.bf16.mxu0 %v1858
    %1980 = vmatpush1.bf16.msra.mxu0 %v1857
    %1981 = vmatprep.subr.bf16.mxu0 %v1862
    %1982 = vmatpush1.bf16.msra.mxu0 %v1861
    %1983 = vmatprep.subr.bf16.mxu0 %v1866
    %1984 = vmatpush1.bf16.msra.mxu0 %v1865
    %1985 = vmatprep.subr.bf16.mxu0 %v1870
    %1986 = vmatpush1.bf16.msra.mxu0 %v1869
    %1987 = vmatprep.subr.bf16.mxu0 %v1874
    %1988 = vmatpush1.bf16.msra.mxu0 %v1873
    %1989 = vmatprep.subr.bf16.mxu0 %v1878
    %1990 = vmatpush1.bf16.msra.mxu0 %v1877
    %1991 = vmatprep.subr.bf16.mxu0 %v1882
    %1992 = vmatpush1.bf16.msra.mxu0 %v1881
    %1993 = vmatprep.subr.bf16.mxu0 %v1886
    %1994 = vmatpush1.bf16.msra.mxu0 %v1885
    %1995 = vmatprep.subr.bf16.mxu0 %v1890
    %1996 = vmatpush1.bf16.msra.mxu0 %v1889
    %1997 = vmatprep.subr.bf16.mxu0 %v1894
    %1998 = vmatpush1.bf16.msra.mxu0 %v1893
    %1999 = vmatprep.subr.bf16.mxu0 %v1898
    %2000 = vmatpush1.bf16.msra.mxu0 %v1897
    %2001 = vmatprep.subr.bf16.mxu0 %v1902
    %2002 = vmatpush1.bf16.msra.mxu0 %v1901
    %2003 = vmatprep.subr.bf16.mxu0 %v1906
    %2004 = vmatpush1.bf16.msra.mxu0 %v1905
    %2005 = vmatprep.mubr.bf16.mxu0 %v1462
    %2006 = vmatmul.mubr.bf16.gmra.mrb[0].mxu0 %v1450
    %v2007 = vpop.f32.mrb[0].mxu0
    %v2008 = vadd.f32 0.0, %v2007
    %v2009 = vpop.f32.mrb[0].mxu0
    %v2010 = vadd.f32 0.0, %v2009
    %v2011 = vpop.f32.mrb[0].mxu0
    %v2012 = vadd.f32 0.0, %v2011
    %v2013 = vpop.f32.mrb[0].mxu0
    %v2014 = vadd.f32 0.0, %v2013
    %2015 = vmatprep.mubr.bf16.mxu0 %v1478
    %2016 = vmatmul.mubr.bf16.gmra.mrb[0].mxu0 %v1470
    %v2017 = vpop.f32.mrb[0].mxu0
    %v2018 = vadd.f32 0.0, %v2017
    %v2019 = vpop.f32.mrb[0].mxu0
    %v2020 = vadd.f32 0.0, %v2019
    %v2021 = vpop.f32.mrb[0].mxu0
    %v2022 = vadd.f32 0.0, %v2021
    %v2023 = vpop.f32.mrb[0].mxu0
    %v2024 = vadd.f32 0.0, %v2023
    %2025 = vmatprep.mubr.bf16.mxu0 %v1494
    %2026 = vmatmul.mubr.bf16.gmra.mrb[0].mxu0 %v1486
    %v2027 = vpop.f32.mrb[0].mxu0
    %v2028 = vadd.f32 0.0, %v2027
    %v2029 = vpop.f32.mrb[0].mxu0
    %v2030 = vadd.f32 0.0, %v2029
    %v2031 = vpop.f32.mrb[0].mxu0
    %v2032 = vadd.f32 0.0, %v2031
    %v2033 = vpop.f32.mrb[0].mxu0
    %v2034 = vadd.f32 0.0, %v2033
    %2035 = vmatprep.mubr.bf16.mxu0 %v1510
    %2036 = vmatmul.mubr.bf16.gmra.mrb[0].mxu0 %v1502
    %v2037 = vpop.f32.mrb[0].mxu0
    %v2038 = vadd.f32 0.0, %v2037
    %v2039 = vpop.f32.mrb[0].mxu0
    %v2040 = vadd.f32 0.0, %v2039
    %v2041 = vpop.f32.mrb[0].mxu0
    %v2042 = vadd.f32 0.0, %v2041
    %v2043 = vpop.f32.mrb[0].mxu0
    %v2044 = vadd.f32 0.0, %v2043
    %2045 = vmatprep.mubr.bf16.mxu0 %v1526
    %2046 = vmatmul.mubr.bf16.gmra.mrb[0].mxu0 %v1518
    %v2047 = vpop.f32.mrb[0].mxu0
    %v2048 = vadd.f32 0.0, %v2047
    %v2049 = vpop.f32.mrb[0].mxu0
    %v2050 = vadd.f32 0.0, %v2049
    %v2051 = vpop.f32.mrb[0].mxu0
    %v2052 = vadd.f32 0.0, %v2051
    %v2053 = vpop.f32.mrb[0].mxu0
    %v2054 = vadd.f32 0.0, %v2053
    %2055 = vmatprep.mubr.bf16.mxu0 %v1542
    %2056 = vmatmul.mubr.bf16.gmra.mrb[0].mxu0 %v1534
    %v2057 = vpop.f32.mrb[0].mxu0
    %v2058 = vadd.f32 0.0, %v2057
    %v2059 = vpop.f32.mrb[0].mxu0
    %v2060 = vadd.f32 0.0, %v2059
    %v2061 = vpop.f32.mrb[0].mxu0
    %v2062 = vadd.f32 0.0, %v2061
    %v2063 = vpop.f32.mrb[0].mxu0
    %v2064 = vadd.f32 0.0, %v2063
    %2065 = vmatprep.mubr.bf16.mxu0 %v1558
    %2066 = vmatmul.mubr.bf16.gmra.mrb[0].mxu0 %v1550
    %v2067 = vpop.f32.mrb[0].mxu0
    %v2068 = vadd.f32 0.0, %v2067
    %v2069 = vpop.f32.mrb[0].mxu0
    %v2070 = vadd.f32 0.0, %v2069
    %v2071 = vpop.f32.mrb[0].mxu0
    %v2072 = vadd.f32 0.0, %v2071
    %v2073 = vpop.f32.mrb[0].mxu0
    %v2074 = vadd.f32 0.0, %v2073
    %2075 = vmatprep.mubr.bf16.mxu0 %v1574
    %2076 = vmatmul.mubr.bf16.gmra.mrb[0].mxu0 %v1566
    %v2077 = vpop.f32.mrb[0].mxu0
    %v2078 = vadd.f32 0.0, %v2077
    %v2079 = vpop.f32.mrb[0].mxu0
    %v2080 = vadd.f32 0.0, %v2079
    %v2081 = vpop.f32.mrb[0].mxu0
    %v2082 = vadd.f32 0.0, %v2081
    %v2083 = vpop.f32.mrb[0].mxu0
    %v2084 = vadd.f32 0.0, %v2083
    %2085 = vmatprep.mubr.bf16.mxu0 %v1590
    %2086 = vmatmul.mubr.bf16.gmra.mrb[0].mxu0 %v1582
    %v2087 = vpop.f32.mrb[0].mxu0
    %v2088 = vadd.f32 0.0, %v2087
    %v2089 = vpop.f32.mrb[0].mxu0
    %v2090 = vadd.f32 0.0, %v2089
    %v2091 = vpop.f32.mrb[0].mxu0
    %v2092 = vadd.f32 0.0, %v2091
    %v2093 = vpop.f32.mrb[0].mxu0
    %v2094 = vadd.f32 0.0, %v2093
    %2095 = vmatprep.mubr.bf16.mxu0 %v1606
    %2096 = vmatmul.mubr.bf16.gmra.mrb[0].mxu0 %v1598
    %v2097 = vpop.f32.mrb[0].mxu0
    %v2098 = vadd.f32 0.0, %v2097
    %v2099 = vpop.f32.mrb[0].mxu0
    %v2100 = vadd.f32 0.0, %v2099
    %v2101 = vpop.f32.mrb[0].mxu0
    %v2102 = vadd.f32 0.0, %v2101
    %v2103 = vpop.f32.mrb[0].mxu0
    %v2104 = vadd.f32 0.0, %v2103
    %2105 = vmatprep.mubr.bf16.mxu0 %v1622
    %2106 = vmatmul.mubr.bf16.gmra.mrb[0].mxu0 %v1614
    %v2107 = vpop.f32.mrb[0].mxu0
    %v2108 = vadd.f32 0.0, %v2107
    %v2109 = vpop.f32.mrb[0].mxu0
    %v2110 = vadd.f32 0.0, %v2109
    %v2111 = vpop.f32.mrb[0].mxu0
    %v2112 = vadd.f32 0.0, %v2111
    %v2113 = vpop.f32.mrb[0].mxu0
    %v2114 = vadd.f32 0.0, %v2113
    %2115 = vmatprep.mubr.bf16.mxu0 %v1628
    %2116 = vmatmul.mubr.bf16.gmra.mrb[0].mxu0 %v1625
    %v2117 = vpop.f32.mrb[0].mxu0
    %v2118 = vadd.f32 0.0, %v2117
    %v2119 = vpop.f32.mrb[0].mxu0
    %v2120 = vadd.f32 0.0, %v2119
    %v2121 = vpop.f32.mrb[0].mxu0
    %v2122 = vadd.f32 0.0, %v2121
    %v2123 = vpop.f32.mrb[0].mxu0
    %v2124 = vadd.f32 0.0, %v2123
    %2125 = vdwg.mxu0
    %2126 = vmatprep.subr.bf16.mxu0 %v1848
    %2127 = vmatpush1.bf16.msra.mxu0 %v1847
    %2128 = vmatprep.subr.bf16.mxu0 %v1852
    %2129 = vmatpush1.bf16.msra.mxu0 %v1851
    %2130 = vmatprep.subr.bf16.mxu0 %v1856
    %2131 = vmatpush1.bf16.msra.mxu0 %v1855
    %2132 = vmatprep.subr.bf16.mxu0 %v1860
    %2133 = vmatpush1.bf16.msra.mxu0 %v1859
    %2134 = vmatprep.subr.bf16.mxu0 %v1864
    %2135 = vmatpush1.bf16.msra.mxu0 %v1863
    %2136 = vmatprep.subr.bf16.mxu0 %v1868
    %2137 = vmatpush1.bf16.msra.mxu0 %v1867
    %2138 = vmatprep.subr.bf16.mxu0 %v1872
    %2139 = vmatpush1.bf16.msra.mxu0 %v1871
    %2140 = vmatprep.subr.bf16.mxu0 %v1876
    %2141 = vmatpush1.bf16.msra.mxu0 %v1875
    %2142 = vmatprep.subr.bf16.mxu0 %v1880
    %2143 = vmatpush1.bf16.msra.mxu0 %v1879
    %2144 = vmatprep.subr.bf16.mxu0 %v1884
    %2145 = vmatpush1.bf16.msra.mxu0 %v1883
    %2146 = vmatprep.subr.bf16.mxu0 %v1888
    %2147 = vmatpush1.bf16.msra.mxu0 %v1887
    %2148 = vmatprep.subr.bf16.mxu0 %v1892
    %2149 = vmatpush1.bf16.msra.mxu0 %v1891
    %2150 = vmatprep.subr.bf16.mxu0 %v1896
    %2151 = vmatpush1.bf16.msra.mxu0 %v1895
    %2152 = vmatprep.subr.bf16.mxu0 %v1900
    %2153 = vmatpush1.bf16.msra.mxu0 %v1899
    %2154 = vmatprep.subr.bf16.mxu0 %v1904
    %2155 = vmatpush1.bf16.msra.mxu0 %v1903
    %2156 = vmatprep.subr.bf16.mxu0 %v1908
    %2157 = vmatpush1.bf16.msra.mxu0 %v1907
    %2158 = vmatprep.mubr.bf16.mxu0 %v1462
    %2159 = vmatmul.mubr.bf16.gmra.mrb[0].mxu0 %v1450
    %v2160 = vpop.f32.mrb[0].mxu0
    %v2161 = vadd.f32 0.0, %v2160
    %v2162 = vpop.f32.mrb[0].mxu0
    %v2163 = vadd.f32 0.0, %v2162
    %v2164 = vpop.f32.mrb[0].mxu0
    %v2165 = vadd.f32 0.0, %v2164
    %v2166 = vpop.f32.mrb[0].mxu0
    %v2167 = vadd.f32 0.0, %v2166
    %2168 = vmatprep.mubr.bf16.mxu0 %v1478
    %2169 = vmatmul.mubr.bf16.gmra.mrb[0].mxu0 %v1470
    %v2170 = vpop.f32.mrb[0].mxu0
    %v2171 = vadd.f32 0.0, %v2170
    %v2172 = vpop.f32.mrb[0].mxu0
    %v2173 = vadd.f32 0.0, %v2172
    %v2174 = vpop.f32.mrb[0].mxu0
    %v2175 = vadd.f32 0.0, %v2174
    %v2176 = vpop.f32.mrb[0].mxu0
    %v2177 = vadd.f32 0.0, %v2176
    %2178 = vmatprep.mubr.bf16.mxu0 %v1494
    %2179 = vmatmul.mubr.bf16.gmra.mrb[0].mxu0 %v1486
    %v2180 = vpop.f32.mrb[0].mxu0
    %v2181 = vadd.f32 0.0, %v2180
    %v2182 = vpop.f32.mrb[0].mxu0
    %v2183 = vadd.f32 0.0, %v2182
    %v2184 = vpop.f32.mrb[0].mxu0
    %v2185 = vadd.f32 0.0, %v2184
    %v2186 = vpop.f32.mrb[0].mxu0
    %v2187 = vadd.f32 0.0, %v2186
    %2188 = vmatprep.mubr.bf16.mxu0 %v1510
    %2189 = vmatmul.mubr.bf16.gmra.mrb[0].mxu0 %v1502
    %v2190 = vpop.f32.mrb[0].mxu0
    %v2191 = vadd.f32 0.0, %v2190
    %v2192 = vpop.f32.mrb[0].mxu0
    %v2193 = vadd.f32 0.0, %v2192
    %v2194 = vpop.f32.mrb[0].mxu0
    %v2195 = vadd.f32 0.0, %v2194
    %v2196 = vpop.f32.mrb[0].mxu0
    %v2197 = vadd.f32 0.0, %v2196
    %2198 = vmatprep.mubr.bf16.mxu0 %v1526
    %2199 = vmatmul.mubr.bf16.gmra.mrb[0].mxu0 %v1518
    %v2200 = vpop.f32.mrb[0].mxu0
    %v2201 = vadd.f32 0.0, %v2200
    %v2202 = vpop.f32.mrb[0].mxu0
    %v2203 = vadd.f32 0.0, %v2202
    %v2204 = vpop.f32.mrb[0].mxu0
    %v2205 = vadd.f32 0.0, %v2204
    %v2206 = vpop.f32.mrb[0].mxu0
    %v2207 = vadd.f32 0.0, %v2206
    %2208 = vmatprep.mubr.bf16.mxu0 %v1542
    %2209 = vmatmul.mubr.bf16.gmra.mrb[0].mxu0 %v1534
    %v2210 = vpop.f32.mrb[0].mxu0
    %v2211 = vadd.f32 0.0, %v2210
    %v2212 = vpop.f32.mrb[0].mxu0
    %v2213 = vadd.f32 0.0, %v2212
    %v2214 = vpop.f32.mrb[0].mxu0
    %v2215 = vadd.f32 0.0, %v2214
    %v2216 = vpop.f32.mrb[0].mxu0
    %v2217 = vadd.f32 0.0, %v2216
    %2218 = vmatprep.mubr.bf16.mxu0 %v1558
    %2219 = vmatmul.mubr.bf16.gmra.mrb[0].mxu0 %v1550
    %v2220 = vpop.f32.mrb[0].mxu0
    %v2221 = vadd.f32 0.0, %v2220
    %v2222 = vpop.f32.mrb[0].mxu0
    %v2223 = vadd.f32 0.0, %v2222
    %v2224 = vpop.f32.mrb[0].mxu0
    %v2225 = vadd.f32 0.0, %v2224
    %v2226 = vpop.f32.mrb[0].mxu0
    %v2227 = vadd.f32 0.0, %v2226
    %2228 = vmatprep.mubr.bf16.mxu0 %v1574
    %2229 = vmatmul.mubr.bf16.gmra.mrb[0].mxu0 %v1566
    %v2230 = vpop.f32.mrb[0].mxu0
    %v2231 = vadd.f32 0.0, %v2230
    %v2232 = vpop.f32.mrb[0].mxu0
    %v2233 = vadd.f32 0.0, %v2232
    %v2234 = vpop.f32.mrb[0].mxu0
    %v2235 = vadd.f32 0.0, %v2234
    %v2236 = vpop.f32.mrb[0].mxu0
    %v2237 = vadd.f32 0.0, %v2236
    %2238 = vmatprep.mubr.bf16.mxu0 %v1590
    %2239 = vmatmul.mubr.bf16.gmra.mrb[0].mxu0 %v1582
    %v2240 = vpop.f32.mrb[0].mxu0
    %v2241 = vadd.f32 0.0, %v2240
    %v2242 = vpop.f32.mrb[0].mxu0
    %v2243 = vadd.f32 0.0, %v2242
    %v2244 = vpop.f32.mrb[0].mxu0
    %v2245 = vadd.f32 0.0, %v2244
    %v2246 = vpop.f32.mrb[0].mxu0
    %v2247 = vadd.f32 0.0, %v2246
    %2248 = vmatprep.mubr.bf16.mxu0 %v1606
    %2249 = vmatmul.mubr.bf16.gmra.mrb[0].mxu0 %v1598
    %v2250 = vpop.f32.mrb[0].mxu0
    %v2251 = vadd.f32 0.0, %v2250
    %v2252 = vpop.f32.mrb[0].mxu0
    %v2253 = vadd.f32 0.0, %v2252
    %v2254 = vpop.f32.mrb[0].mxu0
    %v2255 = vadd.f32 0.0, %v2254
    %v2256 = vpop.f32.mrb[0].mxu0
    %v2257 = vadd.f32 0.0, %v2256
    %2258 = vmatprep.mubr.bf16.mxu0 %v1622
    %2259 = vmatmul.mubr.bf16.gmra.mrb[0].mxu0 %v1614
    %v2260 = vpop.f32.mrb[0].mxu0
    %v2261 = vadd.f32 0.0, %v2260
    %v2262 = vpop.f32.mrb[0].mxu0
    %v2263 = vadd.f32 0.0, %v2262
    %v2264 = vpop.f32.mrb[0].mxu0
    %v2265 = vadd.f32 0.0, %v2264
    %v2266 = vpop.f32.mrb[0].mxu0
    %v2267 = vadd.f32 0.0, %v2266
    %2268 = vmatprep.mubr.bf16.mxu0 %v1628
    %2269 = vmatmul.mubr.bf16.gmra.mrb[0].mxu0 %v1625
    %v2270 = vpop.f32.mrb[0].mxu0
    %v2271 = vadd.f32 0.0, %v2270
    %v2272 = vpop.f32.mrb[0].mxu0
    %v2273 = vadd.f32 0.0, %v2272
    %v2274 = vpop.f32.mrb[0].mxu0
    %v2275 = vadd.f32 0.0, %v2274
    %v2276 = vpop.f32.mrb[0].mxu0
    %v2277 = vadd.f32 0.0, %v2276
    %2278 = vdwg.mxu0
    %v2343 = vunpack.c.l.b16 %v1309
    %v2344 = vunpack.c.h.b16 %v1309
    %v2345 = vunpack.c.l.b16 %v1310
    %v2346 = vunpack.c.h.b16 %v1310
    %v2347 = vunpack.c.l.b16 %v1311
    %v2348 = vunpack.c.h.b16 %v1311
    %v2349 = vunpack.c.l.b16 %v1312
    %v2350 = vunpack.c.h.b16 %v1312
    %v2351 = vunpack.c.l.b16 %v1313
    %v2352 = vunpack.c.h.b16 %v1313
    %v2353 = vunpack.c.l.b16 %v1314
    %v2354 = vunpack.c.h.b16 %v1314
    %v2355 = vunpack.c.l.b16 %v1315
    %v2356 = vunpack.c.h.b16 %v1315
    %v2357 = vunpack.c.l.b16 %v1316
    %v2358 = vunpack.c.h.b16 %v1316
    %v2359 = vunpack.c.l.b16 %v1317
    %v2360 = vunpack.c.h.b16 %v1317
    %v2361 = vunpack.c.l.b16 %v1318
    %v2362 = vunpack.c.h.b16 %v1318
    %v2363 = vunpack.c.l.b16 %v1319
    %v2364 = vunpack.c.h.b16 %v1319
    %v2365 = vunpack.c.l.b16 %v1320
    %v2366 = vunpack.c.h.b16 %v1320
    %v2367 = vunpack.c.l.b16 %v1321
    %v2368 = vunpack.c.h.b16 %v1321
    %v2369 = vunpack.c.l.b16 %v1322
    %v2370 = vunpack.c.h.b16 %v1322
    %v2371 = vunpack.c.l.b16 %v1323
    %v2372 = vunpack.c.h.b16 %v1323
    %v2373 = vunpack.c.l.b16 %v1324
    %v2374 = vunpack.c.h.b16 %v1324
    %v2375 = vunpack.c.l.b16 %v1325
    %v2376 = vunpack.c.h.b16 %v1325
    %v2377 = vunpack.c.l.b16 %v1326
    %v2378 = vunpack.c.h.b16 %v1326
    %v2379 = vunpack.c.l.b16 %v1327
    %v2380 = vunpack.c.h.b16 %v1327
    %v2381 = vunpack.c.l.b16 %v1328
    %v2382 = vunpack.c.h.b16 %v1328
    %v2383 = vunpack.c.l.b16 %v1329
    %v2384 = vunpack.c.h.b16 %v1329
    %v2385 = vunpack.c.l.b16 %v1330
    %v2386 = vunpack.c.h.b16 %v1330
    %v2387 = vunpack.c.l.b16 %v1331
    %v2388 = vunpack.c.h.b16 %v1331
    %v2389 = vunpack.c.l.b16 %v1332
    %v2390 = vunpack.c.h.b16 %v1332
    %v2391 = vunpack.c.l.b16 %v1333
    %v2392 = vunpack.c.h.b16 %v1333
    %v2393 = vunpack.c.l.b16 %v1334
    %v2394 = vunpack.c.h.b16 %v1334
    %v2395 = vunpack.c.l.b16 %v1335
    %v2396 = vunpack.c.h.b16 %v1335
    %v2397 = vunpack.c.l.b16 %v1336
    %v2398 = vunpack.c.h.b16 %v1336
    %v2399 = vunpack.c.l.b16 %v1337
    %v2400 = vunpack.c.h.b16 %v1337
    %v2401 = vunpack.c.l.b16 %v1338
    %v2402 = vunpack.c.h.b16 %v1338
    %v2403 = vunpack.c.l.b16 %v1339
    %v2404 = vunpack.c.h.b16 %v1339
    %v2405 = vunpack.c.l.b16 %v1340
    %v2406 = vunpack.c.h.b16 %v1340
    %v2407 = vunpack.c.l.b16 %v1341
    %v2408 = vunpack.c.h.b16 %v1341
    %v2409 = vunpack.c.l.b16 %v1342
    %v2410 = vunpack.c.h.b16 %v1342
    %v2411 = vunpack.c.l.b16 %v1343
    %v2412 = vunpack.c.h.b16 %v1343
    %v2413 = vunpack.c.l.b16 %v1344
    %v2414 = vunpack.c.h.b16 %v1344
    %v2415 = vunpack.c.l.b16 %v1345
    %v2416 = vunpack.c.h.b16 %v1345
    %v2417 = vunpack.c.l.b16 %v1346
    %v2418 = vunpack.c.h.b16 %v1346
    %v2419 = vunpack.c.l.b16 %v1347
    %v2420 = vunpack.c.h.b16 %v1347
    %v2421 = vunpack.c.l.b16 %v1348
    %v2422 = vunpack.c.h.b16 %v1348
    %v2423 = vunpack.c.l.b16 %v1349
    %v2424 = vunpack.c.h.b16 %v1349
    %v2425 = vunpack.c.l.b16 %v1350
    %v2426 = vunpack.c.h.b16 %v1350
    %v2427 = vunpack.c.l.b16 %v1351
    %v2428 = vunpack.c.h.b16 %v1351
    %v2429 = vunpack.c.l.b16 %v1352
    %v2430 = vunpack.c.h.b16 %v1352
    %v2431 = vunpack.c.l.b16 %v1353
    %v2432 = vunpack.c.h.b16 %v1353
    %v2433 = vunpack.c.l.b16 %v1354
    %v2434 = vunpack.c.h.b16 %v1354
    %v2435 = vunpack.c.l.b16 %v1355
    %v2436 = vunpack.c.h.b16 %v1355
    %v2437 = vunpack.c.l.b16 %v1356
    %v2438 = vunpack.c.h.b16 %v1356
    %v2439 = vunpack.c.l.b16 %v1357
    %v2440 = vunpack.c.h.b16 %v1357
    %v2441 = vunpack.c.l.b16 %v1358
    %v2442 = vunpack.c.h.b16 %v1358
    %v2443 = vunpack.c.l.b16 %v1359
    %v2444 = vunpack.c.h.b16 %v1359
    %v2445 = vunpack.c.l.b16 %v1360
    %v2446 = vunpack.c.h.b16 %v1360
    %v2447 = vunpack.c.l.b16 %v1361
    %v2448 = vunpack.c.h.b16 %v1361
    %v2449 = vunpack.c.l.b16 %v1362
    %v2450 = vunpack.c.h.b16 %v1362
    %v2451 = vunpack.c.l.b16 %v1363
    %v2452 = vunpack.c.h.b16 %v1363
    %v2453 = vunpack.c.l.b16 %v1364
    %v2454 = vunpack.c.h.b16 %v1364
    %v2455 = vunpack.c.l.b16 %v1365
    %v2456 = vunpack.c.h.b16 %v1365
    %v2457 = vunpack.c.l.b16 %v1366
    %v2458 = vunpack.c.h.b16 %v1366
    %v2459 = vunpack.c.l.b16 %v1367
    %v2460 = vunpack.c.h.b16 %v1367
    %v2461 = vunpack.c.l.b16 %v1368
    %v2462 = vunpack.c.h.b16 %v1368
    %v2463 = vunpack.c.l.b16 %v1369
    %v2464 = vunpack.c.h.b16 %v1369
    %v2465 = vunpack.c.l.b16 %v1370
    %v2466 = vunpack.c.h.b16 %v1370
    %v2467 = vunpack.c.l.b16 %v1371
    %v2468 = vunpack.c.h.b16 %v1371
    %v2469 = vunpack.c.l.b16 %v1372
    %v2470 = vunpack.c.h.b16 %v1372
    %v2471 = vpack.c.b16 %v2347, %v2343
    %v2472 = vpack.c.b16 %v2348, %v2344
    %v2473 = vpack.c.b16 %v2349, %v2345
    %v2474 = vpack.c.b16 %v2350, %v2346
    %v2475 = vpack.c.b16 %v2355, %v2351
    %v2476 = vpack.c.b16 %v2356, %v2352
    %v2477 = vpack.c.b16 %v2357, %v2353
    %v2478 = vpack.c.b16 %v2358, %v2354
    %v2479 = vpack.c.b16 %v2363, %v2359
    %v2480 = vpack.c.b16 %v2364, %v2360
    %v2481 = vpack.c.b16 %v2365, %v2361
    %v2482 = vpack.c.b16 %v2366, %v2362
    %v2483 = vpack.c.b16 %v2371, %v2367
    %v2484 = vpack.c.b16 %v2372, %v2368
    %v2485 = vpack.c.b16 %v2373, %v2369
    %v2486 = vpack.c.b16 %v2374, %v2370
    %v2487 = vpack.c.b16 %v2379, %v2375
    %v2488 = vpack.c.b16 %v2380, %v2376
    %v2489 = vpack.c.b16 %v2381, %v2377
    %v2490 = vpack.c.b16 %v2382, %v2378
    %v2491 = vpack.c.b16 %v2387, %v2383
    %v2492 = vpack.c.b16 %v2388, %v2384
    %v2493 = vpack.c.b16 %v2389, %v2385
    %v2494 = vpack.c.b16 %v2390, %v2386
    %v2495 = vpack.c.b16 %v2395, %v2391
    %v2496 = vpack.c.b16 %v2396, %v2392
    %v2497 = vpack.c.b16 %v2397, %v2393
    %v2498 = vpack.c.b16 %v2398, %v2394
    %v2499 = vpack.c.b16 %v2403, %v2399
    %v2500 = vpack.c.b16 %v2404, %v2400
    %v2501 = vpack.c.b16 %v2405, %v2401
    %v2502 = vpack.c.b16 %v2406, %v2402
    %v2503 = vpack.c.b16 %v2411, %v2407
    %v2504 = vpack.c.b16 %v2412, %v2408
    %v2505 = vpack.c.b16 %v2413, %v2409
    %v2506 = vpack.c.b16 %v2414, %v2410
    %v2507 = vpack.c.b16 %v2419, %v2415
    %v2508 = vpack.c.b16 %v2420, %v2416
    %v2509 = vpack.c.b16 %v2421, %v2417
    %v2510 = vpack.c.b16 %v2422, %v2418
    %v2511 = vpack.c.b16 %v2427, %v2423
    %v2512 = vpack.c.b16 %v2428, %v2424
    %v2513 = vpack.c.b16 %v2429, %v2425
    %v2514 = vpack.c.b16 %v2430, %v2426
    %v2515 = vpack.c.b16 %v2435, %v2431
    %v2516 = vpack.c.b16 %v2436, %v2432
    %v2517 = vpack.c.b16 %v2437, %v2433
    %v2518 = vpack.c.b16 %v2438, %v2434
    %v2519 = vpack.c.b16 %v2443, %v2439
    %v2520 = vpack.c.b16 %v2444, %v2440
    %v2521 = vpack.c.b16 %v2445, %v2441
    %v2522 = vpack.c.b16 %v2446, %v2442
    %v2523 = vpack.c.b16 %v2451, %v2447
    %v2524 = vpack.c.b16 %v2452, %v2448
    %v2525 = vpack.c.b16 %v2453, %v2449
    %v2526 = vpack.c.b16 %v2454, %v2450
    %v2527 = vpack.c.b16 %v2459, %v2455
    %v2528 = vpack.c.b16 %v2460, %v2456
    %v2529 = vpack.c.b16 %v2461, %v2457
    %v2530 = vpack.c.b16 %v2462, %v2458
    %v2531 = vpack.c.b16 %v2467, %v2463
    %v2532 = vpack.c.b16 %v2468, %v2464
    %v2533 = vpack.c.b16 %v2469, %v2465
    %v2534 = vpack.c.b16 %v2470, %v2466
    %2599 = vmatprep.subr.bf16.mxu0 %v2472
    %2600 = vmatpush1.bf16.msra.mxu0 %v2471
    %2601 = vmatprep.subr.bf16.mxu0 %v2476
    %2602 = vmatpush1.bf16.msra.mxu0 %v2475
    %2603 = vmatprep.subr.bf16.mxu0 %v2480
    %2604 = vmatpush1.bf16.msra.mxu0 %v2479
    %2605 = vmatprep.subr.bf16.mxu0 %v2484
    %2606 = vmatpush1.bf16.msra.mxu0 %v2483
    %2607 = vmatprep.subr.bf16.mxu0 %v2488
    %2608 = vmatpush1.bf16.msra.mxu0 %v2487
    %2609 = vmatprep.subr.bf16.mxu0 %v2492
    %2610 = vmatpush1.bf16.msra.mxu0 %v2491
    %2611 = vmatprep.subr.bf16.mxu0 %v2496
    %2612 = vmatpush1.bf16.msra.mxu0 %v2495
    %2613 = vmatprep.subr.bf16.mxu0 %v2500
    %2614 = vmatpush1.bf16.msra.mxu0 %v2499
    %2615 = vmatprep.subr.bf16.mxu0 %v2504
    %2616 = vmatpush1.bf16.msra.mxu0 %v2503
    %2617 = vmatprep.subr.bf16.mxu0 %v2508
    %2618 = vmatpush1.bf16.msra.mxu0 %v2507
    %2619 = vmatprep.subr.bf16.mxu0 %v2512
    %2620 = vmatpush1.bf16.msra.mxu0 %v2511
    %2621 = vmatprep.subr.bf16.mxu0 %v2516
    %2622 = vmatpush1.bf16.msra.mxu0 %v2515
    %2623 = vmatprep.subr.bf16.mxu0 %v2520
    %2624 = vmatpush1.bf16.msra.mxu0 %v2519
    %2625 = vmatprep.subr.bf16.mxu0 %v2524
    %2626 = vmatpush1.bf16.msra.mxu0 %v2523
    %2627 = vmatprep.subr.bf16.mxu0 %v2528
    %2628 = vmatpush1.bf16.msra.mxu0 %v2527
    %2629 = vmatprep.subr.bf16.mxu0 %v2532
    %2630 = vmatpush1.bf16.msra.mxu0 %v2531
    %2631 = vmatprep.mubr.bf16.mxu0 %v1286
    %2632 = vmatmul.mubr.bf16.gmra.mrb[0].mxu0 %v1285
    %v2633 = vpop.f32.mrb[0].mxu0
    %v2634 = vadd.f32 %v2008, %v2633
    %v2635 = vpop.f32.mrb[0].mxu0
    %v2636 = vadd.f32 %v2010, %v2635
    %v2637 = vpop.f32.mrb[0].mxu0
    %v2638 = vadd.f32 %v2012, %v2637
    %v2639 = vpop.f32.mrb[0].mxu0
    %v2640 = vadd.f32 %v2014, %v2639
    %2641 = vmatprep.mubr.bf16.mxu0 %v1288
    %2642 = vmatmul.mubr.bf16.gmra.mrb[0].mxu0 %v1287
    %v2643 = vpop.f32.mrb[0].mxu0
    %v2644 = vadd.f32 %v2018, %v2643
    %v2645 = vpop.f32.mrb[0].mxu0
    %v2646 = vadd.f32 %v2020, %v2645
    %v2647 = vpop.f32.mrb[0].mxu0
    %v2648 = vadd.f32 %v2022, %v2647
    %v2649 = vpop.f32.mrb[0].mxu0
    %v2650 = vadd.f32 %v2024, %v2649
    %2651 = vmatprep.mubr.bf16.mxu0 %v1290
    %2652 = vmatmul.mubr.bf16.gmra.mrb[0].mxu0 %v1289
    %v2653 = vpop.f32.mrb[0].mxu0
    %v2654 = vadd.f32 %v2028, %v2653
    %v2655 = vpop.f32.mrb[0].mxu0
    %v2656 = vadd.f32 %v2030, %v2655
    %v2657 = vpop.f32.mrb[0].mxu0
    %v2658 = vadd.f32 %v2032, %v2657
    %v2659 = vpop.f32.mrb[0].mxu0
    %v2660 = vadd.f32 %v2034, %v2659
    %2661 = vmatprep.mubr.bf16.mxu0 %v1292
    %2662 = vmatmul.mubr.bf16.gmra.mrb[0].mxu0 %v1291
    %v2663 = vpop.f32.mrb[0].mxu0
    %v2664 = vadd.f32 %v2038, %v2663
    %v2665 = vpop.f32.mrb[0].mxu0
    %v2666 = vadd.f32 %v2040, %v2665
    %v2667 = vpop.f32.mrb[0].mxu0
    %v2668 = vadd.f32 %v2042, %v2667
    %v2669 = vpop.f32.mrb[0].mxu0
    %v2670 = vadd.f32 %v2044, %v2669
    %2671 = vmatprep.mubr.bf16.mxu0 %v1294
    %2672 = vmatmul.mubr.bf16.gmra.mrb[0].mxu0 %v1293
    %v2673 = vpop.f32.mrb[0].mxu0
    %v2674 = vadd.f32 %v2048, %v2673
    %v2675 = vpop.f32.mrb[0].mxu0
    %v2676 = vadd.f32 %v2050, %v2675
    %v2677 = vpop.f32.mrb[0].mxu0
    %v2678 = vadd.f32 %v2052, %v2677
    %v2679 = vpop.f32.mrb[0].mxu0
    %v2680 = vadd.f32 %v2054, %v2679
    %2681 = vmatprep.mubr.bf16.mxu0 %v1296
    %2682 = vmatmul.mubr.bf16.gmra.mrb[0].mxu0 %v1295
    %v2683 = vpop.f32.mrb[0].mxu0
    %v2684 = vadd.f32 %v2058, %v2683
    %v2685 = vpop.f32.mrb[0].mxu0
    %v2686 = vadd.f32 %v2060, %v2685
    %v2687 = vpop.f32.mrb[0].mxu0
    %v2688 = vadd.f32 %v2062, %v2687
    %v2689 = vpop.f32.mrb[0].mxu0
    %v2690 = vadd.f32 %v2064, %v2689
    %2691 = vmatprep.mubr.bf16.mxu0 %v1298
    %2692 = vmatmul.mubr.bf16.gmra.mrb[0].mxu0 %v1297
    %v2693 = vpop.f32.mrb[0].mxu0
    %v2694 = vadd.f32 %v2068, %v2693
    %v2695 = vpop.f32.mrb[0].mxu0
    %v2696 = vadd.f32 %v2070, %v2695
    %v2697 = vpop.f32.mrb[0].mxu0
    %v2698 = vadd.f32 %v2072, %v2697
    %v2699 = vpop.f32.mrb[0].mxu0
    %v2700 = vadd.f32 %v2074, %v2699
    %2701 = vmatprep.mubr.bf16.mxu0 %v1300
    %2702 = vmatmul.mubr.bf16.gmra.mrb[0].mxu0 %v1299
    %v2703 = vpop.f32.mrb[0].mxu0
    %v2704 = vadd.f32 %v2078, %v2703
    %v2705 = vpop.f32.mrb[0].mxu0
    %v2706 = vadd.f32 %v2080, %v2705
    %v2707 = vpop.f32.mrb[0].mxu0
    %v2708 = vadd.f32 %v2082, %v2707
    %v2709 = vpop.f32.mrb[0].mxu0
    %v2710 = vadd.f32 %v2084, %v2709
    %2711 = vmatprep.mubr.bf16.mxu0 %v1302
    %2712 = vmatmul.mubr.bf16.gmra.mrb[0].mxu0 %v1301
    %v2713 = vpop.f32.mrb[0].mxu0
    %v2714 = vadd.f32 %v2088, %v2713
    %v2715 = vpop.f32.mrb[0].mxu0
    %v2716 = vadd.f32 %v2090, %v2715
    %v2717 = vpop.f32.mrb[0].mxu0
    %v2718 = vadd.f32 %v2092, %v2717
    %v2719 = vpop.f32.mrb[0].mxu0
    %v2720 = vadd.f32 %v2094, %v2719
    %2721 = vmatprep.mubr.bf16.mxu0 %v1304
    %2722 = vmatmul.mubr.bf16.gmra.mrb[0].mxu0 %v1303
    %v2723 = vpop.f32.mrb[0].mxu0
    %v2724 = vadd.f32 %v2098, %v2723
    %v2725 = vpop.f32.mrb[0].mxu0
    %v2726 = vadd.f32 %v2100, %v2725
    %v2727 = vpop.f32.mrb[0].mxu0
    %v2728 = vadd.f32 %v2102, %v2727
    %v2729 = vpop.f32.mrb[0].mxu0
    %v2730 = vadd.f32 %v2104, %v2729
    %2731 = vmatprep.mubr.bf16.mxu0 %v1306
    %2732 = vmatmul.mubr.bf16.gmra.mrb[0].mxu0 %v1305
    %v2733 = vpop.f32.mrb[0].mxu0
    %v2734 = vadd.f32 %v2108, %v2733
    %v2735 = vpop.f32.mrb[0].mxu0
    %v2736 = vadd.f32 %v2110, %v2735
    %v2737 = vpop.f32.mrb[0].mxu0
    %v2738 = vadd.f32 %v2112, %v2737
    %v2739 = vpop.f32.mrb[0].mxu0
    %v2740 = vadd.f32 %v2114, %v2739
    %2741 = vmatprep.mubr.bf16.mxu0 %v1308
    %2742 = vmatmul.mubr.bf16.gmra.mrb[0].mxu0 %v1307
    %v2743 = vpop.f32.mrb[0].mxu0
    %v2744 = vadd.f32 %v2118, %v2743
    %v2745 = vpop.f32.mrb[0].mxu0
    %v2746 = vadd.f32 %v2120, %v2745
    %v2747 = vpop.f32.mrb[0].mxu0
    %v2748 = vadd.f32 %v2122, %v2747
    %v2749 = vpop.f32.mrb[0].mxu0
    %v2750 = vadd.f32 %v2124, %v2749
    %2751 = vdwg.mxu0
    %2752 = vmatprep.subr.bf16.mxu0 %v2474
    %2753 = vmatpush1.bf16.msra.mxu0 %v2473
    %2754 = vmatprep.subr.bf16.mxu0 %v2478
    %2755 = vmatpush1.bf16.msra.mxu0 %v2477
    %2756 = vmatprep.subr.bf16.mxu0 %v2482
    %2757 = vmatpush1.bf16.msra.mxu0 %v2481
    %2758 = vmatprep.subr.bf16.mxu0 %v2486
    %2759 = vmatpush1.bf16.msra.mxu0 %v2485
    %2760 = vmatprep.subr.bf16.mxu0 %v2490
    %2761 = vmatpush1.bf16.msra.mxu0 %v2489
    %2762 = vmatprep.subr.bf16.mxu0 %v2494
    %2763 = vmatpush1.bf16.msra.mxu0 %v2493
    %2764 = vmatprep.subr.bf16.mxu0 %v2498
    %2765 = vmatpush1.bf16.msra.mxu0 %v2497
    %2766 = vmatprep.subr.bf16.mxu0 %v2502
    %2767 = vmatpush1.bf16.msra.mxu0 %v2501
    %2768 = vmatprep.subr.bf16.mxu0 %v2506
    %2769 = vmatpush1.bf16.msra.mxu0 %v2505
    %2770 = vmatprep.subr.bf16.mxu0 %v2510
    %2771 = vmatpush1.bf16.msra.mxu0 %v2509
    %2772 = vmatprep.subr.bf16.mxu0 %v2514
    %2773 = vmatpush1.bf16.msra.mxu0 %v2513
    %2774 = vmatprep.subr.bf16.mxu0 %v2518
    %2775 = vmatpush1.bf16.msra.mxu0 %v2517
    %2776 = vmatprep.subr.bf16.mxu0 %v2522
    %2777 = vmatpush1.bf16.msra.mxu0 %v2521
    %2778 = vmatprep.subr.bf16.mxu0 %v2526
    %2779 = vmatpush1.bf16.msra.mxu0 %v2525
    %2780 = vmatprep.subr.bf16.mxu0 %v2530
    %2781 = vmatpush1.bf16.msra.mxu0 %v2529
    %2782 = vmatprep.subr.bf16.mxu0 %v2534
    %2783 = vmatpush1.bf16.msra.mxu0 %v2533
    %2784 = vmatprep.mubr.bf16.mxu0 %v1286
    %2785 = vmatmul.mubr.bf16.gmra.mrb[0].mxu0 %v1285
    %v2786 = vpop.f32.mrb[0].mxu0
    %v2787 = vadd.f32 %v2161, %v2786
    %v2788 = vpop.f32.mrb[0].mxu0
    %v2789 = vadd.f32 %v2163, %v2788
    %v2790 = vpop.f32.mrb[0].mxu0
    %v2791 = vadd.f32 %v2165, %v2790
    %v2792 = vpop.f32.mrb[0].mxu0
    %v2793 = vadd.f32 %v2167, %v2792
    %2794 = vmatprep.mubr.bf16.mxu0 %v1288
    %2795 = vmatmul.mubr.bf16.gmra.mrb[0].mxu0 %v1287
    %v2796 = vpop.f32.mrb[0].mxu0
    %v2797 = vadd.f32 %v2171, %v2796
    %v2798 = vpop.f32.mrb[0].mxu0
    %v2799 = vadd.f32 %v2173, %v2798
    %v2800 = vpop.f32.mrb[0].mxu0
    %v2801 = vadd.f32 %v2175, %v2800
    %v2802 = vpop.f32.mrb[0].mxu0
    %v2803 = vadd.f32 %v2177, %v2802
    %2804 = vmatprep.mubr.bf16.mxu0 %v1290
    %2805 = vmatmul.mubr.bf16.gmra.mrb[0].mxu0 %v1289
    %v2806 = vpop.f32.mrb[0].mxu0
    %v2807 = vadd.f32 %v2181, %v2806
    %v2808 = vpop.f32.mrb[0].mxu0
    %v2809 = vadd.f32 %v2183, %v2808
    %v2810 = vpop.f32.mrb[0].mxu0
    %v2811 = vadd.f32 %v2185, %v2810
    %v2812 = vpop.f32.mrb[0].mxu0
    %v2813 = vadd.f32 %v2187, %v2812
    %2814 = vmatprep.mubr.bf16.mxu0 %v1292
    %2815 = vmatmul.mubr.bf16.gmra.mrb[0].mxu0 %v1291
    %v2816 = vpop.f32.mrb[0].mxu0
    %v2817 = vadd.f32 %v2191, %v2816
    %v2818 = vpop.f32.mrb[0].mxu0
    %v2819 = vadd.f32 %v2193, %v2818
    %v2820 = vpop.f32.mrb[0].mxu0
    %v2821 = vadd.f32 %v2195, %v2820
    %v2822 = vpop.f32.mrb[0].mxu0
    %v2823 = vadd.f32 %v2197, %v2822
    %2824 = vmatprep.mubr.bf16.mxu0 %v1294
    %2825 = vmatmul.mubr.bf16.gmra.mrb[0].mxu0 %v1293
    %v2826 = vpop.f32.mrb[0].mxu0
    %v2827 = vadd.f32 %v2201, %v2826
    %v2828 = vpop.f32.mrb[0].mxu0
    %v2829 = vadd.f32 %v2203, %v2828
    %v2830 = vpop.f32.mrb[0].mxu0
    %v2831 = vadd.f32 %v2205, %v2830
    %v2832 = vpop.f32.mrb[0].mxu0
    %v2833 = vadd.f32 %v2207, %v2832
    %2834 = vmatprep.mubr.bf16.mxu0 %v1296
    %2835 = vmatmul.mubr.bf16.gmra.mrb[0].mxu0 %v1295
    %v2836 = vpop.f32.mrb[0].mxu0
    %v2837 = vadd.f32 %v2211, %v2836
    %v2838 = vpop.f32.mrb[0].mxu0
    %v2839 = vadd.f32 %v2213, %v2838
    %v2840 = vpop.f32.mrb[0].mxu0
    %v2841 = vadd.f32 %v2215, %v2840
    %v2842 = vpop.f32.mrb[0].mxu0
    %v2843 = vadd.f32 %v2217, %v2842
    %2844 = vmatprep.mubr.bf16.mxu0 %v1298
    %2845 = vmatmul.mubr.bf16.gmra.mrb[0].mxu0 %v1297
    %v2846 = vpop.f32.mrb[0].mxu0
    %v2847 = vadd.f32 %v2221, %v2846
    %v2848 = vpop.f32.mrb[0].mxu0
    %v2849 = vadd.f32 %v2223, %v2848
    %v2850 = vpop.f32.mrb[0].mxu0
    %v2851 = vadd.f32 %v2225, %v2850
    %v2852 = vpop.f32.mrb[0].mxu0
    %v2853 = vadd.f32 %v2227, %v2852
    %2854 = vmatprep.mubr.bf16.mxu0 %v1300
    %2855 = vmatmul.mubr.bf16.gmra.mrb[0].mxu0 %v1299
    %v2856 = vpop.f32.mrb[0].mxu0
    %v2857 = vadd.f32 %v2231, %v2856
    %v2858 = vpop.f32.mrb[0].mxu0
    %v2859 = vadd.f32 %v2233, %v2858
    %v2860 = vpop.f32.mrb[0].mxu0
    %v2861 = vadd.f32 %v2235, %v2860
    %v2862 = vpop.f32.mrb[0].mxu0
    %v2863 = vadd.f32 %v2237, %v2862
    %2864 = vmatprep.mubr.bf16.mxu0 %v1302
    %2865 = vmatmul.mubr.bf16.gmra.mrb[0].mxu0 %v1301
    %v2866 = vpop.f32.mrb[0].mxu0
    %v2867 = vadd.f32 %v2241, %v2866
    %v2868 = vpop.f32.mrb[0].mxu0
    %v2869 = vadd.f32 %v2243, %v2868
    %v2870 = vpop.f32.mrb[0].mxu0
    %v2871 = vadd.f32 %v2245, %v2870
    %v2872 = vpop.f32.mrb[0].mxu0
    %v2873 = vadd.f32 %v2247, %v2872
    %2874 = vmatprep.mubr.bf16.mxu0 %v1304
    %2875 = vmatmul.mubr.bf16.gmra.mrb[0].mxu0 %v1303
    %v2876 = vpop.f32.mrb[0].mxu0
    %v2877 = vadd.f32 %v2251, %v2876
    %v2878 = vpop.f32.mrb[0].mxu0
    %v2879 = vadd.f32 %v2253, %v2878
    %v2880 = vpop.f32.mrb[0].mxu0
    %v2881 = vadd.f32 %v2255, %v2880
    %v2882 = vpop.f32.mrb[0].mxu0
    %v2883 = vadd.f32 %v2257, %v2882
    %2884 = vmatprep.mubr.bf16.mxu0 %v1306
    %2885 = vmatmul.mubr.bf16.gmra.mrb[0].mxu0 %v1305
    %v2886 = vpop.f32.mrb[0].mxu0
    %v2887 = vadd.f32 %v2261, %v2886
    %v2888 = vpop.f32.mrb[0].mxu0
    %v2889 = vadd.f32 %v2263, %v2888
    %v2890 = vpop.f32.mrb[0].mxu0
    %v2891 = vadd.f32 %v2265, %v2890
    %v2892 = vpop.f32.mrb[0].mxu0
    %v2893 = vadd.f32 %v2267, %v2892
    %2894 = vmatprep.mubr.bf16.mxu0 %v1308
    %2895 = vmatmul.mubr.bf16.gmra.mrb[0].mxu0 %v1307
    %v2896 = vpop.f32.mrb[0].mxu0
    %v2897 = vadd.f32 %v2271, %v2896
    %v2898 = vpop.f32.mrb[0].mxu0
    %v2899 = vadd.f32 %v2273, %v2898
    %v2900 = vpop.f32.mrb[0].mxu0
    %v2901 = vadd.f32 %v2275, %v2900
    %v2902 = vpop.f32.mrb[0].mxu0
    %v2903 = vadd.f32 %v2277, %v2902
    %2904 = vdwg.mxu0
    %s2905 = scalar_lea.vmem %s6, 1024
    %v2906 = vld [vmem:[%s2905] sm:$0xff]
    %v2907 = vld [vmem:[%s2905 + $0x8] sm:$0xff]
    %v2908 = vld [vmem:[%s2905 + $0x10] sm:$0xff]
    %v2909 = vld [vmem:[%s2905 + $0x18] sm:$0xff]
    %v2910 = vld [vmem:[%s2905 + $0x20] sm:$0xff]
    %v2911 = vld [vmem:[%s2905 + $0x28] sm:$0xff]
    %v2912 = vld [vmem:[%s2905 + $0x30] sm:$0xff]
    %v2913 = vld [vmem:[%s2905 + $0x38] sm:$0xff]
    %v2914 = vld [vmem:[%s2905 + $0x40] sm:$0xff]
    %v2915 = vld [vmem:[%s2905 + $0x48] sm:$0xff]
    %v2916 = vld [vmem:[%s2905 + $0x50] sm:$0xff]
    %v2917 = vld [vmem:[%s2905 + $0x58] sm:$0xff]
    %v2918 = vld [vmem:[%s2905 + $0x60] sm:$0xff]
    %v2919 = vld [vmem:[%s2905 + $0x68] sm:$0xff]
    %v2920 = vld [vmem:[%s2905 + $0x70] sm:$0xff]
    %v2921 = vld [vmem:[%s2905 + $0x78] sm:$0xff]
    %v2922 = vld [vmem:[%s2905 + $0x80] sm:$0xff]
    %v2923 = vld [vmem:[%s2905 + $0x88] sm:$0xff]
    %v2924 = vld [vmem:[%s2905 + $0x90] sm:$0xff]
    %v2925 = vld [vmem:[%s2905 + $0x98] sm:$0xff]
    %v2926 = vld [vmem:[%s2905 + $0xa0] sm:$0xff]
    %v2927 = vld [vmem:[%s2905 + $0xa8] sm:$0xff]
    %v2928 = vld [vmem:[%s2905 + $0xb0] sm:$0xff]
    %v2929 = vld [vmem:[%s2905 + $0xb8] sm:$0xff]
    %v2930 = vld [vmem:[%s2905 + $0xc0] sm:$0xff]
    %v2931 = vld [vmem:[%s2905 + $0xc8] sm:$0xff]
    %v2932 = vld [vmem:[%s2905 + $0xd0] sm:$0xff]
    %v2933 = vld [vmem:[%s2905 + $0xd8] sm:$0xff]
    %v2934 = vld [vmem:[%s2905 + $0xe0] sm:$0xff]
    %v2935 = vld [vmem:[%s2905 + $0xe8] sm:$0xff]
    %v2936 = vld [vmem:[%s2905 + $0xf0] sm:$0xff]
    %v2937 = vld [vmem:[%s2905 + $0xf8] sm:$0xff]
    %v2938 = vld [vmem:[%s2905 + $0x100] sm:$0xff]
    %v2939 = vld [vmem:[%s2905 + $0x108] sm:$0xff]
    %v2940 = vld [vmem:[%s2905 + $0x110] sm:$0xff]
    %v2941 = vld [vmem:[%s2905 + $0x118] sm:$0xff]
    %v2942 = vld [vmem:[%s2905 + $0x120] sm:$0xff]
    %v2943 = vld [vmem:[%s2905 + $0x128] sm:$0xff]
    %v2944 = vld [vmem:[%s2905 + $0x130] sm:$0xff]
    %v2945 = vld [vmem:[%s2905 + $0x138] sm:$0xff]
    %v2946 = vld [vmem:[%s2905 + $0x140] sm:$0xff]
    %v2947 = vld [vmem:[%s2905 + $0x148] sm:$0xff]
    %v2948 = vld [vmem:[%s2905 + $0x150] sm:$0xff]
    %v2949 = vld [vmem:[%s2905 + $0x158] sm:$0xff]
    %v2950 = vld [vmem:[%s2905 + $0x160] sm:$0xff]
    %v2951 = vld [vmem:[%s2905 + $0x168] sm:$0xff]
    %v2952 = vld [vmem:[%s2905 + $0x170] sm:$0xff]
    %v2953 = vld [vmem:[%s2905 + $0x178] sm:$0xff]
    %v2954 = vld [vmem:[%s2905 + $0x180] sm:$0xff]
    %v2955 = vld [vmem:[%s2905 + $0x188] sm:$0xff]
    %v2956 = vld [vmem:[%s2905 + $0x190] sm:$0xff]
    %v2957 = vld [vmem:[%s2905 + $0x198] sm:$0xff]
    %v2958 = vld [vmem:[%s2905 + $0x1a0] sm:$0xff]
    %v2959 = vld [vmem:[%s2905 + $0x1a8] sm:$0xff]
    %v2960 = vld [vmem:[%s2905 + $0x1b0] sm:$0xff]
    %v2961 = vld [vmem:[%s2905 + $0x1b8] sm:$0xff]
    %v2962 = vld [vmem:[%s2905 + $0x1c0] sm:$0xff]
    %v2963 = vld [vmem:[%s2905 + $0x1c8] sm:$0xff]
    %v2964 = vld [vmem:[%s2905 + $0x1d0] sm:$0xff]
    %v2965 = vld [vmem:[%s2905 + $0x1d8] sm:$0xff]
    %v2966 = vld [vmem:[%s2905 + $0x1e0] sm:$0xff]
    %v2967 = vld [vmem:[%s2905 + $0x1e8] sm:$0xff]
    %v2968 = vld [vmem:[%s2905 + $0x1f0] sm:$0xff]
    %v2969 = vld [vmem:[%s2905 + $0x1f8] sm:$0xff]
    %vm2994 = vcmask 1046528
    %v2995 = vrot.slane %v1285, 1
    %v2996 = vrot.slane %v1287, 1
    %v2997 = vsel %vm2994, %v2995, %v2996
    %v2998 = vrot.slane %v1286, 1
    %v2999 = vrot.slane %v1288, 1
    %v3000 = vsel %vm2994, %v2998, %v2999
    %v3001 = vrot.slane %v1289, 1
    %v3002 = vsel %vm2994, %v2996, %v3001
    %v3003 = vrot.slane %v1290, 1
    %v3004 = vsel %vm2994, %v2999, %v3003
    %v3005 = vrot.slane %v1291, 1
    %v3006 = vsel %vm2994, %v3001, %v3005
    %v3007 = vrot.slane %v1292, 1
    %v3008 = vsel %vm2994, %v3003, %v3007
    %v3009 = vrot.slane %v1293, 1
    %v3010 = vsel %vm2994, %v3005, %v3009
    %v3011 = vrot.slane %v1294, 1
    %v3012 = vsel %vm2994, %v3007, %v3011
    %v3013 = vrot.slane %v1295, 1
    %v3014 = vsel %vm2994, %v3009, %v3013
    %v3015 = vrot.slane %v1296, 1
    %v3016 = vsel %vm2994, %v3011, %v3015
    %v3017 = vrot.slane %v1297, 1
    %v3018 = vsel %vm2994, %v3013, %v3017
    %v3019 = vrot.slane %v1298, 1
    %v3020 = vsel %vm2994, %v3015, %v3019
    %v3021 = vrot.slane %v1299, 1
    %v3022 = vsel %vm2994, %v3017, %v3021
    %v3023 = vrot.slane %v1300, 1
    %v3024 = vsel %vm2994, %v3019, %v3023
    %v3025 = vrot.slane %v1301, 1
    %v3026 = vsel %vm2994, %v3021, %v3025
    %v3027 = vrot.slane %v1302, 1
    %v3028 = vsel %vm2994, %v3023, %v3027
    %v3029 = vrot.slane %v1303, 1
    %v3030 = vsel %vm2994, %v3025, %v3029
    %v3031 = vrot.slane %v1304, 1
    %v3032 = vsel %vm2994, %v3027, %v3031
    %v3033 = vrot.slane %v1305, 1
    %v3034 = vsel %vm2994, %v3029, %v3033
    %v3035 = vrot.slane %v1306, 1
    %v3036 = vsel %vm2994, %v3031, %v3035
    %v3037 = vrot.slane %v1307, 1
    %v3038 = vsel %vm2994, %v3033, %v3037
    %v3039 = vrot.slane %v1308, 1
    %v3040 = vsel %vm2994, %v3035, %v3039
    %v3129 = vunpack.c.l.b16 %v2906
    %v3130 = vunpack.c.h.b16 %v2906
    %v3131 = vunpack.c.l.b16 %v2907
    %v3132 = vunpack.c.h.b16 %v2907
    %v3133 = vunpack.c.l.b16 %v2908
    %v3134 = vunpack.c.h.b16 %v2908
    %v3135 = vunpack.c.l.b16 %v2909
    %v3136 = vunpack.c.h.b16 %v2909
    %v3137 = vunpack.c.l.b16 %v2910
    %v3138 = vunpack.c.h.b16 %v2910
    %v3139 = vunpack.c.l.b16 %v2911
    %v3140 = vunpack.c.h.b16 %v2911
    %v3141 = vunpack.c.l.b16 %v2912
    %v3142 = vunpack.c.h.b16 %v2912
    %v3143 = vunpack.c.l.b16 %v2913
    %v3144 = vunpack.c.h.b16 %v2913
    %v3145 = vunpack.c.l.b16 %v2914
    %v3146 = vunpack.c.h.b16 %v2914
    %v3147 = vunpack.c.l.b16 %v2915
    %v3148 = vunpack.c.h.b16 %v2915
    %v3149 = vunpack.c.l.b16 %v2916
    %v3150 = vunpack.c.h.b16 %v2916
    %v3151 = vunpack.c.l.b16 %v2917
    %v3152 = vunpack.c.h.b16 %v2917
    %v3153 = vunpack.c.l.b16 %v2918
    %v3154 = vunpack.c.h.b16 %v2918
    %v3155 = vunpack.c.l.b16 %v2919
    %v3156 = vunpack.c.h.b16 %v2919
    %v3157 = vunpack.c.l.b16 %v2920
    %v3158 = vunpack.c.h.b16 %v2920
    %v3159 = vunpack.c.l.b16 %v2921
    %v3160 = vunpack.c.h.b16 %v2921
    %v3161 = vunpack.c.l.b16 %v2922
    %v3162 = vunpack.c.h.b16 %v2922
    %v3163 = vunpack.c.l.b16 %v2923
    %v3164 = vunpack.c.h.b16 %v2923
    %v3165 = vunpack.c.l.b16 %v2924
    %v3166 = vunpack.c.h.b16 %v2924
    %v3167 = vunpack.c.l.b16 %v2925
    %v3168 = vunpack.c.h.b16 %v2925
    %v3169 = vunpack.c.l.b16 %v2926
    %v3170 = vunpack.c.h.b16 %v2926
    %v3171 = vunpack.c.l.b16 %v2927
    %v3172 = vunpack.c.h.b16 %v2927
    %v3173 = vunpack.c.l.b16 %v2928
    %v3174 = vunpack.c.h.b16 %v2928
    %v3175 = vunpack.c.l.b16 %v2929
    %v3176 = vunpack.c.h.b16 %v2929
    %v3177 = vunpack.c.l.b16 %v2930
    %v3178 = vunpack.c.h.b16 %v2930
    %v3179 = vunpack.c.l.b16 %v2931
    %v3180 = vunpack.c.h.b16 %v2931
    %v3181 = vunpack.c.l.b16 %v2932
    %v3182 = vunpack.c.h.b16 %v2932
    %v3183 = vunpack.c.l.b16 %v2933
    %v3184 = vunpack.c.h.b16 %v2933
    %v3185 = vunpack.c.l.b16 %v2934
    %v3186 = vunpack.c.h.b16 %v2934
    %v3187 = vunpack.c.l.b16 %v2935
    %v3188 = vunpack.c.h.b16 %v2935
    %v3189 = vunpack.c.l.b16 %v2936
    %v3190 = vunpack.c.h.b16 %v2936
    %v3191 = vunpack.c.l.b16 %v2937
    %v3192 = vunpack.c.h.b16 %v2937
    %v3193 = vunpack.c.l.b16 %v2938
    %v3194 = vunpack.c.h.b16 %v2938
    %v3195 = vunpack.c.l.b16 %v2939
    %v3196 = vunpack.c.h.b16 %v2939
    %v3197 = vunpack.c.l.b16 %v2940
    %v3198 = vunpack.c.h.b16 %v2940
    %v3199 = vunpack.c.l.b16 %v2941
    %v3200 = vunpack.c.h.b16 %v2941
    %v3201 = vunpack.c.l.b16 %v2942
    %v3202 = vunpack.c.h.b16 %v2942
    %v3203 = vunpack.c.l.b16 %v2943
    %v3204 = vunpack.c.h.b16 %v2943
    %v3205 = vunpack.c.l.b16 %v2944
    %v3206 = vunpack.c.h.b16 %v2944
    %v3207 = vunpack.c.l.b16 %v2945
    %v3208 = vunpack.c.h.b16 %v2945
    %v3209 = vunpack.c.l.b16 %v2946
    %v3210 = vunpack.c.h.b16 %v2946
    %v3211 = vunpack.c.l.b16 %v2947
    %v3212 = vunpack.c.h.b16 %v2947
    %v3213 = vunpack.c.l.b16 %v2948
    %v3214 = vunpack.c.h.b16 %v2948
    %v3215 = vunpack.c.l.b16 %v2949
    %v3216 = vunpack.c.h.b16 %v2949
    %v3217 = vunpack.c.l.b16 %v2950
    %v3218 = vunpack.c.h.b16 %v2950
    %v3219 = vunpack.c.l.b16 %v2951
    %v3220 = vunpack.c.h.b16 %v2951
    %v3221 = vunpack.c.l.b16 %v2952
    %v3222 = vunpack.c.h.b16 %v2952
    %v3223 = vunpack.c.l.b16 %v2953
    %v3224 = vunpack.c.h.b16 %v2953
    %v3225 = vunpack.c.l.b16 %v2954
    %v3226 = vunpack.c.h.b16 %v2954
    %v3227 = vunpack.c.l.b16 %v2955
    %v3228 = vunpack.c.h.b16 %v2955
    %v3229 = vunpack.c.l.b16 %v2956
    %v3230 = vunpack.c.h.b16 %v2956
    %v3231 = vunpack.c.l.b16 %v2957
    %v3232 = vunpack.c.h.b16 %v2957
    %v3233 = vunpack.c.l.b16 %v2958
    %v3234 = vunpack.c.h.b16 %v2958
    %v3235 = vunpack.c.l.b16 %v2959
    %v3236 = vunpack.c.h.b16 %v2959
    %v3237 = vunpack.c.l.b16 %v2960
    %v3238 = vunpack.c.h.b16 %v2960
    %v3239 = vunpack.c.l.b16 %v2961
    %v3240 = vunpack.c.h.b16 %v2961
    %v3241 = vunpack.c.l.b16 %v2962
    %v3242 = vunpack.c.h.b16 %v2962
    %v3243 = vunpack.c.l.b16 %v2963
    %v3244 = vunpack.c.h.b16 %v2963
    %v3245 = vunpack.c.l.b16 %v2964
    %v3246 = vunpack.c.h.b16 %v2964
    %v3247 = vunpack.c.l.b16 %v2965
    %v3248 = vunpack.c.h.b16 %v2965
    %v3249 = vunpack.c.l.b16 %v2966
    %v3250 = vunpack.c.h.b16 %v2966
    %v3251 = vunpack.c.l.b16 %v2967
    %v3252 = vunpack.c.h.b16 %v2967
    %v3253 = vunpack.c.l.b16 %v2968
    %v3254 = vunpack.c.h.b16 %v2968
    %v3255 = vunpack.c.l.b16 %v2969
    %v3256 = vunpack.c.h.b16 %v2969
    %v3257 = vpack.c.b16 %v3133, %v3129
    %v3258 = vpack.c.b16 %v3134, %v3130
    %v3259 = vpack.c.b16 %v3135, %v3131
    %v3260 = vpack.c.b16 %v3136, %v3132
    %v3261 = vpack.c.b16 %v3141, %v3137
    %v3262 = vpack.c.b16 %v3142, %v3138
    %v3263 = vpack.c.b16 %v3143, %v3139
    %v3264 = vpack.c.b16 %v3144, %v3140
    %v3265 = vpack.c.b16 %v3149, %v3145
    %v3266 = vpack.c.b16 %v3150, %v3146
    %v3267 = vpack.c.b16 %v3151, %v3147
    %v3268 = vpack.c.b16 %v3152, %v3148
    %v3269 = vpack.c.b16 %v3157, %v3153
    %v3270 = vpack.c.b16 %v3158, %v3154
    %v3271 = vpack.c.b16 %v3159, %v3155
    %v3272 = vpack.c.b16 %v3160, %v3156
    %v3273 = vpack.c.b16 %v3165, %v3161
    %v3274 = vpack.c.b16 %v3166, %v3162
    %v3275 = vpack.c.b16 %v3167, %v3163
    %v3276 = vpack.c.b16 %v3168, %v3164
    %v3277 = vpack.c.b16 %v3173, %v3169
    %v3278 = vpack.c.b16 %v3174, %v3170
    %v3279 = vpack.c.b16 %v3175, %v3171
    %v3280 = vpack.c.b16 %v3176, %v3172
    %v3281 = vpack.c.b16 %v3181, %v3177
    %v3282 = vpack.c.b16 %v3182, %v3178
    %v3283 = vpack.c.b16 %v3183, %v3179
    %v3284 = vpack.c.b16 %v3184, %v3180
    %v3285 = vpack.c.b16 %v3189, %v3185
    %v3286 = vpack.c.b16 %v3190, %v3186
    %v3287 = vpack.c.b16 %v3191, %v3187
    %v3288 = vpack.c.b16 %v3192, %v3188
    %v3289 = vpack.c.b16 %v3197, %v3193
    %v3290 = vpack.c.b16 %v3198, %v3194
    %v3291 = vpack.c.b16 %v3199, %v3195
    %v3292 = vpack.c.b16 %v3200, %v3196
    %v3293 = vpack.c.b16 %v3205, %v3201
    %v3294 = vpack.c.b16 %v3206, %v3202
    %v3295 = vpack.c.b16 %v3207, %v3203
    %v3296 = vpack.c.b16 %v3208, %v3204
    %v3297 = vpack.c.b16 %v3213, %v3209
    %v3298 = vpack.c.b16 %v3214, %v3210
    %v3299 = vpack.c.b16 %v3215, %v3211
    %v3300 = vpack.c.b16 %v3216, %v3212
    %v3301 = vpack.c.b16 %v3221, %v3217
    %v3302 = vpack.c.b16 %v3222, %v3218
    %v3303 = vpack.c.b16 %v3223, %v3219
    %v3304 = vpack.c.b16 %v3224, %v3220
    %v3305 = vpack.c.b16 %v3229, %v3225
    %v3306 = vpack.c.b16 %v3230, %v3226
    %v3307 = vpack.c.b16 %v3231, %v3227
    %v3308 = vpack.c.b16 %v3232, %v3228
    %v3309 = vpack.c.b16 %v3237, %v3233
    %v3310 = vpack.c.b16 %v3238, %v3234
    %v3311 = vpack.c.b16 %v3239, %v3235
    %v3312 = vpack.c.b16 %v3240, %v3236
    %v3313 = vpack.c.b16 %v3245, %v3241
    %v3314 = vpack.c.b16 %v3246, %v3242
    %v3315 = vpack.c.b16 %v3247, %v3243
    %v3316 = vpack.c.b16 %v3248, %v3244
    %v3317 = vpack.c.b16 %v3253, %v3249
    %v3318 = vpack.c.b16 %v3254, %v3250
    %v3319 = vpack.c.b16 %v3255, %v3251
    %v3320 = vpack.c.b16 %v3256, %v3252
    %3385 = vmatprep.subr.bf16.mxu0 %v3258
    %3386 = vmatpush1.bf16.msra.mxu0 %v3257
    %3387 = vmatprep.subr.bf16.mxu0 %v3262
    %3388 = vmatpush1.bf16.msra.mxu0 %v3261
    %3389 = vmatprep.subr.bf16.mxu0 %v3266
    %3390 = vmatpush1.bf16.msra.mxu0 %v3265
    %3391 = vmatprep.subr.bf16.mxu0 %v3270
    %3392 = vmatpush1.bf16.msra.mxu0 %v3269
    %3393 = vmatprep.subr.bf16.mxu0 %v3274
    %3394 = vmatpush1.bf16.msra.mxu0 %v3273
    %3395 = vmatprep.subr.bf16.mxu0 %v3278
    %3396 = vmatpush1.bf16.msra.mxu0 %v3277
    %3397 = vmatprep.subr.bf16.mxu0 %v3282
    %3398 = vmatpush1.bf16.msra.mxu0 %v3281
    %3399 = vmatprep.subr.bf16.mxu0 %v3286
    %3400 = vmatpush1.bf16.msra.mxu0 %v3285
    %3401 = vmatprep.subr.bf16.mxu0 %v3290
    %3402 = vmatpush1.bf16.msra.mxu0 %v3289
    %3403 = vmatprep.subr.bf16.mxu0 %v3294
    %3404 = vmatpush1.bf16.msra.mxu0 %v3293
    %3405 = vmatprep.subr.bf16.mxu0 %v3298
    %3406 = vmatpush1.bf16.msra.mxu0 %v3297
    %3407 = vmatprep.subr.bf16.mxu0 %v3302
    %3408 = vmatpush1.bf16.msra.mxu0 %v3301
    %3409 = vmatprep.subr.bf16.mxu0 %v3306
    %3410 = vmatpush1.bf16.msra.mxu0 %v3305
    %3411 = vmatprep.subr.bf16.mxu0 %v3310
    %3412 = vmatpush1.bf16.msra.mxu0 %v3309
    %3413 = vmatprep.subr.bf16.mxu0 %v3314
    %3414 = vmatpush1.bf16.msra.mxu0 %v3313
    %3415 = vmatprep.subr.bf16.mxu0 %v3318
    %3416 = vmatpush1.bf16.msra.mxu0 %v3317
    %3417 = vmatprep.mubr.bf16.mxu0 %v3000
    %3418 = vmatmul.mubr.bf16.gmra.mrb[0].mxu0 %v2997
    %v3419 = vpop.f32.mrb[0].mxu0
    %v3420 = vadd.f32 0.0, %v3419
    %v3421 = vpop.f32.mrb[0].mxu0
    %v3422 = vadd.f32 0.0, %v3421
    %v3423 = vpop.f32.mrb[0].mxu0
    %v3424 = vadd.f32 0.0, %v3423
    %v3425 = vpop.f32.mrb[0].mxu0
    %v3426 = vadd.f32 0.0, %v3425
    %3427 = vmatprep.mubr.bf16.mxu0 %v3004
    %3428 = vmatmul.mubr.bf16.gmra.mrb[0].mxu0 %v3002
    %v3429 = vpop.f32.mrb[0].mxu0
    %v3430 = vadd.f32 0.0, %v3429
    %v3431 = vpop.f32.mrb[0].mxu0
    %v3432 = vadd.f32 0.0, %v3431
    %v3433 = vpop.f32.mrb[0].mxu0
    %v3434 = vadd.f32 0.0, %v3433
    %v3435 = vpop.f32.mrb[0].mxu0
    %v3436 = vadd.f32 0.0, %v3435
    %3437 = vmatprep.mubr.bf16.mxu0 %v3008
    %3438 = vmatmul.mubr.bf16.gmra.mrb[0].mxu0 %v3006
    %v3439 = vpop.f32.mrb[0].mxu0
    %v3440 = vadd.f32 0.0, %v3439
    %v3441 = vpop.f32.mrb[0].mxu0
    %v3442 = vadd.f32 0.0, %v3441
    %v3443 = vpop.f32.mrb[0].mxu0
    %v3444 = vadd.f32 0.0, %v3443
    %v3445 = vpop.f32.mrb[0].mxu0
    %v3446 = vadd.f32 0.0, %v3445
    %3447 = vmatprep.mubr.bf16.mxu0 %v3012
    %3448 = vmatmul.mubr.bf16.gmra.mrb[0].mxu0 %v3010
    %v3449 = vpop.f32.mrb[0].mxu0
    %v3450 = vadd.f32 0.0, %v3449
    %v3451 = vpop.f32.mrb[0].mxu0
    %v3452 = vadd.f32 0.0, %v3451
    %v3453 = vpop.f32.mrb[0].mxu0
    %v3454 = vadd.f32 0.0, %v3453
    %v3455 = vpop.f32.mrb[0].mxu0
    %v3456 = vadd.f32 0.0, %v3455
    %3457 = vmatprep.mubr.bf16.mxu0 %v3016
    %3458 = vmatmul.mubr.bf16.gmra.mrb[0].mxu0 %v3014
    %v3459 = vpop.f32.mrb[0].mxu0
    %v3460 = vadd.f32 0.0, %v3459
    %v3461 = vpop.f32.mrb[0].mxu0
    %v3462 = vadd.f32 0.0, %v3461
    %v3463 = vpop.f32.mrb[0].mxu0
    %v3464 = vadd.f32 0.0, %v3463
    %v3465 = vpop.f32.mrb[0].mxu0
    %v3466 = vadd.f32 0.0, %v3465
    %3467 = vmatprep.mubr.bf16.mxu0 %v3020
    %3468 = vmatmul.mubr.bf16.gmra.mrb[0].mxu0 %v3018
    %v3469 = vpop.f32.mrb[0].mxu0
    %v3470 = vadd.f32 0.0, %v3469
    %v3471 = vpop.f32.mrb[0].mxu0
    %v3472 = vadd.f32 0.0, %v3471
    %v3473 = vpop.f32.mrb[0].mxu0
    %v3474 = vadd.f32 0.0, %v3473
    %v3475 = vpop.f32.mrb[0].mxu0
    %v3476 = vadd.f32 0.0, %v3475
    %3477 = vmatprep.mubr.bf16.mxu0 %v3024
    %3478 = vmatmul.mubr.bf16.gmra.mrb[0].mxu0 %v3022
    %v3479 = vpop.f32.mrb[0].mxu0
    %v3480 = vadd.f32 0.0, %v3479
    %v3481 = vpop.f32.mrb[0].mxu0
    %v3482 = vadd.f32 0.0, %v3481
    %v3483 = vpop.f32.mrb[0].mxu0
    %v3484 = vadd.f32 0.0, %v3483
    %v3485 = vpop.f32.mrb[0].mxu0
    %v3486 = vadd.f32 0.0, %v3485
    %3487 = vmatprep.mubr.bf16.mxu0 %v3028
    %3488 = vmatmul.mubr.bf16.gmra.mrb[0].mxu0 %v3026
    %v3489 = vpop.f32.mrb[0].mxu0
    %v3490 = vadd.f32 0.0, %v3489
    %v3491 = vpop.f32.mrb[0].mxu0
    %v3492 = vadd.f32 0.0, %v3491
    %v3493 = vpop.f32.mrb[0].mxu0
    %v3494 = vadd.f32 0.0, %v3493
    %v3495 = vpop.f32.mrb[0].mxu0
    %v3496 = vadd.f32 0.0, %v3495
    %3497 = vmatprep.mubr.bf16.mxu0 %v3032
    %3498 = vmatmul.mubr.bf16.gmra.mrb[0].mxu0 %v3030
    %v3499 = vpop.f32.mrb[0].mxu0
    %v3500 = vadd.f32 0.0, %v3499
    %v3501 = vpop.f32.mrb[0].mxu0
    %v3502 = vadd.f32 0.0, %v3501
    %v3503 = vpop.f32.mrb[0].mxu0
    %v3504 = vadd.f32 0.0, %v3503
    %v3505 = vpop.f32.mrb[0].mxu0
    %v3506 = vadd.f32 0.0, %v3505
    %3507 = vmatprep.mubr.bf16.mxu0 %v3036
    %3508 = vmatmul.mubr.bf16.gmra.mrb[0].mxu0 %v3034
    %v3509 = vpop.f32.mrb[0].mxu0
    %v3510 = vadd.f32 0.0, %v3509
    %v3511 = vpop.f32.mrb[0].mxu0
    %v3512 = vadd.f32 0.0, %v3511
    %v3513 = vpop.f32.mrb[0].mxu0
    %v3514 = vadd.f32 0.0, %v3513
    %v3515 = vpop.f32.mrb[0].mxu0
    %v3516 = vadd.f32 0.0, %v3515
    %3517 = vmatprep.mubr.bf16.mxu0 %v3040
    %3518 = vmatmul.mubr.bf16.gmra.mrb[0].mxu0 %v3038
    %v3519 = vpop.f32.mrb[0].mxu0
    %v3520 = vadd.f32 0.0, %v3519
    %v3521 = vpop.f32.mrb[0].mxu0
    %v3522 = vadd.f32 0.0, %v3521
    %v3523 = vpop.f32.mrb[0].mxu0
    %v3524 = vadd.f32 0.0, %v3523
    %v3525 = vpop.f32.mrb[0].mxu0
    %v3526 = vadd.f32 0.0, %v3525
    %3527 = vmatprep.mubr.bf16.mxu0 %v3039
    %3528 = vmatmul.mubr.bf16.gmra.mrb[0].mxu0 %v3037
    %v3529 = vpop.f32.mrb[0].mxu0
    %v3530 = vadd.f32 0.0, %v3529
    %v3531 = vpop.f32.mrb[0].mxu0
    %v3532 = vadd.f32 0.0, %v3531
    %v3533 = vpop.f32.mrb[0].mxu0
    %v3534 = vadd.f32 0.0, %v3533
    %v3535 = vpop.f32.mrb[0].mxu0
    %v3536 = vadd.f32 0.0, %v3535
    %3537 = vdwg.mxu0
    %3538 = vmatprep.subr.bf16.mxu0 %v3260
    %3539 = vmatpush1.bf16.msra.mxu0 %v3259
    %3540 = vmatprep.subr.bf16.mxu0 %v3264
    %3541 = vmatpush1.bf16.msra.mxu0 %v3263
    %3542 = vmatprep.subr.bf16.mxu0 %v3268
    %3543 = vmatpush1.bf16.msra.mxu0 %v3267
    %3544 = vmatprep.subr.bf16.mxu0 %v3272
    %3545 = vmatpush1.bf16.msra.mxu0 %v3271
    %3546 = vmatprep.subr.bf16.mxu0 %v3276
    %3547 = vmatpush1.bf16.msra.mxu0 %v3275
    %3548 = vmatprep.subr.bf16.mxu0 %v3280
    %3549 = vmatpush1.bf16.msra.mxu0 %v3279
    %3550 = vmatprep.subr.bf16.mxu0 %v3284
    %3551 = vmatpush1.bf16.msra.mxu0 %v3283
    %3552 = vmatprep.subr.bf16.mxu0 %v3288
    %3553 = vmatpush1.bf16.msra.mxu0 %v3287
    %3554 = vmatprep.subr.bf16.mxu0 %v3292
    %3555 = vmatpush1.bf16.msra.mxu0 %v3291
    %3556 = vmatprep.subr.bf16.mxu0 %v3296
    %3557 = vmatpush1.bf16.msra.mxu0 %v3295
    %3558 = vmatprep.subr.bf16.mxu0 %v3300
    %3559 = vmatpush1.bf16.msra.mxu0 %v3299
    %3560 = vmatprep.subr.bf16.mxu0 %v3304
    %3561 = vmatpush1.bf16.msra.mxu0 %v3303
    %3562 = vmatprep.subr.bf16.mxu0 %v3308
    %3563 = vmatpush1.bf16.msra.mxu0 %v3307
    %3564 = vmatprep.subr.bf16.mxu0 %v3312
    %3565 = vmatpush1.bf16.msra.mxu0 %v3311
    %3566 = vmatprep.subr.bf16.mxu0 %v3316
    %3567 = vmatpush1.bf16.msra.mxu0 %v3315
    %3568 = vmatprep.subr.bf16.mxu0 %v3320
    %3569 = vmatpush1.bf16.msra.mxu0 %v3319
    %3570 = vmatprep.mubr.bf16.mxu0 %v3000
    %3571 = vmatmul.mubr.bf16.gmra.mrb[0].mxu0 %v2997
    %v3572 = vpop.f32.mrb[0].mxu0
    %v3573 = vadd.f32 0.0, %v3572
    %v3574 = vpop.f32.mrb[0].mxu0
    %v3575 = vadd.f32 0.0, %v3574
    %v3576 = vpop.f32.mrb[0].mxu0
    %v3577 = vadd.f32 0.0, %v3576
    %v3578 = vpop.f32.mrb[0].mxu0
    %v3579 = vadd.f32 0.0, %v3578
    %3580 = vmatprep.mubr.bf16.mxu0 %v3004
    %3581 = vmatmul.mubr.bf16.gmra.mrb[0].mxu0 %v3002
    %v3582 = vpop.f32.mrb[0].mxu0
    %v3583 = vadd.f32 0.0, %v3582
    %v3584 = vpop.f32.mrb[0].mxu0
    %v3585 = vadd.f32 0.0, %v3584
    %v3586 = vpop.f32.mrb[0].mxu0
    %v3587 = vadd.f32 0.0, %v3586
    %v3588 = vpop.f32.mrb[0].mxu0
    %v3589 = vadd.f32 0.0, %v3588
    %3590 = vmatprep.mubr.bf16.mxu0 %v3008
    %3591 = vmatmul.mubr.bf16.gmra.mrb[0].mxu0 %v3006
    %v3592 = vpop.f32.mrb[0].mxu0
    %v3593 = vadd.f32 0.0, %v3592
    %v3594 = vpop.f32.mrb[0].mxu0
    %v3595 = vadd.f32 0.0, %v3594
    %v3596 = vpop.f32.mrb[0].mxu0
    %v3597 = vadd.f32 0.0, %v3596
    %v3598 = vpop.f32.mrb[0].mxu0
    %v3599 = vadd.f32 0.0, %v3598
    %3600 = vmatprep.mubr.bf16.mxu0 %v3012
    %3601 = vmatmul.mubr.bf16.gmra.mrb[0].mxu0 %v3010
    %v3602 = vpop.f32.mrb[0].mxu0
    %v3603 = vadd.f32 0.0, %v3602
    %v3604 = vpop.f32.mrb[0].mxu0
    %v3605 = vadd.f32 0.0, %v3604
    %v3606 = vpop.f32.mrb[0].mxu0
    %v3607 = vadd.f32 0.0, %v3606
    %v3608 = vpop.f32.mrb[0].mxu0
    %v3609 = vadd.f32 0.0, %v3608
    %3610 = vmatprep.mubr.bf16.mxu0 %v3016
    %3611 = vmatmul.mubr.bf16.gmra.mrb[0].mxu0 %v3014
    %v3612 = vpop.f32.mrb[0].mxu0
    %v3613 = vadd.f32 0.0, %v3612
    %v3614 = vpop.f32.mrb[0].mxu0
    %v3615 = vadd.f32 0.0, %v3614
    %v3616 = vpop.f32.mrb[0].mxu0
    %v3617 = vadd.f32 0.0, %v3616
    %v3618 = vpop.f32.mrb[0].mxu0
    %v3619 = vadd.f32 0.0, %v3618
    %3620 = vmatprep.mubr.bf16.mxu0 %v3020
    %3621 = vmatmul.mubr.bf16.gmra.mrb[0].mxu0 %v3018
    %v3622 = vpop.f32.mrb[0].mxu0
    %v3623 = vadd.f32 0.0, %v3622
    %v3624 = vpop.f32.mrb[0].mxu0
    %v3625 = vadd.f32 0.0, %v3624
    %v3626 = vpop.f32.mrb[0].mxu0
    %v3627 = vadd.f32 0.0, %v3626
    %v3628 = vpop.f32.mrb[0].mxu0
    %v3629 = vadd.f32 0.0, %v3628
    %3630 = vmatprep.mubr.bf16.mxu0 %v3024
    %3631 = vmatmul.mubr.bf16.gmra.mrb[0].mxu0 %v3022
    %v3632 = vpop.f32.mrb[0].mxu0
    %v3633 = vadd.f32 0.0, %v3632
    %v3634 = vpop.f32.mrb[0].mxu0
    %v3635 = vadd.f32 0.0, %v3634
    %v3636 = vpop.f32.mrb[0].mxu0
    %v3637 = vadd.f32 0.0, %v3636
    %v3638 = vpop.f32.mrb[0].mxu0
    %v3639 = vadd.f32 0.0, %v3638
    %3640 = vmatprep.mubr.bf16.mxu0 %v3028
    %3641 = vmatmul.mubr.bf16.gmra.mrb[0].mxu0 %v3026
    %v3642 = vpop.f32.mrb[0].mxu0
    %v3643 = vadd.f32 0.0, %v3642
    %v3644 = vpop.f32.mrb[0].mxu0
    %v3645 = vadd.f32 0.0, %v3644
    %v3646 = vpop.f32.mrb[0].mxu0
    %v3647 = vadd.f32 0.0, %v3646
    %v3648 = vpop.f32.mrb[0].mxu0
    %v3649 = vadd.f32 0.0, %v3648
    %3650 = vmatprep.mubr.bf16.mxu0 %v3032
    %3651 = vmatmul.mubr.bf16.gmra.mrb[0].mxu0 %v3030
    %v3652 = vpop.f32.mrb[0].mxu0
    %v3653 = vadd.f32 0.0, %v3652
    %v3654 = vpop.f32.mrb[0].mxu0
    %v3655 = vadd.f32 0.0, %v3654
    %v3656 = vpop.f32.mrb[0].mxu0
    %v3657 = vadd.f32 0.0, %v3656
    %v3658 = vpop.f32.mrb[0].mxu0
    %v3659 = vadd.f32 0.0, %v3658
    %3660 = vmatprep.mubr.bf16.mxu0 %v3036
    %3661 = vmatmul.mubr.bf16.gmra.mrb[0].mxu0 %v3034
    %v3662 = vpop.f32.mrb[0].mxu0
    %v3663 = vadd.f32 0.0, %v3662
    %v3664 = vpop.f32.mrb[0].mxu0
    %v3665 = vadd.f32 0.0, %v3664
    %v3666 = vpop.f32.mrb[0].mxu0
    %v3667 = vadd.f32 0.0, %v3666
    %v3668 = vpop.f32.mrb[0].mxu0
    %v3669 = vadd.f32 0.0, %v3668
    %3670 = vmatprep.mubr.bf16.mxu0 %v3040
    %3671 = vmatmul.mubr.bf16.gmra.mrb[0].mxu0 %v3038
    %v3672 = vpop.f32.mrb[0].mxu0
    %v3673 = vadd.f32 0.0, %v3672
    %v3674 = vpop.f32.mrb[0].mxu0
    %v3675 = vadd.f32 0.0, %v3674
    %v3676 = vpop.f32.mrb[0].mxu0
    %v3677 = vadd.f32 0.0, %v3676
    %v3678 = vpop.f32.mrb[0].mxu0
    %v3679 = vadd.f32 0.0, %v3678
    %3680 = vmatprep.mubr.bf16.mxu0 %v3039
    %3681 = vmatmul.mubr.bf16.gmra.mrb[0].mxu0 %v3037
    %v3682 = vpop.f32.mrb[0].mxu0
    %v3683 = vadd.f32 0.0, %v3682
    %v3684 = vpop.f32.mrb[0].mxu0
    %v3685 = vadd.f32 0.0, %v3684
    %v3686 = vpop.f32.mrb[0].mxu0
    %v3687 = vadd.f32 0.0, %v3686
    %v3688 = vpop.f32.mrb[0].mxu0
    %v3689 = vadd.f32 0.0, %v3688
    %3690 = vdwg.mxu0
    %v3691 = vadd.f32 %v2634, %v3420
    %v3692 = vadd.f32 %v2636, %v3422
    %v3693 = vadd.f32 %v2787, %v3573
    %v3694 = vadd.f32 %v2789, %v3575
    %v3695 = vadd.f32 %v2638, %v3424
    %v3696 = vadd.f32 %v2640, %v3426
    %v3697 = vadd.f32 %v2791, %v3577
    %v3698 = vadd.f32 %v2793, %v3579
    %v3699 = vadd.f32 %v2644, %v3430
    %v3700 = vadd.f32 %v2646, %v3432
    %v3701 = vadd.f32 %v2797, %v3583
    %v3702 = vadd.f32 %v2799, %v3585
    %v3703 = vadd.f32 %v2648, %v3434
    %v3704 = vadd.f32 %v2650, %v3436
    %v3705 = vadd.f32 %v2801, %v3587
    %v3706 = vadd.f32 %v2803, %v3589
    %v3707 = vadd.f32 %v2654, %v3440
    %v3708 = vadd.f32 %v2656, %v3442
    %v3709 = vadd.f32 %v2807, %v3593
    %v3710 = vadd.f32 %v2809, %v3595
    %v3711 = vadd.f32 %v2658, %v3444
    %v3712 = vadd.f32 %v2660, %v3446
    %v3713 = vadd.f32 %v2811, %v3597
    %v3714 = vadd.f32 %v2813, %v3599
    %v3715 = vadd.f32 %v2664, %v3450
    %v3716 = vadd.f32 %v2666, %v3452
    %v3717 = vadd.f32 %v2817, %v3603
    %v3718 = vadd.f32 %v2819, %v3605
    %v3719 = vadd.f32 %v2668, %v3454
    %v3720 = vadd.f32 %v2670, %v3456
    %v3721 = vadd.f32 %v2821, %v3607
    %v3722 = vadd.f32 %v2823, %v3609
    %v3723 = vadd.f32 %v2674, %v3460
    %v3724 = vadd.f32 %v2676, %v3462
    %v3725 = vadd.f32 %v2827, %v3613
    %v3726 = vadd.f32 %v2829, %v3615
    %v3727 = vadd.f32 %v2678, %v3464
    %v3728 = vadd.f32 %v2680, %v3466
    %v3729 = vadd.f32 %v2831, %v3617
    %v3730 = vadd.f32 %v2833, %v3619
    %v3731 = vadd.f32 %v2684, %v3470
    %v3732 = vadd.f32 %v2686, %v3472
    %v3733 = vadd.f32 %v2837, %v3623
    %v3734 = vadd.f32 %v2839, %v3625
    %v3735 = vadd.f32 %v2688, %v3474
    %v3736 = vadd.f32 %v2690, %v3476
    %v3737 = vadd.f32 %v2841, %v3627
    %v3738 = vadd.f32 %v2843, %v3629
    %v3739 = vadd.f32 %v2694, %v3480
    %v3740 = vadd.f32 %v2696, %v3482
    %v3741 = vadd.f32 %v2847, %v3633
    %v3742 = vadd.f32 %v2849, %v3635
    %v3743 = vadd.f32 %v2698, %v3484
    %v3744 = vadd.f32 %v2700, %v3486
    %v3745 = vadd.f32 %v2851, %v3637
    %v3746 = vadd.f32 %v2853, %v3639
    %v3747 = vadd.f32 %v2704, %v3490
    %v3748 = vadd.f32 %v2706, %v3492
    %v3749 = vadd.f32 %v2857, %v3643
    %v3750 = vadd.f32 %v2859, %v3645
    %v3751 = vadd.f32 %v2708, %v3494
    %v3752 = vadd.f32 %v2710, %v3496
    %v3753 = vadd.f32 %v2861, %v3647
    %v3754 = vadd.f32 %v2863, %v3649
    %v3755 = vadd.f32 %v2714, %v3500
    %v3756 = vadd.f32 %v2716, %v3502
    %v3757 = vadd.f32 %v2867, %v3653
    %v3758 = vadd.f32 %v2869, %v3655
    %v3759 = vadd.f32 %v2718, %v3504
    %v3760 = vadd.f32 %v2720, %v3506
    %v3761 = vadd.f32 %v2871, %v3657
    %v3762 = vadd.f32 %v2873, %v3659
    %v3763 = vadd.f32 %v2724, %v3510
    %v3764 = vadd.f32 %v2726, %v3512
    %v3765 = vadd.f32 %v2877, %v3663
    %v3766 = vadd.f32 %v2879, %v3665
    %v3767 = vadd.f32 %v2728, %v3514
    %v3768 = vadd.f32 %v2730, %v3516
    %v3769 = vadd.f32 %v2881, %v3667
    %v3770 = vadd.f32 %v2883, %v3669
    %v3771 = vadd.f32 %v2734, %v3520
    %v3772 = vadd.f32 %v2736, %v3522
    %v3773 = vadd.f32 %v2887, %v3673
    %v3774 = vadd.f32 %v2889, %v3675
    %v3775 = vadd.f32 %v2738, %v3524
    %v3776 = vadd.f32 %v2740, %v3526
    %v3777 = vadd.f32 %v2891, %v3677
    %v3778 = vadd.f32 %v2893, %v3679
    %v3779 = vadd.f32 %v2744, %v3530
    %v3780 = vadd.f32 %v2746, %v3532
    %v3781 = vadd.f32 %v2897, %v3683
    %v3782 = vadd.f32 %v2899, %v3685
    %v3783 = vadd.f32 %v2748, %v3534
    %v3784 = vadd.f32 %v2750, %v3536
    %v3785 = vadd.f32 %v2901, %v3687
    %v3786 = vadd.f32 %v2903, %v3689
    %v3787 = vpack.c.bf16 %v1237, %v1235
    %v3788 = vpack.c.bf16 %v1238, %v1236
    %v3789 = vpack.c.bf16 %v1241, %v1239
    %v3790 = vpack.c.bf16 %v1242, %v1240
    %v3791 = vpack.c.bf16 %v1245, %v1243
    %v3792 = vpack.c.bf16 %v1246, %v1244
    %v3793 = vpack.c.bf16 %v1249, %v1247
    %v3794 = vpack.c.bf16 %v1250, %v1248
    %v3795 = vpack.c.bf16 %v1253, %v1251
    %v3796 = vpack.c.bf16 %v1254, %v1252
    %v3797 = vpack.c.bf16 %v1257, %v1255
    %v3798 = vpack.c.bf16 %v1258, %v1256
    %v3799 = vpack.c.bf16 %v1261, %v1259
    %v3800 = vpack.c.bf16 %v1262, %v1260
    %v3801 = vpack.c.bf16 %v1265, %v1263
    %v3802 = vpack.c.bf16 %v1266, %v1264
    %v3803 = vpack.c.bf16 %v1269, %v1267
    %v3804 = vpack.c.bf16 %v1270, %v1268
    %v3805 = vpack.c.bf16 %v1273, %v1271
    %v3806 = vpack.c.bf16 %v1274, %v1272
    %v3807 = vpack.c.bf16 %v1277, %v1275
    %v3808 = vpack.c.bf16 %v1278, %v1276
    %v3809 = vpack.c.bf16 %v1281, %v1279
    %v3810 = vpack.c.bf16 %v1282, %v1280
    %s3811 = scalar_lea.vmem %s6, 1536
    %v3812 = vld [vmem:[%s3811] sm:$0xff]
    %v3813 = vld [vmem:[%s3811 + $0x8] sm:$0xff]
    %v3814 = vld [vmem:[%s3811 + $0x10] sm:$0xff]
    %v3815 = vld [vmem:[%s3811 + $0x18] sm:$0xff]
    %v3816 = vld [vmem:[%s3811 + $0x20] sm:$0xff]
    %v3817 = vld [vmem:[%s3811 + $0x28] sm:$0xff]
    %v3818 = vld [vmem:[%s3811 + $0x30] sm:$0xff]
    %v3819 = vld [vmem:[%s3811 + $0x38] sm:$0xff]
    %v3820 = vld [vmem:[%s3811 + $0x40] sm:$0xff]
    %v3821 = vld [vmem:[%s3811 + $0x48] sm:$0xff]
    %v3822 = vld [vmem:[%s3811 + $0x50] sm:$0xff]
    %v3823 = vld [vmem:[%s3811 + $0x58] sm:$0xff]
    %v3824 = vld [vmem:[%s3811 + $0x60] sm:$0xff]
    %v3825 = vld [vmem:[%s3811 + $0x68] sm:$0xff]
    %v3826 = vld [vmem:[%s3811 + $0x70] sm:$0xff]
    %v3827 = vld [vmem:[%s3811 + $0x78] sm:$0xff]
    %v3828 = vld [vmem:[%s3811 + $0x80] sm:$0xff]
    %v3829 = vld [vmem:[%s3811 + $0x88] sm:$0xff]
    %v3830 = vld [vmem:[%s3811 + $0x90] sm:$0xff]
    %v3831 = vld [vmem:[%s3811 + $0x98] sm:$0xff]
    %v3832 = vld [vmem:[%s3811 + $0xa0] sm:$0xff]
    %v3833 = vld [vmem:[%s3811 + $0xa8] sm:$0xff]
    %v3834 = vld [vmem:[%s3811 + $0xb0] sm:$0xff]
    %v3835 = vld [vmem:[%s3811 + $0xb8] sm:$0xff]
    %v3836 = vld [vmem:[%s3811 + $0xc0] sm:$0xff]
    %v3837 = vld [vmem:[%s3811 + $0xc8] sm:$0xff]
    %v3838 = vld [vmem:[%s3811 + $0xd0] sm:$0xff]
    %v3839 = vld [vmem:[%s3811 + $0xd8] sm:$0xff]
    %v3840 = vld [vmem:[%s3811 + $0xe0] sm:$0xff]
    %v3841 = vld [vmem:[%s3811 + $0xe8] sm:$0xff]
    %v3842 = vld [vmem:[%s3811 + $0xf0] sm:$0xff]
    %v3843 = vld [vmem:[%s3811 + $0xf8] sm:$0xff]
    %v3844 = vld [vmem:[%s3811 + $0x100] sm:$0xff]
    %v3845 = vld [vmem:[%s3811 + $0x108] sm:$0xff]
    %v3846 = vld [vmem:[%s3811 + $0x110] sm:$0xff]
    %v3847 = vld [vmem:[%s3811 + $0x118] sm:$0xff]
    %v3848 = vld [vmem:[%s3811 + $0x120] sm:$0xff]
    %v3849 = vld [vmem:[%s3811 + $0x128] sm:$0xff]
    %v3850 = vld [vmem:[%s3811 + $0x130] sm:$0xff]
    %v3851 = vld [vmem:[%s3811 + $0x138] sm:$0xff]
    %v3852 = vld [vmem:[%s3811 + $0x140] sm:$0xff]
    %v3853 = vld [vmem:[%s3811 + $0x148] sm:$0xff]
    %v3854 = vld [vmem:[%s3811 + $0x150] sm:$0xff]
    %v3855 = vld [vmem:[%s3811 + $0x158] sm:$0xff]
    %v3856 = vld [vmem:[%s3811 + $0x160] sm:$0xff]
    %v3857 = vld [vmem:[%s3811 + $0x168] sm:$0xff]
    %v3858 = vld [vmem:[%s3811 + $0x170] sm:$0xff]
    %v3859 = vld [vmem:[%s3811 + $0x178] sm:$0xff]
    %v3860 = vld [vmem:[%s3811 + $0x180] sm:$0xff]
    %v3861 = vld [vmem:[%s3811 + $0x188] sm:$0xff]
    %v3862 = vld [vmem:[%s3811 + $0x190] sm:$0xff]
    %v3863 = vld [vmem:[%s3811 + $0x198] sm:$0xff]
    %v3864 = vld [vmem:[%s3811 + $0x1a0] sm:$0xff]
    %v3865 = vld [vmem:[%s3811 + $0x1a8] sm:$0xff]
    %v3866 = vld [vmem:[%s3811 + $0x1b0] sm:$0xff]
    %v3867 = vld [vmem:[%s3811 + $0x1b8] sm:$0xff]
    %v3868 = vld [vmem:[%s3811 + $0x1c0] sm:$0xff]
    %v3869 = vld [vmem:[%s3811 + $0x1c8] sm:$0xff]
    %v3870 = vld [vmem:[%s3811 + $0x1d0] sm:$0xff]
    %v3871 = vld [vmem:[%s3811 + $0x1d8] sm:$0xff]
    %v3872 = vld [vmem:[%s3811 + $0x1e0] sm:$0xff]
    %v3873 = vld [vmem:[%s3811 + $0x1e8] sm:$0xff]
    %v3874 = vld [vmem:[%s3811 + $0x1f0] sm:$0xff]
    %v3875 = vld [vmem:[%s3811 + $0x1f8] sm:$0xff]
    %v3900 = vrot.slane %v3787, 1
    %v3901 = vrot.slane %v3789, 1
    %v3902 = vsel %vm2994, %v3900, %v3901
    %v3903 = vrot.slane %v3788, 1
    %v3904 = vrot.slane %v3790, 1
    %v3905 = vsel %vm2994, %v3903, %v3904
    %v3906 = vrot.slane %v3791, 1
    %v3907 = vsel %vm2994, %v3901, %v3906
    %v3908 = vrot.slane %v3792, 1
    %v3909 = vsel %vm2994, %v3904, %v3908
    %v3910 = vrot.slane %v3793, 1
    %v3911 = vsel %vm2994, %v3906, %v3910
    %v3912 = vrot.slane %v3794, 1
    %v3913 = vsel %vm2994, %v3908, %v3912
    %v3914 = vrot.slane %v3795, 1
    %v3915 = vsel %vm2994, %v3910, %v3914
    %v3916 = vrot.slane %v3796, 1
    %v3917 = vsel %vm2994, %v3912, %v3916
    %v3918 = vrot.slane %v3797, 1
    %v3919 = vsel %vm2994, %v3914, %v3918
    %v3920 = vrot.slane %v3798, 1
    %v3921 = vsel %vm2994, %v3916, %v3920
    %v3922 = vrot.slane %v3799, 1
    %v3923 = vsel %vm2994, %v3918, %v3922
    %v3924 = vrot.slane %v3800, 1
    %v3925 = vsel %vm2994, %v3920, %v3924
    %v3926 = vrot.slane %v3801, 1
    %v3927 = vsel %vm2994, %v3922, %v3926
    %v3928 = vrot.slane %v3802, 1
    %v3929 = vsel %vm2994, %v3924, %v3928
    %v3930 = vrot.slane %v3803, 1
    %v3931 = vsel %vm2994, %v3926, %v3930
    %v3932 = vrot.slane %v3804, 1
    %v3933 = vsel %vm2994, %v3928, %v3932
    %v3934 = vrot.slane %v3805, 1
    %v3935 = vsel %vm2994, %v3930, %v3934
    %v3936 = vrot.slane %v3806, 1
    %v3937 = vsel %vm2994, %v3932, %v3936
    %v3938 = vrot.slane %v3807, 1
    %v3939 = vsel %vm2994, %v3934, %v3938
    %v3940 = vrot.slane %v3808, 1
    %v3941 = vsel %vm2994, %v3936, %v3940
    %v3942 = vrot.slane %v3809, 1
    %v3943 = vsel %vm2994, %v3938, %v3942
    %v3944 = vrot.slane %v3810, 1
    %v3945 = vsel %vm2994, %v3940, %v3944
    %v4034 = vunpack.c.l.b16 %v3812
    %v4035 = vunpack.c.h.b16 %v3812
    %v4036 = vunpack.c.l.b16 %v3813
    %v4037 = vunpack.c.h.b16 %v3813
    %v4038 = vunpack.c.l.b16 %v3814
    %v4039 = vunpack.c.h.b16 %v3814
    %v4040 = vunpack.c.l.b16 %v3815
    %v4041 = vunpack.c.h.b16 %v3815
    %v4042 = vunpack.c.l.b16 %v3816
    %v4043 = vunpack.c.h.b16 %v3816
    %v4044 = vunpack.c.l.b16 %v3817
    %v4045 = vunpack.c.h.b16 %v3817
    %v4046 = vunpack.c.l.b16 %v3818
    %v4047 = vunpack.c.h.b16 %v3818
    %v4048 = vunpack.c.l.b16 %v3819
    %v4049 = vunpack.c.h.b16 %v3819
    %v4050 = vunpack.c.l.b16 %v3820
    %v4051 = vunpack.c.h.b16 %v3820
    %v4052 = vunpack.c.l.b16 %v3821
    %v4053 = vunpack.c.h.b16 %v3821
    %v4054 = vunpack.c.l.b16 %v3822
    %v4055 = vunpack.c.h.b16 %v3822
    %v4056 = vunpack.c.l.b16 %v3823
    %v4057 = vunpack.c.h.b16 %v3823
    %v4058 = vunpack.c.l.b16 %v3824
    %v4059 = vunpack.c.h.b16 %v3824
    %v4060 = vunpack.c.l.b16 %v3825
    %v4061 = vunpack.c.h.b16 %v3825
    %v4062 = vunpack.c.l.b16 %v3826
    %v4063 = vunpack.c.h.b16 %v3826
    %v4064 = vunpack.c.l.b16 %v3827
    %v4065 = vunpack.c.h.b16 %v3827
    %v4066 = vunpack.c.l.b16 %v3828
    %v4067 = vunpack.c.h.b16 %v3828
    %v4068 = vunpack.c.l.b16 %v3829
    %v4069 = vunpack.c.h.b16 %v3829
    %v4070 = vunpack.c.l.b16 %v3830
    %v4071 = vunpack.c.h.b16 %v3830
    %v4072 = vunpack.c.l.b16 %v3831
    %v4073 = vunpack.c.h.b16 %v3831
    %v4074 = vunpack.c.l.b16 %v3832
    %v4075 = vunpack.c.h.b16 %v3832
    %v4076 = vunpack.c.l.b16 %v3833
    %v4077 = vunpack.c.h.b16 %v3833
    %v4078 = vunpack.c.l.b16 %v3834
    %v4079 = vunpack.c.h.b16 %v3834
    %v4080 = vunpack.c.l.b16 %v3835
    %v4081 = vunpack.c.h.b16 %v3835
    %v4082 = vunpack.c.l.b16 %v3836
    %v4083 = vunpack.c.h.b16 %v3836
    %v4084 = vunpack.c.l.b16 %v3837
    %v4085 = vunpack.c.h.b16 %v3837
    %v4086 = vunpack.c.l.b16 %v3838
    %v4087 = vunpack.c.h.b16 %v3838
    %v4088 = vunpack.c.l.b16 %v3839
    %v4089 = vunpack.c.h.b16 %v3839
    %v4090 = vunpack.c.l.b16 %v3840
    %v4091 = vunpack.c.h.b16 %v3840
    %v4092 = vunpack.c.l.b16 %v3841
    %v4093 = vunpack.c.h.b16 %v3841
    %v4094 = vunpack.c.l.b16 %v3842
    %v4095 = vunpack.c.h.b16 %v3842
    %v4096 = vunpack.c.l.b16 %v3843
    %v4097 = vunpack.c.h.b16 %v3843
    %v4098 = vunpack.c.l.b16 %v3844
    %v4099 = vunpack.c.h.b16 %v3844
    %v4100 = vunpack.c.l.b16 %v3845
    %v4101 = vunpack.c.h.b16 %v3845
    %v4102 = vunpack.c.l.b16 %v3846
    %v4103 = vunpack.c.h.b16 %v3846
    %v4104 = vunpack.c.l.b16 %v3847
    %v4105 = vunpack.c.h.b16 %v3847
    %v4106 = vunpack.c.l.b16 %v3848
    %v4107 = vunpack.c.h.b16 %v3848
    %v4108 = vunpack.c.l.b16 %v3849
    %v4109 = vunpack.c.h.b16 %v3849
    %v4110 = vunpack.c.l.b16 %v3850
    %v4111 = vunpack.c.h.b16 %v3850
    %v4112 = vunpack.c.l.b16 %v3851
    %v4113 = vunpack.c.h.b16 %v3851
    %v4114 = vunpack.c.l.b16 %v3852
    %v4115 = vunpack.c.h.b16 %v3852
    %v4116 = vunpack.c.l.b16 %v3853
    %v4117 = vunpack.c.h.b16 %v3853
    %v4118 = vunpack.c.l.b16 %v3854
    %v4119 = vunpack.c.h.b16 %v3854
    %v4120 = vunpack.c.l.b16 %v3855
    %v4121 = vunpack.c.h.b16 %v3855
    %v4122 = vunpack.c.l.b16 %v3856
    %v4123 = vunpack.c.h.b16 %v3856
    %v4124 = vunpack.c.l.b16 %v3857
    %v4125 = vunpack.c.h.b16 %v3857
    %v4126 = vunpack.c.l.b16 %v3858
    %v4127 = vunpack.c.h.b16 %v3858
    %v4128 = vunpack.c.l.b16 %v3859
    %v4129 = vunpack.c.h.b16 %v3859
    %v4130 = vunpack.c.l.b16 %v3860
    %v4131 = vunpack.c.h.b16 %v3860
    %v4132 = vunpack.c.l.b16 %v3861
    %v4133 = vunpack.c.h.b16 %v3861
    %v4134 = vunpack.c.l.b16 %v3862
    %v4135 = vunpack.c.h.b16 %v3862
    %v4136 = vunpack.c.l.b16 %v3863
    %v4137 = vunpack.c.h.b16 %v3863
    %v4138 = vunpack.c.l.b16 %v3864
    %v4139 = vunpack.c.h.b16 %v3864
    %v4140 = vunpack.c.l.b16 %v3865
    %v4141 = vunpack.c.h.b16 %v3865
    %v4142 = vunpack.c.l.b16 %v3866
    %v4143 = vunpack.c.h.b16 %v3866
    %v4144 = vunpack.c.l.b16 %v3867
    %v4145 = vunpack.c.h.b16 %v3867
    %v4146 = vunpack.c.l.b16 %v3868
    %v4147 = vunpack.c.h.b16 %v3868
    %v4148 = vunpack.c.l.b16 %v3869
    %v4149 = vunpack.c.h.b16 %v3869
    %v4150 = vunpack.c.l.b16 %v3870
    %v4151 = vunpack.c.h.b16 %v3870
    %v4152 = vunpack.c.l.b16 %v3871
    %v4153 = vunpack.c.h.b16 %v3871
    %v4154 = vunpack.c.l.b16 %v3872
    %v4155 = vunpack.c.h.b16 %v3872
    %v4156 = vunpack.c.l.b16 %v3873
    %v4157 = vunpack.c.h.b16 %v3873
    %v4158 = vunpack.c.l.b16 %v3874
    %v4159 = vunpack.c.h.b16 %v3874
    %v4160 = vunpack.c.l.b16 %v3875
    %v4161 = vunpack.c.h.b16 %v3875
    %v4162 = vpack.c.b16 %v4038, %v4034
    %v4163 = vpack.c.b16 %v4039, %v4035
    %v4164 = vpack.c.b16 %v4040, %v4036
    %v4165 = vpack.c.b16 %v4041, %v4037
    %v4166 = vpack.c.b16 %v4046, %v4042
    %v4167 = vpack.c.b16 %v4047, %v4043
    %v4168 = vpack.c.b16 %v4048, %v4044
    %v4169 = vpack.c.b16 %v4049, %v4045
    %v4170 = vpack.c.b16 %v4054, %v4050
    %v4171 = vpack.c.b16 %v4055, %v4051
    %v4172 = vpack.c.b16 %v4056, %v4052
    %v4173 = vpack.c.b16 %v4057, %v4053
    %v4174 = vpack.c.b16 %v4062, %v4058
    %v4175 = vpack.c.b16 %v4063, %v4059
    %v4176 = vpack.c.b16 %v4064, %v4060
    %v4177 = vpack.c.b16 %v4065, %v4061
    %v4178 = vpack.c.b16 %v4070, %v4066
    %v4179 = vpack.c.b16 %v4071, %v4067
    %v4180 = vpack.c.b16 %v4072, %v4068
    %v4181 = vpack.c.b16 %v4073, %v4069
    %v4182 = vpack.c.b16 %v4078, %v4074
    %v4183 = vpack.c.b16 %v4079, %v4075
    %v4184 = vpack.c.b16 %v4080, %v4076
    %v4185 = vpack.c.b16 %v4081, %v4077
    %v4186 = vpack.c.b16 %v4086, %v4082
    %v4187 = vpack.c.b16 %v4087, %v4083
    %v4188 = vpack.c.b16 %v4088, %v4084
    %v4189 = vpack.c.b16 %v4089, %v4085
    %v4190 = vpack.c.b16 %v4094, %v4090
    %v4191 = vpack.c.b16 %v4095, %v4091
    %v4192 = vpack.c.b16 %v4096, %v4092
    %v4193 = vpack.c.b16 %v4097, %v4093
    %v4194 = vpack.c.b16 %v4102, %v4098
    %v4195 = vpack.c.b16 %v4103, %v4099
    %v4196 = vpack.c.b16 %v4104, %v4100
    %v4197 = vpack.c.b16 %v4105, %v4101
    %v4198 = vpack.c.b16 %v4110, %v4106
    %v4199 = vpack.c.b16 %v4111, %v4107
    %v4200 = vpack.c.b16 %v4112, %v4108
    %v4201 = vpack.c.b16 %v4113, %v4109
    %v4202 = vpack.c.b16 %v4118, %v4114
    %v4203 = vpack.c.b16 %v4119, %v4115
    %v4204 = vpack.c.b16 %v4120, %v4116
    %v4205 = vpack.c.b16 %v4121, %v4117
    %v4206 = vpack.c.b16 %v4126, %v4122
    %v4207 = vpack.c.b16 %v4127, %v4123
    %v4208 = vpack.c.b16 %v4128, %v4124
    %v4209 = vpack.c.b16 %v4129, %v4125
    %v4210 = vpack.c.b16 %v4134, %v4130
    %v4211 = vpack.c.b16 %v4135, %v4131
    %v4212 = vpack.c.b16 %v4136, %v4132
    %v4213 = vpack.c.b16 %v4137, %v4133
    %v4214 = vpack.c.b16 %v4142, %v4138
    %v4215 = vpack.c.b16 %v4143, %v4139
    %v4216 = vpack.c.b16 %v4144, %v4140
    %v4217 = vpack.c.b16 %v4145, %v4141
    %v4218 = vpack.c.b16 %v4150, %v4146
    %v4219 = vpack.c.b16 %v4151, %v4147
    %v4220 = vpack.c.b16 %v4152, %v4148
    %v4221 = vpack.c.b16 %v4153, %v4149
    %v4222 = vpack.c.b16 %v4158, %v4154
    %v4223 = vpack.c.b16 %v4159, %v4155
    %v4224 = vpack.c.b16 %v4160, %v4156
    %v4225 = vpack.c.b16 %v4161, %v4157
    %4290 = vmatprep.subr.bf16.mxu0 %v4163
    %4291 = vmatpush1.bf16.msra.mxu0 %v4162
    %4292 = vmatprep.subr.bf16.mxu0 %v4167
    %4293 = vmatpush1.bf16.msra.mxu0 %v4166
    %4294 = vmatprep.subr.bf16.mxu0 %v4171
    %4295 = vmatpush1.bf16.msra.mxu0 %v4170
    %4296 = vmatprep.subr.bf16.mxu0 %v4175
    %4297 = vmatpush1.bf16.msra.mxu0 %v4174
    %4298 = vmatprep.subr.bf16.mxu0 %v4179
    %4299 = vmatpush1.bf16.msra.mxu0 %v4178
    %4300 = vmatprep.subr.bf16.mxu0 %v4183
    %4301 = vmatpush1.bf16.msra.mxu0 %v4182
    %4302 = vmatprep.subr.bf16.mxu0 %v4187
    %4303 = vmatpush1.bf16.msra.mxu0 %v4186
    %4304 = vmatprep.subr.bf16.mxu0 %v4191
    %4305 = vmatpush1.bf16.msra.mxu0 %v4190
    %4306 = vmatprep.subr.bf16.mxu0 %v4195
    %4307 = vmatpush1.bf16.msra.mxu0 %v4194
    %4308 = vmatprep.subr.bf16.mxu0 %v4199
    %4309 = vmatpush1.bf16.msra.mxu0 %v4198
    %4310 = vmatprep.subr.bf16.mxu0 %v4203
    %4311 = vmatpush1.bf16.msra.mxu0 %v4202
    %4312 = vmatprep.subr.bf16.mxu0 %v4207
    %4313 = vmatpush1.bf16.msra.mxu0 %v4206
    %4314 = vmatprep.subr.bf16.mxu0 %v4211
    %4315 = vmatpush1.bf16.msra.mxu0 %v4210
    %4316 = vmatprep.subr.bf16.mxu0 %v4215
    %4317 = vmatpush1.bf16.msra.mxu0 %v4214
    %4318 = vmatprep.subr.bf16.mxu0 %v4219
    %4319 = vmatpush1.bf16.msra.mxu0 %v4218
    %4320 = vmatprep.subr.bf16.mxu0 %v4223
    %4321 = vmatpush1.bf16.msra.mxu0 %v4222
    %4322 = vmatprep.mubr.bf16.mxu0 %v3905
    %4323 = vmatmul.mubr.bf16.gmra.mrb[0].mxu0 %v3902
    %v4324 = vpop.f32.mrb[0].mxu0
    %v4325 = vadd.f32 0.0, %v4324
    %v4326 = vpop.f32.mrb[0].mxu0
    %v4327 = vadd.f32 0.0, %v4326
    %v4328 = vpop.f32.mrb[0].mxu0
    %v4329 = vadd.f32 0.0, %v4328
    %v4330 = vpop.f32.mrb[0].mxu0
    %v4331 = vadd.f32 0.0, %v4330
    %4332 = vmatprep.mubr.bf16.mxu0 %v3909
    %4333 = vmatmul.mubr.bf16.gmra.mrb[0].mxu0 %v3907
    %v4334 = vpop.f32.mrb[0].mxu0
    %v4335 = vadd.f32 0.0, %v4334
    %v4336 = vpop.f32.mrb[0].mxu0
    %v4337 = vadd.f32 0.0, %v4336
    %v4338 = vpop.f32.mrb[0].mxu0
    %v4339 = vadd.f32 0.0, %v4338
    %v4340 = vpop.f32.mrb[0].mxu0
    %v4341 = vadd.f32 0.0, %v4340
    %4342 = vmatprep.mubr.bf16.mxu0 %v3913
    %4343 = vmatmul.mubr.bf16.gmra.mrb[0].mxu0 %v3911
    %v4344 = vpop.f32.mrb[0].mxu0
    %v4345 = vadd.f32 0.0, %v4344
    %v4346 = vpop.f32.mrb[0].mxu0
    %v4347 = vadd.f32 0.0, %v4346
    %v4348 = vpop.f32.mrb[0].mxu0
    %v4349 = vadd.f32 0.0, %v4348
    %v4350 = vpop.f32.mrb[0].mxu0
    %v4351 = vadd.f32 0.0, %v4350
    %4352 = vmatprep.mubr.bf16.mxu0 %v3917
    %4353 = vmatmul.mubr.bf16.gmra.mrb[0].mxu0 %v3915
    %v4354 = vpop.f32.mrb[0].mxu0
    %v4355 = vadd.f32 0.0, %v4354
    %v4356 = vpop.f32.mrb[0].mxu0
    %v4357 = vadd.f32 0.0, %v4356
    %v4358 = vpop.f32.mrb[0].mxu0
    %v4359 = vadd.f32 0.0, %v4358
    %v4360 = vpop.f32.mrb[0].mxu0
    %v4361 = vadd.f32 0.0, %v4360
    %4362 = vmatprep.mubr.bf16.mxu0 %v3921
    %4363 = vmatmul.mubr.bf16.gmra.mrb[0].mxu0 %v3919
    %v4364 = vpop.f32.mrb[0].mxu0
    %v4365 = vadd.f32 0.0, %v4364
    %v4366 = vpop.f32.mrb[0].mxu0
    %v4367 = vadd.f32 0.0, %v4366
    %v4368 = vpop.f32.mrb[0].mxu0
    %v4369 = vadd.f32 0.0, %v4368
    %v4370 = vpop.f32.mrb[0].mxu0
    %v4371 = vadd.f32 0.0, %v4370
    %4372 = vmatprep.mubr.bf16.mxu0 %v3925
    %4373 = vmatmul.mubr.bf16.gmra.mrb[0].mxu0 %v3923
    %v4374 = vpop.f32.mrb[0].mxu0
    %v4375 = vadd.f32 0.0, %v4374
    %v4376 = vpop.f32.mrb[0].mxu0
    %v4377 = vadd.f32 0.0, %v4376
    %v4378 = vpop.f32.mrb[0].mxu0
    %v4379 = vadd.f32 0.0, %v4378
    %v4380 = vpop.f32.mrb[0].mxu0
    %v4381 = vadd.f32 0.0, %v4380
    %4382 = vmatprep.mubr.bf16.mxu0 %v3929
    %4383 = vmatmul.mubr.bf16.gmra.mrb[0].mxu0 %v3927
    %v4384 = vpop.f32.mrb[0].mxu0
    %v4385 = vadd.f32 0.0, %v4384
    %v4386 = vpop.f32.mrb[0].mxu0
    %v4387 = vadd.f32 0.0, %v4386
    %v4388 = vpop.f32.mrb[0].mxu0
    %v4389 = vadd.f32 0.0, %v4388
    %v4390 = vpop.f32.mrb[0].mxu0
    %v4391 = vadd.f32 0.0, %v4390
    %4392 = vmatprep.mubr.bf16.mxu0 %v3933
    %4393 = vmatmul.mubr.bf16.gmra.mrb[0].mxu0 %v3931
    %v4394 = vpop.f32.mrb[0].mxu0
    %v4395 = vadd.f32 0.0, %v4394
    %v4396 = vpop.f32.mrb[0].mxu0
    %v4397 = vadd.f32 0.0, %v4396
    %v4398 = vpop.f32.mrb[0].mxu0
    %v4399 = vadd.f32 0.0, %v4398
    %v4400 = vpop.f32.mrb[0].mxu0
    %v4401 = vadd.f32 0.0, %v4400
    %4402 = vmatprep.mubr.bf16.mxu0 %v3937
    %4403 = vmatmul.mubr.bf16.gmra.mrb[0].mxu0 %v3935
    %v4404 = vpop.f32.mrb[0].mxu0
    %v4405 = vadd.f32 0.0, %v4404
    %v4406 = vpop.f32.mrb[0].mxu0
    %v4407 = vadd.f32 0.0, %v4406
    %v4408 = vpop.f32.mrb[0].mxu0
    %v4409 = vadd.f32 0.0, %v4408
    %v4410 = vpop.f32.mrb[0].mxu0
    %v4411 = vadd.f32 0.0, %v4410
    %4412 = vmatprep.mubr.bf16.mxu0 %v3941
    %4413 = vmatmul.mubr.bf16.gmra.mrb[0].mxu0 %v3939
    %v4414 = vpop.f32.mrb[0].mxu0
    %v4415 = vadd.f32 0.0, %v4414
    %v4416 = vpop.f32.mrb[0].mxu0
    %v4417 = vadd.f32 0.0, %v4416
    %v4418 = vpop.f32.mrb[0].mxu0
    %v4419 = vadd.f32 0.0, %v4418
    %v4420 = vpop.f32.mrb[0].mxu0
    %v4421 = vadd.f32 0.0, %v4420
    %4422 = vmatprep.mubr.bf16.mxu0 %v3945
    %4423 = vmatmul.mubr.bf16.gmra.mrb[0].mxu0 %v3943
    %v4424 = vpop.f32.mrb[0].mxu0
    %v4425 = vadd.f32 0.0, %v4424
    %v4426 = vpop.f32.mrb[0].mxu0
    %v4427 = vadd.f32 0.0, %v4426
    %v4428 = vpop.f32.mrb[0].mxu0
    %v4429 = vadd.f32 0.0, %v4428
    %v4430 = vpop.f32.mrb[0].mxu0
    %v4431 = vadd.f32 0.0, %v4430
    %4432 = vmatprep.mubr.bf16.mxu0 %v3944
    %4433 = vmatmul.mubr.bf16.gmra.mrb[0].mxu0 %v3942
    %v4434 = vpop.f32.mrb[0].mxu0
    %v4435 = vadd.f32 0.0, %v4434
    %v4436 = vpop.f32.mrb[0].mxu0
    %v4437 = vadd.f32 0.0, %v4436
    %v4438 = vpop.f32.mrb[0].mxu0
    %v4439 = vadd.f32 0.0, %v4438
    %v4440 = vpop.f32.mrb[0].mxu0
    %v4441 = vadd.f32 0.0, %v4440
    %4442 = vdwg.mxu0
    %4443 = vmatprep.subr.bf16.mxu0 %v4165
    %4444 = vmatpush1.bf16.msra.mxu0 %v4164
    %4445 = vmatprep.subr.bf16.mxu0 %v4169
    %4446 = vmatpush1.bf16.msra.mxu0 %v4168
    %4447 = vmatprep.subr.bf16.mxu0 %v4173
    %4448 = vmatpush1.bf16.msra.mxu0 %v4172
    %4449 = vmatprep.subr.bf16.mxu0 %v4177
    %4450 = vmatpush1.bf16.msra.mxu0 %v4176
    %4451 = vmatprep.subr.bf16.mxu0 %v4181
    %4452 = vmatpush1.bf16.msra.mxu0 %v4180
    %4453 = vmatprep.subr.bf16.mxu0 %v4185
    %4454 = vmatpush1.bf16.msra.mxu0 %v4184
    %4455 = vmatprep.subr.bf16.mxu0 %v4189
    %4456 = vmatpush1.bf16.msra.mxu0 %v4188
    %4457 = vmatprep.subr.bf16.mxu0 %v4193
    %4458 = vmatpush1.bf16.msra.mxu0 %v4192
    %4459 = vmatprep.subr.bf16.mxu0 %v4197
    %4460 = vmatpush1.bf16.msra.mxu0 %v4196
    %4461 = vmatprep.subr.bf16.mxu0 %v4201
    %4462 = vmatpush1.bf16.msra.mxu0 %v4200
    %4463 = vmatprep.subr.bf16.mxu0 %v4205
    %4464 = vmatpush1.bf16.msra.mxu0 %v4204
    %4465 = vmatprep.subr.bf16.mxu0 %v4209
    %4466 = vmatpush1.bf16.msra.mxu0 %v4208
    %4467 = vmatprep.subr.bf16.mxu0 %v4213
    %4468 = vmatpush1.bf16.msra.mxu0 %v4212
    %4469 = vmatprep.subr.bf16.mxu0 %v4217
    %4470 = vmatpush1.bf16.msra.mxu0 %v4216
    %4471 = vmatprep.subr.bf16.mxu0 %v4221
    %4472 = vmatpush1.bf16.msra.mxu0 %v4220
    %4473 = vmatprep.subr.bf16.mxu0 %v4225
    %4474 = vmatpush1.bf16.msra.mxu0 %v4224
    %4475 = vmatprep.mubr.bf16.mxu0 %v3905
    %4476 = vmatmul.mubr.bf16.gmra.mrb[0].mxu0 %v3902
    %v4477 = vpop.f32.mrb[0].mxu0
    %v4478 = vadd.f32 0.0, %v4477
    %v4479 = vpop.f32.mrb[0].mxu0
    %v4480 = vadd.f32 0.0, %v4479
    %v4481 = vpop.f32.mrb[0].mxu0
    %v4482 = vadd.f32 0.0, %v4481
    %v4483 = vpop.f32.mrb[0].mxu0
    %v4484 = vadd.f32 0.0, %v4483
    %4485 = vmatprep.mubr.bf16.mxu0 %v3909
    %4486 = vmatmul.mubr.bf16.gmra.mrb[0].mxu0 %v3907
    %v4487 = vpop.f32.mrb[0].mxu0
    %v4488 = vadd.f32 0.0, %v4487
    %v4489 = vpop.f32.mrb[0].mxu0
    %v4490 = vadd.f32 0.0, %v4489
    %v4491 = vpop.f32.mrb[0].mxu0
    %v4492 = vadd.f32 0.0, %v4491
    %v4493 = vpop.f32.mrb[0].mxu0
    %v4494 = vadd.f32 0.0, %v4493
    %4495 = vmatprep.mubr.bf16.mxu0 %v3913
    %4496 = vmatmul.mubr.bf16.gmra.mrb[0].mxu0 %v3911
    %v4497 = vpop.f32.mrb[0].mxu0
    %v4498 = vadd.f32 0.0, %v4497
    %v4499 = vpop.f32.mrb[0].mxu0
    %v4500 = vadd.f32 0.0, %v4499
    %v4501 = vpop.f32.mrb[0].mxu0
    %v4502 = vadd.f32 0.0, %v4501
    %v4503 = vpop.f32.mrb[0].mxu0
    %v4504 = vadd.f32 0.0, %v4503
    %4505 = vmatprep.mubr.bf16.mxu0 %v3917
    %4506 = vmatmul.mubr.bf16.gmra.mrb[0].mxu0 %v3915
    %v4507 = vpop.f32.mrb[0].mxu0
    %v4508 = vadd.f32 0.0, %v4507
    %v4509 = vpop.f32.mrb[0].mxu0
    %v4510 = vadd.f32 0.0, %v4509
    %v4511 = vpop.f32.mrb[0].mxu0
    %v4512 = vadd.f32 0.0, %v4511
    %v4513 = vpop.f32.mrb[0].mxu0
    %v4514 = vadd.f32 0.0, %v4513
    %4515 = vmatprep.mubr.bf16.mxu0 %v3921
    %4516 = vmatmul.mubr.bf16.gmra.mrb[0].mxu0 %v3919
    %v4517 = vpop.f32.mrb[0].mxu0
    %v4518 = vadd.f32 0.0, %v4517
    %v4519 = vpop.f32.mrb[0].mxu0
    %v4520 = vadd.f32 0.0, %v4519
    %v4521 = vpop.f32.mrb[0].mxu0
    %v4522 = vadd.f32 0.0, %v4521
    %v4523 = vpop.f32.mrb[0].mxu0
    %v4524 = vadd.f32 0.0, %v4523
    %4525 = vmatprep.mubr.bf16.mxu0 %v3925
    %4526 = vmatmul.mubr.bf16.gmra.mrb[0].mxu0 %v3923
    %v4527 = vpop.f32.mrb[0].mxu0
    %v4528 = vadd.f32 0.0, %v4527
    %v4529 = vpop.f32.mrb[0].mxu0
    %v4530 = vadd.f32 0.0, %v4529
    %v4531 = vpop.f32.mrb[0].mxu0
    %v4532 = vadd.f32 0.0, %v4531
    %v4533 = vpop.f32.mrb[0].mxu0
    %v4534 = vadd.f32 0.0, %v4533
    %4535 = vmatprep.mubr.bf16.mxu0 %v3929
    %4536 = vmatmul.mubr.bf16.gmra.mrb[0].mxu0 %v3927
    %v4537 = vpop.f32.mrb[0].mxu0
    %v4538 = vadd.f32 0.0, %v4537
    %v4539 = vpop.f32.mrb[0].mxu0
    %v4540 = vadd.f32 0.0, %v4539
    %v4541 = vpop.f32.mrb[0].mxu0
    %v4542 = vadd.f32 0.0, %v4541
    %v4543 = vpop.f32.mrb[0].mxu0
    %v4544 = vadd.f32 0.0, %v4543
    %4545 = vmatprep.mubr.bf16.mxu0 %v3933
    %4546 = vmatmul.mubr.bf16.gmra.mrb[0].mxu0 %v3931
    %v4547 = vpop.f32.mrb[0].mxu0
    %v4548 = vadd.f32 0.0, %v4547
    %v4549 = vpop.f32.mrb[0].mxu0
    %v4550 = vadd.f32 0.0, %v4549
    %v4551 = vpop.f32.mrb[0].mxu0
    %v4552 = vadd.f32 0.0, %v4551
    %v4553 = vpop.f32.mrb[0].mxu0
    %v4554 = vadd.f32 0.0, %v4553
    %4555 = vmatprep.mubr.bf16.mxu0 %v3937
    %4556 = vmatmul.mubr.bf16.gmra.mrb[0].mxu0 %v3935
    %v4557 = vpop.f32.mrb[0].mxu0
    %v4558 = vadd.f32 0.0, %v4557
    %v4559 = vpop.f32.mrb[0].mxu0
    %v4560 = vadd.f32 0.0, %v4559
    %v4561 = vpop.f32.mrb[0].mxu0
    %v4562 = vadd.f32 0.0, %v4561
    %v4563 = vpop.f32.mrb[0].mxu0
    %v4564 = vadd.f32 0.0, %v4563
    %4565 = vmatprep.mubr.bf16.mxu0 %v3941
    %4566 = vmatmul.mubr.bf16.gmra.mrb[0].mxu0 %v3939
    %v4567 = vpop.f32.mrb[0].mxu0
    %v4568 = vadd.f32 0.0, %v4567
    %v4569 = vpop.f32.mrb[0].mxu0
    %v4570 = vadd.f32 0.0, %v4569
    %v4571 = vpop.f32.mrb[0].mxu0
    %v4572 = vadd.f32 0.0, %v4571
    %v4573 = vpop.f32.mrb[0].mxu0
    %v4574 = vadd.f32 0.0, %v4573
    %4575 = vmatprep.mubr.bf16.mxu0 %v3945
    %4576 = vmatmul.mubr.bf16.gmra.mrb[0].mxu0 %v3943
    %v4577 = vpop.f32.mrb[0].mxu0
    %v4578 = vadd.f32 0.0, %v4577
    %v4579 = vpop.f32.mrb[0].mxu0
    %v4580 = vadd.f32 0.0, %v4579
    %v4581 = vpop.f32.mrb[0].mxu0
    %v4582 = vadd.f32 0.0, %v4581
    %v4583 = vpop.f32.mrb[0].mxu0
    %v4584 = vadd.f32 0.0, %v4583
    %4585 = vmatprep.mubr.bf16.mxu0 %v3944
    %4586 = vmatmul.mubr.bf16.gmra.mrb[0].mxu0 %v3942
    %v4587 = vpop.f32.mrb[0].mxu0
    %v4588 = vadd.f32 0.0, %v4587
    %v4589 = vpop.f32.mrb[0].mxu0
    %v4590 = vadd.f32 0.0, %v4589
    %v4591 = vpop.f32.mrb[0].mxu0
    %v4592 = vadd.f32 0.0, %v4591
    %v4593 = vpop.f32.mrb[0].mxu0
    %v4594 = vadd.f32 0.0, %v4593
    %4595 = vdwg.mxu0
    %v4596 = vadd.f32 %v3691, %v4325
    %v4597 = vadd.f32 %v3692, %v4327
    %v4598 = vadd.f32 %v3693, %v4478
    %v4599 = vadd.f32 %v3694, %v4480
    %v4600 = vadd.f32 %v3695, %v4329
    %v4601 = vadd.f32 %v3696, %v4331
    %v4602 = vadd.f32 %v3697, %v4482
    %v4603 = vadd.f32 %v3698, %v4484
    %v4604 = vadd.f32 %v3699, %v4335
    %v4605 = vadd.f32 %v3700, %v4337
    %v4606 = vadd.f32 %v3701, %v4488
    %v4607 = vadd.f32 %v3702, %v4490
    %v4608 = vadd.f32 %v3703, %v4339
    %v4609 = vadd.f32 %v3704, %v4341
    %v4610 = vadd.f32 %v3705, %v4492
    %v4611 = vadd.f32 %v3706, %v4494
    %v4612 = vadd.f32 %v3707, %v4345
    %v4613 = vadd.f32 %v3708, %v4347
    %v4614 = vadd.f32 %v3709, %v4498
    %v4615 = vadd.f32 %v3710, %v4500
    %v4616 = vadd.f32 %v3711, %v4349
    %v4617 = vadd.f32 %v3712, %v4351
    %v4618 = vadd.f32 %v3713, %v4502
    %v4619 = vadd.f32 %v3714, %v4504
    %v4620 = vadd.f32 %v3715, %v4355
    %v4621 = vadd.f32 %v3716, %v4357
    %v4622 = vadd.f32 %v3717, %v4508
    %v4623 = vadd.f32 %v3718, %v4510
    %v4624 = vadd.f32 %v3719, %v4359
    %v4625 = vadd.f32 %v3720, %v4361
    %v4626 = vadd.f32 %v3721, %v4512
    %v4627 = vadd.f32 %v3722, %v4514
    %v4628 = vadd.f32 %v3723, %v4365
    %v4629 = vadd.f32 %v3724, %v4367
    %v4630 = vadd.f32 %v3725, %v4518
    %v4631 = vadd.f32 %v3726, %v4520
    %v4632 = vadd.f32 %v3727, %v4369
    %v4633 = vadd.f32 %v3728, %v4371
    %v4634 = vadd.f32 %v3729, %v4522
    %v4635 = vadd.f32 %v3730, %v4524
    %v4636 = vadd.f32 %v3731, %v4375
    %v4637 = vadd.f32 %v3732, %v4377
    %v4638 = vadd.f32 %v3733, %v4528
    %v4639 = vadd.f32 %v3734, %v4530
    %v4640 = vadd.f32 %v3735, %v4379
    %v4641 = vadd.f32 %v3736, %v4381
    %v4642 = vadd.f32 %v3737, %v4532
    %v4643 = vadd.f32 %v3738, %v4534
    %v4644 = vadd.f32 %v3739, %v4385
    %v4645 = vadd.f32 %v3740, %v4387
    %v4646 = vadd.f32 %v3741, %v4538
    %v4647 = vadd.f32 %v3742, %v4540
    %v4648 = vadd.f32 %v3743, %v4389
    %v4649 = vadd.f32 %v3744, %v4391
    %v4650 = vadd.f32 %v3745, %v4542
    %v4651 = vadd.f32 %v3746, %v4544
    %v4652 = vadd.f32 %v3747, %v4395
    %v4653 = vadd.f32 %v3748, %v4397
    %v4654 = vadd.f32 %v3749, %v4548
    %v4655 = vadd.f32 %v3750, %v4550
    %v4656 = vadd.f32 %v3751, %v4399
    %v4657 = vadd.f32 %v3752, %v4401
    %v4658 = vadd.f32 %v3753, %v4552
    %v4659 = vadd.f32 %v3754, %v4554
    %v4660 = vadd.f32 %v3755, %v4405
    %v4661 = vadd.f32 %v3756, %v4407
    %v4662 = vadd.f32 %v3757, %v4558
    %v4663 = vadd.f32 %v3758, %v4560
    %v4664 = vadd.f32 %v3759, %v4409
    %v4665 = vadd.f32 %v3760, %v4411
    %v4666 = vadd.f32 %v3761, %v4562
    %v4667 = vadd.f32 %v3762, %v4564
    %v4668 = vadd.f32 %v3763, %v4415
    %v4669 = vadd.f32 %v3764, %v4417
    %v4670 = vadd.f32 %v3765, %v4568
    %v4671 = vadd.f32 %v3766, %v4570
    %v4672 = vadd.f32 %v3767, %v4419
    %v4673 = vadd.f32 %v3768, %v4421
    %v4674 = vadd.f32 %v3769, %v4572
    %v4675 = vadd.f32 %v3770, %v4574
    %v4676 = vadd.f32 %v3771, %v4425
    %v4677 = vadd.f32 %v3772, %v4427
    %v4678 = vadd.f32 %v3773, %v4578
    %v4679 = vadd.f32 %v3774, %v4580
    %v4680 = vadd.f32 %v3775, %v4429
    %v4681 = vadd.f32 %v3776, %v4431
    %v4682 = vadd.f32 %v3777, %v4582
    %v4683 = vadd.f32 %v3778, %v4584
    %v4684 = vadd.f32 %v3779, %v4435
    %v4685 = vadd.f32 %v3780, %v4437
    %v4686 = vadd.f32 %v3781, %v4588
    %v4687 = vadd.f32 %v3782, %v4590
    %v4688 = vadd.f32 %v3783, %v4439
    %v4689 = vadd.f32 %v3784, %v4441
    %v4690 = vadd.f32 %v3785, %v4592
    %v4691 = vadd.f32 %v3786, %v4594
    %s4692 = scalar_lea.vmem %s6, 2048
    %v4693 = vld [vmem:[%s4692] sm:$0xff]
    %v4694 = vld [vmem:[%s4692 + $0x8] sm:$0xff]
    %v4695 = vld [vmem:[%s4692 + $0x10] sm:$0xff]
    %v4696 = vld [vmem:[%s4692 + $0x18] sm:$0xff]
    %v4697 = vld [vmem:[%s4692 + $0x20] sm:$0xff]
    %v4698 = vld [vmem:[%s4692 + $0x28] sm:$0xff]
    %v4699 = vld [vmem:[%s4692 + $0x30] sm:$0xff]
    %v4700 = vld [vmem:[%s4692 + $0x38] sm:$0xff]
    %v4701 = vld [vmem:[%s4692 + $0x40] sm:$0xff]
    %v4702 = vld [vmem:[%s4692 + $0x48] sm:$0xff]
    %v4703 = vld [vmem:[%s4692 + $0x50] sm:$0xff]
    %v4704 = vld [vmem:[%s4692 + $0x58] sm:$0xff]
    %v4705 = vld [vmem:[%s4692 + $0x60] sm:$0xff]
    %v4706 = vld [vmem:[%s4692 + $0x68] sm:$0xff]
    %v4707 = vld [vmem:[%s4692 + $0x70] sm:$0xff]
    %v4708 = vld [vmem:[%s4692 + $0x78] sm:$0xff]
    %v4709 = vld [vmem:[%s4692 + $0x80] sm:$0xff]
    %v4710 = vld [vmem:[%s4692 + $0x88] sm:$0xff]
    %v4711 = vld [vmem:[%s4692 + $0x90] sm:$0xff]
    %v4712 = vld [vmem:[%s4692 + $0x98] sm:$0xff]
    %v4713 = vld [vmem:[%s4692 + $0xa0] sm:$0xff]
    %v4714 = vld [vmem:[%s4692 + $0xa8] sm:$0xff]
    %v4715 = vld [vmem:[%s4692 + $0xb0] sm:$0xff]
    %v4716 = vld [vmem:[%s4692 + $0xb8] sm:$0xff]
    %v4717 = vld [vmem:[%s4692 + $0xc0] sm:$0xff]
    %v4718 = vld [vmem:[%s4692 + $0xc8] sm:$0xff]
    %v4719 = vld [vmem:[%s4692 + $0xd0] sm:$0xff]
    %v4720 = vld [vmem:[%s4692 + $0xd8] sm:$0xff]
    %v4721 = vld [vmem:[%s4692 + $0xe0] sm:$0xff]
    %v4722 = vld [vmem:[%s4692 + $0xe8] sm:$0xff]
    %v4723 = vld [vmem:[%s4692 + $0xf0] sm:$0xff]
    %v4724 = vld [vmem:[%s4692 + $0xf8] sm:$0xff]
    %v4725 = vld [vmem:[%s4692 + $0x100] sm:$0xff]
    %v4726 = vld [vmem:[%s4692 + $0x108] sm:$0xff]
    %v4727 = vld [vmem:[%s4692 + $0x110] sm:$0xff]
    %v4728 = vld [vmem:[%s4692 + $0x118] sm:$0xff]
    %v4729 = vld [vmem:[%s4692 + $0x120] sm:$0xff]
    %v4730 = vld [vmem:[%s4692 + $0x128] sm:$0xff]
    %v4731 = vld [vmem:[%s4692 + $0x130] sm:$0xff]
    %v4732 = vld [vmem:[%s4692 + $0x138] sm:$0xff]
    %v4733 = vld [vmem:[%s4692 + $0x140] sm:$0xff]
    %v4734 = vld [vmem:[%s4692 + $0x148] sm:$0xff]
    %v4735 = vld [vmem:[%s4692 + $0x150] sm:$0xff]
    %v4736 = vld [vmem:[%s4692 + $0x158] sm:$0xff]
    %v4737 = vld [vmem:[%s4692 + $0x160] sm:$0xff]
    %v4738 = vld [vmem:[%s4692 + $0x168] sm:$0xff]
    %v4739 = vld [vmem:[%s4692 + $0x170] sm:$0xff]
    %v4740 = vld [vmem:[%s4692 + $0x178] sm:$0xff]
    %v4741 = vld [vmem:[%s4692 + $0x180] sm:$0xff]
    %v4742 = vld [vmem:[%s4692 + $0x188] sm:$0xff]
    %v4743 = vld [vmem:[%s4692 + $0x190] sm:$0xff]
    %v4744 = vld [vmem:[%s4692 + $0x198] sm:$0xff]
    %v4745 = vld [vmem:[%s4692 + $0x1a0] sm:$0xff]
    %v4746 = vld [vmem:[%s4692 + $0x1a8] sm:$0xff]
    %v4747 = vld [vmem:[%s4692 + $0x1b0] sm:$0xff]
    %v4748 = vld [vmem:[%s4692 + $0x1b8] sm:$0xff]
    %v4749 = vld [vmem:[%s4692 + $0x1c0] sm:$0xff]
    %v4750 = vld [vmem:[%s4692 + $0x1c8] sm:$0xff]
    %v4751 = vld [vmem:[%s4692 + $0x1d0] sm:$0xff]
    %v4752 = vld [vmem:[%s4692 + $0x1d8] sm:$0xff]
    %v4753 = vld [vmem:[%s4692 + $0x1e0] sm:$0xff]
    %v4754 = vld [vmem:[%s4692 + $0x1e8] sm:$0xff]
    %v4755 = vld [vmem:[%s4692 + $0x1f0] sm:$0xff]
    %v4756 = vld [vmem:[%s4692 + $0x1f8] sm:$0xff]
    %vm4757 = vsmask.f32 6400
    %v4759 = vshrl.u32 %v3787, 16
    %v4761 = vrot.slane %v4759, 1
    %v4762 = vshll.u32 %v3787, 16
    %v4764 = vrot.slane %v4762, 2
    %v4765 = vor.u32 %v4761, %v4764
    %v4767 = vshrl.u32 %v3789, 16
    %v4769 = vrot.slane %v4767, 1
    %v4770 = vshll.u32 %v3789, 16
    %v4772 = vrot.slane %v4770, 2
    %v4773 = vor.u32 %v4769, %v4772
    %v4774 = vsel %vm4757, %v4765, %v4773
    %v4776 = vshrl.u32 %v3788, 16
    %v4778 = vrot.slane %v4776, 1
    %v4779 = vshll.u32 %v3788, 16
    %v4781 = vrot.slane %v4779, 2
    %v4782 = vor.u32 %v4778, %v4781
    %v4784 = vshrl.u32 %v3790, 16
    %v4786 = vrot.slane %v4784, 1
    %v4787 = vshll.u32 %v3790, 16
    %v4789 = vrot.slane %v4787, 2
    %v4790 = vor.u32 %v4786, %v4789
    %v4791 = vsel %vm4757, %v4782, %v4790
    %v4793 = vshrl.u32 %v3791, 16
    %v4795 = vrot.slane %v4793, 1
    %v4796 = vshll.u32 %v3791, 16
    %v4798 = vrot.slane %v4796, 2
    %v4799 = vor.u32 %v4795, %v4798
    %v4800 = vsel %vm4757, %v4773, %v4799
    %v4802 = vshrl.u32 %v3792, 16
    %v4804 = vrot.slane %v4802, 1
    %v4805 = vshll.u32 %v3792, 16
    %v4807 = vrot.slane %v4805, 2
    %v4808 = vor.u32 %v4804, %v4807
    %v4809 = vsel %vm4757, %v4790, %v4808
    %v4811 = vshrl.u32 %v3793, 16
    %v4813 = vrot.slane %v4811, 1
    %v4814 = vshll.u32 %v3793, 16
    %v4816 = vrot.slane %v4814, 2
    %v4817 = vor.u32 %v4813, %v4816
    %v4818 = vsel %vm4757, %v4799, %v4817
    %v4820 = vshrl.u32 %v3794, 16
    %v4822 = vrot.slane %v4820, 1
    %v4823 = vshll.u32 %v3794, 16
    %v4825 = vrot.slane %v4823, 2
    %v4826 = vor.u32 %v4822, %v4825
    %v4827 = vsel %vm4757, %v4808, %v4826
    %v4829 = vshrl.u32 %v3795, 16
    %v4831 = vrot.slane %v4829, 1
    %v4832 = vshll.u32 %v3795, 16
    %v4834 = vrot.slane %v4832, 2
    %v4835 = vor.u32 %v4831, %v4834
    %v4836 = vsel %vm4757, %v4817, %v4835
    %v4838 = vshrl.u32 %v3796, 16
    %v4840 = vrot.slane %v4838, 1
    %v4841 = vshll.u32 %v3796, 16
    %v4843 = vrot.slane %v4841, 2
    %v4844 = vor.u32 %v4840, %v4843
    %v4845 = vsel %vm4757, %v4826, %v4844
    %v4847 = vshrl.u32 %v3797, 16
    %v4849 = vrot.slane %v4847, 1
    %v4850 = vshll.u32 %v3797, 16
    %v4852 = vrot.slane %v4850, 2
    %v4853 = vor.u32 %v4849, %v4852
    %v4854 = vsel %vm4757, %v4835, %v4853
    %v4856 = vshrl.u32 %v3798, 16
    %v4858 = vrot.slane %v4856, 1
    %v4859 = vshll.u32 %v3798, 16
    %v4861 = vrot.slane %v4859, 2
    %v4862 = vor.u32 %v4858, %v4861
    %v4863 = vsel %vm4757, %v4844, %v4862
    %v4865 = vshrl.u32 %v3799, 16
    %v4867 = vrot.slane %v4865, 1
    %v4868 = vshll.u32 %v3799, 16
    %v4870 = vrot.slane %v4868, 2
    %v4871 = vor.u32 %v4867, %v4870
    %v4872 = vsel %vm4757, %v4853, %v4871
    %v4874 = vshrl.u32 %v3800, 16
    %v4876 = vrot.slane %v4874, 1
    %v4877 = vshll.u32 %v3800, 16
    %v4879 = vrot.slane %v4877, 2
    %v4880 = vor.u32 %v4876, %v4879
    %v4881 = vsel %vm4757, %v4862, %v4880
    %v4883 = vshrl.u32 %v3801, 16
    %v4885 = vrot.slane %v4883, 1
    %v4886 = vshll.u32 %v3801, 16
    %v4888 = vrot.slane %v4886, 2
    %v4889 = vor.u32 %v4885, %v4888
    %v4890 = vsel %vm4757, %v4871, %v4889
    %v4892 = vshrl.u32 %v3802, 16
    %v4894 = vrot.slane %v4892, 1
    %v4895 = vshll.u32 %v3802, 16
    %v4897 = vrot.slane %v4895, 2
    %v4898 = vor.u32 %v4894, %v4897
    %v4899 = vsel %vm4757, %v4880, %v4898
    %v4901 = vshrl.u32 %v3803, 16
    %v4903 = vrot.slane %v4901, 1
    %v4904 = vshll.u32 %v3803, 16
    %v4906 = vrot.slane %v4904, 2
    %v4907 = vor.u32 %v4903, %v4906
    %v4908 = vsel %vm4757, %v4889, %v4907
    %v4910 = vshrl.u32 %v3804, 16
    %v4912 = vrot.slane %v4910, 1
    %v4913 = vshll.u32 %v3804, 16
    %v4915 = vrot.slane %v4913, 2
    %v4916 = vor.u32 %v4912, %v4915
    %v4917 = vsel %vm4757, %v4898, %v4916
    %v4919 = vshrl.u32 %v3805, 16
    %v4921 = vrot.slane %v4919, 1
    %v4922 = vshll.u32 %v3805, 16
    %v4924 = vrot.slane %v4922, 2
    %v4925 = vor.u32 %v4921, %v4924
    %v4926 = vsel %vm4757, %v4907, %v4925
    %v4928 = vshrl.u32 %v3806, 16
    %v4930 = vrot.slane %v4928, 1
    %v4931 = vshll.u32 %v3806, 16
    %v4933 = vrot.slane %v4931, 2
    %v4934 = vor.u32 %v4930, %v4933
    %v4935 = vsel %vm4757, %v4916, %v4934
    %v4937 = vshrl.u32 %v3807, 16
    %v4939 = vrot.slane %v4937, 1
    %v4940 = vshll.u32 %v3807, 16
    %v4942 = vrot.slane %v4940, 2
    %v4943 = vor.u32 %v4939, %v4942
    %v4944 = vsel %vm4757, %v4925, %v4943
    %v4946 = vshrl.u32 %v3808, 16
    %v4948 = vrot.slane %v4946, 1
    %v4949 = vshll.u32 %v3808, 16
    %v4951 = vrot.slane %v4949, 2
    %v4952 = vor.u32 %v4948, %v4951
    %v4953 = vsel %vm4757, %v4934, %v4952
    %v4955 = vshrl.u32 %v3809, 16
    %v4957 = vrot.slane %v4955, 1
    %v4958 = vshll.u32 %v3809, 16
    %v4960 = vrot.slane %v4958, 2
    %v4961 = vor.u32 %v4957, %v4960
    %v4962 = vsel %vm4757, %v4943, %v4961
    %v4964 = vshrl.u32 %v3810, 16
    %v4966 = vrot.slane %v4964, 1
    %v4967 = vshll.u32 %v3810, 16
    %v4969 = vrot.slane %v4967, 2
    %v4970 = vor.u32 %v4966, %v4969
    %v4971 = vsel %vm4757, %v4952, %v4970
    %v5060 = vunpack.c.l.b16 %v4693
    %v5061 = vunpack.c.h.b16 %v4693
    %v5062 = vunpack.c.l.b16 %v4694
    %v5063 = vunpack.c.h.b16 %v4694
    %v5064 = vunpack.c.l.b16 %v4695
    %v5065 = vunpack.c.h.b16 %v4695
    %v5066 = vunpack.c.l.b16 %v4696
    %v5067 = vunpack.c.h.b16 %v4696
    %v5068 = vunpack.c.l.b16 %v4697
    %v5069 = vunpack.c.h.b16 %v4697
    %v5070 = vunpack.c.l.b16 %v4698
    %v5071 = vunpack.c.h.b16 %v4698
    %v5072 = vunpack.c.l.b16 %v4699
    %v5073 = vunpack.c.h.b16 %v4699
    %v5074 = vunpack.c.l.b16 %v4700
    %v5075 = vunpack.c.h.b16 %v4700
    %v5076 = vunpack.c.l.b16 %v4701
    %v5077 = vunpack.c.h.b16 %v4701
    %v5078 = vunpack.c.l.b16 %v4702
    %v5079 = vunpack.c.h.b16 %v4702
    %v5080 = vunpack.c.l.b16 %v4703
    %v5081 = vunpack.c.h.b16 %v4703
    %v5082 = vunpack.c.l.b16 %v4704
    %v5083 = vunpack.c.h.b16 %v4704
    %v5084 = vunpack.c.l.b16 %v4705
    %v5085 = vunpack.c.h.b16 %v4705
    %v5086 = vunpack.c.l.b16 %v4706
    %v5087 = vunpack.c.h.b16 %v4706
    %v5088 = vunpack.c.l.b16 %v4707
    %v5089 = vunpack.c.h.b16 %v4707
    %v5090 = vunpack.c.l.b16 %v4708
    %v5091 = vunpack.c.h.b16 %v4708
    %v5092 = vunpack.c.l.b16 %v4709
    %v5093 = vunpack.c.h.b16 %v4709
    %v5094 = vunpack.c.l.b16 %v4710
    %v5095 = vunpack.c.h.b16 %v4710
    %v5096 = vunpack.c.l.b16 %v4711
    %v5097 = vunpack.c.h.b16 %v4711
    %v5098 = vunpack.c.l.b16 %v4712
    %v5099 = vunpack.c.h.b16 %v4712
    %v5100 = vunpack.c.l.b16 %v4713
    %v5101 = vunpack.c.h.b16 %v4713
    %v5102 = vunpack.c.l.b16 %v4714
    %v5103 = vunpack.c.h.b16 %v4714
    %v5104 = vunpack.c.l.b16 %v4715
    %v5105 = vunpack.c.h.b16 %v4715
    %v5106 = vunpack.c.l.b16 %v4716
    %v5107 = vunpack.c.h.b16 %v4716
    %v5108 = vunpack.c.l.b16 %v4717
    %v5109 = vunpack.c.h.b16 %v4717
    %v5110 = vunpack.c.l.b16 %v4718
    %v5111 = vunpack.c.h.b16 %v4718
    %v5112 = vunpack.c.l.b16 %v4719
    %v5113 = vunpack.c.h.b16 %v4719
    %v5114 = vunpack.c.l.b16 %v4720
    %v5115 = vunpack.c.h.b16 %v4720
    %v5116 = vunpack.c.l.b16 %v4721
    %v5117 = vunpack.c.h.b16 %v4721
    %v5118 = vunpack.c.l.b16 %v4722
    %v5119 = vunpack.c.h.b16 %v4722
    %v5120 = vunpack.c.l.b16 %v4723
    %v5121 = vunpack.c.h.b16 %v4723
    %v5122 = vunpack.c.l.b16 %v4724
    %v5123 = vunpack.c.h.b16 %v4724
    %v5124 = vunpack.c.l.b16 %v4725
    %v5125 = vunpack.c.h.b16 %v4725
    %v5126 = vunpack.c.l.b16 %v4726
    %v5127 = vunpack.c.h.b16 %v4726
    %v5128 = vunpack.c.l.b16 %v4727
    %v5129 = vunpack.c.h.b16 %v4727
    %v5130 = vunpack.c.l.b16 %v4728
    %v5131 = vunpack.c.h.b16 %v4728
    %v5132 = vunpack.c.l.b16 %v4729
    %v5133 = vunpack.c.h.b16 %v4729
    %v5134 = vunpack.c.l.b16 %v4730
    %v5135 = vunpack.c.h.b16 %v4730
    %v5136 = vunpack.c.l.b16 %v4731
    %v5137 = vunpack.c.h.b16 %v4731
    %v5138 = vunpack.c.l.b16 %v4732
    %v5139 = vunpack.c.h.b16 %v4732
    %v5140 = vunpack.c.l.b16 %v4733
    %v5141 = vunpack.c.h.b16 %v4733
    %v5142 = vunpack.c.l.b16 %v4734
    %v5143 = vunpack.c.h.b16 %v4734
    %v5144 = vunpack.c.l.b16 %v4735
    %v5145 = vunpack.c.h.b16 %v4735
    %v5146 = vunpack.c.l.b16 %v4736
    %v5147 = vunpack.c.h.b16 %v4736
    %v5148 = vunpack.c.l.b16 %v4737
    %v5149 = vunpack.c.h.b16 %v4737
    %v5150 = vunpack.c.l.b16 %v4738
    %v5151 = vunpack.c.h.b16 %v4738
    %v5152 = vunpack.c.l.b16 %v4739
    %v5153 = vunpack.c.h.b16 %v4739
    %v5154 = vunpack.c.l.b16 %v4740
    %v5155 = vunpack.c.h.b16 %v4740
    %v5156 = vunpack.c.l.b16 %v4741
    %v5157 = vunpack.c.h.b16 %v4741
    %v5158 = vunpack.c.l.b16 %v4742
    %v5159 = vunpack.c.h.b16 %v4742
    %v5160 = vunpack.c.l.b16 %v4743
    %v5161 = vunpack.c.h.b16 %v4743
    %v5162 = vunpack.c.l.b16 %v4744
    %v5163 = vunpack.c.h.b16 %v4744
    %v5164 = vunpack.c.l.b16 %v4745
    %v5165 = vunpack.c.h.b16 %v4745
    %v5166 = vunpack.c.l.b16 %v4746
    %v5167 = vunpack.c.h.b16 %v4746
    %v5168 = vunpack.c.l.b16 %v4747
    %v5169 = vunpack.c.h.b16 %v4747
    %v5170 = vunpack.c.l.b16 %v4748
    %v5171 = vunpack.c.h.b16 %v4748
    %v5172 = vunpack.c.l.b16 %v4749
    %v5173 = vunpack.c.h.b16 %v4749
    %v5174 = vunpack.c.l.b16 %v4750
    %v5175 = vunpack.c.h.b16 %v4750
    %v5176 = vunpack.c.l.b16 %v4751
    %v5177 = vunpack.c.h.b16 %v4751
    %v5178 = vunpack.c.l.b16 %v4752
    %v5179 = vunpack.c.h.b16 %v4752
    %v5180 = vunpack.c.l.b16 %v4753
    %v5181 = vunpack.c.h.b16 %v4753
    %v5182 = vunpack.c.l.b16 %v4754
    %v5183 = vunpack.c.h.b16 %v4754
    %v5184 = vunpack.c.l.b16 %v4755
    %v5185 = vunpack.c.h.b16 %v4755
    %v5186 = vunpack.c.l.b16 %v4756
    %v5187 = vunpack.c.h.b16 %v4756
    %v5188 = vpack.c.b16 %v5064, %v5060
    %v5189 = vpack.c.b16 %v5065, %v5061
    %v5190 = vpack.c.b16 %v5066, %v5062
    %v5191 = vpack.c.b16 %v5067, %v5063
    %v5192 = vpack.c.b16 %v5072, %v5068
    %v5193 = vpack.c.b16 %v5073, %v5069
    %v5194 = vpack.c.b16 %v5074, %v5070
    %v5195 = vpack.c.b16 %v5075, %v5071
    %v5196 = vpack.c.b16 %v5080, %v5076
    %v5197 = vpack.c.b16 %v5081, %v5077
    %v5198 = vpack.c.b16 %v5082, %v5078
    %v5199 = vpack.c.b16 %v5083, %v5079
    %v5200 = vpack.c.b16 %v5088, %v5084
    %v5201 = vpack.c.b16 %v5089, %v5085
    %v5202 = vpack.c.b16 %v5090, %v5086
    %v5203 = vpack.c.b16 %v5091, %v5087
    %v5204 = vpack.c.b16 %v5096, %v5092
    %v5205 = vpack.c.b16 %v5097, %v5093
    %v5206 = vpack.c.b16 %v5098, %v5094
    %v5207 = vpack.c.b16 %v5099, %v5095
    %v5208 = vpack.c.b16 %v5104, %v5100
    %v5209 = vpack.c.b16 %v5105, %v5101
    %v5210 = vpack.c.b16 %v5106, %v5102
    %v5211 = vpack.c.b16 %v5107, %v5103
    %v5212 = vpack.c.b16 %v5112, %v5108
    %v5213 = vpack.c.b16 %v5113, %v5109
    %v5214 = vpack.c.b16 %v5114, %v5110
    %v5215 = vpack.c.b16 %v5115, %v5111
    %v5216 = vpack.c.b16 %v5120, %v5116
    %v5217 = vpack.c.b16 %v5121, %v5117
    %v5218 = vpack.c.b16 %v5122, %v5118
    %v5219 = vpack.c.b16 %v5123, %v5119
    %v5220 = vpack.c.b16 %v5128, %v5124
    %v5221 = vpack.c.b16 %v5129, %v5125
    %v5222 = vpack.c.b16 %v5130, %v5126
    %v5223 = vpack.c.b16 %v5131, %v5127
    %v5224 = vpack.c.b16 %v5136, %v5132
    %v5225 = vpack.c.b16 %v5137, %v5133
    %v5226 = vpack.c.b16 %v5138, %v5134
    %v5227 = vpack.c.b16 %v5139, %v5135
    %v5228 = vpack.c.b16 %v5144, %v5140
    %v5229 = vpack.c.b16 %v5145, %v5141
    %v5230 = vpack.c.b16 %v5146, %v5142
    %v5231 = vpack.c.b16 %v5147, %v5143
    %v5232 = vpack.c.b16 %v5152, %v5148
    %v5233 = vpack.c.b16 %v5153, %v5149
    %v5234 = vpack.c.b16 %v5154, %v5150
    %v5235 = vpack.c.b16 %v5155, %v5151
    %v5236 = vpack.c.b16 %v5160, %v5156
    %v5237 = vpack.c.b16 %v5161, %v5157
    %v5238 = vpack.c.b16 %v5162, %v5158
    %v5239 = vpack.c.b16 %v5163, %v5159
    %v5240 = vpack.c.b16 %v5168, %v5164
    %v5241 = vpack.c.b16 %v5169, %v5165
    %v5242 = vpack.c.b16 %v5170, %v5166
    %v5243 = vpack.c.b16 %v5171, %v5167
    %v5244 = vpack.c.b16 %v5176, %v5172
    %v5245 = vpack.c.b16 %v5177, %v5173
    %v5246 = vpack.c.b16 %v5178, %v5174
    %v5247 = vpack.c.b16 %v5179, %v5175
    %v5248 = vpack.c.b16 %v5184, %v5180
    %v5249 = vpack.c.b16 %v5185, %v5181
    %v5250 = vpack.c.b16 %v5186, %v5182
    %v5251 = vpack.c.b16 %v5187, %v5183
    %5316 = vmatprep.subr.bf16.mxu0 %v5189
    %5317 = vmatpush1.bf16.msra.mxu0 %v5188
    %5318 = vmatprep.subr.bf16.mxu0 %v5193
    %5319 = vmatpush1.bf16.msra.mxu0 %v5192
    %5320 = vmatprep.subr.bf16.mxu0 %v5197
    %5321 = vmatpush1.bf16.msra.mxu0 %v5196
    %5322 = vmatprep.subr.bf16.mxu0 %v5201
    %5323 = vmatpush1.bf16.msra.mxu0 %v5200
    %5324 = vmatprep.subr.bf16.mxu0 %v5205
    %5325 = vmatpush1.bf16.msra.mxu0 %v5204
    %5326 = vmatprep.subr.bf16.mxu0 %v5209
    %5327 = vmatpush1.bf16.msra.mxu0 %v5208
    %5328 = vmatprep.subr.bf16.mxu0 %v5213
    %5329 = vmatpush1.bf16.msra.mxu0 %v5212
    %5330 = vmatprep.subr.bf16.mxu0 %v5217
    %5331 = vmatpush1.bf16.msra.mxu0 %v5216
    %5332 = vmatprep.subr.bf16.mxu0 %v5221
    %5333 = vmatpush1.bf16.msra.mxu0 %v5220
    %5334 = vmatprep.subr.bf16.mxu0 %v5225
    %5335 = vmatpush1.bf16.msra.mxu0 %v5224
    %5336 = vmatprep.subr.bf16.mxu0 %v5229
    %5337 = vmatpush1.bf16.msra.mxu0 %v5228
    %5338 = vmatprep.subr.bf16.mxu0 %v5233
    %5339 = vmatpush1.bf16.msra.mxu0 %v5232
    %5340 = vmatprep.subr.bf16.mxu0 %v5237
    %5341 = vmatpush1.bf16.msra.mxu0 %v5236
    %5342 = vmatprep.subr.bf16.mxu0 %v5241
    %5343 = vmatpush1.bf16.msra.mxu0 %v5240
    %5344 = vmatprep.subr.bf16.mxu0 %v5245
    %5345 = vmatpush1.bf16.msra.mxu0 %v5244
    %5346 = vmatprep.subr.bf16.mxu0 %v5249
    %5347 = vmatpush1.bf16.msra.mxu0 %v5248
    %5348 = vmatprep.mubr.bf16.mxu0 %v4791
    %5349 = vmatmul.mubr.bf16.gmra.mrb[0].mxu0 %v4774
    %v5350 = vpop.f32.mrb[0].mxu0
    %v5351 = vadd.f32 0.0, %v5350
    %v5352 = vpop.f32.mrb[0].mxu0
    %v5353 = vadd.f32 0.0, %v5352
    %v5354 = vpop.f32.mrb[0].mxu0
    %v5355 = vadd.f32 0.0, %v5354
    %v5356 = vpop.f32.mrb[0].mxu0
    %v5357 = vadd.f32 0.0, %v5356
    %5358 = vmatprep.mubr.bf16.mxu0 %v4809
    %5359 = vmatmul.mubr.bf16.gmra.mrb[0].mxu0 %v4800
    %v5360 = vpop.f32.mrb[0].mxu0
    %v5361 = vadd.f32 0.0, %v5360
    %v5362 = vpop.f32.mrb[0].mxu0
    %v5363 = vadd.f32 0.0, %v5362
    %v5364 = vpop.f32.mrb[0].mxu0
    %v5365 = vadd.f32 0.0, %v5364
    %v5366 = vpop.f32.mrb[0].mxu0
    %v5367 = vadd.f32 0.0, %v5366
    %5368 = vmatprep.mubr.bf16.mxu0 %v4827
    %5369 = vmatmul.mubr.bf16.gmra.mrb[0].mxu0 %v4818
    %v5370 = vpop.f32.mrb[0].mxu0
    %v5371 = vadd.f32 0.0, %v5370
    %v5372 = vpop.f32.mrb[0].mxu0
    %v5373 = vadd.f32 0.0, %v5372
    %v5374 = vpop.f32.mrb[0].mxu0
    %v5375 = vadd.f32 0.0, %v5374
    %v5376 = vpop.f32.mrb[0].mxu0
    %v5377 = vadd.f32 0.0, %v5376
    %5378 = vmatprep.mubr.bf16.mxu0 %v4845
    %5379 = vmatmul.mubr.bf16.gmra.mrb[0].mxu0 %v4836
    %v5380 = vpop.f32.mrb[0].mxu0
    %v5381 = vadd.f32 0.0, %v5380
    %v5382 = vpop.f32.mrb[0].mxu0
    %v5383 = vadd.f32 0.0, %v5382
    %v5384 = vpop.f32.mrb[0].mxu0
    %v5385 = vadd.f32 0.0, %v5384
    %v5386 = vpop.f32.mrb[0].mxu0
    %v5387 = vadd.f32 0.0, %v5386
    %5388 = vmatprep.mubr.bf16.mxu0 %v4863
    %5389 = vmatmul.mubr.bf16.gmra.mrb[0].mxu0 %v4854
    %v5390 = vpop.f32.mrb[0].mxu0
    %v5391 = vadd.f32 0.0, %v5390
    %v5392 = vpop.f32.mrb[0].mxu0
    %v5393 = vadd.f32 0.0, %v5392
    %v5394 = vpop.f32.mrb[0].mxu0
    %v5395 = vadd.f32 0.0, %v5394
    %v5396 = vpop.f32.mrb[0].mxu0
    %v5397 = vadd.f32 0.0, %v5396
    %5398 = vmatprep.mubr.bf16.mxu0 %v4881
    %5399 = vmatmul.mubr.bf16.gmra.mrb[0].mxu0 %v4872
    %v5400 = vpop.f32.mrb[0].mxu0
    %v5401 = vadd.f32 0.0, %v5400
    %v5402 = vpop.f32.mrb[0].mxu0
    %v5403 = vadd.f32 0.0, %v5402
    %v5404 = vpop.f32.mrb[0].mxu0
    %v5405 = vadd.f32 0.0, %v5404
    %v5406 = vpop.f32.mrb[0].mxu0
    %v5407 = vadd.f32 0.0, %v5406
    %5408 = vmatprep.mubr.bf16.mxu0 %v4899
    %5409 = vmatmul.mubr.bf16.gmra.mrb[0].mxu0 %v4890
    %v5410 = vpop.f32.mrb[0].mxu0
    %v5411 = vadd.f32 0.0, %v5410
    %v5412 = vpop.f32.mrb[0].mxu0
    %v5413 = vadd.f32 0.0, %v5412
    %v5414 = vpop.f32.mrb[0].mxu0
    %v5415 = vadd.f32 0.0, %v5414
    %v5416 = vpop.f32.mrb[0].mxu0
    %v5417 = vadd.f32 0.0, %v5416
    %5418 = vmatprep.mubr.bf16.mxu0 %v4917
    %5419 = vmatmul.mubr.bf16.gmra.mrb[0].mxu0 %v4908
    %v5420 = vpop.f32.mrb[0].mxu0
    %v5421 = vadd.f32 0.0, %v5420
    %v5422 = vpop.f32.mrb[0].mxu0
    %v5423 = vadd.f32 0.0, %v5422
    %v5424 = vpop.f32.mrb[0].mxu0
    %v5425 = vadd.f32 0.0, %v5424
    %v5426 = vpop.f32.mrb[0].mxu0
    %v5427 = vadd.f32 0.0, %v5426
    %5428 = vmatprep.mubr.bf16.mxu0 %v4935
    %5429 = vmatmul.mubr.bf16.gmra.mrb[0].mxu0 %v4926
    %v5430 = vpop.f32.mrb[0].mxu0
    %v5431 = vadd.f32 0.0, %v5430
    %v5432 = vpop.f32.mrb[0].mxu0
    %v5433 = vadd.f32 0.0, %v5432
    %v5434 = vpop.f32.mrb[0].mxu0
    %v5435 = vadd.f32 0.0, %v5434
    %v5436 = vpop.f32.mrb[0].mxu0
    %v5437 = vadd.f32 0.0, %v5436
    %5438 = vmatprep.mubr.bf16.mxu0 %v4953
    %5439 = vmatmul.mubr.bf16.gmra.mrb[0].mxu0 %v4944
    %v5440 = vpop.f32.mrb[0].mxu0
    %v5441 = vadd.f32 0.0, %v5440
    %v5442 = vpop.f32.mrb[0].mxu0
    %v5443 = vadd.f32 0.0, %v5442
    %v5444 = vpop.f32.mrb[0].mxu0
    %v5445 = vadd.f32 0.0, %v5444
    %v5446 = vpop.f32.mrb[0].mxu0
    %v5447 = vadd.f32 0.0, %v5446
    %5448 = vmatprep.mubr.bf16.mxu0 %v4971
    %5449 = vmatmul.mubr.bf16.gmra.mrb[0].mxu0 %v4962
    %v5450 = vpop.f32.mrb[0].mxu0
    %v5451 = vadd.f32 0.0, %v5450
    %v5452 = vpop.f32.mrb[0].mxu0
    %v5453 = vadd.f32 0.0, %v5452
    %v5454 = vpop.f32.mrb[0].mxu0
    %v5455 = vadd.f32 0.0, %v5454
    %v5456 = vpop.f32.mrb[0].mxu0
    %v5457 = vadd.f32 0.0, %v5456
    %5458 = vmatprep.mubr.bf16.mxu0 %v4970
    %5459 = vmatmul.mubr.bf16.gmra.mrb[0].mxu0 %v4961
    %v5460 = vpop.f32.mrb[0].mxu0
    %v5461 = vadd.f32 0.0, %v5460
    %v5462 = vpop.f32.mrb[0].mxu0
    %v5463 = vadd.f32 0.0, %v5462
    %v5464 = vpop.f32.mrb[0].mxu0
    %v5465 = vadd.f32 0.0, %v5464
    %v5466 = vpop.f32.mrb[0].mxu0
    %v5467 = vadd.f32 0.0, %v5466
    %5468 = vdwg.mxu0
    %5469 = vmatprep.subr.bf16.mxu0 %v5191
    %5470 = vmatpush1.bf16.msra.mxu0 %v5190
    %5471 = vmatprep.subr.bf16.mxu0 %v5195
    %5472 = vmatpush1.bf16.msra.mxu0 %v5194
    %5473 = vmatprep.subr.bf16.mxu0 %v5199
    %5474 = vmatpush1.bf16.msra.mxu0 %v5198
    %5475 = vmatprep.subr.bf16.mxu0 %v5203
    %5476 = vmatpush1.bf16.msra.mxu0 %v5202
    %5477 = vmatprep.subr.bf16.mxu0 %v5207
    %5478 = vmatpush1.bf16.msra.mxu0 %v5206
    %5479 = vmatprep.subr.bf16.mxu0 %v5211
    %5480 = vmatpush1.bf16.msra.mxu0 %v5210
    %5481 = vmatprep.subr.bf16.mxu0 %v5215
    %5482 = vmatpush1.bf16.msra.mxu0 %v5214
    %5483 = vmatprep.subr.bf16.mxu0 %v5219
    %5484 = vmatpush1.bf16.msra.mxu0 %v5218
    %5485 = vmatprep.subr.bf16.mxu0 %v5223
    %5486 = vmatpush1.bf16.msra.mxu0 %v5222
    %5487 = vmatprep.subr.bf16.mxu0 %v5227
    %5488 = vmatpush1.bf16.msra.mxu0 %v5226
    %5489 = vmatprep.subr.bf16.mxu0 %v5231
    %5490 = vmatpush1.bf16.msra.mxu0 %v5230
    %5491 = vmatprep.subr.bf16.mxu0 %v5235
    %5492 = vmatpush1.bf16.msra.mxu0 %v5234
    %5493 = vmatprep.subr.bf16.mxu0 %v5239
    %5494 = vmatpush1.bf16.msra.mxu0 %v5238
    %5495 = vmatprep.subr.bf16.mxu0 %v5243
    %5496 = vmatpush1.bf16.msra.mxu0 %v5242
    %5497 = vmatprep.subr.bf16.mxu0 %v5247
    %5498 = vmatpush1.bf16.msra.mxu0 %v5246
    %5499 = vmatprep.subr.bf16.mxu0 %v5251
    %5500 = vmatpush1.bf16.msra.mxu0 %v5250
    %5501 = vmatprep.mubr.bf16.mxu0 %v4791
    %5502 = vmatmul.mubr.bf16.gmra.mrb[0].mxu0 %v4774
    %v5503 = vpop.f32.mrb[0].mxu0
    %v5504 = vadd.f32 0.0, %v5503
    %v5505 = vpop.f32.mrb[0].mxu0
    %v5506 = vadd.f32 0.0, %v5505
    %v5507 = vpop.f32.mrb[0].mxu0
    %v5508 = vadd.f32 0.0, %v5507
    %v5509 = vpop.f32.mrb[0].mxu0
    %v5510 = vadd.f32 0.0, %v5509
    %5511 = vmatprep.mubr.bf16.mxu0 %v4809
    %5512 = vmatmul.mubr.bf16.gmra.mrb[0].mxu0 %v4800
    %v5513 = vpop.f32.mrb[0].mxu0
    %v5514 = vadd.f32 0.0, %v5513
    %v5515 = vpop.f32.mrb[0].mxu0
    %v5516 = vadd.f32 0.0, %v5515
    %v5517 = vpop.f32.mrb[0].mxu0
    %v5518 = vadd.f32 0.0, %v5517
    %v5519 = vpop.f32.mrb[0].mxu0
    %v5520 = vadd.f32 0.0, %v5519
    %5521 = vmatprep.mubr.bf16.mxu0 %v4827
    %5522 = vmatmul.mubr.bf16.gmra.mrb[0].mxu0 %v4818
    %v5523 = vpop.f32.mrb[0].mxu0
    %v5524 = vadd.f32 0.0, %v5523
    %v5525 = vpop.f32.mrb[0].mxu0
    %v5526 = vadd.f32 0.0, %v5525
    %v5527 = vpop.f32.mrb[0].mxu0
    %v5528 = vadd.f32 0.0, %v5527
    %v5529 = vpop.f32.mrb[0].mxu0
    %v5530 = vadd.f32 0.0, %v5529
    %5531 = vmatprep.mubr.bf16.mxu0 %v4845
    %5532 = vmatmul.mubr.bf16.gmra.mrb[0].mxu0 %v4836
    %v5533 = vpop.f32.mrb[0].mxu0
    %v5534 = vadd.f32 0.0, %v5533
    %v5535 = vpop.f32.mrb[0].mxu0
    %v5536 = vadd.f32 0.0, %v5535
    %v5537 = vpop.f32.mrb[0].mxu0
    %v5538 = vadd.f32 0.0, %v5537
    %v5539 = vpop.f32.mrb[0].mxu0
    %v5540 = vadd.f32 0.0, %v5539
    %5541 = vmatprep.mubr.bf16.mxu0 %v4863
    %5542 = vmatmul.mubr.bf16.gmra.mrb[0].mxu0 %v4854
    %v5543 = vpop.f32.mrb[0].mxu0
    %v5544 = vadd.f32 0.0, %v5543
    %v5545 = vpop.f32.mrb[0].mxu0
    %v5546 = vadd.f32 0.0, %v5545
    %v5547 = vpop.f32.mrb[0].mxu0
    %v5548 = vadd.f32 0.0, %v5547
    %v5549 = vpop.f32.mrb[0].mxu0
    %v5550 = vadd.f32 0.0, %v5549
    %5551 = vmatprep.mubr.bf16.mxu0 %v4881
    %5552 = vmatmul.mubr.bf16.gmra.mrb[0].mxu0 %v4872
    %v5553 = vpop.f32.mrb[0].mxu0
    %v5554 = vadd.f32 0.0, %v5553
    %v5555 = vpop.f32.mrb[0].mxu0
    %v5556 = vadd.f32 0.0, %v5555
    %v5557 = vpop.f32.mrb[0].mxu0
    %v5558 = vadd.f32 0.0, %v5557
    %v5559 = vpop.f32.mrb[0].mxu0
    %v5560 = vadd.f32 0.0, %v5559
    %5561 = vmatprep.mubr.bf16.mxu0 %v4899
    %5562 = vmatmul.mubr.bf16.gmra.mrb[0].mxu0 %v4890
    %v5563 = vpop.f32.mrb[0].mxu0
    %v5564 = vadd.f32 0.0, %v5563
    %v5565 = vpop.f32.mrb[0].mxu0
    %v5566 = vadd.f32 0.0, %v5565
    %v5567 = vpop.f32.mrb[0].mxu0
    %v5568 = vadd.f32 0.0, %v5567
    %v5569 = vpop.f32.mrb[0].mxu0
    %v5570 = vadd.f32 0.0, %v5569
    %5571 = vmatprep.mubr.bf16.mxu0 %v4917
    %5572 = vmatmul.mubr.bf16.gmra.mrb[0].mxu0 %v4908
    %v5573 = vpop.f32.mrb[0].mxu0
    %v5574 = vadd.f32 0.0, %v5573
    %v5575 = vpop.f32.mrb[0].mxu0
    %v5576 = vadd.f32 0.0, %v5575
    %v5577 = vpop.f32.mrb[0].mxu0
    %v5578 = vadd.f32 0.0, %v5577
    %v5579 = vpop.f32.mrb[0].mxu0
    %v5580 = vadd.f32 0.0, %v5579
    %5581 = vmatprep.mubr.bf16.mxu0 %v4935
    %5582 = vmatmul.mubr.bf16.gmra.mrb[0].mxu0 %v4926
    %v5583 = vpop.f32.mrb[0].mxu0
    %v5584 = vadd.f32 0.0, %v5583
    %v5585 = vpop.f32.mrb[0].mxu0
    %v5586 = vadd.f32 0.0, %v5585
    %v5587 = vpop.f32.mrb[0].mxu0
    %v5588 = vadd.f32 0.0, %v5587
    %v5589 = vpop.f32.mrb[0].mxu0
    %v5590 = vadd.f32 0.0, %v5589
    %5591 = vmatprep.mubr.bf16.mxu0 %v4953
    %5592 = vmatmul.mubr.bf16.gmra.mrb[0].mxu0 %v4944
    %v5593 = vpop.f32.mrb[0].mxu0
    %v5594 = vadd.f32 0.0, %v5593
    %v5595 = vpop.f32.mrb[0].mxu0
    %v5596 = vadd.f32 0.0, %v5595
    %v5597 = vpop.f32.mrb[0].mxu0
    %v5598 = vadd.f32 0.0, %v5597
    %v5599 = vpop.f32.mrb[0].mxu0
    %v5600 = vadd.f32 0.0, %v5599
    %5601 = vmatprep.mubr.bf16.mxu0 %v4971
    %5602 = vmatmul.mubr.bf16.gmra.mrb[0].mxu0 %v4962
    %v5603 = vpop.f32.mrb[0].mxu0
    %v5604 = vadd.f32 0.0, %v5603
    %v5605 = vpop.f32.mrb[0].mxu0
    %v5606 = vadd.f32 0.0, %v5605
    %v5607 = vpop.f32.mrb[0].mxu0
    %v5608 = vadd.f32 0.0, %v5607
    %v5609 = vpop.f32.mrb[0].mxu0
    %v5610 = vadd.f32 0.0, %v5609
    %5611 = vmatprep.mubr.bf16.mxu0 %v4970
    %5612 = vmatmul.mubr.bf16.gmra.mrb[0].mxu0 %v4961
    %v5613 = vpop.f32.mrb[0].mxu0
    %v5614 = vadd.f32 0.0, %v5613
    %v5615 = vpop.f32.mrb[0].mxu0
    %v5616 = vadd.f32 0.0, %v5615
    %v5617 = vpop.f32.mrb[0].mxu0
    %v5618 = vadd.f32 0.0, %v5617
    %v5619 = vpop.f32.mrb[0].mxu0
    %v5620 = vadd.f32 0.0, %v5619
    %5621 = vdwg.mxu0
    %v5622 = vadd.f32 %v4596, %v5351
    %v5623 = vadd.f32 %v4597, %v5353
    %v5624 = vadd.f32 %v4598, %v5504
    %v5625 = vadd.f32 %v4599, %v5506
    %v5626 = vadd.f32 %v4600, %v5355
    %v5627 = vadd.f32 %v4601, %v5357
    %v5628 = vadd.f32 %v4602, %v5508
    %v5629 = vadd.f32 %v4603, %v5510
    %v5630 = vadd.f32 %v4604, %v5361
    %v5631 = vadd.f32 %v4605, %v5363
    %v5632 = vadd.f32 %v4606, %v5514
    %v5633 = vadd.f32 %v4607, %v5516
    %v5634 = vadd.f32 %v4608, %v5365
    %v5635 = vadd.f32 %v4609, %v5367
    %v5636 = vadd.f32 %v4610, %v5518
    %v5637 = vadd.f32 %v4611, %v5520
    %v5638 = vadd.f32 %v4612, %v5371
    %v5639 = vadd.f32 %v4613, %v5373
    %v5640 = vadd.f32 %v4614, %v5524
    %v5641 = vadd.f32 %v4615, %v5526
    %v5642 = vadd.f32 %v4616, %v5375
    %v5643 = vadd.f32 %v4617, %v5377
    %v5644 = vadd.f32 %v4618, %v5528
    %v5645 = vadd.f32 %v4619, %v5530
    %v5646 = vadd.f32 %v4620, %v5381
    %v5647 = vadd.f32 %v4621, %v5383
    %v5648 = vadd.f32 %v4622, %v5534
    %v5649 = vadd.f32 %v4623, %v5536
    %v5650 = vadd.f32 %v4624, %v5385
    %v5651 = vadd.f32 %v4625, %v5387
    %v5652 = vadd.f32 %v4626, %v5538
    %v5653 = vadd.f32 %v4627, %v5540
    %v5654 = vadd.f32 %v4628, %v5391
    %v5655 = vadd.f32 %v4629, %v5393
    %v5656 = vadd.f32 %v4630, %v5544
    %v5657 = vadd.f32 %v4631, %v5546
    %v5658 = vadd.f32 %v4632, %v5395
    %v5659 = vadd.f32 %v4633, %v5397
    %v5660 = vadd.f32 %v4634, %v5548
    %v5661 = vadd.f32 %v4635, %v5550
    %v5662 = vadd.f32 %v4636, %v5401
    %v5663 = vadd.f32 %v4637, %v5403
    %v5664 = vadd.f32 %v4638, %v5554
    %v5665 = vadd.f32 %v4639, %v5556
    %v5666 = vadd.f32 %v4640, %v5405
    %v5667 = vadd.f32 %v4641, %v5407
    %v5668 = vadd.f32 %v4642, %v5558
    %v5669 = vadd.f32 %v4643, %v5560
    %v5670 = vadd.f32 %v4644, %v5411
    %v5671 = vadd.f32 %v4645, %v5413
    %v5672 = vadd.f32 %v4646, %v5564
    %v5673 = vadd.f32 %v4647, %v5566
    %v5674 = vadd.f32 %v4648, %v5415
    %v5675 = vadd.f32 %v4649, %v5417
    %v5676 = vadd.f32 %v4650, %v5568
    %v5677 = vadd.f32 %v4651, %v5570
    %v5678 = vadd.f32 %v4652, %v5421
    %v5679 = vadd.f32 %v4653, %v5423
    %v5680 = vadd.f32 %v4654, %v5574
    %v5681 = vadd.f32 %v4655, %v5576
    %v5682 = vadd.f32 %v4656, %v5425
    %v5683 = vadd.f32 %v4657, %v5427
    %v5684 = vadd.f32 %v4658, %v5578
    %v5685 = vadd.f32 %v4659, %v5580
    %v5686 = vadd.f32 %v4660, %v5431
    %v5687 = vadd.f32 %v4661, %v5433
    %v5688 = vadd.f32 %v4662, %v5584
    %v5689 = vadd.f32 %v4663, %v5586
    %v5690 = vadd.f32 %v4664, %v5435
    %v5691 = vadd.f32 %v4665, %v5437
    %v5692 = vadd.f32 %v4666, %v5588
    %v5693 = vadd.f32 %v4667, %v5590
    %v5694 = vadd.f32 %v4668, %v5441
    %v5695 = vadd.f32 %v4669, %v5443
    %v5696 = vadd.f32 %v4670, %v5594
    %v5697 = vadd.f32 %v4671, %v5596
    %v5698 = vadd.f32 %v4672, %v5445
    %v5699 = vadd.f32 %v4673, %v5447
    %v5700 = vadd.f32 %v4674, %v5598
    %v5701 = vadd.f32 %v4675, %v5600
    %v5702 = vadd.f32 %v4676, %v5451
    %v5703 = vadd.f32 %v4677, %v5453
    %v5704 = vadd.f32 %v4678, %v5604
    %v5705 = vadd.f32 %v4679, %v5606
    %v5706 = vadd.f32 %v4680, %v5455
    %v5707 = vadd.f32 %v4681, %v5457
    %v5708 = vadd.f32 %v4682, %v5608
    %v5709 = vadd.f32 %v4683, %v5610
    %v5710 = vadd.f32 %v4684, %v5461
    %v5711 = vadd.f32 %v4685, %v5463
    %v5712 = vadd.f32 %v4686, %v5614
    %v5713 = vadd.f32 %v4687, %v5616
    %v5714 = vadd.f32 %v4688, %v5465
    %v5715 = vadd.f32 %v4689, %v5467
    %v5716 = vadd.f32 %v4690, %v5618
    %v5717 = vadd.f32 %v4691, %v5620
    %s5718 = scalar_lea.vmem %s6, 2560
    %v5719 = vld [vmem:[%s5718] sm:$0xff]
    %v5720 = vld [vmem:[%s5718 + $0x8] sm:$0xff]
    %v5721 = vld [vmem:[%s5718 + $0x10] sm:$0xff]
    %v5722 = vld [vmem:[%s5718 + $0x18] sm:$0xff]
    %v5723 = vld [vmem:[%s5718 + $0x20] sm:$0xff]
    %v5724 = vld [vmem:[%s5718 + $0x28] sm:$0xff]
    %v5725 = vld [vmem:[%s5718 + $0x30] sm:$0xff]
    %v5726 = vld [vmem:[%s5718 + $0x38] sm:$0xff]
    %v5727 = vld [vmem:[%s5718 + $0x40] sm:$0xff]
    %v5728 = vld [vmem:[%s5718 + $0x48] sm:$0xff]
    %v5729 = vld [vmem:[%s5718 + $0x50] sm:$0xff]
    %v5730 = vld [vmem:[%s5718 + $0x58] sm:$0xff]
    %v5731 = vld [vmem:[%s5718 + $0x60] sm:$0xff]
    %v5732 = vld [vmem:[%s5718 + $0x68] sm:$0xff]
    %v5733 = vld [vmem:[%s5718 + $0x70] sm:$0xff]
    %v5734 = vld [vmem:[%s5718 + $0x78] sm:$0xff]
    %v5735 = vld [vmem:[%s5718 + $0x80] sm:$0xff]
    %v5736 = vld [vmem:[%s5718 + $0x88] sm:$0xff]
    %v5737 = vld [vmem:[%s5718 + $0x90] sm:$0xff]
    %v5738 = vld [vmem:[%s5718 + $0x98] sm:$0xff]
    %v5739 = vld [vmem:[%s5718 + $0xa0] sm:$0xff]
    %v5740 = vld [vmem:[%s5718 + $0xa8] sm:$0xff]
    %v5741 = vld [vmem:[%s5718 + $0xb0] sm:$0xff]
    %v5742 = vld [vmem:[%s5718 + $0xb8] sm:$0xff]
    %v5743 = vld [vmem:[%s5718 + $0xc0] sm:$0xff]
    %v5744 = vld [vmem:[%s5718 + $0xc8] sm:$0xff]
    %v5745 = vld [vmem:[%s5718 + $0xd0] sm:$0xff]
    %v5746 = vld [vmem:[%s5718 + $0xd8] sm:$0xff]
    %v5747 = vld [vmem:[%s5718 + $0xe0] sm:$0xff]
    %v5748 = vld [vmem:[%s5718 + $0xe8] sm:$0xff]
    %v5749 = vld [vmem:[%s5718 + $0xf0] sm:$0xff]
    %v5750 = vld [vmem:[%s5718 + $0xf8] sm:$0xff]
    %v5751 = vld [vmem:[%s5718 + $0x100] sm:$0xff]
    %v5752 = vld [vmem:[%s5718 + $0x108] sm:$0xff]
    %v5753 = vld [vmem:[%s5718 + $0x110] sm:$0xff]
    %v5754 = vld [vmem:[%s5718 + $0x118] sm:$0xff]
    %v5755 = vld [vmem:[%s5718 + $0x120] sm:$0xff]
    %v5756 = vld [vmem:[%s5718 + $0x128] sm:$0xff]
    %v5757 = vld [vmem:[%s5718 + $0x130] sm:$0xff]
    %v5758 = vld [vmem:[%s5718 + $0x138] sm:$0xff]
    %v5759 = vld [vmem:[%s5718 + $0x140] sm:$0xff]
    %v5760 = vld [vmem:[%s5718 + $0x148] sm:$0xff]
    %v5761 = vld [vmem:[%s5718 + $0x150] sm:$0xff]
    %v5762 = vld [vmem:[%s5718 + $0x158] sm:$0xff]
    %v5763 = vld [vmem:[%s5718 + $0x160] sm:$0xff]
    %v5764 = vld [vmem:[%s5718 + $0x168] sm:$0xff]
    %v5765 = vld [vmem:[%s5718 + $0x170] sm:$0xff]
    %v5766 = vld [vmem:[%s5718 + $0x178] sm:$0xff]
    %v5767 = vld [vmem:[%s5718 + $0x180] sm:$0xff]
    %v5768 = vld [vmem:[%s5718 + $0x188] sm:$0xff]
    %v5769 = vld [vmem:[%s5718 + $0x190] sm:$0xff]
    %v5770 = vld [vmem:[%s5718 + $0x198] sm:$0xff]
    %v5771 = vld [vmem:[%s5718 + $0x1a0] sm:$0xff]
    %v5772 = vld [vmem:[%s5718 + $0x1a8] sm:$0xff]
    %v5773 = vld [vmem:[%s5718 + $0x1b0] sm:$0xff]
    %v5774 = vld [vmem:[%s5718 + $0x1b8] sm:$0xff]
    %v5775 = vld [vmem:[%s5718 + $0x1c0] sm:$0xff]
    %v5776 = vld [vmem:[%s5718 + $0x1c8] sm:$0xff]
    %v5777 = vld [vmem:[%s5718 + $0x1d0] sm:$0xff]
    %v5778 = vld [vmem:[%s5718 + $0x1d8] sm:$0xff]
    %v5779 = vld [vmem:[%s5718 + $0x1e0] sm:$0xff]
    %v5780 = vld [vmem:[%s5718 + $0x1e8] sm:$0xff]
    %v5781 = vld [vmem:[%s5718 + $0x1f0] sm:$0xff]
    %v5782 = vld [vmem:[%s5718 + $0x1f8] sm:$0xff]
    %vm5783 = vcmask 1045504
    %v5784 = vrot.slane %v3787, 2
    %v5785 = vrot.slane %v3789, 2
    %v5786 = vsel %vm5783, %v5784, %v5785
    %v5787 = vrot.slane %v3788, 2
    %v5788 = vrot.slane %v3790, 2
    %v5789 = vsel %vm5783, %v5787, %v5788
    %v5790 = vrot.slane %v3791, 2
    %v5791 = vsel %vm5783, %v5785, %v5790
    %v5792 = vrot.slane %v3792, 2
    %v5793 = vsel %vm5783, %v5788, %v5792
    %v5794 = vrot.slane %v3793, 2
    %v5795 = vsel %vm5783, %v5790, %v5794
    %v5796 = vrot.slane %v3794, 2
    %v5797 = vsel %vm5783, %v5792, %v5796
    %v5798 = vrot.slane %v3795, 2
    %v5799 = vsel %vm5783, %v5794, %v5798
    %v5800 = vrot.slane %v3796, 2
    %v5801 = vsel %vm5783, %v5796, %v5800
    %v5802 = vrot.slane %v3797, 2
    %v5803 = vsel %vm5783, %v5798, %v5802
    %v5804 = vrot.slane %v3798, 2
    %v5805 = vsel %vm5783, %v5800, %v5804
    %v5806 = vrot.slane %v3799, 2
    %v5807 = vsel %vm5783, %v5802, %v5806
    %v5808 = vrot.slane %v3800, 2
    %v5809 = vsel %vm5783, %v5804, %v5808
    %v5810 = vrot.slane %v3801, 2
    %v5811 = vsel %vm5783, %v5806, %v5810
    %v5812 = vrot.slane %v3802, 2
    %v5813 = vsel %vm5783, %v5808, %v5812
    %v5814 = vrot.slane %v3803, 2
    %v5815 = vsel %vm5783, %v5810, %v5814
    %v5816 = vrot.slane %v3804, 2
    %v5817 = vsel %vm5783, %v5812, %v5816
    %v5818 = vrot.slane %v3805, 2
    %v5819 = vsel %vm5783, %v5814, %v5818
    %v5820 = vrot.slane %v3806, 2
    %v5821 = vsel %vm5783, %v5816, %v5820
    %v5822 = vrot.slane %v3807, 2
    %v5823 = vsel %vm5783, %v5818, %v5822
    %v5824 = vrot.slane %v3808, 2
    %v5825 = vsel %vm5783, %v5820, %v5824
    %v5826 = vrot.slane %v3809, 2
    %v5827 = vsel %vm5783, %v5822, %v5826
    %v5828 = vrot.slane %v3810, 2
    %v5829 = vsel %vm5783, %v5824, %v5828
    %v5918 = vunpack.c.l.b16 %v5719
    %v5919 = vunpack.c.h.b16 %v5719
    %v5920 = vunpack.c.l.b16 %v5720
    %v5921 = vunpack.c.h.b16 %v5720
    %v5922 = vunpack.c.l.b16 %v5721
    %v5923 = vunpack.c.h.b16 %v5721
    %v5924 = vunpack.c.l.b16 %v5722
    %v5925 = vunpack.c.h.b16 %v5722
    %v5926 = vunpack.c.l.b16 %v5723
    %v5927 = vunpack.c.h.b16 %v5723
    %v5928 = vunpack.c.l.b16 %v5724
    %v5929 = vunpack.c.h.b16 %v5724
    %v5930 = vunpack.c.l.b16 %v5725
    %v5931 = vunpack.c.h.b16 %v5725
    %v5932 = vunpack.c.l.b16 %v5726
    %v5933 = vunpack.c.h.b16 %v5726
    %v5934 = vunpack.c.l.b16 %v5727
    %v5935 = vunpack.c.h.b16 %v5727
    %v5936 = vunpack.c.l.b16 %v5728
    %v5937 = vunpack.c.h.b16 %v5728
    %v5938 = vunpack.c.l.b16 %v5729
    %v5939 = vunpack.c.h.b16 %v5729
    %v5940 = vunpack.c.l.b16 %v5730
    %v5941 = vunpack.c.h.b16 %v5730
    %v5942 = vunpack.c.l.b16 %v5731
    %v5943 = vunpack.c.h.b16 %v5731
    %v5944 = vunpack.c.l.b16 %v5732
    %v5945 = vunpack.c.h.b16 %v5732
    %v5946 = vunpack.c.l.b16 %v5733
    %v5947 = vunpack.c.h.b16 %v5733
    %v5948 = vunpack.c.l.b16 %v5734
    %v5949 = vunpack.c.h.b16 %v5734
    %v5950 = vunpack.c.l.b16 %v5735
    %v5951 = vunpack.c.h.b16 %v5735
    %v5952 = vunpack.c.l.b16 %v5736
    %v5953 = vunpack.c.h.b16 %v5736
    %v5954 = vunpack.c.l.b16 %v5737
    %v5955 = vunpack.c.h.b16 %v5737
    %v5956 = vunpack.c.l.b16 %v5738
    %v5957 = vunpack.c.h.b16 %v5738
    %v5958 = vunpack.c.l.b16 %v5739
    %v5959 = vunpack.c.h.b16 %v5739
    %v5960 = vunpack.c.l.b16 %v5740
    %v5961 = vunpack.c.h.b16 %v5740
    %v5962 = vunpack.c.l.b16 %v5741
    %v5963 = vunpack.c.h.b16 %v5741
    %v5964 = vunpack.c.l.b16 %v5742
    %v5965 = vunpack.c.h.b16 %v5742
    %v5966 = vunpack.c.l.b16 %v5743
    %v5967 = vunpack.c.h.b16 %v5743
    %v5968 = vunpack.c.l.b16 %v5744
    %v5969 = vunpack.c.h.b16 %v5744
    %v5970 = vunpack.c.l.b16 %v5745
    %v5971 = vunpack.c.h.b16 %v5745
    %v5972 = vunpack.c.l.b16 %v5746
    %v5973 = vunpack.c.h.b16 %v5746
    %v5974 = vunpack.c.l.b16 %v5747
    %v5975 = vunpack.c.h.b16 %v5747
    %v5976 = vunpack.c.l.b16 %v5748
    %v5977 = vunpack.c.h.b16 %v5748
    %v5978 = vunpack.c.l.b16 %v5749
    %v5979 = vunpack.c.h.b16 %v5749
    %v5980 = vunpack.c.l.b16 %v5750
    %v5981 = vunpack.c.h.b16 %v5750
    %v5982 = vunpack.c.l.b16 %v5751
    %v5983 = vunpack.c.h.b16 %v5751
    %v5984 = vunpack.c.l.b16 %v5752
    %v5985 = vunpack.c.h.b16 %v5752
    %v5986 = vunpack.c.l.b16 %v5753
    %v5987 = vunpack.c.h.b16 %v5753
    %v5988 = vunpack.c.l.b16 %v5754
    %v5989 = vunpack.c.h.b16 %v5754
    %v5990 = vunpack.c.l.b16 %v5755
    %v5991 = vunpack.c.h.b16 %v5755
    %v5992 = vunpack.c.l.b16 %v5756
    %v5993 = vunpack.c.h.b16 %v5756
    %v5994 = vunpack.c.l.b16 %v5757
    %v5995 = vunpack.c.h.b16 %v5757
    %v5996 = vunpack.c.l.b16 %v5758
    %v5997 = vunpack.c.h.b16 %v5758
    %v5998 = vunpack.c.l.b16 %v5759
    %v5999 = vunpack.c.h.b16 %v5759
    %v6000 = vunpack.c.l.b16 %v5760
    %v6001 = vunpack.c.h.b16 %v5760
    %v6002 = vunpack.c.l.b16 %v5761
    %v6003 = vunpack.c.h.b16 %v5761
    %v6004 = vunpack.c.l.b16 %v5762
    %v6005 = vunpack.c.h.b16 %v5762
    %v6006 = vunpack.c.l.b16 %v5763
    %v6007 = vunpack.c.h.b16 %v5763
    %v6008 = vunpack.c.l.b16 %v5764
    %v6009 = vunpack.c.h.b16 %v5764
    %v6010 = vunpack.c.l.b16 %v5765
    %v6011 = vunpack.c.h.b16 %v5765
    %v6012 = vunpack.c.l.b16 %v5766
    %v6013 = vunpack.c.h.b16 %v5766
    %v6014 = vunpack.c.l.b16 %v5767
    %v6015 = vunpack.c.h.b16 %v5767
    %v6016 = vunpack.c.l.b16 %v5768
    %v6017 = vunpack.c.h.b16 %v5768
    %v6018 = vunpack.c.l.b16 %v5769
    %v6019 = vunpack.c.h.b16 %v5769
    %v6020 = vunpack.c.l.b16 %v5770
    %v6021 = vunpack.c.h.b16 %v5770
    %v6022 = vunpack.c.l.b16 %v5771
    %v6023 = vunpack.c.h.b16 %v5771
    %v6024 = vunpack.c.l.b16 %v5772
    %v6025 = vunpack.c.h.b16 %v5772
    %v6026 = vunpack.c.l.b16 %v5773
    %v6027 = vunpack.c.h.b16 %v5773
    %v6028 = vunpack.c.l.b16 %v5774
    %v6029 = vunpack.c.h.b16 %v5774
    %v6030 = vunpack.c.l.b16 %v5775
    %v6031 = vunpack.c.h.b16 %v5775
    %v6032 = vunpack.c.l.b16 %v5776
    %v6033 = vunpack.c.h.b16 %v5776
    %v6034 = vunpack.c.l.b16 %v5777
    %v6035 = vunpack.c.h.b16 %v5777
    %v6036 = vunpack.c.l.b16 %v5778
    %v6037 = vunpack.c.h.b16 %v5778
    %v6038 = vunpack.c.l.b16 %v5779
    %v6039 = vunpack.c.h.b16 %v5779
    %v6040 = vunpack.c.l.b16 %v5780
    %v6041 = vunpack.c.h.b16 %v5780
    %v6042 = vunpack.c.l.b16 %v5781
    %v6043 = vunpack.c.h.b16 %v5781
    %v6044 = vunpack.c.l.b16 %v5782
    %v6045 = vunpack.c.h.b16 %v5782
    %v6046 = vpack.c.b16 %v5922, %v5918
    %v6047 = vpack.c.b16 %v5923, %v5919
    %v6048 = vpack.c.b16 %v5924, %v5920
    %v6049 = vpack.c.b16 %v5925, %v5921
    %v6050 = vpack.c.b16 %v5930, %v5926
    %v6051 = vpack.c.b16 %v5931, %v5927
    %v6052 = vpack.c.b16 %v5932, %v5928
    %v6053 = vpack.c.b16 %v5933, %v5929
    %v6054 = vpack.c.b16 %v5938, %v5934
    %v6055 = vpack.c.b16 %v5939, %v5935
    %v6056 = vpack.c.b16 %v5940, %v5936
    %v6057 = vpack.c.b16 %v5941, %v5937
    %v6058 = vpack.c.b16 %v5946, %v5942
    %v6059 = vpack.c.b16 %v5947, %v5943
    %v6060 = vpack.c.b16 %v5948, %v5944
    %v6061 = vpack.c.b16 %v5949, %v5945
    %v6062 = vpack.c.b16 %v5954, %v5950
    %v6063 = vpack.c.b16 %v5955, %v5951
    %v6064 = vpack.c.b16 %v5956, %v5952
    %v6065 = vpack.c.b16 %v5957, %v5953
    %v6066 = vpack.c.b16 %v5962, %v5958
    %v6067 = vpack.c.b16 %v5963, %v5959
    %v6068 = vpack.c.b16 %v5964, %v5960
    %v6069 = vpack.c.b16 %v5965, %v5961
    %v6070 = vpack.c.b16 %v5970, %v5966
    %v6071 = vpack.c.b16 %v5971, %v5967
    %v6072 = vpack.c.b16 %v5972, %v5968
    %v6073 = vpack.c.b16 %v5973, %v5969
    %v6074 = vpack.c.b16 %v5978, %v5974
    %v6075 = vpack.c.b16 %v5979, %v5975
    %v6076 = vpack.c.b16 %v5980, %v5976
    %v6077 = vpack.c.b16 %v5981, %v5977
    %v6078 = vpack.c.b16 %v5986, %v5982
    %v6079 = vpack.c.b16 %v5987, %v5983
    %v6080 = vpack.c.b16 %v5988, %v5984
    %v6081 = vpack.c.b16 %v5989, %v5985
    %v6082 = vpack.c.b16 %v5994, %v5990
    %v6083 = vpack.c.b16 %v5995, %v5991
    %v6084 = vpack.c.b16 %v5996, %v5992
    %v6085 = vpack.c.b16 %v5997, %v5993
    %v6086 = vpack.c.b16 %v6002, %v5998
    %v6087 = vpack.c.b16 %v6003, %v5999
    %v6088 = vpack.c.b16 %v6004, %v6000
    %v6089 = vpack.c.b16 %v6005, %v6001
    %v6090 = vpack.c.b16 %v6010, %v6006
    %v6091 = vpack.c.b16 %v6011, %v6007
    %v6092 = vpack.c.b16 %v6012, %v6008
    %v6093 = vpack.c.b16 %v6013, %v6009
    %v6094 = vpack.c.b16 %v6018, %v6014
    %v6095 = vpack.c.b16 %v6019, %v6015
    %v6096 = vpack.c.b16 %v6020, %v6016
    %v6097 = vpack.c.b16 %v6021, %v6017
    %v6098 = vpack.c.b16 %v6026, %v6022
    %v6099 = vpack.c.b16 %v6027, %v6023
    %v6100 = vpack.c.b16 %v6028, %v6024
    %v6101 = vpack.c.b16 %v6029, %v6025
    %v6102 = vpack.c.b16 %v6034, %v6030
    %v6103 = vpack.c.b16 %v6035, %v6031
    %v6104 = vpack.c.b16 %v6036, %v6032
    %v6105 = vpack.c.b16 %v6037, %v6033
    %v6106 = vpack.c.b16 %v6042, %v6038
    %v6107 = vpack.c.b16 %v6043, %v6039
    %v6108 = vpack.c.b16 %v6044, %v6040
    %v6109 = vpack.c.b16 %v6045, %v6041
    %6174 = vmatprep.subr.bf16.mxu0 %v6047
    %6175 = vmatpush1.bf16.msra.mxu0 %v6046
    %6176 = vmatprep.subr.bf16.mxu0 %v6051
    %6177 = vmatpush1.bf16.msra.mxu0 %v6050
    %6178 = vmatprep.subr.bf16.mxu0 %v6055
    %6179 = vmatpush1.bf16.msra.mxu0 %v6054
    %6180 = vmatprep.subr.bf16.mxu0 %v6059
    %6181 = vmatpush1.bf16.msra.mxu0 %v6058
    %6182 = vmatprep.subr.bf16.mxu0 %v6063
    %6183 = vmatpush1.bf16.msra.mxu0 %v6062
    %6184 = vmatprep.subr.bf16.mxu0 %v6067
    %6185 = vmatpush1.bf16.msra.mxu0 %v6066
    %6186 = vmatprep.subr.bf16.mxu0 %v6071
    %6187 = vmatpush1.bf16.msra.mxu0 %v6070
    %6188 = vmatprep.subr.bf16.mxu0 %v6075
    %6189 = vmatpush1.bf16.msra.mxu0 %v6074
    %6190 = vmatprep.subr.bf16.mxu0 %v6079
    %6191 = vmatpush1.bf16.msra.mxu0 %v6078
    %6192 = vmatprep.subr.bf16.mxu0 %v6083
    %6193 = vmatpush1.bf16.msra.mxu0 %v6082
    %6194 = vmatprep.subr.bf16.mxu0 %v6087
    %6195 = vmatpush1.bf16.msra.mxu0 %v6086
    %6196 = vmatprep.subr.bf16.mxu0 %v6091
    %6197 = vmatpush1.bf16.msra.mxu0 %v6090
    %6198 = vmatprep.subr.bf16.mxu0 %v6095
    %6199 = vmatpush1.bf16.msra.mxu0 %v6094
    %6200 = vmatprep.subr.bf16.mxu0 %v6099
    %6201 = vmatpush1.bf16.msra.mxu0 %v6098
    %6202 = vmatprep.subr.bf16.mxu0 %v6103
    %6203 = vmatpush1.bf16.msra.mxu0 %v6102
    %6204 = vmatprep.subr.bf16.mxu0 %v6107
    %6205 = vmatpush1.bf16.msra.mxu0 %v6106
    %6206 = vmatprep.mubr.bf16.mxu0 %v5789
    %6207 = vmatmul.mubr.bf16.gmra.mrb[0].mxu0 %v5786
    %v6208 = vpop.f32.mrb[0].mxu0
    %v6209 = vadd.f32 0.0, %v6208
    %v6210 = vpop.f32.mrb[0].mxu0
    %v6211 = vadd.f32 0.0, %v6210
    %v6212 = vpop.f32.mrb[0].mxu0
    %v6213 = vadd.f32 0.0, %v6212
    %v6214 = vpop.f32.mrb[0].mxu0
    %v6215 = vadd.f32 0.0, %v6214
    %6216 = vmatprep.mubr.bf16.mxu0 %v5793
    %6217 = vmatmul.mubr.bf16.gmra.mrb[0].mxu0 %v5791
    %v6218 = vpop.f32.mrb[0].mxu0
    %v6219 = vadd.f32 0.0, %v6218
    %v6220 = vpop.f32.mrb[0].mxu0
    %v6221 = vadd.f32 0.0, %v6220
    %v6222 = vpop.f32.mrb[0].mxu0
    %v6223 = vadd.f32 0.0, %v6222
    %v6224 = vpop.f32.mrb[0].mxu0
    %v6225 = vadd.f32 0.0, %v6224
    %6226 = vmatprep.mubr.bf16.mxu0 %v5797
    %6227 = vmatmul.mubr.bf16.gmra.mrb[0].mxu0 %v5795
    %v6228 = vpop.f32.mrb[0].mxu0
    %v6229 = vadd.f32 0.0, %v6228
    %v6230 = vpop.f32.mrb[0].mxu0
    %v6231 = vadd.f32 0.0, %v6230
    %v6232 = vpop.f32.mrb[0].mxu0
    %v6233 = vadd.f32 0.0, %v6232
    %v6234 = vpop.f32.mrb[0].mxu0
    %v6235 = vadd.f32 0.0, %v6234
    %6236 = vmatprep.mubr.bf16.mxu0 %v5801
    %6237 = vmatmul.mubr.bf16.gmra.mrb[0].mxu0 %v5799
    %v6238 = vpop.f32.mrb[0].mxu0
    %v6239 = vadd.f32 0.0, %v6238
    %v6240 = vpop.f32.mrb[0].mxu0
    %v6241 = vadd.f32 0.0, %v6240
    %v6242 = vpop.f32.mrb[0].mxu0
    %v6243 = vadd.f32 0.0, %v6242
    %v6244 = vpop.f32.mrb[0].mxu0
    %v6245 = vadd.f32 0.0, %v6244
    %6246 = vmatprep.mubr.bf16.mxu0 %v5805
    %6247 = vmatmul.mubr.bf16.gmra.mrb[0].mxu0 %v5803
    %v6248 = vpop.f32.mrb[0].mxu0
    %v6249 = vadd.f32 0.0, %v6248
    %v6250 = vpop.f32.mrb[0].mxu0
    %v6251 = vadd.f32 0.0, %v6250
    %v6252 = vpop.f32.mrb[0].mxu0
    %v6253 = vadd.f32 0.0, %v6252
    %v6254 = vpop.f32.mrb[0].mxu0
    %v6255 = vadd.f32 0.0, %v6254
    %6256 = vmatprep.mubr.bf16.mxu0 %v5809
    %6257 = vmatmul.mubr.bf16.gmra.mrb[0].mxu0 %v5807
    %v6258 = vpop.f32.mrb[0].mxu0
    %v6259 = vadd.f32 0.0, %v6258
    %v6260 = vpop.f32.mrb[0].mxu0
    %v6261 = vadd.f32 0.0, %v6260
    %v6262 = vpop.f32.mrb[0].mxu0
    %v6263 = vadd.f32 0.0, %v6262
    %v6264 = vpop.f32.mrb[0].mxu0
    %v6265 = vadd.f32 0.0, %v6264
    %6266 = vmatprep.mubr.bf16.mxu0 %v5813
    %6267 = vmatmul.mubr.bf16.gmra.mrb[0].mxu0 %v5811
    %v6268 = vpop.f32.mrb[0].mxu0
    %v6269 = vadd.f32 0.0, %v6268
    %v6270 = vpop.f32.mrb[0].mxu0
    %v6271 = vadd.f32 0.0, %v6270
    %v6272 = vpop.f32.mrb[0].mxu0
    %v6273 = vadd.f32 0.0, %v6272
    %v6274 = vpop.f32.mrb[0].mxu0
    %v6275 = vadd.f32 0.0, %v6274
    %6276 = vmatprep.mubr.bf16.mxu0 %v5817
    %6277 = vmatmul.mubr.bf16.gmra.mrb[0].mxu0 %v5815
    %v6278 = vpop.f32.mrb[0].mxu0
    %v6279 = vadd.f32 0.0, %v6278
    %v6280 = vpop.f32.mrb[0].mxu0
    %v6281 = vadd.f32 0.0, %v6280
    %v6282 = vpop.f32.mrb[0].mxu0
    %v6283 = vadd.f32 0.0, %v6282
    %v6284 = vpop.f32.mrb[0].mxu0
    %v6285 = vadd.f32 0.0, %v6284
    %6286 = vmatprep.mubr.bf16.mxu0 %v5821
    %6287 = vmatmul.mubr.bf16.gmra.mrb[0].mxu0 %v5819
    %v6288 = vpop.f32.mrb[0].mxu0
    %v6289 = vadd.f32 0.0, %v6288
    %v6290 = vpop.f32.mrb[0].mxu0
    %v6291 = vadd.f32 0.0, %v6290
    %v6292 = vpop.f32.mrb[0].mxu0
    %v6293 = vadd.f32 0.0, %v6292
    %v6294 = vpop.f32.mrb[0].mxu0
    %v6295 = vadd.f32 0.0, %v6294
    %6296 = vmatprep.mubr.bf16.mxu0 %v5825
    %6297 = vmatmul.mubr.bf16.gmra.mrb[0].mxu0 %v5823
    %v6298 = vpop.f32.mrb[0].mxu0
    %v6299 = vadd.f32 0.0, %v6298
    %v6300 = vpop.f32.mrb[0].mxu0
    %v6301 = vadd.f32 0.0, %v6300
    %v6302 = vpop.f32.mrb[0].mxu0
    %v6303 = vadd.f32 0.0, %v6302
    %v6304 = vpop.f32.mrb[0].mxu0
    %v6305 = vadd.f32 0.0, %v6304
    %6306 = vmatprep.mubr.bf16.mxu0 %v5829
    %6307 = vmatmul.mubr.bf16.gmra.mrb[0].mxu0 %v5827
    %v6308 = vpop.f32.mrb[0].mxu0
    %v6309 = vadd.f32 0.0, %v6308
    %v6310 = vpop.f32.mrb[0].mxu0
    %v6311 = vadd.f32 0.0, %v6310
    %v6312 = vpop.f32.mrb[0].mxu0
    %v6313 = vadd.f32 0.0, %v6312
    %v6314 = vpop.f32.mrb[0].mxu0
    %v6315 = vadd.f32 0.0, %v6314
    %6316 = vmatprep.mubr.bf16.mxu0 %v5828
    %6317 = vmatmul.mubr.bf16.gmra.mrb[0].mxu0 %v5826
    %v6318 = vpop.f32.mrb[0].mxu0
    %v6319 = vadd.f32 0.0, %v6318
    %v6320 = vpop.f32.mrb[0].mxu0
    %v6321 = vadd.f32 0.0, %v6320
    %v6322 = vpop.f32.mrb[0].mxu0
    %v6323 = vadd.f32 0.0, %v6322
    %v6324 = vpop.f32.mrb[0].mxu0
    %v6325 = vadd.f32 0.0, %v6324
    %6326 = vdwg.mxu0
    %6327 = vmatprep.subr.bf16.mxu0 %v6049
    %6328 = vmatpush1.bf16.msra.mxu0 %v6048
    %6329 = vmatprep.subr.bf16.mxu0 %v6053
    %6330 = vmatpush1.bf16.msra.mxu0 %v6052
    %6331 = vmatprep.subr.bf16.mxu0 %v6057
    %6332 = vmatpush1.bf16.msra.mxu0 %v6056
    %6333 = vmatprep.subr.bf16.mxu0 %v6061
    %6334 = vmatpush1.bf16.msra.mxu0 %v6060
    %6335 = vmatprep.subr.bf16.mxu0 %v6065
    %6336 = vmatpush1.bf16.msra.mxu0 %v6064
    %6337 = vmatprep.subr.bf16.mxu0 %v6069
    %6338 = vmatpush1.bf16.msra.mxu0 %v6068
    %6339 = vmatprep.subr.bf16.mxu0 %v6073
    %6340 = vmatpush1.bf16.msra.mxu0 %v6072
    %6341 = vmatprep.subr.bf16.mxu0 %v6077
    %6342 = vmatpush1.bf16.msra.mxu0 %v6076
    %6343 = vmatprep.subr.bf16.mxu0 %v6081
    %6344 = vmatpush1.bf16.msra.mxu0 %v6080
    %6345 = vmatprep.subr.bf16.mxu0 %v6085
    %6346 = vmatpush1.bf16.msra.mxu0 %v6084
    %6347 = vmatprep.subr.bf16.mxu0 %v6089
    %6348 = vmatpush1.bf16.msra.mxu0 %v6088
    %6349 = vmatprep.subr.bf16.mxu0 %v6093
    %6350 = vmatpush1.bf16.msra.mxu0 %v6092
    %6351 = vmatprep.subr.bf16.mxu0 %v6097
    %6352 = vmatpush1.bf16.msra.mxu0 %v6096
    %6353 = vmatprep.subr.bf16.mxu0 %v6101
    %6354 = vmatpush1.bf16.msra.mxu0 %v6100
    %6355 = vmatprep.subr.bf16.mxu0 %v6105
    %6356 = vmatpush1.bf16.msra.mxu0 %v6104
    %6357 = vmatprep.subr.bf16.mxu0 %v6109
    %6358 = vmatpush1.bf16.msra.mxu0 %v6108
    %6359 = vmatprep.mubr.bf16.mxu0 %v5789
    %6360 = vmatmul.mubr.bf16.gmra.mrb[0].mxu0 %v5786
    %v6361 = vpop.f32.mrb[0].mxu0
    %v6362 = vadd.f32 0.0, %v6361
    %v6363 = vpop.f32.mrb[0].mxu0
    %v6364 = vadd.f32 0.0, %v6363
    %v6365 = vpop.f32.mrb[0].mxu0
    %v6366 = vadd.f32 0.0, %v6365
    %v6367 = vpop.f32.mrb[0].mxu0
    %v6368 = vadd.f32 0.0, %v6367
    %6369 = vmatprep.mubr.bf16.mxu0 %v5793
    %6370 = vmatmul.mubr.bf16.gmra.mrb[0].mxu0 %v5791
    %v6371 = vpop.f32.mrb[0].mxu0
    %v6372 = vadd.f32 0.0, %v6371
    %v6373 = vpop.f32.mrb[0].mxu0
    %v6374 = vadd.f32 0.0, %v6373
    %v6375 = vpop.f32.mrb[0].mxu0
    %v6376 = vadd.f32 0.0, %v6375
    %v6377 = vpop.f32.mrb[0].mxu0
    %v6378 = vadd.f32 0.0, %v6377
    %6379 = vmatprep.mubr.bf16.mxu0 %v5797
    %6380 = vmatmul.mubr.bf16.gmra.mrb[0].mxu0 %v5795
    %v6381 = vpop.f32.mrb[0].mxu0
    %v6382 = vadd.f32 0.0, %v6381
    %v6383 = vpop.f32.mrb[0].mxu0
    %v6384 = vadd.f32 0.0, %v6383
    %v6385 = vpop.f32.mrb[0].mxu0
    %v6386 = vadd.f32 0.0, %v6385
    %v6387 = vpop.f32.mrb[0].mxu0
    %v6388 = vadd.f32 0.0, %v6387
    %6389 = vmatprep.mubr.bf16.mxu0 %v5801
    %6390 = vmatmul.mubr.bf16.gmra.mrb[0].mxu0 %v5799
    %v6391 = vpop.f32.mrb[0].mxu0
    %v6392 = vadd.f32 0.0, %v6391
    %v6393 = vpop.f32.mrb[0].mxu0
    %v6394 = vadd.f32 0.0, %v6393
    %v6395 = vpop.f32.mrb[0].mxu0
    %v6396 = vadd.f32 0.0, %v6395
    %v6397 = vpop.f32.mrb[0].mxu0
    %v6398 = vadd.f32 0.0, %v6397
    %6399 = vmatprep.mubr.bf16.mxu0 %v5805
    %6400 = vmatmul.mubr.bf16.gmra.mrb[0].mxu0 %v5803
    %v6401 = vpop.f32.mrb[0].mxu0
    %v6402 = vadd.f32 0.0, %v6401
    %v6403 = vpop.f32.mrb[0].mxu0
    %v6404 = vadd.f32 0.0, %v6403
    %v6405 = vpop.f32.mrb[0].mxu0
    %v6406 = vadd.f32 0.0, %v6405
    %v6407 = vpop.f32.mrb[0].mxu0
    %v6408 = vadd.f32 0.0, %v6407
    %6409 = vmatprep.mubr.bf16.mxu0 %v5809
    %6410 = vmatmul.mubr.bf16.gmra.mrb[0].mxu0 %v5807
    %v6411 = vpop.f32.mrb[0].mxu0
    %v6412 = vadd.f32 0.0, %v6411
    %v6413 = vpop.f32.mrb[0].mxu0
    %v6414 = vadd.f32 0.0, %v6413
    %v6415 = vpop.f32.mrb[0].mxu0
    %v6416 = vadd.f32 0.0, %v6415
    %v6417 = vpop.f32.mrb[0].mxu0
    %v6418 = vadd.f32 0.0, %v6417
    %6419 = vmatprep.mubr.bf16.mxu0 %v5813
    %6420 = vmatmul.mubr.bf16.gmra.mrb[0].mxu0 %v5811
    %v6421 = vpop.f32.mrb[0].mxu0
    %v6422 = vadd.f32 0.0, %v6421
    %v6423 = vpop.f32.mrb[0].mxu0
    %v6424 = vadd.f32 0.0, %v6423
    %v6425 = vpop.f32.mrb[0].mxu0
    %v6426 = vadd.f32 0.0, %v6425
    %v6427 = vpop.f32.mrb[0].mxu0
    %v6428 = vadd.f32 0.0, %v6427
    %6429 = vmatprep.mubr.bf16.mxu0 %v5817
    %6430 = vmatmul.mubr.bf16.gmra.mrb[0].mxu0 %v5815
    %v6431 = vpop.f32.mrb[0].mxu0
    %v6432 = vadd.f32 0.0, %v6431
    %v6433 = vpop.f32.mrb[0].mxu0
    %v6434 = vadd.f32 0.0, %v6433
    %v6435 = vpop.f32.mrb[0].mxu0
    %v6436 = vadd.f32 0.0, %v6435
    %v6437 = vpop.f32.mrb[0].mxu0
    %v6438 = vadd.f32 0.0, %v6437
    %6439 = vmatprep.mubr.bf16.mxu0 %v5821
    %6440 = vmatmul.mubr.bf16.gmra.mrb[0].mxu0 %v5819
    %v6441 = vpop.f32.mrb[0].mxu0
    %v6442 = vadd.f32 0.0, %v6441
    %v6443 = vpop.f32.mrb[0].mxu0
    %v6444 = vadd.f32 0.0, %v6443
    %v6445 = vpop.f32.mrb[0].mxu0
    %v6446 = vadd.f32 0.0, %v6445
    %v6447 = vpop.f32.mrb[0].mxu0
    %v6448 = vadd.f32 0.0, %v6447
    %6449 = vmatprep.mubr.bf16.mxu0 %v5825
    %6450 = vmatmul.mubr.bf16.gmra.mrb[0].mxu0 %v5823
    %v6451 = vpop.f32.mrb[0].mxu0
    %v6452 = vadd.f32 0.0, %v6451
    %v6453 = vpop.f32.mrb[0].mxu0
    %v6454 = vadd.f32 0.0, %v6453
    %v6455 = vpop.f32.mrb[0].mxu0
    %v6456 = vadd.f32 0.0, %v6455
    %v6457 = vpop.f32.mrb[0].mxu0
    %v6458 = vadd.f32 0.0, %v6457
    %6459 = vmatprep.mubr.bf16.mxu0 %v5829
    %6460 = vmatmul.mubr.bf16.gmra.mrb[0].mxu0 %v5827
    %v6461 = vpop.f32.mrb[0].mxu0
    %v6462 = vadd.f32 0.0, %v6461
    %v6463 = vpop.f32.mrb[0].mxu0
    %v6464 = vadd.f32 0.0, %v6463
    %v6465 = vpop.f32.mrb[0].mxu0
    %v6466 = vadd.f32 0.0, %v6465
    %v6467 = vpop.f32.mrb[0].mxu0
    %v6468 = vadd.f32 0.0, %v6467
    %6469 = vmatprep.mubr.bf16.mxu0 %v5828
    %6470 = vmatmul.mubr.bf16.gmra.mrb[0].mxu0 %v5826
    %v6471 = vpop.f32.mrb[0].mxu0
    %v6472 = vadd.f32 0.0, %v6471
    %v6473 = vpop.f32.mrb[0].mxu0
    %v6474 = vadd.f32 0.0, %v6473
    %v6475 = vpop.f32.mrb[0].mxu0
    %v6476 = vadd.f32 0.0, %v6475
    %v6477 = vpop.f32.mrb[0].mxu0
    %v6478 = vadd.f32 0.0, %v6477
    %6479 = vdwg.mxu0
    %v6480 = vadd.f32 %v5622, %v6209
    %v6481 = vadd.f32 %v5623, %v6211
    %v6482 = vadd.f32 %v5624, %v6362
    %v6483 = vadd.f32 %v5625, %v6364
    %v6484 = vadd.f32 %v5626, %v6213
    %v6485 = vadd.f32 %v5627, %v6215
    %v6486 = vadd.f32 %v5628, %v6366
    %v6487 = vadd.f32 %v5629, %v6368
    %v6488 = vadd.f32 %v5630, %v6219
    %v6489 = vadd.f32 %v5631, %v6221
    %v6490 = vadd.f32 %v5632, %v6372
    %v6491 = vadd.f32 %v5633, %v6374
    %v6492 = vadd.f32 %v5634, %v6223
    %v6493 = vadd.f32 %v5635, %v6225
    %v6494 = vadd.f32 %v5636, %v6376
    %v6495 = vadd.f32 %v5637, %v6378
    %v6496 = vadd.f32 %v5638, %v6229
    %v6497 = vadd.f32 %v5639, %v6231
    %v6498 = vadd.f32 %v5640, %v6382
    %v6499 = vadd.f32 %v5641, %v6384
    %v6500 = vadd.f32 %v5642, %v6233
    %v6501 = vadd.f32 %v5643, %v6235
    %v6502 = vadd.f32 %v5644, %v6386
    %v6503 = vadd.f32 %v5645, %v6388
    %v6504 = vadd.f32 %v5646, %v6239
    %v6505 = vadd.f32 %v5647, %v6241
    %v6506 = vadd.f32 %v5648, %v6392
    %v6507 = vadd.f32 %v5649, %v6394
    %v6508 = vadd.f32 %v5650, %v6243
    %v6509 = vadd.f32 %v5651, %v6245
    %v6510 = vadd.f32 %v5652, %v6396
    %v6511 = vadd.f32 %v5653, %v6398
    %v6512 = vadd.f32 %v5654, %v6249
    %v6513 = vadd.f32 %v5655, %v6251
    %v6514 = vadd.f32 %v5656, %v6402
    %v6515 = vadd.f32 %v5657, %v6404
    %v6516 = vadd.f32 %v5658, %v6253
    %v6517 = vadd.f32 %v5659, %v6255
    %v6518 = vadd.f32 %v5660, %v6406
    %v6519 = vadd.f32 %v5661, %v6408
    %v6520 = vadd.f32 %v5662, %v6259
    %v6521 = vadd.f32 %v5663, %v6261
    %v6522 = vadd.f32 %v5664, %v6412
    %v6523 = vadd.f32 %v5665, %v6414
    %v6524 = vadd.f32 %v5666, %v6263
    %v6525 = vadd.f32 %v5667, %v6265
    %v6526 = vadd.f32 %v5668, %v6416
    %v6527 = vadd.f32 %v5669, %v6418
    %v6528 = vadd.f32 %v5670, %v6269
    %v6529 = vadd.f32 %v5671, %v6271
    %v6530 = vadd.f32 %v5672, %v6422
    %v6531 = vadd.f32 %v5673, %v6424
    %v6532 = vadd.f32 %v5674, %v6273
    %v6533 = vadd.f32 %v5675, %v6275
    %v6534 = vadd.f32 %v5676, %v6426
    %v6535 = vadd.f32 %v5677, %v6428
    %v6536 = vadd.f32 %v5678, %v6279
    %v6537 = vadd.f32 %v5679, %v6281
    %v6538 = vadd.f32 %v5680, %v6432
    %v6539 = vadd.f32 %v5681, %v6434
    %v6540 = vadd.f32 %v5682, %v6283
    %v6541 = vadd.f32 %v5683, %v6285
    %v6542 = vadd.f32 %v5684, %v6436
    %v6543 = vadd.f32 %v5685, %v6438
    %v6544 = vadd.f32 %v5686, %v6289
    %v6545 = vadd.f32 %v5687, %v6291
    %v6546 = vadd.f32 %v5688, %v6442
    %v6547 = vadd.f32 %v5689, %v6444
    %v6548 = vadd.f32 %v5690, %v6293
    %v6549 = vadd.f32 %v5691, %v6295
    %v6550 = vadd.f32 %v5692, %v6446
    %v6551 = vadd.f32 %v5693, %v6448
    %v6552 = vadd.f32 %v5694, %v6299
    %v6553 = vadd.f32 %v5695, %v6301
    %v6554 = vadd.f32 %v5696, %v6452
    %v6555 = vadd.f32 %v5697, %v6454
    %v6556 = vadd.f32 %v5698, %v6303
    %v6557 = vadd.f32 %v5699, %v6305
    %v6558 = vadd.f32 %v5700, %v6456
    %v6559 = vadd.f32 %v5701, %v6458
    %v6560 = vadd.f32 %v5702, %v6309
    %v6561 = vadd.f32 %v5703, %v6311
    %v6562 = vadd.f32 %v5704, %v6462
    %v6563 = vadd.f32 %v5705, %v6464
    %v6564 = vadd.f32 %v5706, %v6313
    %v6565 = vadd.f32 %v5707, %v6315
    %v6566 = vadd.f32 %v5708, %v6466
    %v6567 = vadd.f32 %v5709, %v6468
    %v6568 = vadd.f32 %v5710, %v6319
    %v6569 = vadd.f32 %v5711, %v6321
    %v6570 = vadd.f32 %v5712, %v6472
    %v6571 = vadd.f32 %v5713, %v6474
    %v6572 = vadd.f32 %v5714, %v6323
    %v6573 = vadd.f32 %v5715, %v6325
    %v6574 = vadd.f32 %v5716, %v6476
    %v6575 = vadd.f32 %v5717, %v6478
    %v6576 = vpack.c.bf16 %v1283, %v1281
    %v6577 = vpack.c.bf16 %v1284, %v1282
    %s6578 = scalar_lea.vmem %s6, 3072
    %v6579 = vld [vmem:[%s6578] sm:$0xff]
    %v6580 = vld [vmem:[%s6578 + $0x8] sm:$0xff]
    %v6581 = vld [vmem:[%s6578 + $0x10] sm:$0xff]
    %v6582 = vld [vmem:[%s6578 + $0x18] sm:$0xff]
    %v6583 = vld [vmem:[%s6578 + $0x20] sm:$0xff]
    %v6584 = vld [vmem:[%s6578 + $0x28] sm:$0xff]
    %v6585 = vld [vmem:[%s6578 + $0x30] sm:$0xff]
    %v6586 = vld [vmem:[%s6578 + $0x38] sm:$0xff]
    %v6587 = vld [vmem:[%s6578 + $0x40] sm:$0xff]
    %v6588 = vld [vmem:[%s6578 + $0x48] sm:$0xff]
    %v6589 = vld [vmem:[%s6578 + $0x50] sm:$0xff]
    %v6590 = vld [vmem:[%s6578 + $0x58] sm:$0xff]
    %v6591 = vld [vmem:[%s6578 + $0x60] sm:$0xff]
    %v6592 = vld [vmem:[%s6578 + $0x68] sm:$0xff]
    %v6593 = vld [vmem:[%s6578 + $0x70] sm:$0xff]
    %v6594 = vld [vmem:[%s6578 + $0x78] sm:$0xff]
    %v6595 = vld [vmem:[%s6578 + $0x80] sm:$0xff]
    %v6596 = vld [vmem:[%s6578 + $0x88] sm:$0xff]
    %v6597 = vld [vmem:[%s6578 + $0x90] sm:$0xff]
    %v6598 = vld [vmem:[%s6578 + $0x98] sm:$0xff]
    %v6599 = vld [vmem:[%s6578 + $0xa0] sm:$0xff]
    %v6600 = vld [vmem:[%s6578 + $0xa8] sm:$0xff]
    %v6601 = vld [vmem:[%s6578 + $0xb0] sm:$0xff]
    %v6602 = vld [vmem:[%s6578 + $0xb8] sm:$0xff]
    %v6603 = vld [vmem:[%s6578 + $0xc0] sm:$0xff]
    %v6604 = vld [vmem:[%s6578 + $0xc8] sm:$0xff]
    %v6605 = vld [vmem:[%s6578 + $0xd0] sm:$0xff]
    %v6606 = vld [vmem:[%s6578 + $0xd8] sm:$0xff]
    %v6607 = vld [vmem:[%s6578 + $0xe0] sm:$0xff]
    %v6608 = vld [vmem:[%s6578 + $0xe8] sm:$0xff]
    %v6609 = vld [vmem:[%s6578 + $0xf0] sm:$0xff]
    %v6610 = vld [vmem:[%s6578 + $0xf8] sm:$0xff]
    %v6611 = vld [vmem:[%s6578 + $0x100] sm:$0xff]
    %v6612 = vld [vmem:[%s6578 + $0x108] sm:$0xff]
    %v6613 = vld [vmem:[%s6578 + $0x110] sm:$0xff]
    %v6614 = vld [vmem:[%s6578 + $0x118] sm:$0xff]
    %v6615 = vld [vmem:[%s6578 + $0x120] sm:$0xff]
    %v6616 = vld [vmem:[%s6578 + $0x128] sm:$0xff]
    %v6617 = vld [vmem:[%s6578 + $0x130] sm:$0xff]
    %v6618 = vld [vmem:[%s6578 + $0x138] sm:$0xff]
    %v6619 = vld [vmem:[%s6578 + $0x140] sm:$0xff]
    %v6620 = vld [vmem:[%s6578 + $0x148] sm:$0xff]
    %v6621 = vld [vmem:[%s6578 + $0x150] sm:$0xff]
    %v6622 = vld [vmem:[%s6578 + $0x158] sm:$0xff]
    %v6623 = vld [vmem:[%s6578 + $0x160] sm:$0xff]
    %v6624 = vld [vmem:[%s6578 + $0x168] sm:$0xff]
    %v6625 = vld [vmem:[%s6578 + $0x170] sm:$0xff]
    %v6626 = vld [vmem:[%s6578 + $0x178] sm:$0xff]
    %v6627 = vld [vmem:[%s6578 + $0x180] sm:$0xff]
    %v6628 = vld [vmem:[%s6578 + $0x188] sm:$0xff]
    %v6629 = vld [vmem:[%s6578 + $0x190] sm:$0xff]
    %v6630 = vld [vmem:[%s6578 + $0x198] sm:$0xff]
    %v6631 = vld [vmem:[%s6578 + $0x1a0] sm:$0xff]
    %v6632 = vld [vmem:[%s6578 + $0x1a8] sm:$0xff]
    %v6633 = vld [vmem:[%s6578 + $0x1b0] sm:$0xff]
    %v6634 = vld [vmem:[%s6578 + $0x1b8] sm:$0xff]
    %v6635 = vld [vmem:[%s6578 + $0x1c0] sm:$0xff]
    %v6636 = vld [vmem:[%s6578 + $0x1c8] sm:$0xff]
    %v6637 = vld [vmem:[%s6578 + $0x1d0] sm:$0xff]
    %v6638 = vld [vmem:[%s6578 + $0x1d8] sm:$0xff]
    %v6639 = vld [vmem:[%s6578 + $0x1e0] sm:$0xff]
    %v6640 = vld [vmem:[%s6578 + $0x1e8] sm:$0xff]
    %v6641 = vld [vmem:[%s6578 + $0x1f0] sm:$0xff]
    %v6642 = vld [vmem:[%s6578 + $0x1f8] sm:$0xff]
    %v6645 = vrot.slane %v1287, 2
    %v6646 = vrot.slane %v1289, 2
    %v6647 = vsel %vm5783, %v6645, %v6646
    %v6648 = vrot.slane %v1288, 2
    %v6649 = vrot.slane %v1290, 2
    %v6650 = vsel %vm5783, %v6648, %v6649
    %v6651 = vrot.slane %v1291, 2
    %v6652 = vsel %vm5783, %v6646, %v6651
    %v6653 = vrot.slane %v1292, 2
    %v6654 = vsel %vm5783, %v6649, %v6653
    %v6655 = vrot.slane %v1293, 2
    %v6656 = vsel %vm5783, %v6651, %v6655
    %v6657 = vrot.slane %v1294, 2
    %v6658 = vsel %vm5783, %v6653, %v6657
    %v6659 = vrot.slane %v1295, 2
    %v6660 = vsel %vm5783, %v6655, %v6659
    %v6661 = vrot.slane %v1296, 2
    %v6662 = vsel %vm5783, %v6657, %v6661
    %v6663 = vrot.slane %v1297, 2
    %v6664 = vsel %vm5783, %v6659, %v6663
    %v6665 = vrot.slane %v1298, 2
    %v6666 = vsel %vm5783, %v6661, %v6665
    %v6667 = vrot.slane %v1299, 2
    %v6668 = vsel %vm5783, %v6663, %v6667
    %v6669 = vrot.slane %v1300, 2
    %v6670 = vsel %vm5783, %v6665, %v6669
    %v6671 = vrot.slane %v1301, 2
    %v6672 = vsel %vm5783, %v6667, %v6671
    %v6673 = vrot.slane %v1302, 2
    %v6674 = vsel %vm5783, %v6669, %v6673
    %v6675 = vrot.slane %v1303, 2
    %v6676 = vsel %vm5783, %v6671, %v6675
    %v6677 = vrot.slane %v1304, 2
    %v6678 = vsel %vm5783, %v6673, %v6677
    %v6679 = vrot.slane %v1305, 2
    %v6680 = vsel %vm5783, %v6675, %v6679
    %v6681 = vrot.slane %v1306, 2
    %v6682 = vsel %vm5783, %v6677, %v6681
    %v6683 = vrot.slane %v1307, 2
    %v6684 = vsel %vm5783, %v6679, %v6683
    %v6685 = vrot.slane %v1308, 2
    %v6686 = vsel %vm5783, %v6681, %v6685
    %v6687 = vrot.slane %v6576, 2
    %v6688 = vsel %vm5783, %v6683, %v6687
    %v6689 = vrot.slane %v6577, 2
    %v6690 = vsel %vm5783, %v6685, %v6689
    %v6779 = vunpack.c.l.b16 %v6579
    %v6780 = vunpack.c.h.b16 %v6579
    %v6781 = vunpack.c.l.b16 %v6580
    %v6782 = vunpack.c.h.b16 %v6580
    %v6783 = vunpack.c.l.b16 %v6581
    %v6784 = vunpack.c.h.b16 %v6581
    %v6785 = vunpack.c.l.b16 %v6582
    %v6786 = vunpack.c.h.b16 %v6582
    %v6787 = vunpack.c.l.b16 %v6583
    %v6788 = vunpack.c.h.b16 %v6583
    %v6789 = vunpack.c.l.b16 %v6584
    %v6790 = vunpack.c.h.b16 %v6584
    %v6791 = vunpack.c.l.b16 %v6585
    %v6792 = vunpack.c.h.b16 %v6585
    %v6793 = vunpack.c.l.b16 %v6586
    %v6794 = vunpack.c.h.b16 %v6586
    %v6795 = vunpack.c.l.b16 %v6587
    %v6796 = vunpack.c.h.b16 %v6587
    %v6797 = vunpack.c.l.b16 %v6588
    %v6798 = vunpack.c.h.b16 %v6588
    %v6799 = vunpack.c.l.b16 %v6589
    %v6800 = vunpack.c.h.b16 %v6589
    %v6801 = vunpack.c.l.b16 %v6590
    %v6802 = vunpack.c.h.b16 %v6590
    %v6803 = vunpack.c.l.b16 %v6591
    %v6804 = vunpack.c.h.b16 %v6591
    %v6805 = vunpack.c.l.b16 %v6592
    %v6806 = vunpack.c.h.b16 %v6592
    %v6807 = vunpack.c.l.b16 %v6593
    %v6808 = vunpack.c.h.b16 %v6593
    %v6809 = vunpack.c.l.b16 %v6594
    %v6810 = vunpack.c.h.b16 %v6594
    %v6811 = vunpack.c.l.b16 %v6595
    %v6812 = vunpack.c.h.b16 %v6595
    %v6813 = vunpack.c.l.b16 %v6596
    %v6814 = vunpack.c.h.b16 %v6596
    %v6815 = vunpack.c.l.b16 %v6597
    %v6816 = vunpack.c.h.b16 %v6597
    %v6817 = vunpack.c.l.b16 %v6598
    %v6818 = vunpack.c.h.b16 %v6598
    %v6819 = vunpack.c.l.b16 %v6599
    %v6820 = vunpack.c.h.b16 %v6599
    %v6821 = vunpack.c.l.b16 %v6600
    %v6822 = vunpack.c.h.b16 %v6600
    %v6823 = vunpack.c.l.b16 %v6601
    %v6824 = vunpack.c.h.b16 %v6601
    %v6825 = vunpack.c.l.b16 %v6602
    %v6826 = vunpack.c.h.b16 %v6602
    %v6827 = vunpack.c.l.b16 %v6603
    %v6828 = vunpack.c.h.b16 %v6603
    %v6829 = vunpack.c.l.b16 %v6604
    %v6830 = vunpack.c.h.b16 %v6604
    %v6831 = vunpack.c.l.b16 %v6605
    %v6832 = vunpack.c.h.b16 %v6605
    %v6833 = vunpack.c.l.b16 %v6606
    %v6834 = vunpack.c.h.b16 %v6606
    %v6835 = vunpack.c.l.b16 %v6607
    %v6836 = vunpack.c.h.b16 %v6607
    %v6837 = vunpack.c.l.b16 %v6608
    %v6838 = vunpack.c.h.b16 %v6608
    %v6839 = vunpack.c.l.b16 %v6609
    %v6840 = vunpack.c.h.b16 %v6609
    %v6841 = vunpack.c.l.b16 %v6610
    %v6842 = vunpack.c.h.b16 %v6610
    %v6843 = vunpack.c.l.b16 %v6611
    %v6844 = vunpack.c.h.b16 %v6611
    %v6845 = vunpack.c.l.b16 %v6612
    %v6846 = vunpack.c.h.b16 %v6612
    %v6847 = vunpack.c.l.b16 %v6613
    %v6848 = vunpack.c.h.b16 %v6613
    %v6849 = vunpack.c.l.b16 %v6614
    %v6850 = vunpack.c.h.b16 %v6614
    %v6851 = vunpack.c.l.b16 %v6615
    %v6852 = vunpack.c.h.b16 %v6615
    %v6853 = vunpack.c.l.b16 %v6616
    %v6854 = vunpack.c.h.b16 %v6616
    %v6855 = vunpack.c.l.b16 %v6617
    %v6856 = vunpack.c.h.b16 %v6617
    %v6857 = vunpack.c.l.b16 %v6618
    %v6858 = vunpack.c.h.b16 %v6618
    %v6859 = vunpack.c.l.b16 %v6619
    %v6860 = vunpack.c.h.b16 %v6619
    %v6861 = vunpack.c.l.b16 %v6620
    %v6862 = vunpack.c.h.b16 %v6620
    %v6863 = vunpack.c.l.b16 %v6621
    %v6864 = vunpack.c.h.b16 %v6621
    %v6865 = vunpack.c.l.b16 %v6622
    %v6866 = vunpack.c.h.b16 %v6622
    %v6867 = vunpack.c.l.b16 %v6623
    %v6868 = vunpack.c.h.b16 %v6623
    %v6869 = vunpack.c.l.b16 %v6624
    %v6870 = vunpack.c.h.b16 %v6624
    %v6871 = vunpack.c.l.b16 %v6625
    %v6872 = vunpack.c.h.b16 %v6625
    %v6873 = vunpack.c.l.b16 %v6626
    %v6874 = vunpack.c.h.b16 %v6626
    %v6875 = vunpack.c.l.b16 %v6627
    %v6876 = vunpack.c.h.b16 %v6627
    %v6877 = vunpack.c.l.b16 %v6628
    %v6878 = vunpack.c.h.b16 %v6628
    %v6879 = vunpack.c.l.b16 %v6629
    %v6880 = vunpack.c.h.b16 %v6629
    %v6881 = vunpack.c.l.b16 %v6630
    %v6882 = vunpack.c.h.b16 %v6630
    %v6883 = vunpack.c.l.b16 %v6631
    %v6884 = vunpack.c.h.b16 %v6631
    %v6885 = vunpack.c.l.b16 %v6632
    %v6886 = vunpack.c.h.b16 %v6632
    %v6887 = vunpack.c.l.b16 %v6633
    %v6888 = vunpack.c.h.b16 %v6633
    %v6889 = vunpack.c.l.b16 %v6634
    %v6890 = vunpack.c.h.b16 %v6634
    %v6891 = vunpack.c.l.b16 %v6635
    %v6892 = vunpack.c.h.b16 %v6635
    %v6893 = vunpack.c.l.b16 %v6636
    %v6894 = vunpack.c.h.b16 %v6636
    %v6895 = vunpack.c.l.b16 %v6637
    %v6896 = vunpack.c.h.b16 %v6637
    %v6897 = vunpack.c.l.b16 %v6638
    %v6898 = vunpack.c.h.b16 %v6638
    %v6899 = vunpack.c.l.b16 %v6639
    %v6900 = vunpack.c.h.b16 %v6639
    %v6901 = vunpack.c.l.b16 %v6640
    %v6902 = vunpack.c.h.b16 %v6640
    %v6903 = vunpack.c.l.b16 %v6641
    %v6904 = vunpack.c.h.b16 %v6641
    %v6905 = vunpack.c.l.b16 %v6642
    %v6906 = vunpack.c.h.b16 %v6642
    %v6907 = vpack.c.b16 %v6783, %v6779
    %v6908 = vpack.c.b16 %v6784, %v6780
    %v6909 = vpack.c.b16 %v6785, %v6781
    %v6910 = vpack.c.b16 %v6786, %v6782
    %v6911 = vpack.c.b16 %v6791, %v6787
    %v6912 = vpack.c.b16 %v6792, %v6788
    %v6913 = vpack.c.b16 %v6793, %v6789
    %v6914 = vpack.c.b16 %v6794, %v6790
    %v6915 = vpack.c.b16 %v6799, %v6795
    %v6916 = vpack.c.b16 %v6800, %v6796
    %v6917 = vpack.c.b16 %v6801, %v6797
    %v6918 = vpack.c.b16 %v6802, %v6798
    %v6919 = vpack.c.b16 %v6807, %v6803
    %v6920 = vpack.c.b16 %v6808, %v6804
    %v6921 = vpack.c.b16 %v6809, %v6805
    %v6922 = vpack.c.b16 %v6810, %v6806
    %v6923 = vpack.c.b16 %v6815, %v6811
    %v6924 = vpack.c.b16 %v6816, %v6812
    %v6925 = vpack.c.b16 %v6817, %v6813
    %v6926 = vpack.c.b16 %v6818, %v6814
    %v6927 = vpack.c.b16 %v6823, %v6819
    %v6928 = vpack.c.b16 %v6824, %v6820
    %v6929 = vpack.c.b16 %v6825, %v6821
    %v6930 = vpack.c.b16 %v6826, %v6822
    %v6931 = vpack.c.b16 %v6831, %v6827
    %v6932 = vpack.c.b16 %v6832, %v6828
    %v6933 = vpack.c.b16 %v6833, %v6829
    %v6934 = vpack.c.b16 %v6834, %v6830
    %v6935 = vpack.c.b16 %v6839, %v6835
    %v6936 = vpack.c.b16 %v6840, %v6836
    %v6937 = vpack.c.b16 %v6841, %v6837
    %v6938 = vpack.c.b16 %v6842, %v6838
    %v6939 = vpack.c.b16 %v6847, %v6843
    %v6940 = vpack.c.b16 %v6848, %v6844
    %v6941 = vpack.c.b16 %v6849, %v6845
    %v6942 = vpack.c.b16 %v6850, %v6846
    %v6943 = vpack.c.b16 %v6855, %v6851
    %v6944 = vpack.c.b16 %v6856, %v6852
    %v6945 = vpack.c.b16 %v6857, %v6853
    %v6946 = vpack.c.b16 %v6858, %v6854
    %v6947 = vpack.c.b16 %v6863, %v6859
    %v6948 = vpack.c.b16 %v6864, %v6860
    %v6949 = vpack.c.b16 %v6865, %v6861
    %v6950 = vpack.c.b16 %v6866, %v6862
    %v6951 = vpack.c.b16 %v6871, %v6867
    %v6952 = vpack.c.b16 %v6872, %v6868
    %v6953 = vpack.c.b16 %v6873, %v6869
    %v6954 = vpack.c.b16 %v6874, %v6870
    %v6955 = vpack.c.b16 %v6879, %v6875
    %v6956 = vpack.c.b16 %v6880, %v6876
    %v6957 = vpack.c.b16 %v6881, %v6877
    %v6958 = vpack.c.b16 %v6882, %v6878
    %v6959 = vpack.c.b16 %v6887, %v6883
    %v6960 = vpack.c.b16 %v6888, %v6884
    %v6961 = vpack.c.b16 %v6889, %v6885
    %v6962 = vpack.c.b16 %v6890, %v6886
    %v6963 = vpack.c.b16 %v6895, %v6891
    %v6964 = vpack.c.b16 %v6896, %v6892
    %v6965 = vpack.c.b16 %v6897, %v6893
    %v6966 = vpack.c.b16 %v6898, %v6894
    %v6967 = vpack.c.b16 %v6903, %v6899
    %v6968 = vpack.c.b16 %v6904, %v6900
    %v6969 = vpack.c.b16 %v6905, %v6901
    %v6970 = vpack.c.b16 %v6906, %v6902
    %7035 = vmatprep.subr.bf16.mxu0 %v6908
    %7036 = vmatpush1.bf16.msra.mxu0 %v6907
    %7037 = vmatprep.subr.bf16.mxu0 %v6912
    %7038 = vmatpush1.bf16.msra.mxu0 %v6911
    %7039 = vmatprep.subr.bf16.mxu0 %v6916
    %7040 = vmatpush1.bf16.msra.mxu0 %v6915
    %7041 = vmatprep.subr.bf16.mxu0 %v6920
    %7042 = vmatpush1.bf16.msra.mxu0 %v6919
    %7043 = vmatprep.subr.bf16.mxu0 %v6924
    %7044 = vmatpush1.bf16.msra.mxu0 %v6923
    %7045 = vmatprep.subr.bf16.mxu0 %v6928
    %7046 = vmatpush1.bf16.msra.mxu0 %v6927
    %7047 = vmatprep.subr.bf16.mxu0 %v6932
    %7048 = vmatpush1.bf16.msra.mxu0 %v6931
    %7049 = vmatprep.subr.bf16.mxu0 %v6936
    %7050 = vmatpush1.bf16.msra.mxu0 %v6935
    %7051 = vmatprep.subr.bf16.mxu0 %v6940
    %7052 = vmatpush1.bf16.msra.mxu0 %v6939
    %7053 = vmatprep.subr.bf16.mxu0 %v6944
    %7054 = vmatpush1.bf16.msra.mxu0 %v6943
    %7055 = vmatprep.subr.bf16.mxu0 %v6948
    %7056 = vmatpush1.bf16.msra.mxu0 %v6947
    %7057 = vmatprep.subr.bf16.mxu0 %v6952
    %7058 = vmatpush1.bf16.msra.mxu0 %v6951
    %7059 = vmatprep.subr.bf16.mxu0 %v6956
    %7060 = vmatpush1.bf16.msra.mxu0 %v6955
    %7061 = vmatprep.subr.bf16.mxu0 %v6960
    %7062 = vmatpush1.bf16.msra.mxu0 %v6959
    %7063 = vmatprep.subr.bf16.mxu0 %v6964
    %7064 = vmatpush1.bf16.msra.mxu0 %v6963
    %7065 = vmatprep.subr.bf16.mxu0 %v6968
    %7066 = vmatpush1.bf16.msra.mxu0 %v6967
    %7067 = vmatprep.mubr.bf16.mxu0 %v6650
    %7068 = vmatmul.mubr.bf16.gmra.mrb[0].mxu0 %v6647
    %v7069 = vpop.f32.mrb[0].mxu0
    %v7070 = vadd.f32 0.0, %v7069
    %v7071 = vpop.f32.mrb[0].mxu0
    %v7072 = vadd.f32 0.0, %v7071
    %v7073 = vpop.f32.mrb[0].mxu0
    %v7074 = vadd.f32 0.0, %v7073
    %v7075 = vpop.f32.mrb[0].mxu0
    %v7076 = vadd.f32 0.0, %v7075
    %7077 = vmatprep.mubr.bf16.mxu0 %v6654
    %7078 = vmatmul.mubr.bf16.gmra.mrb[0].mxu0 %v6652
    %v7079 = vpop.f32.mrb[0].mxu0
    %v7080 = vadd.f32 0.0, %v7079
    %v7081 = vpop.f32.mrb[0].mxu0
    %v7082 = vadd.f32 0.0, %v7081
    %v7083 = vpop.f32.mrb[0].mxu0
    %v7084 = vadd.f32 0.0, %v7083
    %v7085 = vpop.f32.mrb[0].mxu0
    %v7086 = vadd.f32 0.0, %v7085
    %7087 = vmatprep.mubr.bf16.mxu0 %v6658
    %7088 = vmatmul.mubr.bf16.gmra.mrb[0].mxu0 %v6656
    %v7089 = vpop.f32.mrb[0].mxu0
    %v7090 = vadd.f32 0.0, %v7089
    %v7091 = vpop.f32.mrb[0].mxu0
    %v7092 = vadd.f32 0.0, %v7091
    %v7093 = vpop.f32.mrb[0].mxu0
    %v7094 = vadd.f32 0.0, %v7093
    %v7095 = vpop.f32.mrb[0].mxu0
    %v7096 = vadd.f32 0.0, %v7095
    %7097 = vmatprep.mubr.bf16.mxu0 %v6662
    %7098 = vmatmul.mubr.bf16.gmra.mrb[0].mxu0 %v6660
    %v7099 = vpop.f32.mrb[0].mxu0
    %v7100 = vadd.f32 0.0, %v7099
    %v7101 = vpop.f32.mrb[0].mxu0
    %v7102 = vadd.f32 0.0, %v7101
    %v7103 = vpop.f32.mrb[0].mxu0
    %v7104 = vadd.f32 0.0, %v7103
    %v7105 = vpop.f32.mrb[0].mxu0
    %v7106 = vadd.f32 0.0, %v7105
    %7107 = vmatprep.mubr.bf16.mxu0 %v6666
    %7108 = vmatmul.mubr.bf16.gmra.mrb[0].mxu0 %v6664
    %v7109 = vpop.f32.mrb[0].mxu0
    %v7110 = vadd.f32 0.0, %v7109
    %v7111 = vpop.f32.mrb[0].mxu0
    %v7112 = vadd.f32 0.0, %v7111
    %v7113 = vpop.f32.mrb[0].mxu0
    %v7114 = vadd.f32 0.0, %v7113
    %v7115 = vpop.f32.mrb[0].mxu0
    %v7116 = vadd.f32 0.0, %v7115
    %7117 = vmatprep.mubr.bf16.mxu0 %v6670
    %7118 = vmatmul.mubr.bf16.gmra.mrb[0].mxu0 %v6668
    %v7119 = vpop.f32.mrb[0].mxu0
    %v7120 = vadd.f32 0.0, %v7119
    %v7121 = vpop.f32.mrb[0].mxu0
    %v7122 = vadd.f32 0.0, %v7121
    %v7123 = vpop.f32.mrb[0].mxu0
    %v7124 = vadd.f32 0.0, %v7123
    %v7125 = vpop.f32.mrb[0].mxu0
    %v7126 = vadd.f32 0.0, %v7125
    %7127 = vmatprep.mubr.bf16.mxu0 %v6674
    %7128 = vmatmul.mubr.bf16.gmra.mrb[0].mxu0 %v6672
    %v7129 = vpop.f32.mrb[0].mxu0
    %v7130 = vadd.f32 0.0, %v7129
    %v7131 = vpop.f32.mrb[0].mxu0
    %v7132 = vadd.f32 0.0, %v7131
    %v7133 = vpop.f32.mrb[0].mxu0
    %v7134 = vadd.f32 0.0, %v7133
    %v7135 = vpop.f32.mrb[0].mxu0
    %v7136 = vadd.f32 0.0, %v7135
    %7137 = vmatprep.mubr.bf16.mxu0 %v6678
    %7138 = vmatmul.mubr.bf16.gmra.mrb[0].mxu0 %v6676
    %v7139 = vpop.f32.mrb[0].mxu0
    %v7140 = vadd.f32 0.0, %v7139
    %v7141 = vpop.f32.mrb[0].mxu0
    %v7142 = vadd.f32 0.0, %v7141
    %v7143 = vpop.f32.mrb[0].mxu0
    %v7144 = vadd.f32 0.0, %v7143
    %v7145 = vpop.f32.mrb[0].mxu0
    %v7146 = vadd.f32 0.0, %v7145
    %7147 = vmatprep.mubr.bf16.mxu0 %v6682
    %7148 = vmatmul.mubr.bf16.gmra.mrb[0].mxu0 %v6680
    %v7149 = vpop.f32.mrb[0].mxu0
    %v7150 = vadd.f32 0.0, %v7149
    %v7151 = vpop.f32.mrb[0].mxu0
    %v7152 = vadd.f32 0.0, %v7151
    %v7153 = vpop.f32.mrb[0].mxu0
    %v7154 = vadd.f32 0.0, %v7153
    %v7155 = vpop.f32.mrb[0].mxu0
    %v7156 = vadd.f32 0.0, %v7155
    %7157 = vmatprep.mubr.bf16.mxu0 %v6686
    %7158 = vmatmul.mubr.bf16.gmra.mrb[0].mxu0 %v6684
    %v7159 = vpop.f32.mrb[0].mxu0
    %v7160 = vadd.f32 0.0, %v7159
    %v7161 = vpop.f32.mrb[0].mxu0
    %v7162 = vadd.f32 0.0, %v7161
    %v7163 = vpop.f32.mrb[0].mxu0
    %v7164 = vadd.f32 0.0, %v7163
    %v7165 = vpop.f32.mrb[0].mxu0
    %v7166 = vadd.f32 0.0, %v7165
    %7167 = vmatprep.mubr.bf16.mxu0 %v6690
    %7168 = vmatmul.mubr.bf16.gmra.mrb[0].mxu0 %v6688
    %v7169 = vpop.f32.mrb[0].mxu0
    %v7170 = vadd.f32 0.0, %v7169
    %v7171 = vpop.f32.mrb[0].mxu0
    %v7172 = vadd.f32 0.0, %v7171
    %v7173 = vpop.f32.mrb[0].mxu0
    %v7174 = vadd.f32 0.0, %v7173
    %v7175 = vpop.f32.mrb[0].mxu0
    %v7176 = vadd.f32 0.0, %v7175
    %7177 = vmatprep.mubr.bf16.mxu0 %v6689
    %7178 = vmatmul.mubr.bf16.gmra.mrb[0].mxu0 %v6687
    %v7179 = vpop.f32.mrb[0].mxu0
    %v7180 = vadd.f32 0.0, %v7179
    %v7181 = vpop.f32.mrb[0].mxu0
    %v7182 = vadd.f32 0.0, %v7181
    %v7183 = vpop.f32.mrb[0].mxu0
    %v7184 = vadd.f32 0.0, %v7183
    %v7185 = vpop.f32.mrb[0].mxu0
    %v7186 = vadd.f32 0.0, %v7185
    %7187 = vdwg.mxu0
    %7188 = vmatprep.subr.bf16.mxu0 %v6910
    %7189 = vmatpush1.bf16.msra.mxu0 %v6909
    %7190 = vmatprep.subr.bf16.mxu0 %v6914
    %7191 = vmatpush1.bf16.msra.mxu0 %v6913
    %7192 = vmatprep.subr.bf16.mxu0 %v6918
    %7193 = vmatpush1.bf16.msra.mxu0 %v6917
    %7194 = vmatprep.subr.bf16.mxu0 %v6922
    %7195 = vmatpush1.bf16.msra.mxu0 %v6921
    %7196 = vmatprep.subr.bf16.mxu0 %v6926
    %7197 = vmatpush1.bf16.msra.mxu0 %v6925
    %7198 = vmatprep.subr.bf16.mxu0 %v6930
    %7199 = vmatpush1.bf16.msra.mxu0 %v6929
    %7200 = vmatprep.subr.bf16.mxu0 %v6934
    %7201 = vmatpush1.bf16.msra.mxu0 %v6933
    %7202 = vmatprep.subr.bf16.mxu0 %v6938
    %7203 = vmatpush1.bf16.msra.mxu0 %v6937
    %7204 = vmatprep.subr.bf16.mxu0 %v6942
    %7205 = vmatpush1.bf16.msra.mxu0 %v6941
    %7206 = vmatprep.subr.bf16.mxu0 %v6946
    %7207 = vmatpush1.bf16.msra.mxu0 %v6945
    %7208 = vmatprep.subr.bf16.mxu0 %v6950
    %7209 = vmatpush1.bf16.msra.mxu0 %v6949
    %7210 = vmatprep.subr.bf16.mxu0 %v6954
    %7211 = vmatpush1.bf16.msra.mxu0 %v6953
    %7212 = vmatprep.subr.bf16.mxu0 %v6958
    %7213 = vmatpush1.bf16.msra.mxu0 %v6957
    %7214 = vmatprep.subr.bf16.mxu0 %v6962
    %7215 = vmatpush1.bf16.msra.mxu0 %v6961
    %7216 = vmatprep.subr.bf16.mxu0 %v6966
    %7217 = vmatpush1.bf16.msra.mxu0 %v6965
    %7218 = vmatprep.subr.bf16.mxu0 %v6970
    %7219 = vmatpush1.bf16.msra.mxu0 %v6969
    %7220 = vmatprep.mubr.bf16.mxu0 %v6650
    %7221 = vmatmul.mubr.bf16.gmra.mrb[0].mxu0 %v6647
    %v7222 = vpop.f32.mrb[0].mxu0
    %v7223 = vadd.f32 0.0, %v7222
    %v7224 = vpop.f32.mrb[0].mxu0
    %v7225 = vadd.f32 0.0, %v7224
    %v7226 = vpop.f32.mrb[0].mxu0
    %v7227 = vadd.f32 0.0, %v7226
    %v7228 = vpop.f32.mrb[0].mxu0
    %v7229 = vadd.f32 0.0, %v7228
    %7230 = vmatprep.mubr.bf16.mxu0 %v6654
    %7231 = vmatmul.mubr.bf16.gmra.mrb[0].mxu0 %v6652
    %v7232 = vpop.f32.mrb[0].mxu0
    %v7233 = vadd.f32 0.0, %v7232
    %v7234 = vpop.f32.mrb[0].mxu0
    %v7235 = vadd.f32 0.0, %v7234
    %v7236 = vpop.f32.mrb[0].mxu0
    %v7237 = vadd.f32 0.0, %v7236
    %v7238 = vpop.f32.mrb[0].mxu0
    %v7239 = vadd.f32 0.0, %v7238
    %7240 = vmatprep.mubr.bf16.mxu0 %v6658
    %7241 = vmatmul.mubr.bf16.gmra.mrb[0].mxu0 %v6656
    %v7242 = vpop.f32.mrb[0].mxu0
    %v7243 = vadd.f32 0.0, %v7242
    %v7244 = vpop.f32.mrb[0].mxu0
    %v7245 = vadd.f32 0.0, %v7244
    %v7246 = vpop.f32.mrb[0].mxu0
    %v7247 = vadd.f32 0.0, %v7246
    %v7248 = vpop.f32.mrb[0].mxu0
    %v7249 = vadd.f32 0.0, %v7248
    %7250 = vmatprep.mubr.bf16.mxu0 %v6662
    %7251 = vmatmul.mubr.bf16.gmra.mrb[0].mxu0 %v6660
    %v7252 = vpop.f32.mrb[0].mxu0
    %v7253 = vadd.f32 0.0, %v7252
    %v7254 = vpop.f32.mrb[0].mxu0
    %v7255 = vadd.f32 0.0, %v7254
    %v7256 = vpop.f32.mrb[0].mxu0
    %v7257 = vadd.f32 0.0, %v7256
    %v7258 = vpop.f32.mrb[0].mxu0
    %v7259 = vadd.f32 0.0, %v7258
    %7260 = vmatprep.mubr.bf16.mxu0 %v6666
    %7261 = vmatmul.mubr.bf16.gmra.mrb[0].mxu0 %v6664
    %v7262 = vpop.f32.mrb[0].mxu0
    %v7263 = vadd.f32 0.0, %v7262
    %v7264 = vpop.f32.mrb[0].mxu0
    %v7265 = vadd.f32 0.0, %v7264
    %v7266 = vpop.f32.mrb[0].mxu0
    %v7267 = vadd.f32 0.0, %v7266
    %v7268 = vpop.f32.mrb[0].mxu0
    %v7269 = vadd.f32 0.0, %v7268
    %7270 = vmatprep.mubr.bf16.mxu0 %v6670
    %7271 = vmatmul.mubr.bf16.gmra.mrb[0].mxu0 %v6668
    %v7272 = vpop.f32.mrb[0].mxu0
    %v7273 = vadd.f32 0.0, %v7272
    %v7274 = vpop.f32.mrb[0].mxu0
    %v7275 = vadd.f32 0.0, %v7274
    %v7276 = vpop.f32.mrb[0].mxu0
    %v7277 = vadd.f32 0.0, %v7276
    %v7278 = vpop.f32.mrb[0].mxu0
    %v7279 = vadd.f32 0.0, %v7278
    %7280 = vmatprep.mubr.bf16.mxu0 %v6674
    %7281 = vmatmul.mubr.bf16.gmra.mrb[0].mxu0 %v6672
    %v7282 = vpop.f32.mrb[0].mxu0
    %v7283 = vadd.f32 0.0, %v7282
    %v7284 = vpop.f32.mrb[0].mxu0
    %v7285 = vadd.f32 0.0, %v7284
    %v7286 = vpop.f32.mrb[0].mxu0
    %v7287 = vadd.f32 0.0, %v7286
    %v7288 = vpop.f32.mrb[0].mxu0
    %v7289 = vadd.f32 0.0, %v7288
    %7290 = vmatprep.mubr.bf16.mxu0 %v6678
    %7291 = vmatmul.mubr.bf16.gmra.mrb[0].mxu0 %v6676
    %v7292 = vpop.f32.mrb[0].mxu0
    %v7293 = vadd.f32 0.0, %v7292
    %v7294 = vpop.f32.mrb[0].mxu0
    %v7295 = vadd.f32 0.0, %v7294
    %v7296 = vpop.f32.mrb[0].mxu0
    %v7297 = vadd.f32 0.0, %v7296
    %v7298 = vpop.f32.mrb[0].mxu0
    %v7299 = vadd.f32 0.0, %v7298
    %7300 = vmatprep.mubr.bf16.mxu0 %v6682
    %7301 = vmatmul.mubr.bf16.gmra.mrb[0].mxu0 %v6680
    %v7302 = vpop.f32.mrb[0].mxu0
    %v7303 = vadd.f32 0.0, %v7302
    %v7304 = vpop.f32.mrb[0].mxu0
    %v7305 = vadd.f32 0.0, %v7304
    %v7306 = vpop.f32.mrb[0].mxu0
    %v7307 = vadd.f32 0.0, %v7306
    %v7308 = vpop.f32.mrb[0].mxu0
    %v7309 = vadd.f32 0.0, %v7308
    %7310 = vmatprep.mubr.bf16.mxu0 %v6686
    %7311 = vmatmul.mubr.bf16.gmra.mrb[0].mxu0 %v6684
    %v7312 = vpop.f32.mrb[0].mxu0
    %v7313 = vadd.f32 0.0, %v7312
    %v7314 = vpop.f32.mrb[0].mxu0
    %v7315 = vadd.f32 0.0, %v7314
    %v7316 = vpop.f32.mrb[0].mxu0
    %v7317 = vadd.f32 0.0, %v7316
    %v7318 = vpop.f32.mrb[0].mxu0
    %v7319 = vadd.f32 0.0, %v7318
    %7320 = vmatprep.mubr.bf16.mxu0 %v6690
    %7321 = vmatmul.mubr.bf16.gmra.mrb[0].mxu0 %v6688
    %v7322 = vpop.f32.mrb[0].mxu0
    %v7323 = vadd.f32 0.0, %v7322
    %v7324 = vpop.f32.mrb[0].mxu0
    %v7325 = vadd.f32 0.0, %v7324
    %v7326 = vpop.f32.mrb[0].mxu0
    %v7327 = vadd.f32 0.0, %v7326
    %v7328 = vpop.f32.mrb[0].mxu0
    %v7329 = vadd.f32 0.0, %v7328
    %7330 = vmatprep.mubr.bf16.mxu0 %v6689
    %7331 = vmatmul.mubr.bf16.gmra.mrb[0].mxu0 %v6687
    %v7332 = vpop.f32.mrb[0].mxu0
    %v7333 = vadd.f32 0.0, %v7332
    %v7334 = vpop.f32.mrb[0].mxu0
    %v7335 = vadd.f32 0.0, %v7334
    %v7336 = vpop.f32.mrb[0].mxu0
    %v7337 = vadd.f32 0.0, %v7336
    %v7338 = vpop.f32.mrb[0].mxu0
    %v7339 = vadd.f32 0.0, %v7338
    %7340 = vdwg.mxu0
    %v7341 = vadd.f32 %v6480, %v7070
    %v7342 = vadd.f32 %v6481, %v7072
    %v7343 = vadd.f32 %v6482, %v7223
    %v7344 = vadd.f32 %v6483, %v7225
    %v7345 = vadd.f32 %v6484, %v7074
    %v7346 = vadd.f32 %v6485, %v7076
    %v7347 = vadd.f32 %v6486, %v7227
    %v7348 = vadd.f32 %v6487, %v7229
    %v7349 = vadd.f32 %v6488, %v7080
    %v7350 = vadd.f32 %v6489, %v7082
    %v7351 = vadd.f32 %v6490, %v7233
    %v7352 = vadd.f32 %v6491, %v7235
    %v7353 = vadd.f32 %v6492, %v7084
    %v7354 = vadd.f32 %v6493, %v7086
    %v7355 = vadd.f32 %v6494, %v7237
    %v7356 = vadd.f32 %v6495, %v7239
    %v7357 = vadd.f32 %v6496, %v7090
    %v7358 = vadd.f32 %v6497, %v7092
    %v7359 = vadd.f32 %v6498, %v7243
    %v7360 = vadd.f32 %v6499, %v7245
    %v7361 = vadd.f32 %v6500, %v7094
    %v7362 = vadd.f32 %v6501, %v7096
    %v7363 = vadd.f32 %v6502, %v7247
    %v7364 = vadd.f32 %v6503, %v7249
    %v7365 = vadd.f32 %v6504, %v7100
    %v7366 = vadd.f32 %v6505, %v7102
    %v7367 = vadd.f32 %v6506, %v7253
    %v7368 = vadd.f32 %v6507, %v7255
    %v7369 = vadd.f32 %v6508, %v7104
    %v7370 = vadd.f32 %v6509, %v7106
    %v7371 = vadd.f32 %v6510, %v7257
    %v7372 = vadd.f32 %v6511, %v7259
    %v7373 = vadd.f32 %v6512, %v7110
    %v7374 = vadd.f32 %v6513, %v7112
    %v7375 = vadd.f32 %v6514, %v7263
    %v7376 = vadd.f32 %v6515, %v7265
    %v7377 = vadd.f32 %v6516, %v7114
    %v7378 = vadd.f32 %v6517, %v7116
    %v7379 = vadd.f32 %v6518, %v7267
    %v7380 = vadd.f32 %v6519, %v7269
    %v7381 = vadd.f32 %v6520, %v7120
    %v7382 = vadd.f32 %v6521, %v7122
    %v7383 = vadd.f32 %v6522, %v7273
    %v7384 = vadd.f32 %v6523, %v7275
    %v7385 = vadd.f32 %v6524, %v7124
    %v7386 = vadd.f32 %v6525, %v7126
    %v7387 = vadd.f32 %v6526, %v7277
    %v7388 = vadd.f32 %v6527, %v7279
    %v7389 = vadd.f32 %v6528, %v7130
    %v7390 = vadd.f32 %v6529, %v7132
    %v7391 = vadd.f32 %v6530, %v7283
    %v7392 = vadd.f32 %v6531, %v7285
    %v7393 = vadd.f32 %v6532, %v7134
    %v7394 = vadd.f32 %v6533, %v7136
    %v7395 = vadd.f32 %v6534, %v7287
    %v7396 = vadd.f32 %v6535, %v7289
    %v7397 = vadd.f32 %v6536, %v7140
    %v7398 = vadd.f32 %v6537, %v7142
    %v7399 = vadd.f32 %v6538, %v7293
    %v7400 = vadd.f32 %v6539, %v7295
    %v7401 = vadd.f32 %v6540, %v7144
    %v7402 = vadd.f32 %v6541, %v7146
    %v7403 = vadd.f32 %v6542, %v7297
    %v7404 = vadd.f32 %v6543, %v7299
    %v7405 = vadd.f32 %v6544, %v7150
    %v7406 = vadd.f32 %v6545, %v7152
    %v7407 = vadd.f32 %v6546, %v7303
    %v7408 = vadd.f32 %v6547, %v7305
    %v7409 = vadd.f32 %v6548, %v7154
    %v7410 = vadd.f32 %v6549, %v7156
    %v7411 = vadd.f32 %v6550, %v7307
    %v7412 = vadd.f32 %v6551, %v7309
    %v7413 = vadd.f32 %v6552, %v7160
    %v7414 = vadd.f32 %v6553, %v7162
    %v7415 = vadd.f32 %v6554, %v7313
    %v7416 = vadd.f32 %v6555, %v7315
    %v7417 = vadd.f32 %v6556, %v7164
    %v7418 = vadd.f32 %v6557, %v7166
    %v7419 = vadd.f32 %v6558, %v7317
    %v7420 = vadd.f32 %v6559, %v7319
    %v7421 = vadd.f32 %v6560, %v7170
    %v7422 = vadd.f32 %v6561, %v7172
    %v7423 = vadd.f32 %v6562, %v7323
    %v7424 = vadd.f32 %v6563, %v7325
    %v7425 = vadd.f32 %v6564, %v7174
    %v7426 = vadd.f32 %v6565, %v7176
    %v7427 = vadd.f32 %v6566, %v7327
    %v7428 = vadd.f32 %v6567, %v7329
    %v7429 = vadd.f32 %v6568, %v7180
    %v7430 = vadd.f32 %v6569, %v7182
    %v7431 = vadd.f32 %v6570, %v7333
    %v7432 = vadd.f32 %v6571, %v7335
    %v7433 = vadd.f32 %v6572, %v7184
    %v7434 = vadd.f32 %v6573, %v7186
    %v7435 = vadd.f32 %v6574, %v7337
    %v7436 = vadd.f32 %v6575, %v7339
    %s7437 = scalar_lea.vmem %s6, 3584
    %v7438 = vld [vmem:[%s7437] sm:$0xff]
    %v7439 = vld [vmem:[%s7437 + $0x8] sm:$0xff]
    %v7440 = vld [vmem:[%s7437 + $0x10] sm:$0xff]
    %v7441 = vld [vmem:[%s7437 + $0x18] sm:$0xff]
    %v7442 = vld [vmem:[%s7437 + $0x20] sm:$0xff]
    %v7443 = vld [vmem:[%s7437 + $0x28] sm:$0xff]
    %v7444 = vld [vmem:[%s7437 + $0x30] sm:$0xff]
    %v7445 = vld [vmem:[%s7437 + $0x38] sm:$0xff]
    %v7446 = vld [vmem:[%s7437 + $0x40] sm:$0xff]
    %v7447 = vld [vmem:[%s7437 + $0x48] sm:$0xff]
    %v7448 = vld [vmem:[%s7437 + $0x50] sm:$0xff]
    %v7449 = vld [vmem:[%s7437 + $0x58] sm:$0xff]
    %v7450 = vld [vmem:[%s7437 + $0x60] sm:$0xff]
    %v7451 = vld [vmem:[%s7437 + $0x68] sm:$0xff]
    %v7452 = vld [vmem:[%s7437 + $0x70] sm:$0xff]
    %v7453 = vld [vmem:[%s7437 + $0x78] sm:$0xff]
    %v7454 = vld [vmem:[%s7437 + $0x80] sm:$0xff]
    %v7455 = vld [vmem:[%s7437 + $0x88] sm:$0xff]
    %v7456 = vld [vmem:[%s7437 + $0x90] sm:$0xff]
    %v7457 = vld [vmem:[%s7437 + $0x98] sm:$0xff]
    %v7458 = vld [vmem:[%s7437 + $0xa0] sm:$0xff]
    %v7459 = vld [vmem:[%s7437 + $0xa8] sm:$0xff]
    %v7460 = vld [vmem:[%s7437 + $0xb0] sm:$0xff]
    %v7461 = vld [vmem:[%s7437 + $0xb8] sm:$0xff]
    %v7462 = vld [vmem:[%s7437 + $0xc0] sm:$0xff]
    %v7463 = vld [vmem:[%s7437 + $0xc8] sm:$0xff]
    %v7464 = vld [vmem:[%s7437 + $0xd0] sm:$0xff]
    %v7465 = vld [vmem:[%s7437 + $0xd8] sm:$0xff]
    %v7466 = vld [vmem:[%s7437 + $0xe0] sm:$0xff]
    %v7467 = vld [vmem:[%s7437 + $0xe8] sm:$0xff]
    %v7468 = vld [vmem:[%s7437 + $0xf0] sm:$0xff]
    %v7469 = vld [vmem:[%s7437 + $0xf8] sm:$0xff]
    %v7470 = vld [vmem:[%s7437 + $0x100] sm:$0xff]
    %v7471 = vld [vmem:[%s7437 + $0x108] sm:$0xff]
    %v7472 = vld [vmem:[%s7437 + $0x110] sm:$0xff]
    %v7473 = vld [vmem:[%s7437 + $0x118] sm:$0xff]
    %v7474 = vld [vmem:[%s7437 + $0x120] sm:$0xff]
    %v7475 = vld [vmem:[%s7437 + $0x128] sm:$0xff]
    %v7476 = vld [vmem:[%s7437 + $0x130] sm:$0xff]
    %v7477 = vld [vmem:[%s7437 + $0x138] sm:$0xff]
    %v7478 = vld [vmem:[%s7437 + $0x140] sm:$0xff]
    %v7479 = vld [vmem:[%s7437 + $0x148] sm:$0xff]
    %v7480 = vld [vmem:[%s7437 + $0x150] sm:$0xff]
    %v7481 = vld [vmem:[%s7437 + $0x158] sm:$0xff]
    %v7482 = vld [vmem:[%s7437 + $0x160] sm:$0xff]
    %v7483 = vld [vmem:[%s7437 + $0x168] sm:$0xff]
    %v7484 = vld [vmem:[%s7437 + $0x170] sm:$0xff]
    %v7485 = vld [vmem:[%s7437 + $0x178] sm:$0xff]
    %v7486 = vld [vmem:[%s7437 + $0x180] sm:$0xff]
    %v7487 = vld [vmem:[%s7437 + $0x188] sm:$0xff]
    %v7488 = vld [vmem:[%s7437 + $0x190] sm:$0xff]
    %v7489 = vld [vmem:[%s7437 + $0x198] sm:$0xff]
    %v7490 = vld [vmem:[%s7437 + $0x1a0] sm:$0xff]
    %v7491 = vld [vmem:[%s7437 + $0x1a8] sm:$0xff]
    %v7492 = vld [vmem:[%s7437 + $0x1b0] sm:$0xff]
    %v7493 = vld [vmem:[%s7437 + $0x1b8] sm:$0xff]
    %v7494 = vld [vmem:[%s7437 + $0x1c0] sm:$0xff]
    %v7495 = vld [vmem:[%s7437 + $0x1c8] sm:$0xff]
    %v7496 = vld [vmem:[%s7437 + $0x1d0] sm:$0xff]
    %v7497 = vld [vmem:[%s7437 + $0x1d8] sm:$0xff]
    %v7498 = vld [vmem:[%s7437 + $0x1e0] sm:$0xff]
    %v7499 = vld [vmem:[%s7437 + $0x1e8] sm:$0xff]
    %v7500 = vld [vmem:[%s7437 + $0x1f0] sm:$0xff]
    %v7501 = vld [vmem:[%s7437 + $0x1f8] sm:$0xff]
    %vm7502 = vsmask.f32 5376
    %v7503 = vrot.slane %v1463, 2
    %v7504 = vrot.slane %v1447, 3
    %v7505 = vor.u32 %v7503, %v7504
    %v7506 = vrot.slane %v1479, 2
    %v7507 = vrot.slane %v1467, 3
    %v7508 = vor.u32 %v7506, %v7507
    %v7509 = vsel %vm7502, %v7505, %v7508
    %v7510 = vrot.slane %v1471, 2
    %v7511 = vrot.slane %v1459, 3
    %v7512 = vor.u32 %v7510, %v7511
    %v7513 = vrot.slane %v1487, 2
    %v7514 = vrot.slane %v1475, 3
    %v7515 = vor.u32 %v7513, %v7514
    %v7516 = vsel %vm7502, %v7512, %v7515
    %v7517 = vrot.slane %v1495, 2
    %v7518 = vrot.slane %v1483, 3
    %v7519 = vor.u32 %v7517, %v7518
    %v7520 = vsel %vm7502, %v7508, %v7519
    %v7521 = vrot.slane %v1503, 2
    %v7522 = vrot.slane %v1491, 3
    %v7523 = vor.u32 %v7521, %v7522
    %v7524 = vsel %vm7502, %v7515, %v7523
    %v7525 = vrot.slane %v1511, 2
    %v7526 = vrot.slane %v1499, 3
    %v7527 = vor.u32 %v7525, %v7526
    %v7528 = vsel %vm7502, %v7519, %v7527
    %v7529 = vrot.slane %v1519, 2
    %v7530 = vrot.slane %v1507, 3
    %v7531 = vor.u32 %v7529, %v7530
    %v7532 = vsel %vm7502, %v7523, %v7531
    %v7533 = vrot.slane %v1527, 2
    %v7534 = vrot.slane %v1515, 3
    %v7535 = vor.u32 %v7533, %v7534
    %v7536 = vsel %vm7502, %v7527, %v7535
    %v7537 = vrot.slane %v1535, 2
    %v7538 = vrot.slane %v1523, 3
    %v7539 = vor.u32 %v7537, %v7538
    %v7540 = vsel %vm7502, %v7531, %v7539
    %v7541 = vrot.slane %v1543, 2
    %v7542 = vrot.slane %v1531, 3
    %v7543 = vor.u32 %v7541, %v7542
    %v7544 = vsel %vm7502, %v7535, %v7543
    %v7545 = vrot.slane %v1551, 2
    %v7546 = vrot.slane %v1539, 3
    %v7547 = vor.u32 %v7545, %v7546
    %v7548 = vsel %vm7502, %v7539, %v7547
    %v7549 = vrot.slane %v1559, 2
    %v7550 = vrot.slane %v1547, 3
    %v7551 = vor.u32 %v7549, %v7550
    %v7552 = vsel %vm7502, %v7543, %v7551
    %v7553 = vrot.slane %v1567, 2
    %v7554 = vrot.slane %v1555, 3
    %v7555 = vor.u32 %v7553, %v7554
    %v7556 = vsel %vm7502, %v7547, %v7555
    %v7557 = vrot.slane %v1575, 2
    %v7558 = vrot.slane %v1563, 3
    %v7559 = vor.u32 %v7557, %v7558
    %v7560 = vsel %vm7502, %v7551, %v7559
    %v7561 = vrot.slane %v1583, 2
    %v7562 = vrot.slane %v1571, 3
    %v7563 = vor.u32 %v7561, %v7562
    %v7564 = vsel %vm7502, %v7555, %v7563
    %v7565 = vrot.slane %v1591, 2
    %v7566 = vrot.slane %v1579, 3
    %v7567 = vor.u32 %v7565, %v7566
    %v7568 = vsel %vm7502, %v7559, %v7567
    %v7569 = vrot.slane %v1599, 2
    %v7570 = vrot.slane %v1587, 3
    %v7571 = vor.u32 %v7569, %v7570
    %v7572 = vsel %vm7502, %v7563, %v7571
    %v7573 = vrot.slane %v1607, 2
    %v7574 = vrot.slane %v1595, 3
    %v7575 = vor.u32 %v7573, %v7574
    %v7576 = vsel %vm7502, %v7567, %v7575
    %v7577 = vrot.slane %v1615, 2
    %v7578 = vrot.slane %v1603, 3
    %v7579 = vor.u32 %v7577, %v7578
    %v7580 = vsel %vm7502, %v7571, %v7579
    %v7581 = vrot.slane %v1623, 2
    %v7582 = vrot.slane %v1611, 3
    %v7583 = vor.u32 %v7581, %v7582
    %v7584 = vsel %vm7502, %v7575, %v7583
    %v7585 = vrot.slane %v1626, 2
    %v7586 = vrot.slane %v1619, 3
    %v7587 = vor.u32 %v7585, %v7586
    %v7588 = vsel %vm7502, %v7579, %v7587
    %v7590 = vshrl.u32 %v6576, 16
    %v7592 = vrot.slane %v7590, 2
    %v7593 = vshll.u32 %v6576, 16
    %v7595 = vrot.slane %v7593, 3
    %v7596 = vor.u32 %v7592, %v7595
    %v7597 = vsel %vm7502, %v7583, %v7596
    %v7599 = vshrl.u32 %v6577, 16
    %v7601 = vrot.slane %v7599, 2
    %v7602 = vshll.u32 %v6577, 16
    %v7604 = vrot.slane %v7602, 3
    %v7605 = vor.u32 %v7601, %v7604
    %v7606 = vsel %vm7502, %v7587, %v7605
    %v7695 = vunpack.c.l.b16 %v7438
    %v7696 = vunpack.c.h.b16 %v7438
    %v7697 = vunpack.c.l.b16 %v7439
    %v7698 = vunpack.c.h.b16 %v7439
    %v7699 = vunpack.c.l.b16 %v7440
    %v7700 = vunpack.c.h.b16 %v7440
    %v7701 = vunpack.c.l.b16 %v7441
    %v7702 = vunpack.c.h.b16 %v7441
    %v7703 = vunpack.c.l.b16 %v7442
    %v7704 = vunpack.c.h.b16 %v7442
    %v7705 = vunpack.c.l.b16 %v7443
    %v7706 = vunpack.c.h.b16 %v7443
    %v7707 = vunpack.c.l.b16 %v7444
    %v7708 = vunpack.c.h.b16 %v7444
    %v7709 = vunpack.c.l.b16 %v7445
    %v7710 = vunpack.c.h.b16 %v7445
    %v7711 = vunpack.c.l.b16 %v7446
    %v7712 = vunpack.c.h.b16 %v7446
    %v7713 = vunpack.c.l.b16 %v7447
    %v7714 = vunpack.c.h.b16 %v7447
    %v7715 = vunpack.c.l.b16 %v7448
    %v7716 = vunpack.c.h.b16 %v7448
    %v7717 = vunpack.c.l.b16 %v7449
    %v7718 = vunpack.c.h.b16 %v7449
    %v7719 = vunpack.c.l.b16 %v7450
    %v7720 = vunpack.c.h.b16 %v7450
    %v7721 = vunpack.c.l.b16 %v7451
    %v7722 = vunpack.c.h.b16 %v7451
    %v7723 = vunpack.c.l.b16 %v7452
    %v7724 = vunpack.c.h.b16 %v7452
    %v7725 = vunpack.c.l.b16 %v7453
    %v7726 = vunpack.c.h.b16 %v7453
    %v7727 = vunpack.c.l.b16 %v7454
    %v7728 = vunpack.c.h.b16 %v7454
    %v7729 = vunpack.c.l.b16 %v7455
    %v7730 = vunpack.c.h.b16 %v7455
    %v7731 = vunpack.c.l.b16 %v7456
    %v7732 = vunpack.c.h.b16 %v7456
    %v7733 = vunpack.c.l.b16 %v7457
    %v7734 = vunpack.c.h.b16 %v7457
    %v7735 = vunpack.c.l.b16 %v7458
    %v7736 = vunpack.c.h.b16 %v7458
    %v7737 = vunpack.c.l.b16 %v7459
    %v7738 = vunpack.c.h.b16 %v7459
    %v7739 = vunpack.c.l.b16 %v7460
    %v7740 = vunpack.c.h.b16 %v7460
    %v7741 = vunpack.c.l.b16 %v7461
    %v7742 = vunpack.c.h.b16 %v7461
    %v7743 = vunpack.c.l.b16 %v7462
    %v7744 = vunpack.c.h.b16 %v7462
    %v7745 = vunpack.c.l.b16 %v7463
    %v7746 = vunpack.c.h.b16 %v7463
    %v7747 = vunpack.c.l.b16 %v7464
    %v7748 = vunpack.c.h.b16 %v7464
    %v7749 = vunpack.c.l.b16 %v7465
    %v7750 = vunpack.c.h.b16 %v7465
    %v7751 = vunpack.c.l.b16 %v7466
    %v7752 = vunpack.c.h.b16 %v7466
    %v7753 = vunpack.c.l.b16 %v7467
    %v7754 = vunpack.c.h.b16 %v7467
    %v7755 = vunpack.c.l.b16 %v7468
    %v7756 = vunpack.c.h.b16 %v7468
    %v7757 = vunpack.c.l.b16 %v7469
    %v7758 = vunpack.c.h.b16 %v7469
    %v7759 = vunpack.c.l.b16 %v7470
    %v7760 = vunpack.c.h.b16 %v7470
    %v7761 = vunpack.c.l.b16 %v7471
    %v7762 = vunpack.c.h.b16 %v7471
    %v7763 = vunpack.c.l.b16 %v7472
    %v7764 = vunpack.c.h.b16 %v7472
    %v7765 = vunpack.c.l.b16 %v7473
    %v7766 = vunpack.c.h.b16 %v7473
    %v7767 = vunpack.c.l.b16 %v7474
    %v7768 = vunpack.c.h.b16 %v7474
    %v7769 = vunpack.c.l.b16 %v7475
    %v7770 = vunpack.c.h.b16 %v7475
    %v7771 = vunpack.c.l.b16 %v7476
    %v7772 = vunpack.c.h.b16 %v7476
    %v7773 = vunpack.c.l.b16 %v7477
    %v7774 = vunpack.c.h.b16 %v7477
    %v7775 = vunpack.c.l.b16 %v7478
    %v7776 = vunpack.c.h.b16 %v7478
    %v7777 = vunpack.c.l.b16 %v7479
    %v7778 = vunpack.c.h.b16 %v7479
    %v7779 = vunpack.c.l.b16 %v7480
    %v7780 = vunpack.c.h.b16 %v7480
    %v7781 = vunpack.c.l.b16 %v7481
    %v7782 = vunpack.c.h.b16 %v7481
    %v7783 = vunpack.c.l.b16 %v7482
    %v7784 = vunpack.c.h.b16 %v7482
    %v7785 = vunpack.c.l.b16 %v7483
    %v7786 = vunpack.c.h.b16 %v7483
    %v7787 = vunpack.c.l.b16 %v7484
    %v7788 = vunpack.c.h.b16 %v7484
    %v7789 = vunpack.c.l.b16 %v7485
    %v7790 = vunpack.c.h.b16 %v7485
    %v7791 = vunpack.c.l.b16 %v7486
    %v7792 = vunpack.c.h.b16 %v7486
    %v7793 = vunpack.c.l.b16 %v7487
    %v7794 = vunpack.c.h.b16 %v7487
    %v7795 = vunpack.c.l.b16 %v7488
    %v7796 = vunpack.c.h.b16 %v7488
    %v7797 = vunpack.c.l.b16 %v7489
    %v7798 = vunpack.c.h.b16 %v7489
    %v7799 = vunpack.c.l.b16 %v7490
    %v7800 = vunpack.c.h.b16 %v7490
    %v7801 = vunpack.c.l.b16 %v7491
    %v7802 = vunpack.c.h.b16 %v7491
    %v7803 = vunpack.c.l.b16 %v7492
    %v7804 = vunpack.c.h.b16 %v7492
    %v7805 = vunpack.c.l.b16 %v7493
    %v7806 = vunpack.c.h.b16 %v7493
    %v7807 = vunpack.c.l.b16 %v7494
    %v7808 = vunpack.c.h.b16 %v7494
    %v7809 = vunpack.c.l.b16 %v7495
    %v7810 = vunpack.c.h.b16 %v7495
    %v7811 = vunpack.c.l.b16 %v7496
    %v7812 = vunpack.c.h.b16 %v7496
    %v7813 = vunpack.c.l.b16 %v7497
    %v7814 = vunpack.c.h.b16 %v7497
    %v7815 = vunpack.c.l.b16 %v7498
    %v7816 = vunpack.c.h.b16 %v7498
    %v7817 = vunpack.c.l.b16 %v7499
    %v7818 = vunpack.c.h.b16 %v7499
    %v7819 = vunpack.c.l.b16 %v7500
    %v7820 = vunpack.c.h.b16 %v7500
    %v7821 = vunpack.c.l.b16 %v7501
    %v7822 = vunpack.c.h.b16 %v7501
    %v7823 = vpack.c.b16 %v7699, %v7695
    %v7824 = vpack.c.b16 %v7700, %v7696
    %v7825 = vpack.c.b16 %v7701, %v7697
    %v7826 = vpack.c.b16 %v7702, %v7698
    %v7827 = vpack.c.b16 %v7707, %v7703
    %v7828 = vpack.c.b16 %v7708, %v7704
    %v7829 = vpack.c.b16 %v7709, %v7705
    %v7830 = vpack.c.b16 %v7710, %v7706
    %v7831 = vpack.c.b16 %v7715, %v7711
    %v7832 = vpack.c.b16 %v7716, %v7712
    %v7833 = vpack.c.b16 %v7717, %v7713
    %v7834 = vpack.c.b16 %v7718, %v7714
    %v7835 = vpack.c.b16 %v7723, %v7719
    %v7836 = vpack.c.b16 %v7724, %v7720
    %v7837 = vpack.c.b16 %v7725, %v7721
    %v7838 = vpack.c.b16 %v7726, %v7722
    %v7839 = vpack.c.b16 %v7731, %v7727
    %v7840 = vpack.c.b16 %v7732, %v7728
    %v7841 = vpack.c.b16 %v7733, %v7729
    %v7842 = vpack.c.b16 %v7734, %v7730
    %v7843 = vpack.c.b16 %v7739, %v7735
    %v7844 = vpack.c.b16 %v7740, %v7736
    %v7845 = vpack.c.b16 %v7741, %v7737
    %v7846 = vpack.c.b16 %v7742, %v7738
    %v7847 = vpack.c.b16 %v7747, %v7743
    %v7848 = vpack.c.b16 %v7748, %v7744
    %v7849 = vpack.c.b16 %v7749, %v7745
    %v7850 = vpack.c.b16 %v7750, %v7746
    %v7851 = vpack.c.b16 %v7755, %v7751
    %v7852 = vpack.c.b16 %v7756, %v7752
    %v7853 = vpack.c.b16 %v7757, %v7753
    %v7854 = vpack.c.b16 %v7758, %v7754
    %v7855 = vpack.c.b16 %v7763, %v7759
    %v7856 = vpack.c.b16 %v7764, %v7760
    %v7857 = vpack.c.b16 %v7765, %v7761
    %v7858 = vpack.c.b16 %v7766, %v7762
    %v7859 = vpack.c.b16 %v7771, %v7767
    %v7860 = vpack.c.b16 %v7772, %v7768
    %v7861 = vpack.c.b16 %v7773, %v7769
    %v7862 = vpack.c.b16 %v7774, %v7770
    %v7863 = vpack.c.b16 %v7779, %v7775
    %v7864 = vpack.c.b16 %v7780, %v7776
    %v7865 = vpack.c.b16 %v7781, %v7777
    %v7866 = vpack.c.b16 %v7782, %v7778
    %v7867 = vpack.c.b16 %v7787, %v7783
    %v7868 = vpack.c.b16 %v7788, %v7784
    %v7869 = vpack.c.b16 %v7789, %v7785
    %v7870 = vpack.c.b16 %v7790, %v7786
    %v7871 = vpack.c.b16 %v7795, %v7791
    %v7872 = vpack.c.b16 %v7796, %v7792
    %v7873 = vpack.c.b16 %v7797, %v7793
    %v7874 = vpack.c.b16 %v7798, %v7794
    %v7875 = vpack.c.b16 %v7803, %v7799
    %v7876 = vpack.c.b16 %v7804, %v7800
    %v7877 = vpack.c.b16 %v7805, %v7801
    %v7878 = vpack.c.b16 %v7806, %v7802
    %v7879 = vpack.c.b16 %v7811, %v7807
    %v7880 = vpack.c.b16 %v7812, %v7808
    %v7881 = vpack.c.b16 %v7813, %v7809
    %v7882 = vpack.c.b16 %v7814, %v7810
    %v7883 = vpack.c.b16 %v7819, %v7815
    %v7884 = vpack.c.b16 %v7820, %v7816
    %v7885 = vpack.c.b16 %v7821, %v7817
    %v7886 = vpack.c.b16 %v7822, %v7818
    %7951 = vmatprep.subr.bf16.mxu0 %v7824
    %7952 = vmatpush1.bf16.msra.mxu0 %v7823
    %7953 = vmatprep.subr.bf16.mxu0 %v7828
    %7954 = vmatpush1.bf16.msra.mxu0 %v7827
    %7955 = vmatprep.subr.bf16.mxu0 %v7832
    %7956 = vmatpush1.bf16.msra.mxu0 %v7831
    %7957 = vmatprep.subr.bf16.mxu0 %v7836
    %7958 = vmatpush1.bf16.msra.mxu0 %v7835
    %7959 = vmatprep.subr.bf16.mxu0 %v7840
    %7960 = vmatpush1.bf16.msra.mxu0 %v7839
    %7961 = vmatprep.subr.bf16.mxu0 %v7844
    %7962 = vmatpush1.bf16.msra.mxu0 %v7843
    %7963 = vmatprep.subr.bf16.mxu0 %v7848
    %7964 = vmatpush1.bf16.msra.mxu0 %v7847
    %7965 = vmatprep.subr.bf16.mxu0 %v7852
    %7966 = vmatpush1.bf16.msra.mxu0 %v7851
    %7967 = vmatprep.subr.bf16.mxu0 %v7856
    %7968 = vmatpush1.bf16.msra.mxu0 %v7855
    %7969 = vmatprep.subr.bf16.mxu0 %v7860
    %7970 = vmatpush1.bf16.msra.mxu0 %v7859
    %7971 = vmatprep.subr.bf16.mxu0 %v7864
    %7972 = vmatpush1.bf16.msra.mxu0 %v7863
    %7973 = vmatprep.subr.bf16.mxu0 %v7868
    %7974 = vmatpush1.bf16.msra.mxu0 %v7867
    %7975 = vmatprep.subr.bf16.mxu0 %v7872
    %7976 = vmatpush1.bf16.msra.mxu0 %v7871
    %7977 = vmatprep.subr.bf16.mxu0 %v7876
    %7978 = vmatpush1.bf16.msra.mxu0 %v7875
    %7979 = vmatprep.subr.bf16.mxu0 %v7880
    %7980 = vmatpush1.bf16.msra.mxu0 %v7879
    %7981 = vmatprep.subr.bf16.mxu0 %v7884
    %7982 = vmatpush1.bf16.msra.mxu0 %v7883
    %7983 = vmatprep.mubr.bf16.mxu0 %v7516
    %7984 = vmatmul.mubr.bf16.gmra.mrb[0].mxu0 %v7509
    %v7985 = vpop.f32.mrb[0].mxu0
    %v7986 = vadd.f32 0.0, %v7985
    %v7987 = vpop.f32.mrb[0].mxu0
    %v7988 = vadd.f32 0.0, %v7987
    %v7989 = vpop.f32.mrb[0].mxu0
    %v7990 = vadd.f32 0.0, %v7989
    %v7991 = vpop.f32.mrb[0].mxu0
    %v7992 = vadd.f32 0.0, %v7991
    %7993 = vmatprep.mubr.bf16.mxu0 %v7524
    %7994 = vmatmul.mubr.bf16.gmra.mrb[0].mxu0 %v7520
    %v7995 = vpop.f32.mrb[0].mxu0
    %v7996 = vadd.f32 0.0, %v7995
    %v7997 = vpop.f32.mrb[0].mxu0
    %v7998 = vadd.f32 0.0, %v7997
    %v7999 = vpop.f32.mrb[0].mxu0
    %v8000 = vadd.f32 0.0, %v7999
    %v8001 = vpop.f32.mrb[0].mxu0
    %v8002 = vadd.f32 0.0, %v8001
    %8003 = vmatprep.mubr.bf16.mxu0 %v7532
    %8004 = vmatmul.mubr.bf16.gmra.mrb[0].mxu0 %v7528
    %v8005 = vpop.f32.mrb[0].mxu0
    %v8006 = vadd.f32 0.0, %v8005
    %v8007 = vpop.f32.mrb[0].mxu0
    %v8008 = vadd.f32 0.0, %v8007
    %v8009 = vpop.f32.mrb[0].mxu0
    %v8010 = vadd.f32 0.0, %v8009
    %v8011 = vpop.f32.mrb[0].mxu0
    %v8012 = vadd.f32 0.0, %v8011
    %8013 = vmatprep.mubr.bf16.mxu0 %v7540
    %8014 = vmatmul.mubr.bf16.gmra.mrb[0].mxu0 %v7536
    %v8015 = vpop.f32.mrb[0].mxu0
    %v8016 = vadd.f32 0.0, %v8015
    %v8017 = vpop.f32.mrb[0].mxu0
    %v8018 = vadd.f32 0.0, %v8017
    %v8019 = vpop.f32.mrb[0].mxu0
    %v8020 = vadd.f32 0.0, %v8019
    %v8021 = vpop.f32.mrb[0].mxu0
    %v8022 = vadd.f32 0.0, %v8021
    %8023 = vmatprep.mubr.bf16.mxu0 %v7548
    %8024 = vmatmul.mubr.bf16.gmra.mrb[0].mxu0 %v7544
    %v8025 = vpop.f32.mrb[0].mxu0
    %v8026 = vadd.f32 0.0, %v8025
    %v8027 = vpop.f32.mrb[0].mxu0
    %v8028 = vadd.f32 0.0, %v8027
    %v8029 = vpop.f32.mrb[0].mxu0
    %v8030 = vadd.f32 0.0, %v8029
    %v8031 = vpop.f32.mrb[0].mxu0
    %v8032 = vadd.f32 0.0, %v8031
    %8033 = vmatprep.mubr.bf16.mxu0 %v7556
    %8034 = vmatmul.mubr.bf16.gmra.mrb[0].mxu0 %v7552
    %v8035 = vpop.f32.mrb[0].mxu0
    %v8036 = vadd.f32 0.0, %v8035
    %v8037 = vpop.f32.mrb[0].mxu0
    %v8038 = vadd.f32 0.0, %v8037
    %v8039 = vpop.f32.mrb[0].mxu0
    %v8040 = vadd.f32 0.0, %v8039
    %v8041 = vpop.f32.mrb[0].mxu0
    %v8042 = vadd.f32 0.0, %v8041
    %8043 = vmatprep.mubr.bf16.mxu0 %v7564
    %8044 = vmatmul.mubr.bf16.gmra.mrb[0].mxu0 %v7560
    %v8045 = vpop.f32.mrb[0].mxu0
    %v8046 = vadd.f32 0.0, %v8045
    %v8047 = vpop.f32.mrb[0].mxu0
    %v8048 = vadd.f32 0.0, %v8047
    %v8049 = vpop.f32.mrb[0].mxu0
    %v8050 = vadd.f32 0.0, %v8049
    %v8051 = vpop.f32.mrb[0].mxu0
    %v8052 = vadd.f32 0.0, %v8051
    %8053 = vmatprep.mubr.bf16.mxu0 %v7572
    %8054 = vmatmul.mubr.bf16.gmra.mrb[0].mxu0 %v7568
    %v8055 = vpop.f32.mrb[0].mxu0
    %v8056 = vadd.f32 0.0, %v8055
    %v8057 = vpop.f32.mrb[0].mxu0
    %v8058 = vadd.f32 0.0, %v8057
    %v8059 = vpop.f32.mrb[0].mxu0
    %v8060 = vadd.f32 0.0, %v8059
    %v8061 = vpop.f32.mrb[0].mxu0
    %v8062 = vadd.f32 0.0, %v8061
    %8063 = vmatprep.mubr.bf16.mxu0 %v7580
    %8064 = vmatmul.mubr.bf16.gmra.mrb[0].mxu0 %v7576
    %v8065 = vpop.f32.mrb[0].mxu0
    %v8066 = vadd.f32 0.0, %v8065
    %v8067 = vpop.f32.mrb[0].mxu0
    %v8068 = vadd.f32 0.0, %v8067
    %v8069 = vpop.f32.mrb[0].mxu0
    %v8070 = vadd.f32 0.0, %v8069
    %v8071 = vpop.f32.mrb[0].mxu0
    %v8072 = vadd.f32 0.0, %v8071
    %8073 = vmatprep.mubr.bf16.mxu0 %v7588
    %8074 = vmatmul.mubr.bf16.gmra.mrb[0].mxu0 %v7584
    %v8075 = vpop.f32.mrb[0].mxu0
    %v8076 = vadd.f32 0.0, %v8075
    %v8077 = vpop.f32.mrb[0].mxu0
    %v8078 = vadd.f32 0.0, %v8077
    %v8079 = vpop.f32.mrb[0].mxu0
    %v8080 = vadd.f32 0.0, %v8079
    %v8081 = vpop.f32.mrb[0].mxu0
    %v8082 = vadd.f32 0.0, %v8081
    %8083 = vmatprep.mubr.bf16.mxu0 %v7606
    %8084 = vmatmul.mubr.bf16.gmra.mrb[0].mxu0 %v7597
    %v8085 = vpop.f32.mrb[0].mxu0
    %v8086 = vadd.f32 0.0, %v8085
    %v8087 = vpop.f32.mrb[0].mxu0
    %v8088 = vadd.f32 0.0, %v8087
    %v8089 = vpop.f32.mrb[0].mxu0
    %v8090 = vadd.f32 0.0, %v8089
    %v8091 = vpop.f32.mrb[0].mxu0
    %v8092 = vadd.f32 0.0, %v8091
    %8093 = vmatprep.mubr.bf16.mxu0 %v7605
    %8094 = vmatmul.mubr.bf16.gmra.mrb[0].mxu0 %v7596
    %v8095 = vpop.f32.mrb[0].mxu0
    %v8096 = vadd.f32 0.0, %v8095
    %v8097 = vpop.f32.mrb[0].mxu0
    %v8098 = vadd.f32 0.0, %v8097
    %v8099 = vpop.f32.mrb[0].mxu0
    %v8100 = vadd.f32 0.0, %v8099
    %v8101 = vpop.f32.mrb[0].mxu0
    %v8102 = vadd.f32 0.0, %v8101
    %8103 = vdwg.mxu0
    %8104 = vmatprep.subr.bf16.mxu0 %v7826
    %8105 = vmatpush1.bf16.msra.mxu0 %v7825
    %8106 = vmatprep.subr.bf16.mxu0 %v7830
    %8107 = vmatpush1.bf16.msra.mxu0 %v7829
    %8108 = vmatprep.subr.bf16.mxu0 %v7834
    %8109 = vmatpush1.bf16.msra.mxu0 %v7833
    %8110 = vmatprep.subr.bf16.mxu0 %v7838
    %8111 = vmatpush1.bf16.msra.mxu0 %v7837
    %8112 = vmatprep.subr.bf16.mxu0 %v7842
    %8113 = vmatpush1.bf16.msra.mxu0 %v7841
    %8114 = vmatprep.subr.bf16.mxu0 %v7846
    %8115 = vmatpush1.bf16.msra.mxu0 %v7845
    %8116 = vmatprep.subr.bf16.mxu0 %v7850
    %8117 = vmatpush1.bf16.msra.mxu0 %v7849
    %8118 = vmatprep.subr.bf16.mxu0 %v7854
    %8119 = vmatpush1.bf16.msra.mxu0 %v7853
    %8120 = vmatprep.subr.bf16.mxu0 %v7858
    %8121 = vmatpush1.bf16.msra.mxu0 %v7857
    %8122 = vmatprep.subr.bf16.mxu0 %v7862
    %8123 = vmatpush1.bf16.msra.mxu0 %v7861
    %8124 = vmatprep.subr.bf16.mxu0 %v7866
    %8125 = vmatpush1.bf16.msra.mxu0 %v7865
    %8126 = vmatprep.subr.bf16.mxu0 %v7870
    %8127 = vmatpush1.bf16.msra.mxu0 %v7869
    %8128 = vmatprep.subr.bf16.mxu0 %v7874
    %8129 = vmatpush1.bf16.msra.mxu0 %v7873
    %8130 = vmatprep.subr.bf16.mxu0 %v7878
    %8131 = vmatpush1.bf16.msra.mxu0 %v7877
    %8132 = vmatprep.subr.bf16.mxu0 %v7882
    %8133 = vmatpush1.bf16.msra.mxu0 %v7881
    %8134 = vmatprep.subr.bf16.mxu0 %v7886
    %8135 = vmatpush1.bf16.msra.mxu0 %v7885
    %8136 = vmatprep.mubr.bf16.mxu0 %v7516
    %8137 = vmatmul.mubr.bf16.gmra.mrb[0].mxu0 %v7509
    %v8138 = vpop.f32.mrb[0].mxu0
    %v8139 = vadd.f32 0.0, %v8138
    %v8140 = vpop.f32.mrb[0].mxu0
    %v8141 = vadd.f32 0.0, %v8140
    %v8142 = vpop.f32.mrb[0].mxu0
    %v8143 = vadd.f32 0.0, %v8142
    %v8144 = vpop.f32.mrb[0].mxu0
    %v8145 = vadd.f32 0.0, %v8144
    %8146 = vmatprep.mubr.bf16.mxu0 %v7524
    %8147 = vmatmul.mubr.bf16.gmra.mrb[0].mxu0 %v7520
    %v8148 = vpop.f32.mrb[0].mxu0
    %v8149 = vadd.f32 0.0, %v8148
    %v8150 = vpop.f32.mrb[0].mxu0
    %v8151 = vadd.f32 0.0, %v8150
    %v8152 = vpop.f32.mrb[0].mxu0
    %v8153 = vadd.f32 0.0, %v8152
    %v8154 = vpop.f32.mrb[0].mxu0
    %v8155 = vadd.f32 0.0, %v8154
    %8156 = vmatprep.mubr.bf16.mxu0 %v7532
    %8157 = vmatmul.mubr.bf16.gmra.mrb[0].mxu0 %v7528
    %v8158 = vpop.f32.mrb[0].mxu0
    %v8159 = vadd.f32 0.0, %v8158
    %v8160 = vpop.f32.mrb[0].mxu0
    %v8161 = vadd.f32 0.0, %v8160
    %v8162 = vpop.f32.mrb[0].mxu0
    %v8163 = vadd.f32 0.0, %v8162
    %v8164 = vpop.f32.mrb[0].mxu0
    %v8165 = vadd.f32 0.0, %v8164
    %8166 = vmatprep.mubr.bf16.mxu0 %v7540
    %8167 = vmatmul.mubr.bf16.gmra.mrb[0].mxu0 %v7536
    %v8168 = vpop.f32.mrb[0].mxu0
    %v8169 = vadd.f32 0.0, %v8168
    %v8170 = vpop.f32.mrb[0].mxu0
    %v8171 = vadd.f32 0.0, %v8170
    %v8172 = vpop.f32.mrb[0].mxu0
    %v8173 = vadd.f32 0.0, %v8172
    %v8174 = vpop.f32.mrb[0].mxu0
    %v8175 = vadd.f32 0.0, %v8174
    %8176 = vmatprep.mubr.bf16.mxu0 %v7548
    %8177 = vmatmul.mubr.bf16.gmra.mrb[0].mxu0 %v7544
    %v8178 = vpop.f32.mrb[0].mxu0
    %v8179 = vadd.f32 0.0, %v8178
    %v8180 = vpop.f32.mrb[0].mxu0
    %v8181 = vadd.f32 0.0, %v8180
    %v8182 = vpop.f32.mrb[0].mxu0
    %v8183 = vadd.f32 0.0, %v8182
    %v8184 = vpop.f32.mrb[0].mxu0
    %v8185 = vadd.f32 0.0, %v8184
    %8186 = vmatprep.mubr.bf16.mxu0 %v7556
    %8187 = vmatmul.mubr.bf16.gmra.mrb[0].mxu0 %v7552
    %v8188 = vpop.f32.mrb[0].mxu0
    %v8189 = vadd.f32 0.0, %v8188
    %v8190 = vpop.f32.mrb[0].mxu0
    %v8191 = vadd.f32 0.0, %v8190
    %v8192 = vpop.f32.mrb[0].mxu0
    %v8193 = vadd.f32 0.0, %v8192
    %v8194 = vpop.f32.mrb[0].mxu0
    %v8195 = vadd.f32 0.0, %v8194
    %8196 = vmatprep.mubr.bf16.mxu0 %v7564
    %8197 = vmatmul.mubr.bf16.gmra.mrb[0].mxu0 %v7560
    %v8198 = vpop.f32.mrb[0].mxu0
    %v8199 = vadd.f32 0.0, %v8198
    %v8200 = vpop.f32.mrb[0].mxu0
    %v8201 = vadd.f32 0.0, %v8200
    %v8202 = vpop.f32.mrb[0].mxu0
    %v8203 = vadd.f32 0.0, %v8202
    %v8204 = vpop.f32.mrb[0].mxu0
    %v8205 = vadd.f32 0.0, %v8204
    %8206 = vmatprep.mubr.bf16.mxu0 %v7572
    %8207 = vmatmul.mubr.bf16.gmra.mrb[0].mxu0 %v7568
    %v8208 = vpop.f32.mrb[0].mxu0
    %v8209 = vadd.f32 0.0, %v8208
    %v8210 = vpop.f32.mrb[0].mxu0
    %v8211 = vadd.f32 0.0, %v8210
    %v8212 = vpop.f32.mrb[0].mxu0
    %v8213 = vadd.f32 0.0, %v8212
    %v8214 = vpop.f32.mrb[0].mxu0
    %v8215 = vadd.f32 0.0, %v8214
    %8216 = vmatprep.mubr.bf16.mxu0 %v7580
    %8217 = vmatmul.mubr.bf16.gmra.mrb[0].mxu0 %v7576
    %v8218 = vpop.f32.mrb[0].mxu0
    %v8219 = vadd.f32 0.0, %v8218
    %v8220 = vpop.f32.mrb[0].mxu0
    %v8221 = vadd.f32 0.0, %v8220
    %v8222 = vpop.f32.mrb[0].mxu0
    %v8223 = vadd.f32 0.0, %v8222
    %v8224 = vpop.f32.mrb[0].mxu0
    %v8225 = vadd.f32 0.0, %v8224
    %8226 = vmatprep.mubr.bf16.mxu0 %v7588
    %8227 = vmatmul.mubr.bf16.gmra.mrb[0].mxu0 %v7584
    %v8228 = vpop.f32.mrb[0].mxu0
    %v8229 = vadd.f32 0.0, %v8228
    %v8230 = vpop.f32.mrb[0].mxu0
    %v8231 = vadd.f32 0.0, %v8230
    %v8232 = vpop.f32.mrb[0].mxu0
    %v8233 = vadd.f32 0.0, %v8232
    %v8234 = vpop.f32.mrb[0].mxu0
    %v8235 = vadd.f32 0.0, %v8234
    %8236 = vmatprep.mubr.bf16.mxu0 %v7606
    %8237 = vmatmul.mubr.bf16.gmra.mrb[0].mxu0 %v7597
    %v8238 = vpop.f32.mrb[0].mxu0
    %v8239 = vadd.f32 0.0, %v8238
    %v8240 = vpop.f32.mrb[0].mxu0
    %v8241 = vadd.f32 0.0, %v8240
    %v8242 = vpop.f32.mrb[0].mxu0
    %v8243 = vadd.f32 0.0, %v8242
    %v8244 = vpop.f32.mrb[0].mxu0
    %v8245 = vadd.f32 0.0, %v8244
    %8246 = vmatprep.mubr.bf16.mxu0 %v7605
    %8247 = vmatmul.mubr.bf16.gmra.mrb[0].mxu0 %v7596
    %v8248 = vpop.f32.mrb[0].mxu0
    %v8249 = vadd.f32 0.0, %v8248
    %v8250 = vpop.f32.mrb[0].mxu0
    %v8251 = vadd.f32 0.0, %v8250
    %v8252 = vpop.f32.mrb[0].mxu0
    %v8253 = vadd.f32 0.0, %v8252
    %v8254 = vpop.f32.mrb[0].mxu0
    %v8255 = vadd.f32 0.0, %v8254
    %8256 = vdwg.mxu0
    %v8257 = vadd.f32 %v7341, %v7986
    %v8258 = vadd.f32 %v7342, %v7988
    %v8259 = vadd.f32 %v7343, %v8139
    %v8260 = vadd.f32 %v7344, %v8141
    %v8261 = vadd.f32 %v7345, %v7990
    %v8262 = vadd.f32 %v7346, %v7992
    %v8263 = vadd.f32 %v7347, %v8143
    %v8264 = vadd.f32 %v7348, %v8145
    %v8265 = vadd.f32 %v7349, %v7996
    %v8266 = vadd.f32 %v7350, %v7998
    %v8267 = vadd.f32 %v7351, %v8149
    %v8268 = vadd.f32 %v7352, %v8151
    %v8269 = vadd.f32 %v7353, %v8000
    %v8270 = vadd.f32 %v7354, %v8002
    %v8271 = vadd.f32 %v7355, %v8153
    %v8272 = vadd.f32 %v7356, %v8155
    %v8273 = vadd.f32 %v7357, %v8006
    %v8274 = vadd.f32 %v7358, %v8008
    %v8275 = vadd.f32 %v7359, %v8159
    %v8276 = vadd.f32 %v7360, %v8161
    %v8277 = vadd.f32 %v7361, %v8010
    %v8278 = vadd.f32 %v7362, %v8012
    %v8279 = vadd.f32 %v7363, %v8163
    %v8280 = vadd.f32 %v7364, %v8165
    %v8281 = vadd.f32 %v7365, %v8016
    %v8282 = vadd.f32 %v7366, %v8018
    %v8283 = vadd.f32 %v7367, %v8169
    %v8284 = vadd.f32 %v7368, %v8171
    %v8285 = vadd.f32 %v7369, %v8020
    %v8286 = vadd.f32 %v7370, %v8022
    %v8287 = vadd.f32 %v7371, %v8173
    %v8288 = vadd.f32 %v7372, %v8175
    %v8289 = vadd.f32 %v7373, %v8026
    %v8290 = vadd.f32 %v7374, %v8028
    %v8291 = vadd.f32 %v7375, %v8179
    %v8292 = vadd.f32 %v7376, %v8181
    %v8293 = vadd.f32 %v7377, %v8030
    %v8294 = vadd.f32 %v7378, %v8032
    %v8295 = vadd.f32 %v7379, %v8183
    %v8296 = vadd.f32 %v7380, %v8185
    %v8297 = vadd.f32 %v7381, %v8036
    %v8298 = vadd.f32 %v7382, %v8038
    %v8299 = vadd.f32 %v7383, %v8189
    %v8300 = vadd.f32 %v7384, %v8191
    %v8301 = vadd.f32 %v7385, %v8040
    %v8302 = vadd.f32 %v7386, %v8042
    %v8303 = vadd.f32 %v7387, %v8193
    %v8304 = vadd.f32 %v7388, %v8195
    %v8305 = vadd.f32 %v7389, %v8046
    %v8306 = vadd.f32 %v7390, %v8048
    %v8307 = vadd.f32 %v7391, %v8199
    %v8308 = vadd.f32 %v7392, %v8201
    %v8309 = vadd.f32 %v7393, %v8050
    %v8310 = vadd.f32 %v7394, %v8052
    %v8311 = vadd.f32 %v7395, %v8203
    %v8312 = vadd.f32 %v7396, %v8205
    %v8313 = vadd.f32 %v7397, %v8056
    %v8314 = vadd.f32 %v7398, %v8058
    %v8315 = vadd.f32 %v7399, %v8209
    %v8316 = vadd.f32 %v7400, %v8211
    %v8317 = vadd.f32 %v7401, %v8060
    %v8318 = vadd.f32 %v7402, %v8062
    %v8319 = vadd.f32 %v7403, %v8213
    %v8320 = vadd.f32 %v7404, %v8215
    %v8321 = vadd.f32 %v7405, %v8066
    %v8322 = vadd.f32 %v7406, %v8068
    %v8323 = vadd.f32 %v7407, %v8219
    %v8324 = vadd.f32 %v7408, %v8221
    %v8325 = vadd.f32 %v7409, %v8070
    %v8326 = vadd.f32 %v7410, %v8072
    %v8327 = vadd.f32 %v7411, %v8223
    %v8328 = vadd.f32 %v7412, %v8225
    %v8329 = vadd.f32 %v7413, %v8076
    %v8330 = vadd.f32 %v7414, %v8078
    %v8331 = vadd.f32 %v7415, %v8229
    %v8332 = vadd.f32 %v7416, %v8231
    %v8333 = vadd.f32 %v7417, %v8080
    %v8334 = vadd.f32 %v7418, %v8082
    %v8335 = vadd.f32 %v7419, %v8233
    %v8336 = vadd.f32 %v7420, %v8235
    %v8337 = vadd.f32 %v7421, %v8086
    %v8338 = vadd.f32 %v7422, %v8088
    %v8339 = vadd.f32 %v7423, %v8239
    %v8340 = vadd.f32 %v7424, %v8241
    %v8341 = vadd.f32 %v7425, %v8090
    %v8342 = vadd.f32 %v7426, %v8092
    %v8343 = vadd.f32 %v7427, %v8243
    %v8344 = vadd.f32 %v7428, %v8245
    %v8345 = vadd.f32 %v7429, %v8096
    %v8346 = vadd.f32 %v7430, %v8098
    %v8347 = vadd.f32 %v7431, %v8249
    %v8348 = vadd.f32 %v7432, %v8251
    %v8349 = vadd.f32 %v7433, %v8100
    %v8350 = vadd.f32 %v7434, %v8102
    %v8351 = vadd.f32 %v7435, %v8253
    %v8352 = vadd.f32 %v7436, %v8255
    %s8353 = scalar_lea.vmem %s6, 4096
    %v8354 = vld [vmem:[%s8353] sm:$0xff]
    %v8355 = vld [vmem:[%s8353 + $0x8] sm:$0xff]
    %v8356 = vld [vmem:[%s8353 + $0x10] sm:$0xff]
    %v8357 = vld [vmem:[%s8353 + $0x18] sm:$0xff]
    %v8358 = vld [vmem:[%s8353 + $0x20] sm:$0xff]
    %v8359 = vld [vmem:[%s8353 + $0x28] sm:$0xff]
    %v8360 = vld [vmem:[%s8353 + $0x30] sm:$0xff]
    %v8361 = vld [vmem:[%s8353 + $0x38] sm:$0xff]
    %v8362 = vld [vmem:[%s8353 + $0x40] sm:$0xff]
    %v8363 = vld [vmem:[%s8353 + $0x48] sm:$0xff]
    %v8364 = vld [vmem:[%s8353 + $0x50] sm:$0xff]
    %v8365 = vld [vmem:[%s8353 + $0x58] sm:$0xff]
    %v8366 = vld [vmem:[%s8353 + $0x60] sm:$0xff]
    %v8367 = vld [vmem:[%s8353 + $0x68] sm:$0xff]
    %v8368 = vld [vmem:[%s8353 + $0x70] sm:$0xff]
    %v8369 = vld [vmem:[%s8353 + $0x78] sm:$0xff]
    %v8370 = vld [vmem:[%s8353 + $0x80] sm:$0xff]
    %v8371 = vld [vmem:[%s8353 + $0x88] sm:$0xff]
    %v8372 = vld [vmem:[%s8353 + $0x90] sm:$0xff]
    %v8373 = vld [vmem:[%s8353 + $0x98] sm:$0xff]
    %v8374 = vld [vmem:[%s8353 + $0xa0] sm:$0xff]
    %v8375 = vld [vmem:[%s8353 + $0xa8] sm:$0xff]
    %v8376 = vld [vmem:[%s8353 + $0xb0] sm:$0xff]
    %v8377 = vld [vmem:[%s8353 + $0xb8] sm:$0xff]
    %v8378 = vld [vmem:[%s8353 + $0xc0] sm:$0xff]
    %v8379 = vld [vmem:[%s8353 + $0xc8] sm:$0xff]
    %v8380 = vld [vmem:[%s8353 + $0xd0] sm:$0xff]
    %v8381 = vld [vmem:[%s8353 + $0xd8] sm:$0xff]
    %v8382 = vld [vmem:[%s8353 + $0xe0] sm:$0xff]
    %v8383 = vld [vmem:[%s8353 + $0xe8] sm:$0xff]
    %v8384 = vld [vmem:[%s8353 + $0xf0] sm:$0xff]
    %v8385 = vld [vmem:[%s8353 + $0xf8] sm:$0xff]
    %v8386 = vld [vmem:[%s8353 + $0x100] sm:$0xff]
    %v8387 = vld [vmem:[%s8353 + $0x108] sm:$0xff]
    %v8388 = vld [vmem:[%s8353 + $0x110] sm:$0xff]
    %v8389 = vld [vmem:[%s8353 + $0x118] sm:$0xff]
    %v8390 = vld [vmem:[%s8353 + $0x120] sm:$0xff]
    %v8391 = vld [vmem:[%s8353 + $0x128] sm:$0xff]
    %v8392 = vld [vmem:[%s8353 + $0x130] sm:$0xff]
    %v8393 = vld [vmem:[%s8353 + $0x138] sm:$0xff]
    %v8394 = vld [vmem:[%s8353 + $0x140] sm:$0xff]
    %v8395 = vld [vmem:[%s8353 + $0x148] sm:$0xff]
    %v8396 = vld [vmem:[%s8353 + $0x150] sm:$0xff]
    %v8397 = vld [vmem:[%s8353 + $0x158] sm:$0xff]
    %v8398 = vld [vmem:[%s8353 + $0x160] sm:$0xff]
    %v8399 = vld [vmem:[%s8353 + $0x168] sm:$0xff]
    %v8400 = vld [vmem:[%s8353 + $0x170] sm:$0xff]
    %v8401 = vld [vmem:[%s8353 + $0x178] sm:$0xff]
    %v8402 = vld [vmem:[%s8353 + $0x180] sm:$0xff]
    %v8403 = vld [vmem:[%s8353 + $0x188] sm:$0xff]
    %v8404 = vld [vmem:[%s8353 + $0x190] sm:$0xff]
    %v8405 = vld [vmem:[%s8353 + $0x198] sm:$0xff]
    %v8406 = vld [vmem:[%s8353 + $0x1a0] sm:$0xff]
    %v8407 = vld [vmem:[%s8353 + $0x1a8] sm:$0xff]
    %v8408 = vld [vmem:[%s8353 + $0x1b0] sm:$0xff]
    %v8409 = vld [vmem:[%s8353 + $0x1b8] sm:$0xff]
    %v8410 = vld [vmem:[%s8353 + $0x1c0] sm:$0xff]
    %v8411 = vld [vmem:[%s8353 + $0x1c8] sm:$0xff]
    %v8412 = vld [vmem:[%s8353 + $0x1d0] sm:$0xff]
    %v8413 = vld [vmem:[%s8353 + $0x1d8] sm:$0xff]
    %v8414 = vld [vmem:[%s8353 + $0x1e0] sm:$0xff]
    %v8415 = vld [vmem:[%s8353 + $0x1e8] sm:$0xff]
    %v8416 = vld [vmem:[%s8353 + $0x1f0] sm:$0xff]
    %v8417 = vld [vmem:[%s8353 + $0x1f8] sm:$0xff]
    %vm8418 = vcmask 1044480
    %v8419 = vrot.slane %v1287, 3
    %v8420 = vrot.slane %v1289, 3
    %v8421 = vsel %vm8418, %v8419, %v8420
    %v8422 = vrot.slane %v1288, 3
    %v8423 = vrot.slane %v1290, 3
    %v8424 = vsel %vm8418, %v8422, %v8423
    %v8425 = vrot.slane %v1291, 3
    %v8426 = vsel %vm8418, %v8420, %v8425
    %v8427 = vrot.slane %v1292, 3
    %v8428 = vsel %vm8418, %v8423, %v8427
    %v8429 = vrot.slane %v1293, 3
    %v8430 = vsel %vm8418, %v8425, %v8429
    %v8431 = vrot.slane %v1294, 3
    %v8432 = vsel %vm8418, %v8427, %v8431
    %v8433 = vrot.slane %v1295, 3
    %v8434 = vsel %vm8418, %v8429, %v8433
    %v8435 = vrot.slane %v1296, 3
    %v8436 = vsel %vm8418, %v8431, %v8435
    %v8437 = vrot.slane %v1297, 3
    %v8438 = vsel %vm8418, %v8433, %v8437
    %v8439 = vrot.slane %v1298, 3
    %v8440 = vsel %vm8418, %v8435, %v8439
    %v8441 = vrot.slane %v1299, 3
    %v8442 = vsel %vm8418, %v8437, %v8441
    %v8443 = vrot.slane %v1300, 3
    %v8444 = vsel %vm8418, %v8439, %v8443
    %v8445 = vrot.slane %v1301, 3
    %v8446 = vsel %vm8418, %v8441, %v8445
    %v8447 = vrot.slane %v1302, 3
    %v8448 = vsel %vm8418, %v8443, %v8447
    %v8449 = vrot.slane %v1303, 3
    %v8450 = vsel %vm8418, %v8445, %v8449
    %v8451 = vrot.slane %v1304, 3
    %v8452 = vsel %vm8418, %v8447, %v8451
    %v8453 = vrot.slane %v1305, 3
    %v8454 = vsel %vm8418, %v8449, %v8453
    %v8455 = vrot.slane %v1306, 3
    %v8456 = vsel %vm8418, %v8451, %v8455
    %v8457 = vrot.slane %v1307, 3
    %v8458 = vsel %vm8418, %v8453, %v8457
    %v8459 = vrot.slane %v1308, 3
    %v8460 = vsel %vm8418, %v8455, %v8459
    %v8461 = vrot.slane %v6576, 3
    %v8462 = vsel %vm8418, %v8457, %v8461
    %v8463 = vrot.slane %v6577, 3
    %v8464 = vsel %vm8418, %v8459, %v8463
    %v8553 = vunpack.c.l.b16 %v8354
    %v8554 = vunpack.c.h.b16 %v8354
    %v8555 = vunpack.c.l.b16 %v8355
    %v8556 = vunpack.c.h.b16 %v8355
    %v8557 = vunpack.c.l.b16 %v8356
    %v8558 = vunpack.c.h.b16 %v8356
    %v8559 = vunpack.c.l.b16 %v8357
    %v8560 = vunpack.c.h.b16 %v8357
    %v8561 = vunpack.c.l.b16 %v8358
    %v8562 = vunpack.c.h.b16 %v8358
    %v8563 = vunpack.c.l.b16 %v8359
    %v8564 = vunpack.c.h.b16 %v8359
    %v8565 = vunpack.c.l.b16 %v8360
    %v8566 = vunpack.c.h.b16 %v8360
    %v8567 = vunpack.c.l.b16 %v8361
    %v8568 = vunpack.c.h.b16 %v8361
    %v8569 = vunpack.c.l.b16 %v8362
    %v8570 = vunpack.c.h.b16 %v8362
    %v8571 = vunpack.c.l.b16 %v8363
    %v8572 = vunpack.c.h.b16 %v8363
    %v8573 = vunpack.c.l.b16 %v8364
    %v8574 = vunpack.c.h.b16 %v8364
    %v8575 = vunpack.c.l.b16 %v8365
    %v8576 = vunpack.c.h.b16 %v8365
    %v8577 = vunpack.c.l.b16 %v8366
    %v8578 = vunpack.c.h.b16 %v8366
    %v8579 = vunpack.c.l.b16 %v8367
    %v8580 = vunpack.c.h.b16 %v8367
    %v8581 = vunpack.c.l.b16 %v8368
    %v8582 = vunpack.c.h.b16 %v8368
    %v8583 = vunpack.c.l.b16 %v8369
    %v8584 = vunpack.c.h.b16 %v8369
    %v8585 = vunpack.c.l.b16 %v8370
    %v8586 = vunpack.c.h.b16 %v8370
    %v8587 = vunpack.c.l.b16 %v8371
    %v8588 = vunpack.c.h.b16 %v8371
    %v8589 = vunpack.c.l.b16 %v8372
    %v8590 = vunpack.c.h.b16 %v8372
    %v8591 = vunpack.c.l.b16 %v8373
    %v8592 = vunpack.c.h.b16 %v8373
    %v8593 = vunpack.c.l.b16 %v8374
    %v8594 = vunpack.c.h.b16 %v8374
    %v8595 = vunpack.c.l.b16 %v8375
    %v8596 = vunpack.c.h.b16 %v8375
    %v8597 = vunpack.c.l.b16 %v8376
    %v8598 = vunpack.c.h.b16 %v8376
    %v8599 = vunpack.c.l.b16 %v8377
    %v8600 = vunpack.c.h.b16 %v8377
    %v8601 = vunpack.c.l.b16 %v8378
    %v8602 = vunpack.c.h.b16 %v8378
    %v8603 = vunpack.c.l.b16 %v8379
    %v8604 = vunpack.c.h.b16 %v8379
    %v8605 = vunpack.c.l.b16 %v8380
    %v8606 = vunpack.c.h.b16 %v8380
    %v8607 = vunpack.c.l.b16 %v8381
    %v8608 = vunpack.c.h.b16 %v8381
    %v8609 = vunpack.c.l.b16 %v8382
    %v8610 = vunpack.c.h.b16 %v8382
    %v8611 = vunpack.c.l.b16 %v8383
    %v8612 = vunpack.c.h.b16 %v8383
    %v8613 = vunpack.c.l.b16 %v8384
    %v8614 = vunpack.c.h.b16 %v8384
    %v8615 = vunpack.c.l.b16 %v8385
    %v8616 = vunpack.c.h.b16 %v8385
    %v8617 = vunpack.c.l.b16 %v8386
    %v8618 = vunpack.c.h.b16 %v8386
    %v8619 = vunpack.c.l.b16 %v8387
    %v8620 = vunpack.c.h.b16 %v8387
    %v8621 = vunpack.c.l.b16 %v8388
    %v8622 = vunpack.c.h.b16 %v8388
    %v8623 = vunpack.c.l.b16 %v8389
    %v8624 = vunpack.c.h.b16 %v8389
    %v8625 = vunpack.c.l.b16 %v8390
    %v8626 = vunpack.c.h.b16 %v8390
    %v8627 = vunpack.c.l.b16 %v8391
    %v8628 = vunpack.c.h.b16 %v8391
    %v8629 = vunpack.c.l.b16 %v8392
    %v8630 = vunpack.c.h.b16 %v8392
    %v8631 = vunpack.c.l.b16 %v8393
    %v8632 = vunpack.c.h.b16 %v8393
    %v8633 = vunpack.c.l.b16 %v8394
    %v8634 = vunpack.c.h.b16 %v8394
    %v8635 = vunpack.c.l.b16 %v8395
    %v8636 = vunpack.c.h.b16 %v8395
    %v8637 = vunpack.c.l.b16 %v8396
    %v8638 = vunpack.c.h.b16 %v8396
    %v8639 = vunpack.c.l.b16 %v8397
    %v8640 = vunpack.c.h.b16 %v8397
    %v8641 = vunpack.c.l.b16 %v8398
    %v8642 = vunpack.c.h.b16 %v8398
    %v8643 = vunpack.c.l.b16 %v8399
    %v8644 = vunpack.c.h.b16 %v8399
    %v8645 = vunpack.c.l.b16 %v8400
    %v8646 = vunpack.c.h.b16 %v8400
    %v8647 = vunpack.c.l.b16 %v8401
    %v8648 = vunpack.c.h.b16 %v8401
    %v8649 = vunpack.c.l.b16 %v8402
    %v8650 = vunpack.c.h.b16 %v8402
    %v8651 = vunpack.c.l.b16 %v8403
    %v8652 = vunpack.c.h.b16 %v8403
    %v8653 = vunpack.c.l.b16 %v8404
    %v8654 = vunpack.c.h.b16 %v8404
    %v8655 = vunpack.c.l.b16 %v8405
    %v8656 = vunpack.c.h.b16 %v8405
    %v8657 = vunpack.c.l.b16 %v8406
    %v8658 = vunpack.c.h.b16 %v8406
    %v8659 = vunpack.c.l.b16 %v8407
    %v8660 = vunpack.c.h.b16 %v8407
    %v8661 = vunpack.c.l.b16 %v8408
    %v8662 = vunpack.c.h.b16 %v8408
    %v8663 = vunpack.c.l.b16 %v8409
    %v8664 = vunpack.c.h.b16 %v8409
    %v8665 = vunpack.c.l.b16 %v8410
    %v8666 = vunpack.c.h.b16 %v8410
    %v8667 = vunpack.c.l.b16 %v8411
    %v8668 = vunpack.c.h.b16 %v8411
    %v8669 = vunpack.c.l.b16 %v8412
    %v8670 = vunpack.c.h.b16 %v8412
    %v8671 = vunpack.c.l.b16 %v8413
    %v8672 = vunpack.c.h.b16 %v8413
    %v8673 = vunpack.c.l.b16 %v8414
    %v8674 = vunpack.c.h.b16 %v8414
    %v8675 = vunpack.c.l.b16 %v8415
    %v8676 = vunpack.c.h.b16 %v8415
    %v8677 = vunpack.c.l.b16 %v8416
    %v8678 = vunpack.c.h.b16 %v8416
    %v8679 = vunpack.c.l.b16 %v8417
    %v8680 = vunpack.c.h.b16 %v8417
    %v8681 = vpack.c.b16 %v8557, %v8553
    %v8682 = vpack.c.b16 %v8558, %v8554
    %v8683 = vpack.c.b16 %v8559, %v8555
    %v8684 = vpack.c.b16 %v8560, %v8556
    %v8685 = vpack.c.b16 %v8565, %v8561
    %v8686 = vpack.c.b16 %v8566, %v8562
    %v8687 = vpack.c.b16 %v8567, %v8563
    %v8688 = vpack.c.b16 %v8568, %v8564
    %v8689 = vpack.c.b16 %v8573, %v8569
    %v8690 = vpack.c.b16 %v8574, %v8570
    %v8691 = vpack.c.b16 %v8575, %v8571
    %v8692 = vpack.c.b16 %v8576, %v8572
    %v8693 = vpack.c.b16 %v8581, %v8577
    %v8694 = vpack.c.b16 %v8582, %v8578
    %v8695 = vpack.c.b16 %v8583, %v8579
    %v8696 = vpack.c.b16 %v8584, %v8580
    %v8697 = vpack.c.b16 %v8589, %v8585
    %v8698 = vpack.c.b16 %v8590, %v8586
    %v8699 = vpack.c.b16 %v8591, %v8587
    %v8700 = vpack.c.b16 %v8592, %v8588
    %v8701 = vpack.c.b16 %v8597, %v8593
    %v8702 = vpack.c.b16 %v8598, %v8594
    %v8703 = vpack.c.b16 %v8599, %v8595
    %v8704 = vpack.c.b16 %v8600, %v8596
    %v8705 = vpack.c.b16 %v8605, %v8601
    %v8706 = vpack.c.b16 %v8606, %v8602
    %v8707 = vpack.c.b16 %v8607, %v8603
    %v8708 = vpack.c.b16 %v8608, %v8604
    %v8709 = vpack.c.b16 %v8613, %v8609
    %v8710 = vpack.c.b16 %v8614, %v8610
    %v8711 = vpack.c.b16 %v8615, %v8611
    %v8712 = vpack.c.b16 %v8616, %v8612
    %v8713 = vpack.c.b16 %v8621, %v8617
    %v8714 = vpack.c.b16 %v8622, %v8618
    %v8715 = vpack.c.b16 %v8623, %v8619
    %v8716 = vpack.c.b16 %v8624, %v8620
    %v8717 = vpack.c.b16 %v8629, %v8625
    %v8718 = vpack.c.b16 %v8630, %v8626
    %v8719 = vpack.c.b16 %v8631, %v8627
    %v8720 = vpack.c.b16 %v8632, %v8628
    %v8721 = vpack.c.b16 %v8637, %v8633
    %v8722 = vpack.c.b16 %v8638, %v8634
    %v8723 = vpack.c.b16 %v8639, %v8635
    %v8724 = vpack.c.b16 %v8640, %v8636
    %v8725 = vpack.c.b16 %v8645, %v8641
    %v8726 = vpack.c.b16 %v8646, %v8642
    %v8727 = vpack.c.b16 %v8647, %v8643
    %v8728 = vpack.c.b16 %v8648, %v8644
    %v8729 = vpack.c.b16 %v8653, %v8649
    %v8730 = vpack.c.b16 %v8654, %v8650
    %v8731 = vpack.c.b16 %v8655, %v8651
    %v8732 = vpack.c.b16 %v8656, %v8652
    %v8733 = vpack.c.b16 %v8661, %v8657
    %v8734 = vpack.c.b16 %v8662, %v8658
    %v8735 = vpack.c.b16 %v8663, %v8659
    %v8736 = vpack.c.b16 %v8664, %v8660
    %v8737 = vpack.c.b16 %v8669, %v8665
    %v8738 = vpack.c.b16 %v8670, %v8666
    %v8739 = vpack.c.b16 %v8671, %v8667
    %v8740 = vpack.c.b16 %v8672, %v8668
    %v8741 = vpack.c.b16 %v8677, %v8673
    %v8742 = vpack.c.b16 %v8678, %v8674
    %v8743 = vpack.c.b16 %v8679, %v8675
    %v8744 = vpack.c.b16 %v8680, %v8676
    %8809 = vmatprep.subr.bf16.mxu0 %v8682
    %8810 = vmatpush1.bf16.msra.mxu0 %v8681
    %8811 = vmatprep.subr.bf16.mxu0 %v8686
    %8812 = vmatpush1.bf16.msra.mxu0 %v8685
    %8813 = vmatprep.subr.bf16.mxu0 %v8690
    %8814 = vmatpush1.bf16.msra.mxu0 %v8689
    %8815 = vmatprep.subr.bf16.mxu0 %v8694
    %8816 = vmatpush1.bf16.msra.mxu0 %v8693
    %8817 = vmatprep.subr.bf16.mxu0 %v8698
    %8818 = vmatpush1.bf16.msra.mxu0 %v8697
    %8819 = vmatprep.subr.bf16.mxu0 %v8702
    %8820 = vmatpush1.bf16.msra.mxu0 %v8701
    %8821 = vmatprep.subr.bf16.mxu0 %v8706
    %8822 = vmatpush1.bf16.msra.mxu0 %v8705
    %8823 = vmatprep.subr.bf16.mxu0 %v8710
    %8824 = vmatpush1.bf16.msra.mxu0 %v8709
    %8825 = vmatprep.subr.bf16.mxu0 %v8714
    %8826 = vmatpush1.bf16.msra.mxu0 %v8713
    %8827 = vmatprep.subr.bf16.mxu0 %v8718
    %8828 = vmatpush1.bf16.msra.mxu0 %v8717
    %8829 = vmatprep.subr.bf16.mxu0 %v8722
    %8830 = vmatpush1.bf16.msra.mxu0 %v8721
    %8831 = vmatprep.subr.bf16.mxu0 %v8726
    %8832 = vmatpush1.bf16.msra.mxu0 %v8725
    %8833 = vmatprep.subr.bf16.mxu0 %v8730
    %8834 = vmatpush1.bf16.msra.mxu0 %v8729
    %8835 = vmatprep.subr.bf16.mxu0 %v8734
    %8836 = vmatpush1.bf16.msra.mxu0 %v8733
    %8837 = vmatprep.subr.bf16.mxu0 %v8738
    %8838 = vmatpush1.bf16.msra.mxu0 %v8737
    %8839 = vmatprep.subr.bf16.mxu0 %v8742
    %8840 = vmatpush1.bf16.msra.mxu0 %v8741
    %8841 = vmatprep.mubr.bf16.mxu0 %v8424
    %8842 = vmatmul.mubr.bf16.gmra.mrb[0].mxu0 %v8421
    %v8843 = vpop.f32.mrb[0].mxu0
    %v8844 = vadd.f32 0.0, %v8843
    %v8845 = vpop.f32.mrb[0].mxu0
    %v8846 = vadd.f32 0.0, %v8845
    %v8847 = vpop.f32.mrb[0].mxu0
    %v8848 = vadd.f32 0.0, %v8847
    %v8849 = vpop.f32.mrb[0].mxu0
    %v8850 = vadd.f32 0.0, %v8849
    %8851 = vmatprep.mubr.bf16.mxu0 %v8428
    %8852 = vmatmul.mubr.bf16.gmra.mrb[0].mxu0 %v8426
    %v8853 = vpop.f32.mrb[0].mxu0
    %v8854 = vadd.f32 0.0, %v8853
    %v8855 = vpop.f32.mrb[0].mxu0
    %v8856 = vadd.f32 0.0, %v8855
    %v8857 = vpop.f32.mrb[0].mxu0
    %v8858 = vadd.f32 0.0, %v8857
    %v8859 = vpop.f32.mrb[0].mxu0
    %v8860 = vadd.f32 0.0, %v8859
    %8861 = vmatprep.mubr.bf16.mxu0 %v8432
    %8862 = vmatmul.mubr.bf16.gmra.mrb[0].mxu0 %v8430
    %v8863 = vpop.f32.mrb[0].mxu0
    %v8864 = vadd.f32 0.0, %v8863
    %v8865 = vpop.f32.mrb[0].mxu0
    %v8866 = vadd.f32 0.0, %v8865
    %v8867 = vpop.f32.mrb[0].mxu0
    %v8868 = vadd.f32 0.0, %v8867
    %v8869 = vpop.f32.mrb[0].mxu0
    %v8870 = vadd.f32 0.0, %v8869
    %8871 = vmatprep.mubr.bf16.mxu0 %v8436
    %8872 = vmatmul.mubr.bf16.gmra.mrb[0].mxu0 %v8434
    %v8873 = vpop.f32.mrb[0].mxu0
    %v8874 = vadd.f32 0.0, %v8873
    %v8875 = vpop.f32.mrb[0].mxu0
    %v8876 = vadd.f32 0.0, %v8875
    %v8877 = vpop.f32.mrb[0].mxu0
    %v8878 = vadd.f32 0.0, %v8877
    %v8879 = vpop.f32.mrb[0].mxu0
    %v8880 = vadd.f32 0.0, %v8879
    %8881 = vmatprep.mubr.bf16.mxu0 %v8440
    %8882 = vmatmul.mubr.bf16.gmra.mrb[0].mxu0 %v8438
    %v8883 = vpop.f32.mrb[0].mxu0
    %v8884 = vadd.f32 0.0, %v8883
    %v8885 = vpop.f32.mrb[0].mxu0
    %v8886 = vadd.f32 0.0, %v8885
    %v8887 = vpop.f32.mrb[0].mxu0
    %v8888 = vadd.f32 0.0, %v8887
    %v8889 = vpop.f32.mrb[0].mxu0
    %v8890 = vadd.f32 0.0, %v8889
    %8891 = vmatprep.mubr.bf16.mxu0 %v8444
    %8892 = vmatmul.mubr.bf16.gmra.mrb[0].mxu0 %v8442
    %v8893 = vpop.f32.mrb[0].mxu0
    %v8894 = vadd.f32 0.0, %v8893
    %v8895 = vpop.f32.mrb[0].mxu0
    %v8896 = vadd.f32 0.0, %v8895
    %v8897 = vpop.f32.mrb[0].mxu0
    %v8898 = vadd.f32 0.0, %v8897
    %v8899 = vpop.f32.mrb[0].mxu0
    %v8900 = vadd.f32 0.0, %v8899
    %8901 = vmatprep.mubr.bf16.mxu0 %v8448
    %8902 = vmatmul.mubr.bf16.gmra.mrb[0].mxu0 %v8446
    %v8903 = vpop.f32.mrb[0].mxu0
    %v8904 = vadd.f32 0.0, %v8903
    %v8905 = vpop.f32.mrb[0].mxu0
    %v8906 = vadd.f32 0.0, %v8905
    %v8907 = vpop.f32.mrb[0].mxu0
    %v8908 = vadd.f32 0.0, %v8907
    %v8909 = vpop.f32.mrb[0].mxu0
    %v8910 = vadd.f32 0.0, %v8909
    %8911 = vmatprep.mubr.bf16.mxu0 %v8452
    %8912 = vmatmul.mubr.bf16.gmra.mrb[0].mxu0 %v8450
    %v8913 = vpop.f32.mrb[0].mxu0
    %v8914 = vadd.f32 0.0, %v8913
    %v8915 = vpop.f32.mrb[0].mxu0
    %v8916 = vadd.f32 0.0, %v8915
    %v8917 = vpop.f32.mrb[0].mxu0
    %v8918 = vadd.f32 0.0, %v8917
    %v8919 = vpop.f32.mrb[0].mxu0
    %v8920 = vadd.f32 0.0, %v8919
    %8921 = vmatprep.mubr.bf16.mxu0 %v8456
    %8922 = vmatmul.mubr.bf16.gmra.mrb[0].mxu0 %v8454
    %v8923 = vpop.f32.mrb[0].mxu0
    %v8924 = vadd.f32 0.0, %v8923
    %v8925 = vpop.f32.mrb[0].mxu0
    %v8926 = vadd.f32 0.0, %v8925
    %v8927 = vpop.f32.mrb[0].mxu0
    %v8928 = vadd.f32 0.0, %v8927
    %v8929 = vpop.f32.mrb[0].mxu0
    %v8930 = vadd.f32 0.0, %v8929
    %8931 = vmatprep.mubr.bf16.mxu0 %v8460
    %8932 = vmatmul.mubr.bf16.gmra.mrb[0].mxu0 %v8458
    %v8933 = vpop.f32.mrb[0].mxu0
    %v8934 = vadd.f32 0.0, %v8933
    %v8935 = vpop.f32.mrb[0].mxu0
    %v8936 = vadd.f32 0.0, %v8935
    %v8937 = vpop.f32.mrb[0].mxu0
    %v8938 = vadd.f32 0.0, %v8937
    %v8939 = vpop.f32.mrb[0].mxu0
    %v8940 = vadd.f32 0.0, %v8939
    %8941 = vmatprep.mubr.bf16.mxu0 %v8464
    %8942 = vmatmul.mubr.bf16.gmra.mrb[0].mxu0 %v8462
    %v8943 = vpop.f32.mrb[0].mxu0
    %v8944 = vadd.f32 0.0, %v8943
    %v8945 = vpop.f32.mrb[0].mxu0
    %v8946 = vadd.f32 0.0, %v8945
    %v8947 = vpop.f32.mrb[0].mxu0
    %v8948 = vadd.f32 0.0, %v8947
    %v8949 = vpop.f32.mrb[0].mxu0
    %v8950 = vadd.f32 0.0, %v8949
    %8951 = vmatprep.mubr.bf16.mxu0 %v8463
    %8952 = vmatmul.mubr.bf16.gmra.mrb[0].mxu0 %v8461
    %v8953 = vpop.f32.mrb[0].mxu0
    %v8954 = vadd.f32 0.0, %v8953
    %v8955 = vpop.f32.mrb[0].mxu0
    %v8956 = vadd.f32 0.0, %v8955
    %v8957 = vpop.f32.mrb[0].mxu0
    %v8958 = vadd.f32 0.0, %v8957
    %v8959 = vpop.f32.mrb[0].mxu0
    %v8960 = vadd.f32 0.0, %v8959
    %8961 = vdwg.mxu0
    %8962 = vmatprep.subr.bf16.mxu0 %v8684
    %8963 = vmatpush1.bf16.msra.mxu0 %v8683
    %8964 = vmatprep.subr.bf16.mxu0 %v8688
    %8965 = vmatpush1.bf16.msra.mxu0 %v8687
    %8966 = vmatprep.subr.bf16.mxu0 %v8692
    %8967 = vmatpush1.bf16.msra.mxu0 %v8691
    %8968 = vmatprep.subr.bf16.mxu0 %v8696
    %8969 = vmatpush1.bf16.msra.mxu0 %v8695
    %8970 = vmatprep.subr.bf16.mxu0 %v8700
    %8971 = vmatpush1.bf16.msra.mxu0 %v8699
    %8972 = vmatprep.subr.bf16.mxu0 %v8704
    %8973 = vmatpush1.bf16.msra.mxu0 %v8703
    %8974 = vmatprep.subr.bf16.mxu0 %v8708
    %8975 = vmatpush1.bf16.msra.mxu0 %v8707
    %8976 = vmatprep.subr.bf16.mxu0 %v8712
    %8977 = vmatpush1.bf16.msra.mxu0 %v8711
    %8978 = vmatprep.subr.bf16.mxu0 %v8716
    %8979 = vmatpush1.bf16.msra.mxu0 %v8715
    %8980 = vmatprep.subr.bf16.mxu0 %v8720
    %8981 = vmatpush1.bf16.msra.mxu0 %v8719
    %8982 = vmatprep.subr.bf16.mxu0 %v8724
    %8983 = vmatpush1.bf16.msra.mxu0 %v8723
    %8984 = vmatprep.subr.bf16.mxu0 %v8728
    %8985 = vmatpush1.bf16.msra.mxu0 %v8727
    %8986 = vmatprep.subr.bf16.mxu0 %v8732
    %8987 = vmatpush1.bf16.msra.mxu0 %v8731
    %8988 = vmatprep.subr.bf16.mxu0 %v8736
    %8989 = vmatpush1.bf16.msra.mxu0 %v8735
    %8990 = vmatprep.subr.bf16.mxu0 %v8740
    %8991 = vmatpush1.bf16.msra.mxu0 %v8739
    %8992 = vmatprep.subr.bf16.mxu0 %v8744
    %8993 = vmatpush1.bf16.msra.mxu0 %v8743
    %8994 = vmatprep.mubr.bf16.mxu0 %v8424
    %8995 = vmatmul.mubr.bf16.gmra.mrb[0].mxu0 %v8421
    %v8996 = vpop.f32.mrb[0].mxu0
    %v8997 = vadd.f32 0.0, %v8996
    %v8998 = vpop.f32.mrb[0].mxu0
    %v8999 = vadd.f32 0.0, %v8998
    %v9000 = vpop.f32.mrb[0].mxu0
    %v9001 = vadd.f32 0.0, %v9000
    %v9002 = vpop.f32.mrb[0].mxu0
    %v9003 = vadd.f32 0.0, %v9002
    %9004 = vmatprep.mubr.bf16.mxu0 %v8428
    %9005 = vmatmul.mubr.bf16.gmra.mrb[0].mxu0 %v8426
    %v9006 = vpop.f32.mrb[0].mxu0
    %v9007 = vadd.f32 0.0, %v9006
    %v9008 = vpop.f32.mrb[0].mxu0
    %v9009 = vadd.f32 0.0, %v9008
    %v9010 = vpop.f32.mrb[0].mxu0
    %v9011 = vadd.f32 0.0, %v9010
    %v9012 = vpop.f32.mrb[0].mxu0
    %v9013 = vadd.f32 0.0, %v9012
    %9014 = vmatprep.mubr.bf16.mxu0 %v8432
    %9015 = vmatmul.mubr.bf16.gmra.mrb[0].mxu0 %v8430
    %v9016 = vpop.f32.mrb[0].mxu0
    %v9017 = vadd.f32 0.0, %v9016
    %v9018 = vpop.f32.mrb[0].mxu0
    %v9019 = vadd.f32 0.0, %v9018
    %v9020 = vpop.f32.mrb[0].mxu0
    %v9021 = vadd.f32 0.0, %v9020
    %v9022 = vpop.f32.mrb[0].mxu0
    %v9023 = vadd.f32 0.0, %v9022
    %9024 = vmatprep.mubr.bf16.mxu0 %v8436
    %9025 = vmatmul.mubr.bf16.gmra.mrb[0].mxu0 %v8434
    %v9026 = vpop.f32.mrb[0].mxu0
    %v9027 = vadd.f32 0.0, %v9026
    %v9028 = vpop.f32.mrb[0].mxu0
    %v9029 = vadd.f32 0.0, %v9028
    %v9030 = vpop.f32.mrb[0].mxu0
    %v9031 = vadd.f32 0.0, %v9030
    %v9032 = vpop.f32.mrb[0].mxu0
    %v9033 = vadd.f32 0.0, %v9032
    %9034 = vmatprep.mubr.bf16.mxu0 %v8440
    %9035 = vmatmul.mubr.bf16.gmra.mrb[0].mxu0 %v8438
    %v9036 = vpop.f32.mrb[0].mxu0
    %v9037 = vadd.f32 0.0, %v9036
    %v9038 = vpop.f32.mrb[0].mxu0
    %v9039 = vadd.f32 0.0, %v9038
    %v9040 = vpop.f32.mrb[0].mxu0
    %v9041 = vadd.f32 0.0, %v9040
    %v9042 = vpop.f32.mrb[0].mxu0
    %v9043 = vadd.f32 0.0, %v9042
    %9044 = vmatprep.mubr.bf16.mxu0 %v8444
    %9045 = vmatmul.mubr.bf16.gmra.mrb[0].mxu0 %v8442
    %v9046 = vpop.f32.mrb[0].mxu0
    %v9047 = vadd.f32 0.0, %v9046
    %v9048 = vpop.f32.mrb[0].mxu0
    %v9049 = vadd.f32 0.0, %v9048
    %v9050 = vpop.f32.mrb[0].mxu0
    %v9051 = vadd.f32 0.0, %v9050
    %v9052 = vpop.f32.mrb[0].mxu0
    %v9053 = vadd.f32 0.0, %v9052
    %9054 = vmatprep.mubr.bf16.mxu0 %v8448
    %9055 = vmatmul.mubr.bf16.gmra.mrb[0].mxu0 %v8446
    %v9056 = vpop.f32.mrb[0].mxu0
    %v9057 = vadd.f32 0.0, %v9056
    %v9058 = vpop.f32.mrb[0].mxu0
    %v9059 = vadd.f32 0.0, %v9058
    %v9060 = vpop.f32.mrb[0].mxu0
    %v9061 = vadd.f32 0.0, %v9060
    %v9062 = vpop.f32.mrb[0].mxu0
    %v9063 = vadd.f32 0.0, %v9062
    %9064 = vmatprep.mubr.bf16.mxu0 %v8452
    %9065 = vmatmul.mubr.bf16.gmra.mrb[0].mxu0 %v8450
    %v9066 = vpop.f32.mrb[0].mxu0
    %v9067 = vadd.f32 0.0, %v9066
    %v9068 = vpop.f32.mrb[0].mxu0
    %v9069 = vadd.f32 0.0, %v9068
    %v9070 = vpop.f32.mrb[0].mxu0
    %v9071 = vadd.f32 0.0, %v9070
    %v9072 = vpop.f32.mrb[0].mxu0
    %v9073 = vadd.f32 0.0, %v9072
    %9074 = vmatprep.mubr.bf16.mxu0 %v8456
    %9075 = vmatmul.mubr.bf16.gmra.mrb[0].mxu0 %v8454
    %v9076 = vpop.f32.mrb[0].mxu0
    %v9077 = vadd.f32 0.0, %v9076
    %v9078 = vpop.f32.mrb[0].mxu0
    %v9079 = vadd.f32 0.0, %v9078
    %v9080 = vpop.f32.mrb[0].mxu0
    %v9081 = vadd.f32 0.0, %v9080
    %v9082 = vpop.f32.mrb[0].mxu0
    %v9083 = vadd.f32 0.0, %v9082
    %9084 = vmatprep.mubr.bf16.mxu0 %v8460
    %9085 = vmatmul.mubr.bf16.gmra.mrb[0].mxu0 %v8458
    %v9086 = vpop.f32.mrb[0].mxu0
    %v9087 = vadd.f32 0.0, %v9086
    %v9088 = vpop.f32.mrb[0].mxu0
    %v9089 = vadd.f32 0.0, %v9088
    %v9090 = vpop.f32.mrb[0].mxu0
    %v9091 = vadd.f32 0.0, %v9090
    %v9092 = vpop.f32.mrb[0].mxu0
    %v9093 = vadd.f32 0.0, %v9092
    %9094 = vmatprep.mubr.bf16.mxu0 %v8464
    %9095 = vmatmul.mubr.bf16.gmra.mrb[0].mxu0 %v8462
    %v9096 = vpop.f32.mrb[0].mxu0
    %v9097 = vadd.f32 0.0, %v9096
    %v9098 = vpop.f32.mrb[0].mxu0
    %v9099 = vadd.f32 0.0, %v9098
    %v9100 = vpop.f32.mrb[0].mxu0
    %v9101 = vadd.f32 0.0, %v9100
    %v9102 = vpop.f32.mrb[0].mxu0
    %v9103 = vadd.f32 0.0, %v9102
    %9104 = vmatprep.mubr.bf16.mxu0 %v8463
    %9105 = vmatmul.mubr.bf16.gmra.mrb[0].mxu0 %v8461
    %v9106 = vpop.f32.mrb[0].mxu0
    %v9107 = vadd.f32 0.0, %v9106
    %v9108 = vpop.f32.mrb[0].mxu0
    %v9109 = vadd.f32 0.0, %v9108
    %v9110 = vpop.f32.mrb[0].mxu0
    %v9111 = vadd.f32 0.0, %v9110
    %v9112 = vpop.f32.mrb[0].mxu0
    %v9113 = vadd.f32 0.0, %v9112
    %9114 = vdwg.mxu0
    %v9115 = vadd.f32 %v8257, %v8844
    %v9116 = vadd.f32 %v8258, %v8846
    %v9117 = vadd.f32 %v8259, %v8997
    %v9118 = vadd.f32 %v8260, %v8999
    %v9119 = vadd.f32 %v8261, %v8848
    %v9120 = vadd.f32 %v8262, %v8850
    %v9121 = vadd.f32 %v8263, %v9001
    %v9122 = vadd.f32 %v8264, %v9003
    %v9123 = vadd.f32 %v8265, %v8854
    %v9124 = vadd.f32 %v8266, %v8856
    %v9125 = vadd.f32 %v8267, %v9007
    %v9126 = vadd.f32 %v8268, %v9009
    %v9127 = vadd.f32 %v8269, %v8858
    %v9128 = vadd.f32 %v8270, %v8860
    %v9129 = vadd.f32 %v8271, %v9011
    %v9130 = vadd.f32 %v8272, %v9013
    %v9131 = vadd.f32 %v8273, %v8864
    %v9132 = vadd.f32 %v8274, %v8866
    %v9133 = vadd.f32 %v8275, %v9017
    %v9134 = vadd.f32 %v8276, %v9019
    %v9135 = vadd.f32 %v8277, %v8868
    %v9136 = vadd.f32 %v8278, %v8870
    %v9137 = vadd.f32 %v8279, %v9021
    %v9138 = vadd.f32 %v8280, %v9023
    %v9139 = vadd.f32 %v8281, %v8874
    %v9140 = vadd.f32 %v8282, %v8876
    %v9141 = vadd.f32 %v8283, %v9027
    %v9142 = vadd.f32 %v8284, %v9029
    %v9143 = vadd.f32 %v8285, %v8878
    %v9144 = vadd.f32 %v8286, %v8880
    %v9145 = vadd.f32 %v8287, %v9031
    %v9146 = vadd.f32 %v8288, %v9033
    %v9147 = vadd.f32 %v8289, %v8884
    %v9148 = vadd.f32 %v8290, %v8886
    %v9149 = vadd.f32 %v8291, %v9037
    %v9150 = vadd.f32 %v8292, %v9039
    %v9151 = vadd.f32 %v8293, %v8888
    %v9152 = vadd.f32 %v8294, %v8890
    %v9153 = vadd.f32 %v8295, %v9041
    %v9154 = vadd.f32 %v8296, %v9043
    %v9155 = vadd.f32 %v8297, %v8894
    %v9156 = vadd.f32 %v8298, %v8896
    %v9157 = vadd.f32 %v8299, %v9047
    %v9158 = vadd.f32 %v8300, %v9049
    %v9159 = vadd.f32 %v8301, %v8898
    %v9160 = vadd.f32 %v8302, %v8900
    %v9161 = vadd.f32 %v8303, %v9051
    %v9162 = vadd.f32 %v8304, %v9053
    %v9163 = vadd.f32 %v8305, %v8904
    %v9164 = vadd.f32 %v8306, %v8906
    %v9165 = vadd.f32 %v8307, %v9057
    %v9166 = vadd.f32 %v8308, %v9059
    %v9167 = vadd.f32 %v8309, %v8908
    %v9168 = vadd.f32 %v8310, %v8910
    %v9169 = vadd.f32 %v8311, %v9061
    %v9170 = vadd.f32 %v8312, %v9063
    %v9171 = vadd.f32 %v8313, %v8914
    %v9172 = vadd.f32 %v8314, %v8916
    %v9173 = vadd.f32 %v8315, %v9067
    %v9174 = vadd.f32 %v8316, %v9069
    %v9175 = vadd.f32 %v8317, %v8918
    %v9176 = vadd.f32 %v8318, %v8920
    %v9177 = vadd.f32 %v8319, %v9071
    %v9178 = vadd.f32 %v8320, %v9073
    %v9179 = vadd.f32 %v8321, %v8924
    %v9180 = vadd.f32 %v8322, %v8926
    %v9181 = vadd.f32 %v8323, %v9077
    %v9182 = vadd.f32 %v8324, %v9079
    %v9183 = vadd.f32 %v8325, %v8928
    %v9184 = vadd.f32 %v8326, %v8930
    %v9185 = vadd.f32 %v8327, %v9081
    %v9186 = vadd.f32 %v8328, %v9083
    %v9187 = vadd.f32 %v8329, %v8934
    %v9188 = vadd.f32 %v8330, %v8936
    %v9189 = vadd.f32 %v8331, %v9087
    %v9190 = vadd.f32 %v8332, %v9089
    %v9191 = vadd.f32 %v8333, %v8938
    %v9192 = vadd.f32 %v8334, %v8940
    %v9193 = vadd.f32 %v8335, %v9091
    %v9194 = vadd.f32 %v8336, %v9093
    %v9195 = vadd.f32 %v8337, %v8944
    %v9196 = vadd.f32 %v8338, %v8946
    %v9197 = vadd.f32 %v8339, %v9097
    %v9198 = vadd.f32 %v8340, %v9099
    %v9199 = vadd.f32 %v8341, %v8948
    %v9200 = vadd.f32 %v8342, %v8950
    %v9201 = vadd.f32 %v8343, %v9101
    %v9202 = vadd.f32 %v8344, %v9103
    %v9203 = vadd.f32 %v8345, %v8954
    %v9204 = vadd.f32 %v8346, %v8956
    %v9205 = vadd.f32 %v8347, %v9107
    %v9206 = vadd.f32 %v8348, %v9109
    %v9207 = vadd.f32 %v8349, %v8958
    %v9208 = vadd.f32 %v8350, %v8960
    %v9209 = vadd.f32 %v8351, %v9111
    %v9210 = vadd.f32 %v8352, %v9113
    %v9211 = vld [vmem:[%s7] sm:$0xf]
    %v9213 = vlaneseq
    %v9214 = vshrl.u32 %v9213, 7
    %v9215 = vsub.s32 0, %v9214
    %v9216 = vrot.slane %v9211, %v9215
    %v9217 = vlaneseq
    %v9218 = vshrl.u32 %v9217, 7
    %v9219 = vsub.s32 1, %v9218
    %v9220 = vrot.slane %v9211, %v9219
    %v9221 = vlaneseq
    %v9222 = vshrl.u32 %v9221, 7
    %v9223 = vsub.s32 2, %v9222
    %v9224 = vrot.slane %v9211, %v9223
    %v9225 = vlaneseq
    %v9226 = vshrl.u32 %v9225, 7
    %v9227 = vsub.s32 3, %v9226
    %v9228 = vrot.slane %v9211, %v9227
    %v9233 = vadd.f32 %v9115, %v9216
    %v9234 = vadd.f32 %v9116, %v9220
    %v9235 = vadd.f32 %v9117, %v9224
    %v9236 = vadd.f32 %v9118, %v9228
    %v9237 = vadd.f32 %v9119, %v9216
    %v9238 = vadd.f32 %v9120, %v9220
    %v9239 = vadd.f32 %v9121, %v9224
    %v9240 = vadd.f32 %v9122, %v9228
    %v9241 = vadd.f32 %v9123, %v9216
    %v9242 = vadd.f32 %v9124, %v9220
    %v9243 = vadd.f32 %v9125, %v9224
    %v9244 = vadd.f32 %v9126, %v9228
    %v9245 = vadd.f32 %v9127, %v9216
    %v9246 = vadd.f32 %v9128, %v9220
    %v9247 = vadd.f32 %v9129, %v9224
    %v9248 = vadd.f32 %v9130, %v9228
    %v9249 = vadd.f32 %v9131, %v9216
    %v9250 = vadd.f32 %v9132, %v9220
    %v9251 = vadd.f32 %v9133, %v9224
    %v9252 = vadd.f32 %v9134, %v9228
    %v9253 = vadd.f32 %v9135, %v9216
    %v9254 = vadd.f32 %v9136, %v9220
    %v9255 = vadd.f32 %v9137, %v9224
    %v9256 = vadd.f32 %v9138, %v9228
    %v9257 = vadd.f32 %v9139, %v9216
    %v9258 = vadd.f32 %v9140, %v9220
    %v9259 = vadd.f32 %v9141, %v9224
    %v9260 = vadd.f32 %v9142, %v9228
    %v9261 = vadd.f32 %v9143, %v9216
    %v9262 = vadd.f32 %v9144, %v9220
    %v9263 = vadd.f32 %v9145, %v9224
    %v9264 = vadd.f32 %v9146, %v9228
    %v9265 = vadd.f32 %v9147, %v9216
    %v9266 = vadd.f32 %v9148, %v9220
    %v9267 = vadd.f32 %v9149, %v9224
    %v9268 = vadd.f32 %v9150, %v9228
    %v9269 = vadd.f32 %v9151, %v9216
    %v9270 = vadd.f32 %v9152, %v9220
    %v9271 = vadd.f32 %v9153, %v9224
    %v9272 = vadd.f32 %v9154, %v9228
    %v9273 = vadd.f32 %v9155, %v9216
    %v9274 = vadd.f32 %v9156, %v9220
    %v9275 = vadd.f32 %v9157, %v9224
    %v9276 = vadd.f32 %v9158, %v9228
    %v9277 = vadd.f32 %v9159, %v9216
    %v9278 = vadd.f32 %v9160, %v9220
    %v9279 = vadd.f32 %v9161, %v9224
    %v9280 = vadd.f32 %v9162, %v9228
    %v9281 = vadd.f32 %v9163, %v9216
    %v9282 = vadd.f32 %v9164, %v9220
    %v9283 = vadd.f32 %v9165, %v9224
    %v9284 = vadd.f32 %v9166, %v9228
    %v9285 = vadd.f32 %v9167, %v9216
    %v9286 = vadd.f32 %v9168, %v9220
    %v9287 = vadd.f32 %v9169, %v9224
    %v9288 = vadd.f32 %v9170, %v9228
    %v9289 = vadd.f32 %v9171, %v9216
    %v9290 = vadd.f32 %v9172, %v9220
    %v9291 = vadd.f32 %v9173, %v9224
    %v9292 = vadd.f32 %v9174, %v9228
    %v9293 = vadd.f32 %v9175, %v9216
    %v9294 = vadd.f32 %v9176, %v9220
    %v9295 = vadd.f32 %v9177, %v9224
    %v9296 = vadd.f32 %v9178, %v9228
    %v9297 = vadd.f32 %v9179, %v9216
    %v9298 = vadd.f32 %v9180, %v9220
    %v9299 = vadd.f32 %v9181, %v9224
    %v9300 = vadd.f32 %v9182, %v9228
    %v9301 = vadd.f32 %v9183, %v9216
    %v9302 = vadd.f32 %v9184, %v9220
    %v9303 = vadd.f32 %v9185, %v9224
    %v9304 = vadd.f32 %v9186, %v9228
    %v9305 = vadd.f32 %v9187, %v9216
    %v9306 = vadd.f32 %v9188, %v9220
    %v9307 = vadd.f32 %v9189, %v9224
    %v9308 = vadd.f32 %v9190, %v9228
    %v9309 = vadd.f32 %v9191, %v9216
    %v9310 = vadd.f32 %v9192, %v9220
    %v9311 = vadd.f32 %v9193, %v9224
    %v9312 = vadd.f32 %v9194, %v9228
    %v9313 = vadd.f32 %v9195, %v9216
    %v9314 = vadd.f32 %v9196, %v9220
    %v9315 = vadd.f32 %v9197, %v9224
    %v9316 = vadd.f32 %v9198, %v9228
    %v9317 = vadd.f32 %v9199, %v9216
    %v9318 = vadd.f32 %v9200, %v9220
    %v9319 = vadd.f32 %v9201, %v9224
    %v9320 = vadd.f32 %v9202, %v9228
    %v9321 = vadd.f32 %v9203, %v9216
    %v9322 = vadd.f32 %v9204, %v9220
    %v9323 = vadd.f32 %v9205, %v9224
    %v9324 = vadd.f32 %v9206, %v9228
    %v9325 = vadd.f32 %v9207, %v9216
    %v9326 = vadd.f32 %v9208, %v9220
    %v9327 = vadd.f32 %v9209, %v9224
    %v9328 = vadd.f32 %v9210, %v9228
    %v9329 = vmax.f32 %v9233, 0.0
    %v9330 = vmax.f32 %v9234, 0.0
    %v9331 = vmax.f32 %v9235, 0.0
    %v9332 = vmax.f32 %v9236, 0.0
    %v9333 = vmax.f32 %v9237, 0.0
    %v9334 = vmax.f32 %v9238, 0.0
    %v9335 = vmax.f32 %v9239, 0.0
    %v9336 = vmax.f32 %v9240, 0.0
    %v9337 = vmax.f32 %v9241, 0.0
    %v9338 = vmax.f32 %v9242, 0.0
    %v9339 = vmax.f32 %v9243, 0.0
    %v9340 = vmax.f32 %v9244, 0.0
    %v9341 = vmax.f32 %v9245, 0.0
    %v9342 = vmax.f32 %v9246, 0.0
    %v9343 = vmax.f32 %v9247, 0.0
    %v9344 = vmax.f32 %v9248, 0.0
    %v9345 = vmax.f32 %v9249, 0.0
    %v9346 = vmax.f32 %v9250, 0.0
    %v9347 = vmax.f32 %v9251, 0.0
    %v9348 = vmax.f32 %v9252, 0.0
    %v9349 = vmax.f32 %v9253, 0.0
    %v9350 = vmax.f32 %v9254, 0.0
    %v9351 = vmax.f32 %v9255, 0.0
    %v9352 = vmax.f32 %v9256, 0.0
    %v9353 = vmax.f32 %v9257, 0.0
    %v9354 = vmax.f32 %v9258, 0.0
    %v9355 = vmax.f32 %v9259, 0.0
    %v9356 = vmax.f32 %v9260, 0.0
    %v9357 = vmax.f32 %v9261, 0.0
    %v9358 = vmax.f32 %v9262, 0.0
    %v9359 = vmax.f32 %v9263, 0.0
    %v9360 = vmax.f32 %v9264, 0.0
    %v9361 = vmax.f32 %v9265, 0.0
    %v9362 = vmax.f32 %v9266, 0.0
    %v9363 = vmax.f32 %v9267, 0.0
    %v9364 = vmax.f32 %v9268, 0.0
    %v9365 = vmax.f32 %v9269, 0.0
    %v9366 = vmax.f32 %v9270, 0.0
    %v9367 = vmax.f32 %v9271, 0.0
    %v9368 = vmax.f32 %v9272, 0.0
    %v9369 = vmax.f32 %v9273, 0.0
    %v9370 = vmax.f32 %v9274, 0.0
    %v9371 = vmax.f32 %v9275, 0.0
    %v9372 = vmax.f32 %v9276, 0.0
    %v9373 = vmax.f32 %v9277, 0.0
    %v9374 = vmax.f32 %v9278, 0.0
    %v9375 = vmax.f32 %v9279, 0.0
    %v9376 = vmax.f32 %v9280, 0.0
    %v9377 = vmax.f32 %v9281, 0.0
    %v9378 = vmax.f32 %v9282, 0.0
    %v9379 = vmax.f32 %v9283, 0.0
    %v9380 = vmax.f32 %v9284, 0.0
    %v9381 = vmax.f32 %v9285, 0.0
    %v9382 = vmax.f32 %v9286, 0.0
    %v9383 = vmax.f32 %v9287, 0.0
    %v9384 = vmax.f32 %v9288, 0.0
    %v9385 = vmax.f32 %v9289, 0.0
    %v9386 = vmax.f32 %v9290, 0.0
    %v9387 = vmax.f32 %v9291, 0.0
    %v9388 = vmax.f32 %v9292, 0.0
    %v9389 = vmax.f32 %v9293, 0.0
    %v9390 = vmax.f32 %v9294, 0.0
    %v9391 = vmax.f32 %v9295, 0.0
    %v9392 = vmax.f32 %v9296, 0.0
    %v9393 = vmax.f32 %v9297, 0.0
    %v9394 = vmax.f32 %v9298, 0.0
    %v9395 = vmax.f32 %v9299, 0.0
    %v9396 = vmax.f32 %v9300, 0.0
    %v9397 = vmax.f32 %v9301, 0.0
    %v9398 = vmax.f32 %v9302, 0.0
    %v9399 = vmax.f32 %v9303, 0.0
    %v9400 = vmax.f32 %v9304, 0.0
    %v9401 = vmax.f32 %v9305, 0.0
    %v9402 = vmax.f32 %v9306, 0.0
    %v9403 = vmax.f32 %v9307, 0.0
    %v9404 = vmax.f32 %v9308, 0.0
    %v9405 = vmax.f32 %v9309, 0.0
    %v9406 = vmax.f32 %v9310, 0.0
    %v9407 = vmax.f32 %v9311, 0.0
    %v9408 = vmax.f32 %v9312, 0.0
    %v9409 = vmax.f32 %v9313, 0.0
    %v9410 = vmax.f32 %v9314, 0.0
    %v9411 = vmax.f32 %v9315, 0.0
    %v9412 = vmax.f32 %v9316, 0.0
    %v9413 = vmax.f32 %v9317, 0.0
    %v9414 = vmax.f32 %v9318, 0.0
    %v9415 = vmax.f32 %v9319, 0.0
    %v9416 = vmax.f32 %v9320, 0.0
    %v9417 = vmax.f32 %v9321, 0.0
    %v9418 = vmax.f32 %v9322, 0.0
    %v9419 = vmax.f32 %v9323, 0.0
    %v9420 = vmax.f32 %v9324, 0.0
    %v9421 = vmax.f32 %v9325, 0.0
    %v9422 = vmax.f32 %v9326, 0.0
    %v9423 = vmax.f32 %v9327, 0.0
    %v9424 = vmax.f32 %v9328, 0.0
    %v9425 = vadd.f32 %v9329, %v9330
    %v9426 = vadd.f32 %v9425, %v9331
    %v9427 = vadd.f32 %v9426, %v9332
    %9428 = vadd.xlane.f32.xlu0 %v9427
    %v9429 = vpop.xlane.xlu0 %9428
    %v9430 = vadd.f32 %v9333, %v9334
    %v9431 = vadd.f32 %v9430, %v9335
    %v9432 = vadd.f32 %v9431, %v9336
    %9433 = vadd.xlane.f32.xlu0 %v9432
    %v9434 = vpop.xlane.xlu0 %9433
    %v9435 = vadd.f32 %v9337, %v9338
    %v9436 = vadd.f32 %v9435, %v9339
    %v9437 = vadd.f32 %v9436, %v9340
    %9438 = vadd.xlane.f32.xlu0 %v9437
    %v9439 = vpop.xlane.xlu0 %9438
    %v9440 = vadd.f32 %v9341, %v9342
    %v9441 = vadd.f32 %v9440, %v9343
    %v9442 = vadd.f32 %v9441, %v9344
    %9443 = vadd.xlane.f32.xlu0 %v9442
    %v9444 = vpop.xlane.xlu0 %9443
    %v9445 = vadd.f32 %v9345, %v9346
    %v9446 = vadd.f32 %v9445, %v9347
    %v9447 = vadd.f32 %v9446, %v9348
    %9448 = vadd.xlane.f32.xlu0 %v9447
    %v9449 = vpop.xlane.xlu0 %9448
    %v9450 = vadd.f32 %v9349, %v9350
    %v9451 = vadd.f32 %v9450, %v9351
    %v9452 = vadd.f32 %v9451, %v9352
    %9453 = vadd.xlane.f32.xlu0 %v9452
    %v9454 = vpop.xlane.xlu0 %9453
    %v9455 = vadd.f32 %v9353, %v9354
    %v9456 = vadd.f32 %v9455, %v9355
    %v9457 = vadd.f32 %v9456, %v9356
    %9458 = vadd.xlane.f32.xlu0 %v9457
    %v9459 = vpop.xlane.xlu0 %9458
    %v9460 = vadd.f32 %v9357, %v9358
    %v9461 = vadd.f32 %v9460, %v9359
    %v9462 = vadd.f32 %v9461, %v9360
    %9463 = vadd.xlane.f32.xlu0 %v9462
    %v9464 = vpop.xlane.xlu0 %9463
    %v9465 = vadd.f32 %v9361, %v9362
    %v9466 = vadd.f32 %v9465, %v9363
    %v9467 = vadd.f32 %v9466, %v9364
    %9468 = vadd.xlane.f32.xlu0 %v9467
    %v9469 = vpop.xlane.xlu0 %9468
    %v9470 = vadd.f32 %v9365, %v9366
    %v9471 = vadd.f32 %v9470, %v9367
    %v9472 = vadd.f32 %v9471, %v9368
    %9473 = vadd.xlane.f32.xlu0 %v9472
    %v9474 = vpop.xlane.xlu0 %9473
    %v9475 = vadd.f32 %v9369, %v9370
    %v9476 = vadd.f32 %v9475, %v9371
    %v9477 = vadd.f32 %v9476, %v9372
    %9478 = vadd.xlane.f32.xlu0 %v9477
    %v9479 = vpop.xlane.xlu0 %9478
    %v9480 = vadd.f32 %v9373, %v9374
    %v9481 = vadd.f32 %v9480, %v9375
    %v9482 = vadd.f32 %v9481, %v9376
    %9483 = vadd.xlane.f32.xlu0 %v9482
    %v9484 = vpop.xlane.xlu0 %9483
    %v9485 = vadd.f32 %v9377, %v9378
    %v9486 = vadd.f32 %v9485, %v9379
    %v9487 = vadd.f32 %v9486, %v9380
    %9488 = vadd.xlane.f32.xlu0 %v9487
    %v9489 = vpop.xlane.xlu0 %9488
    %v9490 = vadd.f32 %v9381, %v9382
    %v9491 = vadd.f32 %v9490, %v9383
    %v9492 = vadd.f32 %v9491, %v9384
    %9493 = vadd.xlane.f32.xlu0 %v9492
    %v9494 = vpop.xlane.xlu0 %9493
    %v9495 = vadd.f32 %v9385, %v9386
    %v9496 = vadd.f32 %v9495, %v9387
    %v9497 = vadd.f32 %v9496, %v9388
    %9498 = vadd.xlane.f32.xlu0 %v9497
    %v9499 = vpop.xlane.xlu0 %9498
    %v9500 = vadd.f32 %v9389, %v9390
    %v9501 = vadd.f32 %v9500, %v9391
    %v9502 = vadd.f32 %v9501, %v9392
    %9503 = vadd.xlane.f32.xlu0 %v9502
    %v9504 = vpop.xlane.xlu0 %9503
    %v9505 = vadd.f32 %v9393, %v9394
    %v9506 = vadd.f32 %v9505, %v9395
    %v9507 = vadd.f32 %v9506, %v9396
    %9508 = vadd.xlane.f32.xlu0 %v9507
    %v9509 = vpop.xlane.xlu0 %9508
    %v9510 = vadd.f32 %v9397, %v9398
    %v9511 = vadd.f32 %v9510, %v9399
    %v9512 = vadd.f32 %v9511, %v9400
    %9513 = vadd.xlane.f32.xlu0 %v9512
    %v9514 = vpop.xlane.xlu0 %9513
    %v9515 = vadd.f32 %v9401, %v9402
    %v9516 = vadd.f32 %v9515, %v9403
    %v9517 = vadd.f32 %v9516, %v9404
    %9518 = vadd.xlane.f32.xlu0 %v9517
    %v9519 = vpop.xlane.xlu0 %9518
    %v9520 = vadd.f32 %v9405, %v9406
    %v9521 = vadd.f32 %v9520, %v9407
    %v9522 = vadd.f32 %v9521, %v9408
    %9523 = vadd.xlane.f32.xlu0 %v9522
    %v9524 = vpop.xlane.xlu0 %9523
    %v9525 = vadd.f32 %v9409, %v9410
    %v9526 = vadd.f32 %v9525, %v9411
    %v9527 = vadd.f32 %v9526, %v9412
    %9528 = vadd.xlane.f32.xlu0 %v9527
    %v9529 = vpop.xlane.xlu0 %9528
    %v9530 = vadd.f32 %v9413, %v9414
    %v9531 = vadd.f32 %v9530, %v9415
    %v9532 = vadd.f32 %v9531, %v9416
    %9533 = vadd.xlane.f32.xlu0 %v9532
    %v9534 = vpop.xlane.xlu0 %9533
    %v9535 = vadd.f32 %v9417, %v9418
    %v9536 = vadd.f32 %v9535, %v9419
    %v9537 = vadd.f32 %v9536, %v9420
    %9538 = vadd.xlane.f32.xlu0 %v9537
    %v9539 = vpop.xlane.xlu0 %9538
    %vm9540 = vcmask 1041408
    %v9541 = vsel %vm9540, %v9421, 0.0
    %v9542 = vsel %vm9540, %v9422, 0.0
    %v9543 = vadd.f32 %v9541, %v9542
    %v9544 = vsel %vm9540, %v9423, 0.0
    %v9545 = vadd.f32 %v9543, %v9544
    %v9546 = vsel %vm9540, %v9424, 0.0
    %v9547 = vadd.f32 %v9545, %v9546
    %9548 = vadd.xlane.f32.xlu0 %v9547
    %v9549 = vpop.xlane.xlu0 %9548
    %v9550 = vld [vmem:[%s1] sm:$0xff]
    %v9551 = vld [vmem:[%s1 + $0x8] sm:$0xff]
    %v9552 = vld [vmem:[%s1 + $0x10] sm:$0xff]
    %v9553 = vld [vmem:[%s1 + $0x18] sm:$0xff]
    %v9554 = vld [vmem:[%s1 + $0x20] sm:$0xff]
    %v9555 = vld [vmem:[%s1 + $0x28] sm:$0xff]
    %v9556 = vld [vmem:[%s1 + $0x30] sm:$0xff]
    %v9557 = vld [vmem:[%s1 + $0x38] sm:$0xff]
    %v9558 = vld [vmem:[%s1 + $0x40] sm:$0xff]
    %v9559 = vld [vmem:[%s1 + $0x48] sm:$0xff]
    %v9560 = vld [vmem:[%s1 + $0x50] sm:$0xff]
    %v9561 = vld [vmem:[%s1 + $0x58] sm:$0xff]
    %v9562 = vld [vmem:[%s1 + $0x60] sm:$0xff]
    %v9563 = vld [vmem:[%s1 + $0x68] sm:$0xff]
    %v9564 = vld [vmem:[%s1 + $0x70] sm:$0xff]
    %v9565 = vld [vmem:[%s1 + $0x78] sm:$0xff]
    %v9566 = vld [vmem:[%s1 + $0x80] sm:$0xff]
    %v9567 = vld [vmem:[%s1 + $0x88] sm:$0xff]
    %v9568 = vld [vmem:[%s1 + $0x90] sm:$0xff]
    %v9569 = vld [vmem:[%s1 + $0x98] sm:$0xff]
    %v9570 = vld [vmem:[%s1 + $0xa0] sm:$0xff]
    %v9571 = vld [vmem:[%s1 + $0xa8] sm:$0xff]
    %v9572 = vld [vmem:[%s1 + $0xb0] sm:$0xff]
    %v9573 = vld [vmem:[%s1 + $0xb8] sm:$0xff]
    %v9574 = vld [vmem:[%s1 + $0xc0] sm:$0xff]
    %v9575 = vld [vmem:[%s1 + $0xc8] sm:$0xff]
    %v9576 = vld [vmem:[%s1 + $0xd0] sm:$0xff]
    %v9577 = vld [vmem:[%s1 + $0xd8] sm:$0xff]
    %v9578 = vld [vmem:[%s1 + $0xe0] sm:$0xff]
    %v9579 = vld [vmem:[%s1 + $0xe8] sm:$0xff]
    %v9580 = vld [vmem:[%s1 + $0xf0] sm:$0xff]
    %v9581 = vld [vmem:[%s1 + $0xf8] sm:$0xff]
    %v9582 = vld [vmem:[%s1 + $0x100] sm:$0xff]
    %v9583 = vld [vmem:[%s1 + $0x108] sm:$0xff]
    %v9584 = vld [vmem:[%s1 + $0x110] sm:$0xff]
    %v9585 = vld [vmem:[%s1 + $0x118] sm:$0xff]
    %v9586 = vld [vmem:[%s1 + $0x120] sm:$0xff]
    %v9587 = vld [vmem:[%s1 + $0x128] sm:$0xff]
    %v9588 = vld [vmem:[%s1 + $0x130] sm:$0xff]
    %v9589 = vld [vmem:[%s1 + $0x138] sm:$0xff]
    %v9590 = vld [vmem:[%s1 + $0x140] sm:$0xff]
    %v9591 = vld [vmem:[%s1 + $0x148] sm:$0xff]
    %v9592 = vld [vmem:[%s1 + $0x150] sm:$0xff]
    %v9593 = vld [vmem:[%s1 + $0x158] sm:$0xff]
    %v9594 = vld [vmem:[%s1 + $0x160] sm:$0xff]
    %v9595 = vld [vmem:[%s1 + $0x168] sm:$0xff]
    %v9596 = vld [vmem:[%s1 + $0x170] sm:$0xff]
    %v9597 = vld [vmem:[%s1 + $0x178] sm:$0xff]
    %v9598 = vunpack.c.l.bf16 %v9550
    %v9599 = vunpack.c.h.bf16 %v9550
    %v9600 = vunpack.c.l.bf16 %v9551
    %v9601 = vunpack.c.h.bf16 %v9551
    %v9602 = vunpack.c.l.bf16 %v9552
    %v9603 = vunpack.c.h.bf16 %v9552
    %v9604 = vunpack.c.l.bf16 %v9553
    %v9605 = vunpack.c.h.bf16 %v9553
    %v9606 = vunpack.c.l.bf16 %v9554
    %v9607 = vunpack.c.h.bf16 %v9554
    %v9608 = vunpack.c.l.bf16 %v9555
    %v9609 = vunpack.c.h.bf16 %v9555
    %v9610 = vunpack.c.l.bf16 %v9556
    %v9611 = vunpack.c.h.bf16 %v9556
    %v9612 = vunpack.c.l.bf16 %v9557
    %v9613 = vunpack.c.h.bf16 %v9557
    %v9614 = vunpack.c.l.bf16 %v9558
    %v9615 = vunpack.c.h.bf16 %v9558
    %v9616 = vunpack.c.l.bf16 %v9559
    %v9617 = vunpack.c.h.bf16 %v9559
    %v9618 = vunpack.c.l.bf16 %v9560
    %v9619 = vunpack.c.h.bf16 %v9560
    %v9620 = vunpack.c.l.bf16 %v9561
    %v9621 = vunpack.c.h.bf16 %v9561
    %v9622 = vunpack.c.l.bf16 %v9562
    %v9623 = vunpack.c.h.bf16 %v9562
    %v9624 = vunpack.c.l.bf16 %v9563
    %v9625 = vunpack.c.h.bf16 %v9563
    %v9626 = vunpack.c.l.bf16 %v9564
    %v9627 = vunpack.c.h.bf16 %v9564
    %v9628 = vunpack.c.l.bf16 %v9565
    %v9629 = vunpack.c.h.bf16 %v9565
    %v9630 = vunpack.c.l.bf16 %v9566
    %v9631 = vunpack.c.h.bf16 %v9566
    %v9632 = vunpack.c.l.bf16 %v9567
    %v9633 = vunpack.c.h.bf16 %v9567
    %v9634 = vunpack.c.l.bf16 %v9568
    %v9635 = vunpack.c.h.bf16 %v9568
    %v9636 = vunpack.c.l.bf16 %v9569
    %v9637 = vunpack.c.h.bf16 %v9569
    %v9638 = vunpack.c.l.bf16 %v9570
    %v9639 = vunpack.c.h.bf16 %v9570
    %v9640 = vunpack.c.l.bf16 %v9571
    %v9641 = vunpack.c.h.bf16 %v9571
    %v9642 = vunpack.c.l.bf16 %v9572
    %v9643 = vunpack.c.h.bf16 %v9572
    %v9644 = vunpack.c.l.bf16 %v9573
    %v9645 = vunpack.c.h.bf16 %v9573
    %v9646 = vunpack.c.l.bf16 %v9574
    %v9647 = vunpack.c.h.bf16 %v9574
    %v9648 = vunpack.c.l.bf16 %v9575
    %v9649 = vunpack.c.h.bf16 %v9575
    %v9650 = vunpack.c.l.bf16 %v9576
    %v9651 = vunpack.c.h.bf16 %v9576
    %v9652 = vunpack.c.l.bf16 %v9577
    %v9653 = vunpack.c.h.bf16 %v9577
    %v9654 = vunpack.c.l.bf16 %v9578
    %v9655 = vunpack.c.h.bf16 %v9578
    %v9656 = vunpack.c.l.bf16 %v9579
    %v9657 = vunpack.c.h.bf16 %v9579
    %v9658 = vunpack.c.l.bf16 %v9580
    %v9659 = vunpack.c.h.bf16 %v9580
    %v9660 = vunpack.c.l.bf16 %v9581
    %v9661 = vunpack.c.h.bf16 %v9581
    %v9662 = vunpack.c.l.bf16 %v9582
    %v9663 = vunpack.c.h.bf16 %v9582
    %v9664 = vunpack.c.l.bf16 %v9583
    %v9665 = vunpack.c.h.bf16 %v9583
    %v9666 = vunpack.c.l.bf16 %v9584
    %v9667 = vunpack.c.h.bf16 %v9584
    %v9668 = vunpack.c.l.bf16 %v9585
    %v9669 = vunpack.c.h.bf16 %v9585
    %v9670 = vunpack.c.l.bf16 %v9586
    %v9671 = vunpack.c.h.bf16 %v9586
    %v9672 = vunpack.c.l.bf16 %v9587
    %v9673 = vunpack.c.h.bf16 %v9587
    %v9674 = vunpack.c.l.bf16 %v9588
    %v9675 = vunpack.c.h.bf16 %v9588
    %v9676 = vunpack.c.l.bf16 %v9589
    %v9677 = vunpack.c.h.bf16 %v9589
    %v9678 = vunpack.c.l.bf16 %v9590
    %v9679 = vunpack.c.h.bf16 %v9590
    %v9680 = vunpack.c.l.bf16 %v9591
    %v9681 = vunpack.c.h.bf16 %v9591
    %v9682 = vunpack.c.l.bf16 %v9592
    %v9683 = vunpack.c.h.bf16 %v9592
    %v9684 = vunpack.c.l.bf16 %v9593
    %v9685 = vunpack.c.h.bf16 %v9593
    %v9686 = vunpack.c.l.bf16 %v9594
    %v9687 = vunpack.c.h.bf16 %v9594
    %v9688 = vunpack.c.l.bf16 %v9595
    %v9689 = vunpack.c.h.bf16 %v9595
    %v9690 = vunpack.c.l.bf16 %v9596
    %v9691 = vunpack.c.h.bf16 %v9596
    %v9692 = vunpack.c.l.bf16 %v9597
    %v9693 = vunpack.c.h.bf16 %v9597
    %v9694 = vmul.f32 %v9598, %v9429
    %v9695 = vmul.f32 %v9599, %v9429
    %v9696 = vmul.f32 %v9600, %v9429
    %v9697 = vmul.f32 %v9601, %v9429
    %v9698 = vmul.f32 %v9602, %v9434
    %v9699 = vmul.f32 %v9603, %v9434
    %v9700 = vmul.f32 %v9604, %v9434
    %v9701 = vmul.f32 %v9605, %v9434
    %v9702 = vmul.f32 %v9606, %v9439
    %v9703 = vmul.f32 %v9607, %v9439
    %v9704 = vmul.f32 %v9608, %v9439
    %v9705 = vmul.f32 %v9609, %v9439
    %v9706 = vmul.f32 %v9610, %v9444
    %v9707 = vmul.f32 %v9611, %v9444
    %v9708 = vmul.f32 %v9612, %v9444
    %v9709 = vmul.f32 %v9613, %v9444
    %v9710 = vmul.f32 %v9614, %v9449
    %v9711 = vmul.f32 %v9615, %v9449
    %v9712 = vmul.f32 %v9616, %v9449
    %v9713 = vmul.f32 %v9617, %v9449
    %v9714 = vmul.f32 %v9618, %v9454
    %v9715 = vmul.f32 %v9619, %v9454
    %v9716 = vmul.f32 %v9620, %v9454
    %v9717 = vmul.f32 %v9621, %v9454
    %v9718 = vmul.f32 %v9622, %v9459
    %v9719 = vmul.f32 %v9623, %v9459
    %v9720 = vmul.f32 %v9624, %v9459
    %v9721 = vmul.f32 %v9625, %v9459
    %v9722 = vmul.f32 %v9626, %v9464
    %v9723 = vmul.f32 %v9627, %v9464
    %v9724 = vmul.f32 %v9628, %v9464
    %v9725 = vmul.f32 %v9629, %v9464
    %v9726 = vmul.f32 %v9630, %v9469
    %v9727 = vmul.f32 %v9631, %v9469
    %v9728 = vmul.f32 %v9632, %v9469
    %v9729 = vmul.f32 %v9633, %v9469
    %v9730 = vmul.f32 %v9634, %v9474
    %v9731 = vmul.f32 %v9635, %v9474
    %v9732 = vmul.f32 %v9636, %v9474
    %v9733 = vmul.f32 %v9637, %v9474
    %v9734 = vmul.f32 %v9638, %v9479
    %v9735 = vmul.f32 %v9639, %v9479
    %v9736 = vmul.f32 %v9640, %v9479
    %v9737 = vmul.f32 %v9641, %v9479
    %v9738 = vmul.f32 %v9642, %v9484
    %v9739 = vmul.f32 %v9643, %v9484
    %v9740 = vmul.f32 %v9644, %v9484
    %v9741 = vmul.f32 %v9645, %v9484
    %v9742 = vmul.f32 %v9646, %v9489
    %v9743 = vmul.f32 %v9647, %v9489
    %v9744 = vmul.f32 %v9648, %v9489
    %v9745 = vmul.f32 %v9649, %v9489
    %v9746 = vmul.f32 %v9650, %v9494
    %v9747 = vmul.f32 %v9651, %v9494
    %v9748 = vmul.f32 %v9652, %v9494
    %v9749 = vmul.f32 %v9653, %v9494
    %v9750 = vmul.f32 %v9654, %v9499
    %v9751 = vmul.f32 %v9655, %v9499
    %v9752 = vmul.f32 %v9656, %v9499
    %v9753 = vmul.f32 %v9657, %v9499
    %v9754 = vmul.f32 %v9658, %v9504
    %v9755 = vmul.f32 %v9659, %v9504
    %v9756 = vmul.f32 %v9660, %v9504
    %v9757 = vmul.f32 %v9661, %v9504
    %v9758 = vmul.f32 %v9662, %v9509
    %v9759 = vmul.f32 %v9663, %v9509
    %v9760 = vmul.f32 %v9664, %v9509
    %v9761 = vmul.f32 %v9665, %v9509
    %v9762 = vmul.f32 %v9666, %v9514
    %v9763 = vmul.f32 %v9667, %v9514
    %v9764 = vmul.f32 %v9668, %v9514
    %v9765 = vmul.f32 %v9669, %v9514
    %v9766 = vmul.f32 %v9670, %v9519
    %v9767 = vmul.f32 %v9671, %v9519
    %v9768 = vmul.f32 %v9672, %v9519
    %v9769 = vmul.f32 %v9673, %v9519
    %v9770 = vmul.f32 %v9674, %v9524
    %v9771 = vmul.f32 %v9675, %v9524
    %v9772 = vmul.f32 %v9676, %v9524
    %v9773 = vmul.f32 %v9677, %v9524
    %v9774 = vmul.f32 %v9678, %v9529
    %v9775 = vmul.f32 %v9679, %v9529
    %v9776 = vmul.f32 %v9680, %v9529
    %v9777 = vmul.f32 %v9681, %v9529
    %v9778 = vmul.f32 %v9682, %v9534
    %v9779 = vmul.f32 %v9683, %v9534
    %v9780 = vmul.f32 %v9684, %v9534
    %v9781 = vmul.f32 %v9685, %v9534
    %v9782 = vmul.f32 %v9686, %v9539
    %v9783 = vmul.f32 %v9687, %v9539
    %v9784 = vmul.f32 %v9688, %v9539
    %v9785 = vmul.f32 %v9689, %v9539
    %v9786 = vmul.f32 %v9690, %v9549
    %v9787 = vmul.f32 %v9691, %v9549
    %v9788 = vmul.f32 %v9692, %v9549
    %v9789 = vmul.f32 %v9693, %v9549
    %v9790 = vld [vmem:[%s3] sm:$0xf]
    %v9793 = vunpack.c.l.s4 1983009808
    %v9794 = vunpack.c.0.s8 %v9793
    %v9795 = vlaneseq
    %v9796 = vshrl.u32 %v9795, 7
    %v9797 = vsub.s32 %v9794, %v9796
    %v9798 = vrot.slane %v9790, %v9797
    %v9799 = vcombine.high %v9798, %v9798
    %vm9801 = vcmask 474112
    %v9802 = vsel %vm9801, %v9799, 0
    %v9805 = vsel %vm9540, %v9786, 0
    %v9808 = vsel %vm9540, %v9787, 0
    %v9811 = vsel %vm9540, %v9788, 0
    %v9814 = vsel %vm9540, %v9789, 0
    %9816 = vmatprep.subr.mxu0 %v9695
    %9817 = vmatpush1.msra.mxu0 %v9694
    %9818 = vmatprep.subr.mxu0 %v9699
    %9819 = vmatpush1.msra.mxu0 %v9698
    %9820 = vmatprep.subr.mxu0 %v9703
    %9821 = vmatpush1.msra.mxu0 %v9702
    %9822 = vmatprep.subr.mxu0 %v9707
    %9823 = vmatpush1.msra.mxu0 %v9706
    %9824 = vmatprep.subr.mxu0 %v9711
    %9825 = vmatpush1.msra.mxu0 %v9710
    %9826 = vmatprep.subr.mxu0 %v9715
    %9827 = vmatpush1.msra.mxu0 %v9714
    %9828 = vmatprep.subr.mxu0 %v9719
    %9829 = vmatpush1.msra.mxu0 %v9718
    %9830 = vmatprep.subr.mxu0 %v9723
    %9831 = vmatpush1.msra.mxu0 %v9722
    %9832 = vmatprep.subr.mxu0 %v9727
    %9833 = vmatpush1.msra.mxu0 %v9726
    %9834 = vmatprep.subr.mxu0 %v9731
    %9835 = vmatpush1.msra.mxu0 %v9730
    %9836 = vmatprep.subr.mxu0 %v9735
    %9837 = vmatpush1.msra.mxu0 %v9734
    %9838 = vmatprep.subr.mxu0 %v9739
    %9839 = vmatpush1.msra.mxu0 %v9738
    %9840 = vmatprep.subr.mxu0 %v9743
    %9841 = vmatpush1.msra.mxu0 %v9742
    %9842 = vmatprep.subr.mxu0 %v9747
    %9843 = vmatpush1.msra.mxu0 %v9746
    %9844 = vmatprep.subr.mxu0 %v9751
    %9845 = vmatpush1.msra.mxu0 %v9750
    %9846 = vmatprep.subr.mxu0 %v9755
    %9847 = vmatpush1.msra.mxu0 %v9754
    %9848 = vmatprep.subr.mxu0 %v9759
    %9849 = vmatpush1.msra.mxu0 %v9758
    %9850 = vmatprep.subr.mxu0 %v9763
    %9851 = vmatpush1.msra.mxu0 %v9762
    %9852 = vmatprep.subr.mxu0 %v9767
    %9853 = vmatpush1.msra.mxu0 %v9766
    %9854 = vmatprep.subr.mxu0 %v9771
    %9855 = vmatpush1.msra.mxu0 %v9770
    %9856 = vmatprep.subr.mxu0 %v9775
    %9857 = vmatpush1.msra.mxu0 %v9774
    %9858 = vmatprep.subr.mxu0 %v9779
    %9859 = vmatpush1.msra.mxu0 %v9778
    %9860 = vmatprep.subr.mxu0 %v9783
    %9861 = vmatpush1.msra.mxu0 %v9782
    %9862 = vmatprep.subr.mxu0 %v9808
    %9863 = vmatpush1.msra.mxu0 %v9805
    %9864 = vmatprep.subr.mxu0 0.0
    %9865 = vmatpush1.msra.mxu0 0.0
    %9866 = vmatprep.subr.mxu0 0.0
    %9867 = vmatpush1.msra.mxu0 0.0
    %9868 = vmatprep.subr.mxu0 0.0
    %9869 = vmatpush1.msra.mxu0 0.0
    %9870 = vmatprep.subr.mxu0 0.0
    %9871 = vmatpush1.msra.mxu0 0.0
    %9872 = vmatprep.subr.mxu0 0.0
    %9873 = vmatpush1.msra.mxu0 0.0
    %9874 = vmatprep.subr.mxu0 0.0
    %9875 = vmatpush1.msra.mxu0 0.0
    %9876 = vmatprep.subr.mxu0 0.0
    %9877 = vmatpush1.msra.mxu0 0.0
    %9878 = vmatprep.subr.mxu0 0.0
    %9879 = vmatpush1.msra.mxu0 0.0
    %9880 = vmatprep.mubr.f32.mxu0 %v9802
    %9881 = vmatmul.mubr.f32.gmra.mrb[0].mxu0 %v9798
    %v9882 = vpop.f32.mrb[0].mxu0
    %v9883 = vadd.f32 0.0, %v9882
    %v9884 = vpop.f32.mrb[0].mxu0
    %v9885 = vadd.f32 0.0, %v9884
    %9886 = vdwg.mxu0
    %9887 = vmatprep.subr.mxu0 %v9697
    %9888 = vmatpush1.msra.mxu0 %v9696
    %9889 = vmatprep.subr.mxu0 %v9701
    %9890 = vmatpush1.msra.mxu0 %v9700
    %9891 = vmatprep.subr.mxu0 %v9705
    %9892 = vmatpush1.msra.mxu0 %v9704
    %9893 = vmatprep.subr.mxu0 %v9709
    %9894 = vmatpush1.msra.mxu0 %v9708
    %9895 = vmatprep.subr.mxu0 %v9713
    %9896 = vmatpush1.msra.mxu0 %v9712
    %9897 = vmatprep.subr.mxu0 %v9717
    %9898 = vmatpush1.msra.mxu0 %v9716
    %9899 = vmatprep.subr.mxu0 %v9721
    %9900 = vmatpush1.msra.mxu0 %v9720
    %9901 = vmatprep.subr.mxu0 %v9725
    %9902 = vmatpush1.msra.mxu0 %v9724
    %9903 = vmatprep.subr.mxu0 %v9729
    %9904 = vmatpush1.msra.mxu0 %v9728
    %9905 = vmatprep.subr.mxu0 %v9733
    %9906 = vmatpush1.msra.mxu0 %v9732
    %9907 = vmatprep.subr.mxu0 %v9737
    %9908 = vmatpush1.msra.mxu0 %v9736
    %9909 = vmatprep.subr.mxu0 %v9741
    %9910 = vmatpush1.msra.mxu0 %v9740
    %9911 = vmatprep.subr.mxu0 %v9745
    %9912 = vmatpush1.msra.mxu0 %v9744
    %9913 = vmatprep.subr.mxu0 %v9749
    %9914 = vmatpush1.msra.mxu0 %v9748
    %9915 = vmatprep.subr.mxu0 %v9753
    %9916 = vmatpush1.msra.mxu0 %v9752
    %9917 = vmatprep.subr.mxu0 %v9757
    %9918 = vmatpush1.msra.mxu0 %v9756
    %9919 = vmatprep.subr.mxu0 %v9761
    %9920 = vmatpush1.msra.mxu0 %v9760
    %9921 = vmatprep.subr.mxu0 %v9765
    %9922 = vmatpush1.msra.mxu0 %v9764
    %9923 = vmatprep.subr.mxu0 %v9769
    %9924 = vmatpush1.msra.mxu0 %v9768
    %9925 = vmatprep.subr.mxu0 %v9773
    %9926 = vmatpush1.msra.mxu0 %v9772
    %9927 = vmatprep.subr.mxu0 %v9777
    %9928 = vmatpush1.msra.mxu0 %v9776
    %9929 = vmatprep.subr.mxu0 %v9781
    %9930 = vmatpush1.msra.mxu0 %v9780
    %9931 = vmatprep.subr.mxu0 %v9785
    %9932 = vmatpush1.msra.mxu0 %v9784
    %9933 = vmatprep.subr.mxu0 %v9814
    %9934 = vmatpush1.msra.mxu0 %v9811
    %9935 = vmatprep.subr.mxu0 0.0
    %9936 = vmatpush1.msra.mxu0 0.0
    %9937 = vmatprep.subr.mxu0 0.0
    %9938 = vmatpush1.msra.mxu0 0.0
    %9939 = vmatprep.subr.mxu0 0.0
    %9940 = vmatpush1.msra.mxu0 0.0
    %9941 = vmatprep.subr.mxu0 0.0
    %9942 = vmatpush1.msra.mxu0 0.0
    %9943 = vmatprep.subr.mxu0 0.0
    %9944 = vmatpush1.msra.mxu0 0.0
    %9945 = vmatprep.subr.mxu0 0.0
    %9946 = vmatpush1.msra.mxu0 0.0
    %9947 = vmatprep.subr.mxu0 0.0
    %9948 = vmatpush1.msra.mxu0 0.0
    %9949 = vmatprep.subr.mxu0 0.0
    %9950 = vmatpush1.msra.mxu0 0.0
    %9951 = vmatprep.mubr.f32.mxu0 %v9802
    %9952 = vmatmul.mubr.f32.gmra.mrb[0].mxu0 %v9798
    %v9953 = vpop.f32.mrb[0].mxu0
    %v9954 = vadd.f32 0.0, %v9953
    %v9955 = vpop.f32.mrb[0].mxu0
    %v9956 = vadd.f32 0.0, %v9955
    %9957 = vdwg.mxu0
    %v9958 = vpack.c.bf16 %v9883, %v9883
    %v9959 = vpack.c.bf16 %v9885, %v9885
    %v9960 = vpack.c.bf16 %v9954, %v9954
    %v9961 = vpack.c.bf16 %v9956, %v9956
    %v9962 = vld [vmem:[%s8] sm:$0xf]
    %v9963 = vld [vmem:[%s8 + $0x4] sm:$0xf]
    %v9964 = vld [vmem:[%s8 + $0x8] sm:$0xf]
    %v9965 = vld [vmem:[%s8 + $0xc] sm:$0xf]
    %v9966 = vld [vmem:[%s8 + $0x10] sm:$0xf]
    %v9967 = vld [vmem:[%s8 + $0x14] sm:$0xf]
    %v9968 = vld [vmem:[%s8 + $0x18] sm:$0xf]
    %v9969 = vld [vmem:[%s8 + $0x1c] sm:$0xf]
    %v9970 = vld [vmem:[%s8 + $0x20] sm:$0xf]
    %v9971 = vld [vmem:[%s8 + $0x24] sm:$0xf]
    %v9972 = vld [vmem:[%s8 + $0x28] sm:$0xf]
    %v9973 = vld [vmem:[%s8 + $0x2c] sm:$0xf]
    %v9974 = vld [vmem:[%s8 + $0x30] sm:$0xf]
    %v9975 = vld [vmem:[%s8 + $0x34] sm:$0xf]
    %v9976 = vld [vmem:[%s8 + $0x38] sm:$0xf]
    %v9977 = vld [vmem:[%s8 + $0x3c] sm:$0xf]
    %v9978 = vld [vmem:[%s8 + $0x40] sm:$0xf]
    %v9979 = vld [vmem:[%s8 + $0x44] sm:$0xf]
    %v9980 = vld [vmem:[%s8 + $0x48] sm:$0xf]
    %v9981 = vld [vmem:[%s8 + $0x4c] sm:$0xf]
    %v9982 = vld [vmem:[%s8 + $0x50] sm:$0xf]
    %v9983 = vld [vmem:[%s8 + $0x54] sm:$0xf]
    %v9984 = vld [vmem:[%s8 + $0x58] sm:$0xf]
    %v9985 = vld [vmem:[%s8 + $0x5c] sm:$0xf]
    %v9986 = vld [vmem:[%s8 + $0x60] sm:$0xf]
    %v9987 = vld [vmem:[%s8 + $0x64] sm:$0xf]
    %v9988 = vld [vmem:[%s8 + $0x68] sm:$0xf]
    %v9989 = vld [vmem:[%s8 + $0x6c] sm:$0xf]
    %v9990 = vld [vmem:[%s8 + $0x70] sm:$0xf]
    %v9991 = vld [vmem:[%s8 + $0x74] sm:$0xf]
    %v9992 = vld [vmem:[%s8 + $0x78] sm:$0xf]
    %v9993 = vld [vmem:[%s8 + $0x7c] sm:$0xf]
    %v9994 = vld [vmem:[%s8 + $0x80] sm:$0xf]
    %v9995 = vld [vmem:[%s8 + $0x84] sm:$0xf]
    %v9996 = vld [vmem:[%s8 + $0x88] sm:$0xf]
    %v9997 = vld [vmem:[%s8 + $0x8c] sm:$0xf]
    %v9998 = vld [vmem:[%s8 + $0x90] sm:$0xf]
    %v9999 = vld [vmem:[%s8 + $0x94] sm:$0xf]
    %v10000 = vld [vmem:[%s8 + $0x98] sm:$0xf]
    %v10001 = vld [vmem:[%s8 + $0x9c] sm:$0xf]
    %v10002 = vld [vmem:[%s8 + $0xa0] sm:$0xf]
    %v10003 = vld [vmem:[%s8 + $0xa4] sm:$0xf]
    %v10004 = vld [vmem:[%s8 + $0xa8] sm:$0xf]
    %v10005 = vld [vmem:[%s8 + $0xac] sm:$0xf]
    %v10006 = vld [vmem:[%s8 + $0xb0] sm:$0xf]
    %v10007 = vld [vmem:[%s8 + $0xb4] sm:$0xf]
    %v10008 = vld [vmem:[%s8 + $0xb8] sm:$0xf]
    %v10009 = vld [vmem:[%s8 + $0xbc] sm:$0xf]
    %v10010 = vld [vmem:[%s8 + $0xc0] sm:$0xf]
    %v10011 = vld [vmem:[%s8 + $0xc4] sm:$0xf]
    %v10012 = vld [vmem:[%s8 + $0xc8] sm:$0xf]
    %v10013 = vld [vmem:[%s8 + $0xcc] sm:$0xf]
    %v10014 = vld [vmem:[%s8 + $0xd0] sm:$0xf]
    %v10015 = vld [vmem:[%s8 + $0xd4] sm:$0xf]
    %v10016 = vld [vmem:[%s8 + $0xd8] sm:$0xf]
    %v10017 = vld [vmem:[%s8 + $0xdc] sm:$0xf]
    %v10018 = vld [vmem:[%s8 + $0xe0] sm:$0xf]
    %v10019 = vld [vmem:[%s8 + $0xe4] sm:$0xf]
    %v10020 = vld [vmem:[%s8 + $0xe8] sm:$0xf]
    %v10021 = vld [vmem:[%s8 + $0xec] sm:$0xf]
    %v10022 = vld [vmem:[%s8 + $0xf0] sm:$0xf]
    %v10023 = vld [vmem:[%s8 + $0xf4] sm:$0xf]
    %v10024 = vld [vmem:[%s8 + $0xf8] sm:$0xf]
    %v10025 = vld [vmem:[%s8 + $0xfc] sm:$0xf]
    %v10026 = vld [vmem:[%s9] sm:$0x1]
    %v10028 = vlaneseq
    %v10029 = vshrl.u32 %v10028, 7
    %v10030 = vsub.s32 0, %v10029
    %v10031 = vrot.slane %v10026, %v10030
    %v10097 = vunpack.c.l.b16 %v9962
    %v10098 = vunpack.c.l.b16 %v9963
    %v10099 = vunpack.c.l.b16 %v9964
    %v10100 = vunpack.c.l.b16 %v9965
    %v10101 = vunpack.c.l.b16 %v9966
    %v10102 = vunpack.c.l.b16 %v9967
    %v10103 = vunpack.c.l.b16 %v9968
    %v10104 = vunpack.c.l.b16 %v9969
    %v10105 = vunpack.c.l.b16 %v9970
    %v10106 = vunpack.c.l.b16 %v9971
    %v10107 = vunpack.c.l.b16 %v9972
    %v10108 = vunpack.c.l.b16 %v9973
    %v10109 = vunpack.c.l.b16 %v9974
    %v10110 = vunpack.c.l.b16 %v9975
    %v10111 = vunpack.c.l.b16 %v9976
    %v10112 = vunpack.c.l.b16 %v9977
    %v10113 = vunpack.c.l.b16 %v9978
    %v10114 = vunpack.c.l.b16 %v9979
    %v10115 = vunpack.c.l.b16 %v9980
    %v10116 = vunpack.c.l.b16 %v9981
    %v10117 = vunpack.c.l.b16 %v9982
    %v10118 = vunpack.c.l.b16 %v9983
    %v10119 = vunpack.c.l.b16 %v9984
    %v10120 = vunpack.c.l.b16 %v9985
    %v10121 = vunpack.c.l.b16 %v9986
    %v10122 = vunpack.c.l.b16 %v9987
    %v10123 = vunpack.c.l.b16 %v9988
    %v10124 = vunpack.c.l.b16 %v9989
    %v10125 = vunpack.c.l.b16 %v9990
    %v10126 = vunpack.c.l.b16 %v9991
    %v10127 = vunpack.c.l.b16 %v9992
    %v10128 = vunpack.c.l.b16 %v9993
    %v10129 = vunpack.c.l.b16 %v9994
    %v10130 = vunpack.c.l.b16 %v9995
    %v10131 = vunpack.c.l.b16 %v9996
    %v10132 = vunpack.c.l.b16 %v9997
    %v10133 = vunpack.c.l.b16 %v9998
    %v10134 = vunpack.c.l.b16 %v9999
    %v10135 = vunpack.c.l.b16 %v10000
    %v10136 = vunpack.c.l.b16 %v10001
    %v10137 = vunpack.c.l.b16 %v10002
    %v10138 = vunpack.c.l.b16 %v10003
    %v10139 = vunpack.c.l.b16 %v10004
    %v10140 = vunpack.c.l.b16 %v10005
    %v10141 = vunpack.c.l.b16 %v10006
    %v10142 = vunpack.c.l.b16 %v10007
    %v10143 = vunpack.c.l.b16 %v10008
    %v10144 = vunpack.c.l.b16 %v10009
    %v10145 = vunpack.c.l.b16 %v10010
    %v10146 = vunpack.c.l.b16 %v10011
    %v10147 = vunpack.c.l.b16 %v10012
    %v10148 = vunpack.c.l.b16 %v10013
    %v10149 = vunpack.c.l.b16 %v10014
    %v10150 = vunpack.c.l.b16 %v10015
    %v10151 = vunpack.c.l.b16 %v10016
    %v10152 = vunpack.c.l.b16 %v10017
    %v10153 = vunpack.c.l.b16 %v10018
    %v10154 = vunpack.c.l.b16 %v10019
    %v10155 = vunpack.c.l.b16 %v10020
    %v10156 = vunpack.c.l.b16 %v10021
    %v10157 = vunpack.c.l.b16 %v10022
    %v10158 = vunpack.c.l.b16 %v10023
    %v10159 = vunpack.c.l.b16 %v10024
    %v10160 = vunpack.c.l.b16 %v10025
    %v10161 = vpack.c.b16 %v10098, %v10097
    %v10162 = vpack.c.b16 %v10100, %v10099
    %v10163 = vpack.c.b16 %v10102, %v10101
    %v10164 = vpack.c.b16 %v10104, %v10103
    %v10165 = vpack.c.b16 %v10106, %v10105
    %v10166 = vpack.c.b16 %v10108, %v10107
    %v10167 = vpack.c.b16 %v10110, %v10109
    %v10168 = vpack.c.b16 %v10112, %v10111
    %v10169 = vpack.c.b16 %v10114, %v10113
    %v10170 = vpack.c.b16 %v10116, %v10115
    %v10171 = vpack.c.b16 %v10118, %v10117
    %v10172 = vpack.c.b16 %v10120, %v10119
    %v10173 = vpack.c.b16 %v10122, %v10121
    %v10174 = vpack.c.b16 %v10124, %v10123
    %v10175 = vpack.c.b16 %v10126, %v10125
    %v10176 = vpack.c.b16 %v10128, %v10127
    %v10177 = vpack.c.b16 %v10130, %v10129
    %v10178 = vpack.c.b16 %v10132, %v10131
    %v10179 = vpack.c.b16 %v10134, %v10133
    %v10180 = vpack.c.b16 %v10136, %v10135
    %v10181 = vpack.c.b16 %v10138, %v10137
    %v10182 = vpack.c.b16 %v10140, %v10139
    %v10183 = vpack.c.b16 %v10142, %v10141
    %v10184 = vpack.c.b16 %v10144, %v10143
    %v10185 = vpack.c.b16 %v10146, %v10145
    %v10186 = vpack.c.b16 %v10148, %v10147
    %v10187 = vpack.c.b16 %v10150, %v10149
    %v10188 = vpack.c.b16 %v10152, %v10151
    %v10189 = vpack.c.b16 %v10154, %v10153
    %v10190 = vpack.c.b16 %v10156, %v10155
    %v10191 = vpack.c.b16 %v10158, %v10157
    %v10192 = vpack.c.b16 %v10160, %v10159
    %10225 = vmatprep.subr.bf16.mxu0 0
    %10226 = vmatpush1.bf16.msra.mxu0 %v10161
    %10227 = vmatprep.subr.bf16.mxu0 0
    %10228 = vmatpush1.bf16.msra.mxu0 %v10162
    %10229 = vmatprep.subr.bf16.mxu0 0
    %10230 = vmatpush1.bf16.msra.mxu0 %v10163
    %10231 = vmatprep.subr.bf16.mxu0 0
    %10232 = vmatpush1.bf16.msra.mxu0 %v10164
    %10233 = vmatprep.subr.bf16.mxu0 0
    %10234 = vmatpush1.bf16.msra.mxu0 %v10165
    %10235 = vmatprep.subr.bf16.mxu0 0
    %10236 = vmatpush1.bf16.msra.mxu0 %v10166
    %10237 = vmatprep.subr.bf16.mxu0 0
    %10238 = vmatpush1.bf16.msra.mxu0 %v10167
    %10239 = vmatprep.subr.bf16.mxu0 0
    %10240 = vmatpush1.bf16.msra.mxu0 %v10168
    %10241 = vmatprep.subr.bf16.mxu0 0
    %10242 = vmatpush1.bf16.msra.mxu0 %v10169
    %10243 = vmatprep.subr.bf16.mxu0 0
    %10244 = vmatpush1.bf16.msra.mxu0 %v10170
    %10245 = vmatprep.subr.bf16.mxu0 0
    %10246 = vmatpush1.bf16.msra.mxu0 %v10171
    %10247 = vmatprep.subr.bf16.mxu0 0
    %10248 = vmatpush1.bf16.msra.mxu0 %v10172
    %10249 = vmatprep.subr.bf16.mxu0 0
    %10250 = vmatpush1.bf16.msra.mxu0 %v10173
    %10251 = vmatprep.subr.bf16.mxu0 0
    %10252 = vmatpush1.bf16.msra.mxu0 %v10174
    %10253 = vmatprep.subr.bf16.mxu0 0
    %10254 = vmatpush1.bf16.msra.mxu0 %v10175
    %10255 = vmatprep.subr.bf16.mxu0 0
    %10256 = vmatpush1.bf16.msra.mxu0 %v10176
    %10257 = vmatprep.mubr.bf16.mxu0 %v9959
    %10258 = vmatmul.mubr.bf16.gmra.mrb[0].mxu0 %v9958
    %v10259 = vpop.f32.mrb[0].mxu0
    %v10260 = vadd.f32 %v10031, %v10259
    %v10261 = vpop.f32.mrb[0].mxu0
    %v10262 = vpop.f32.mrb[0].mxu0
    %v10263 = vpop.f32.mrb[0].mxu0
    %10264 = vdwg.mxu0
    %10265 = vmatprep.subr.bf16.mxu0 0
    %10266 = vmatpush1.bf16.msra.mxu0 %v10177
    %10267 = vmatprep.subr.bf16.mxu0 0
    %10268 = vmatpush1.bf16.msra.mxu0 %v10178
    %10269 = vmatprep.subr.bf16.mxu0 0
    %10270 = vmatpush1.bf16.msra.mxu0 %v10179
    %10271 = vmatprep.subr.bf16.mxu0 0
    %10272 = vmatpush1.bf16.msra.mxu0 %v10180
    %10273 = vmatprep.subr.bf16.mxu0 0
    %10274 = vmatpush1.bf16.msra.mxu0 %v10181
    %10275 = vmatprep.subr.bf16.mxu0 0
    %10276 = vmatpush1.bf16.msra.mxu0 %v10182
    %10277 = vmatprep.subr.bf16.mxu0 0
    %10278 = vmatpush1.bf16.msra.mxu0 %v10183
    %10279 = vmatprep.subr.bf16.mxu0 0
    %10280 = vmatpush1.bf16.msra.mxu0 %v10184
    %10281 = vmatprep.subr.bf16.mxu0 0
    %10282 = vmatpush1.bf16.msra.mxu0 %v10185
    %10283 = vmatprep.subr.bf16.mxu0 0
    %10284 = vmatpush1.bf16.msra.mxu0 %v10186
    %10285 = vmatprep.subr.bf16.mxu0 0
    %10286 = vmatpush1.bf16.msra.mxu0 %v10187
    %10287 = vmatprep.subr.bf16.mxu0 0
    %10288 = vmatpush1.bf16.msra.mxu0 %v10188
    %10289 = vmatprep.subr.bf16.mxu0 0
    %10290 = vmatpush1.bf16.msra.mxu0 %v10189
    %10291 = vmatprep.subr.bf16.mxu0 0
    %10292 = vmatpush1.bf16.msra.mxu0 %v10190
    %10293 = vmatprep.subr.bf16.mxu0 0
    %10294 = vmatpush1.bf16.msra.mxu0 %v10191
    %10295 = vmatprep.subr.bf16.mxu0 0
    %10296 = vmatpush1.bf16.msra.mxu0 %v10192
    %10297 = vmatprep.mubr.bf16.mxu0 %v9961
    %10298 = vmatmul.mubr.bf16.gmra.mrb[0].mxu0 %v9960
    %v10299 = vpop.f32.mrb[0].mxu0
    %v10300 = vadd.f32 %v10260, %v10299
    %v10301 = vpop.f32.mrb[0].mxu0
    %v10302 = vpop.f32.mrb[0].mxu0
    %v10303 = vpop.f32.mrb[0].mxu0
    %10304 = vdwg.mxu0
    %v10305 = vmax.f32 %v10300, 0.0
    %v10306 = vpack.c.bf16 %v10305, %v10305
    %v10307 = vld [vmem:[%s10] sm:$0xff]
    %v10308 = vld [vmem:[%s10 + $0x8] sm:$0xff]
    %v10309 = vld [vmem:[%s10 + $0x10] sm:$0xff]
    %v10310 = vld [vmem:[%s10 + $0x18] sm:$0xff]
    %v10311 = vld [vmem:[%s10 + $0x20] sm:$0xff]
    %v10312 = vld [vmem:[%s10 + $0x28] sm:$0xff]
    %v10313 = vld [vmem:[%s10 + $0x30] sm:$0xff]
    %v10314 = vld [vmem:[%s10 + $0x38] sm:$0xff]
    %v10315 = vld [vmem:[%s11] sm:$0xf]
    %v10317 = vlaneseq
    %v10318 = vshrl.u32 %v10317, 7
    %v10319 = vsub.s32 0, %v10318
    %v10320 = vrot.slane %v10315, %v10319
    %v10321 = vlaneseq
    %v10322 = vshrl.u32 %v10321, 7
    %v10323 = vsub.s32 1, %v10322
    %v10324 = vrot.slane %v10315, %v10323
    %v10325 = vlaneseq
    %v10326 = vshrl.u32 %v10325, 7
    %v10327 = vsub.s32 2, %v10326
    %v10328 = vrot.slane %v10315, %v10327
    %v10329 = vlaneseq
    %v10330 = vshrl.u32 %v10329, 7
    %v10331 = vsub.s32 3, %v10330
    %v10332 = vrot.slane %v10315, %v10331
    %v10345 = vunpack.c.l.b16 %v10307
    %v10346 = vunpack.c.h.b16 %v10307
    %v10347 = vunpack.c.l.b16 %v10308
    %v10348 = vunpack.c.h.b16 %v10308
    %v10349 = vunpack.c.l.b16 %v10309
    %v10350 = vunpack.c.h.b16 %v10309
    %v10351 = vunpack.c.l.b16 %v10310
    %v10352 = vunpack.c.h.b16 %v10310
    %v10353 = vunpack.c.l.b16 %v10311
    %v10354 = vunpack.c.h.b16 %v10311
    %v10355 = vunpack.c.l.b16 %v10312
    %v10356 = vunpack.c.h.b16 %v10312
    %v10357 = vunpack.c.l.b16 %v10313
    %v10358 = vunpack.c.h.b16 %v10313
    %v10359 = vunpack.c.l.b16 %v10314
    %v10360 = vunpack.c.h.b16 %v10314
    %v10361 = vpack.c.b16 %v10349, %v10345
    %v10362 = vpack.c.b16 %v10350, %v10346
    %v10363 = vpack.c.b16 %v10351, %v10347
    %v10364 = vpack.c.b16 %v10352, %v10348
    %v10365 = vpack.c.b16 %v10357, %v10353
    %v10366 = vpack.c.b16 %v10358, %v10354
    %v10367 = vpack.c.b16 %v10359, %v10355
    %v10368 = vpack.c.b16 %v10360, %v10356
    %vm10377 = vcmask 261120
    %v10379 = vsel %vm10377, %v10306, 0
    %10381 = vmatprep.subr.bf16.mxu0 %v10362
    %10382 = vmatpush1.bf16.msra.mxu0 %v10361
    %10383 = vmatprep.subr.bf16.mxu0 %v10366
    %10384 = vmatpush1.bf16.msra.mxu0 %v10365
    %10385 = vmatprep.subr.bf16.mxu0 0
    %10386 = vmatpush1.bf16.msra.mxu0 0
    %10387 = vmatprep.subr.bf16.mxu0 0
    %10388 = vmatpush1.bf16.msra.mxu0 0
    %10389 = vmatprep.subr.bf16.mxu0 0
    %10390 = vmatpush1.bf16.msra.mxu0 0
    %10391 = vmatprep.subr.bf16.mxu0 0
    %10392 = vmatpush1.bf16.msra.mxu0 0
    %10393 = vmatprep.subr.bf16.mxu0 0
    %10394 = vmatpush1.bf16.msra.mxu0 0
    %10395 = vmatprep.subr.bf16.mxu0 0
    %10396 = vmatpush1.bf16.msra.mxu0 0
    %10397 = vmatprep.subr.bf16.mxu0 0
    %10398 = vmatpush1.bf16.msra.mxu0 0
    %10399 = vmatprep.subr.bf16.mxu0 0
    %10400 = vmatpush1.bf16.msra.mxu0 0
    %10401 = vmatprep.subr.bf16.mxu0 0
    %10402 = vmatpush1.bf16.msra.mxu0 0
    %10403 = vmatprep.subr.bf16.mxu0 0
    %10404 = vmatpush1.bf16.msra.mxu0 0
    %10405 = vmatprep.subr.bf16.mxu0 0
    %10406 = vmatpush1.bf16.msra.mxu0 0
    %10407 = vmatprep.subr.bf16.mxu0 0
    %10408 = vmatpush1.bf16.msra.mxu0 0
    %10409 = vmatprep.subr.bf16.mxu0 0
    %10410 = vmatpush1.bf16.msra.mxu0 0
    %10411 = vmatprep.subr.bf16.mxu0 0
    %10412 = vmatpush1.bf16.msra.mxu0 0
    %10413 = vmatprep.mubr.bf16.mxu0 0
    %10414 = vmatmul.mubr.bf16.gmra.mrb[0].mxu0 %v10379
    %v10415 = vpop.f32.mrb[0].mxu0
    %v10416 = vadd.f32 %v10320, %v10415
    %v10417 = vpop.f32.mrb[0].mxu0
    %v10418 = vadd.f32 %v10324, %v10417
    %v10419 = vpop.f32.mrb[0].mxu0
    %v10420 = vpop.f32.mrb[0].mxu0
    %10421 = vdwg.mxu0
    %10422 = vmatprep.subr.bf16.mxu0 %v10364
    %10423 = vmatpush1.bf16.msra.mxu0 %v10363
    %10424 = vmatprep.subr.bf16.mxu0 %v10368
    %10425 = vmatpush1.bf16.msra.mxu0 %v10367
    %10426 = vmatprep.subr.bf16.mxu0 0
    %10427 = vmatpush1.bf16.msra.mxu0 0
    %10428 = vmatprep.subr.bf16.mxu0 0
    %10429 = vmatpush1.bf16.msra.mxu0 0
    %10430 = vmatprep.subr.bf16.mxu0 0
    %10431 = vmatpush1.bf16.msra.mxu0 0
    %10432 = vmatprep.subr.bf16.mxu0 0
    %10433 = vmatpush1.bf16.msra.mxu0 0
    %10434 = vmatprep.subr.bf16.mxu0 0
    %10435 = vmatpush1.bf16.msra.mxu0 0
    %10436 = vmatprep.subr.bf16.mxu0 0
    %10437 = vmatpush1.bf16.msra.mxu0 0
    %10438 = vmatprep.subr.bf16.mxu0 0
    %10439 = vmatpush1.bf16.msra.mxu0 0
    %10440 = vmatprep.subr.bf16.mxu0 0
    %10441 = vmatpush1.bf16.msra.mxu0 0
    %10442 = vmatprep.subr.bf16.mxu0 0
    %10443 = vmatpush1.bf16.msra.mxu0 0
    %10444 = vmatprep.subr.bf16.mxu0 0
    %10445 = vmatpush1.bf16.msra.mxu0 0
    %10446 = vmatprep.subr.bf16.mxu0 0
    %10447 = vmatpush1.bf16.msra.mxu0 0
    %10448 = vmatprep.subr.bf16.mxu0 0
    %10449 = vmatpush1.bf16.msra.mxu0 0
    %10450 = vmatprep.subr.bf16.mxu0 0
    %10451 = vmatpush1.bf16.msra.mxu0 0
    %10452 = vmatprep.subr.bf16.mxu0 0
    %10453 = vmatpush1.bf16.msra.mxu0 0
    %10454 = vmatprep.mubr.bf16.mxu0 0
    %10455 = vmatmul.mubr.bf16.gmra.mrb[0].mxu0 %v10379
    %v10456 = vpop.f32.mrb[0].mxu0
    %v10457 = vadd.f32 %v10328, %v10456
    %v10458 = vpop.f32.mrb[0].mxu0
    %v10459 = vadd.f32 %v10332, %v10458
    %v10460 = vpop.f32.mrb[0].mxu0
    %v10461 = vpop.f32.mrb[0].mxu0
    %10462 = vdwg.mxu0
    %v10463 = vxor.u32 %v10416, 2147483648
    %v10464 = vxor.u32 %v10418, 2147483648
    %v10465 = vxor.u32 %v10457, 2147483648
    %v10466 = vxor.u32 %v10459, 2147483648
    %v10467 = vmul.f32 %v10463, 1.442695
    %v10468 = vpow.pop %v10467
    %v10469 = vmul.f32 %v10464, 1.442695
    %v10470 = vpow.pop %v10469
    %v10471 = vmul.f32 %v10465, 1.442695
    %v10472 = vpow.pop %v10471
    %v10473 = vmul.f32 %v10466, 1.442695
    %v10474 = vpow.pop %v10473
    %v10475 = vadd.f32 %v10468, 1.0
    %v10476 = vadd.f32 %v10470, 1.0
    %v10477 = vadd.f32 %v10472, 1.0
    %v10478 = vadd.f32 %v10474, 1.0
    %v10479 = vrcp.pop %v10475
    %v10480 = vmul.f32 1.0, %v10479
    %v10481 = vrcp.pop %v10476
    %v10482 = vmul.f32 1.0, %v10481
    %v10483 = vrcp.pop %v10477
    %v10484 = vmul.f32 1.0, %v10483
    %v10485 = vrcp.pop %v10478
    %v10486 = vmul.f32 1.0, %v10485
    %v10487 = vmul.f32 %v9883, %v10480
    %v10488 = vmul.f32 %v9885, %v10482
    %v10489 = vmul.f32 %v9954, %v10484
    %v10490 = vmul.f32 %v9956, %v10486
    %v10495 = vcombine.low %v10487, %v10488
    %v10496 = vcombine.low %v10489, %v10490
    %v10498 = vunpack.c.l.s4 1983009808
    %v10499 = vunpack.c.0.s8 %v10498
    %v10500 = vlaneseq
    %v10501 = vshrl.u32 %v10500, 7
    %v10502 = vsub.s32 %v10499, %v10501
    %v10503 = vrot.slane %v10495, %v10502
    %v10505 = vunpack.c.l.s4 1983009808
    %v10506 = vunpack.c.0.s8 %v10505
    %v10507 = vlaneseq
    %v10508 = vshrl.u32 %v10507, 7
    %v10509 = vsub.s32 %v10506, %v10508
    %v10510 = vrot.slane %v10496, %v10509
    %v10511 = vcombine.low %v10503, %v10510
    %10513 = vst [vmem:[#allocation2] sm:$0xff] %v10511
    // Predicated region
    $region50: #{cross_attention_head.1} parent=1 // pred_check
      _
    $region51: #{cross_attention_head.1} parent=1 // pred_check_branch
      %10515 = sbr.rel (0) target = $region53
    $region52: #{cross_attention_head.1} parent=1 // pred_region
      %s10517 = ssub.s32 128, 128
      %10518 = vsyncadd [#allocation3], %s10517
      %s10520 = sshll.u32 [#allocation2], 4
      %s10521 = int_to_ptr.vmem [resolvable:$true] %s10520
      %10523 = dma.vmem_to_hbm [thread:$0]  %s10521, 128, %s12, [#allocation3]
    $region53: #{cross_attention_head.1} parent=1 // pred_fallthru
      _
    // Predicated region
    $region54: #{cross_attention_head.1} parent=1 // pred_check
      _
    $region55: #{cross_attention_head.1} parent=1 // pred_check_branch
      %10525 = sbr.rel (0) target = $region57
    $region56: #{cross_attention_head.1} parent=1 // pred_region
      %10526 = dma.done [#allocation3], 128
    $region57: #{cross_attention_head.1} parent=1 // pred_fallthru
      _
    %10527 = vsyncpa [#allocation3], 1

</llo_original>
